<compile_context>
chip_gen: v5e
topology: v5e:2x2
jax: 0.10.0
libtpu: 0.0.40
codegen_flags: <defaults>
</compile_context>

<pallas_src>
import functools

import numpy as np
import jax
import jax.numpy as jnp
from jax import lax
from jax.experimental import pallas as pl
from jax.experimental.pallas import tpu as pltpu

BN_EPS = 1e-5
L2_EPS = 1e-12
INV_SQRT2 = float(1.0 / np.sqrt(2.0))


# --------------------------------------------------------------------------- #
# Shared math helpers (usable both in-kernel and in the pure-JAX reference)
# --------------------------------------------------------------------------- #
def _gelu_exact(x):
    # nn.GELU() default: 0.5 * x * (1 + erf(x / sqrt(2)))
    return 0.5 * x * (1.0 + lax.erf(x * INV_SQRT2))


def _bn_gelu(h, gamma, beta):
    # BatchNorm1d (training mode, biased batch stats) + exact GELU, all f32.
    mu = jnp.mean(h, axis=0, keepdims=True)
    hc = h - mu
    var = jnp.mean(hc * hc, axis=0, keepdims=True)
    return _gelu_exact(hc * (lax.rsqrt(var + BN_EPS) * gamma) + beta)


# --------------------------------------------------------------------------- #
# Hardware-gated sizing
# --------------------------------------------------------------------------- #
def _vmem_limit_bytes():
    cap = 128 * 1024 * 1024
    try:
        info = pltpu.get_tpu_info()
        c = getattr(info, "vmem_capacity_bytes", None)
        if c:
            cap = int(c)
    except Exception:
        pass  # conservative default (v5e/v6e-like)
    # ~80% of physical VMEM, capped: ~51 MiB on v7x (64 MiB), ~102 MiB on v5e/v6e.
    return min(int(cap * 0.8), 112 * 1024 * 1024)


def _tile_targets(vmem_limit):
    # Larger output / K tiles when VMEM is plentiful (v5e/v6e 128 MiB);
    # stay at 256 for v7x's 64 MiB per-TensorCore VMEM.
    if vmem_limit >= 96 * 1024 * 1024:
        return 512, 512
    return 256, 256


def _tile(dim, target):
    """Largest multiple-of-128 divisor of `dim` that is <= target (else dim)."""
    best = None
    t = 128
    while t <= min(dim, target):
        if dim % t == 0:
            best = t
        t += 128
    return best if best is not None else dim


def _pick_out_tile(dim, target, prefer_two=True):
    """Output-feature tile; prefers >=2 tiles so both v7x TCs get work."""
    tn = _tile(dim, target)
    if prefer_two and dim // tn < 2:
        cand = _tile(dim, max(128, tn // 2))
        if dim // cand >= 2:
            tn = cand
    return tn


# --------------------------------------------------------------------------- #
# Fully fused path: whole projector in one pallas_call (everything in VMEM)
# --------------------------------------------------------------------------- #
def _fused_kernel(x_ref, inv_ref,
                  w1_ref, b1_ref, g1_ref, be1_ref,
                  w2_ref, b2_ref, g2_ref, be2_ref,
                  w3_ref, b3_ref, g3_ref, be3_ref,
                  w4_ref, o_ref):
    h = jnp.dot(x_ref[...], w1_ref[...], preferred_element_type=jnp.float32)
    # (x/||x||) @ W == (x @ W) * (1/||x||); bias added afterwards.
    h = _bn_gelu(h * inv_ref[...] + b1_ref[...], g1_ref[...], be1_ref[...])
    h = jnp.dot(h.astype(jnp.bfloat16), w2_ref[...],
                preferred_element_type=jnp.float32)
    h = _bn_gelu(h + b2_ref[...], g2_ref[...], be2_ref[...])
    h = jnp.dot(h.astype(jnp.bfloat16), w3_ref[...],
                preferred_element_type=jnp.float32)
    h = _bn_gelu(h + b3_ref[...], g3_ref[...], be3_ref[...])
    o_ref[...] = jnp.dot(h.astype(jnp.bfloat16), w4_ref[...],
                         preferred_element_type=jnp.float32).astype(o_ref.dtype)


def _fused_forward(x_bf16, inv, params, out_dtype, vmem_limit):
    w4 = params[-1]
    N = x_bf16.shape[0]
    B = w4.shape[1]
    vmem_spec = pl.BlockSpec(memory_space=pltpu.MemorySpace.VMEM)
    return pl.pallas_call(
        _fused_kernel,
        out_shape=jax.ShapeDtypeStruct((N, B), out_dtype),
        in_specs=[vmem_spec] * (2 + len(params)),
        out_specs=vmem_spec,
        compiler_params=pltpu.CompilerParams(vmem_limit_bytes=vmem_limit),
    )(x_bf16, inv, *params)


def _fused_fits(N, ft, H, B, vmem_limit):
    w_bytes = 2 * (ft * H + 2 * H * H + H * B)   # bf16 weights
    affine_bytes = 4 * 9 * H                     # biases + BN affine (f32)
    act_bytes = 4 * N * max(ft, H) * 6           # conservative f32 temporaries
    io_bytes = 2 * N * ft + 4 * N * B + 4 * N
    return (w_bytes + affine_bytes + act_bytes + io_bytes) <= int(vmem_limit * 0.6)


# --------------------------------------------------------------------------- #
# Tiled per-layer kernels
# --------------------------------------------------------------------------- #
def _layer_resident_kernel(x_ref, inv_ref, w_ref, b_ref, g_ref, be_ref, o_ref,
                           *, apply_inv):
    """Activations fully VMEM-resident; one full-K matmul per output tile."""
    h = jnp.dot(x_ref[...], w_ref[...], preferred_element_type=jnp.float32)
    if apply_inv:
        h = h * inv_ref[...]
    o_ref[...] = _bn_gelu(h + b_ref[...], g_ref[...], be_ref[...]).astype(o_ref.dtype)


def _layer_streamed_kernel(x_ref, inv_ref, w_ref, b_ref, g_ref, be_ref, o_ref,
                           acc_ref, *, apply_inv):
    """Fallback: K-streamed activations with an f32 VMEM accumulator."""
    k = pl.program_id(1)

    @pl.when(k == 0)
    def _():
        acc_ref[...] = jnp.zeros_like(acc_ref)

    acc_ref[...] += jnp.dot(x_ref[...], w_ref[...],
                            preferred_element_type=jnp.float32)

    @pl.when(k == pl.num_programs(1) - 1)
    def _():
        h = acc_ref[...]
        if apply_inv:
            h = h * inv_ref[...]
        o_ref[...] = _bn_gelu(h + b_ref[...], g_ref[...],
                              be_ref[...]).astype(o_ref.dtype)


def _proj_resident_kernel(h_ref, w_ref, o_ref):
    o_ref[...] = jnp.dot(h_ref[...], w_ref[...],
                         preferred_element_type=jnp.float32).astype(o_ref.dtype)


def _proj_streamed_kernel(h_ref, w_ref, o_ref, acc_ref):
    k = pl.program_id(1)

    @pl.when(k == 0)
    def _():
        acc_ref[...] = jnp.zeros_like(acc_ref)

    acc_ref[...] += jnp.dot(h_ref[...], w_ref[...],
                            preferred_element_type=jnp.float32)

    @pl.when(k == pl.num_programs(1) - 1)
    def _():
        o_ref[...] = acc_ref[...].astype(o_ref.dtype)


# --------------------------------------------------------------------------- #
# Tiled per-layer wrappers (resident-x preferred, K-streamed fallback)
# --------------------------------------------------------------------------- #
def _mlp_layer(x, inv, w, b, g, be, *, apply_inv, mode, vmem_limit,
               tn_target, tk_target, out_dtype=jnp.bfloat16):
    N, K = x.shape
    _, H = w.shape
    budget = int(vmem_limit * 0.7)
    out_isize = jnp.dtype(out_dtype).itemsize

    def resident_bytes(tn_):
        return (2 * N * K * x.dtype.itemsize      # resident activations (x2 headroom)
                + 2 * K * tn_ * w.dtype.itemsize  # double-buffered weight column tile
                + 2 * N * tn_ * out_isize         # double-buffered output tile
                + 2 * N * tn_ * 4                 # f32 epilogue temporaries
                + 8 * tn_ * 4 + 4 * N)

    use_resident = (mode == "resident"
                    or (mode == "auto" and resident_bytes(128) <= budget))

    if use_resident:
        tn = _pick_out_tile(H, tn_target)
        while resident_bytes(tn) > budget and tn > 128:
            cand = _tile(H, tn // 2)
            if cand == tn:
                break
            tn = cand
        kernel = functools.partial(_layer_resident_kernel, apply_inv=apply_inv)
        return pl.pallas_call(
            kernel,
            out_shape=jax.ShapeDtypeStruct((N, H), out_dtype),
            grid_spec=pltpu.PrefetchScalarGridSpec(
                num_scalar_prefetch=0,
                grid=(H // tn,),
                in_specs=[
                    pl.BlockSpec((N, K), lambda j: (0, 0)),   # activations, fetched once
                    pl.BlockSpec((N, 1), lambda j: (0, 0)),   # 1/||x|| (layer 1)
                    pl.BlockSpec((K, tn), lambda j: (0, j)),  # streamed weight column tile
                    pl.BlockSpec((1, tn), lambda j: (0, j)),  # bias
                    pl.BlockSpec((1, tn), lambda j: (0, j)),  # BN gamma
                    pl.BlockSpec((1, tn), lambda j: (0, j)),  # BN beta
                ],
                out_specs=pl.BlockSpec((N, tn), lambda j: (0, j)),
            ),
            compiler_params=pltpu.CompilerParams(
                dimension_semantics=("parallel",),
                vmem_limit_bytes=vmem_limit),
        )(x, inv, w, b, g, be)

    # Fallback: batch too large for VMEM residency -> stream x along K.
    tn = _tile(H, tn_target)
    tk = _tile(K, tk_target)
    kernel = functools.partial(_layer_streamed_kernel, apply_inv=apply_inv)
    return pl.pallas_call(
        kernel,
        out_shape=jax.ShapeDtypeStruct((N, H), out_dtype),
        grid_spec=pltpu.PrefetchScalarGridSpec(
            num_scalar_prefetch=0,
            grid=(H // tn, K // tk),
            in_specs=[
                pl.BlockSpec((N, tk), lambda j, k: (0, k)),
                pl.BlockSpec((N, 1), lambda j, k: (0, 0)),
                pl.BlockSpec((tk, tn), lambda j, k: (k, j)),
                pl.BlockSpec((1, tn), lambda j, k: (0, j)),
                pl.BlockSpec((1, tn), lambda j, k: (0, j)),
                pl.BlockSpec((1, tn), lambda j, k: (0, j)),
            ],
            out_specs=pl.BlockSpec((N, tn), lambda j, k: (0, j)),
            scratch_shapes=[pltpu.VMEM((N, tn), jnp.float32)],
        ),
        compiler_params=pltpu.CompilerParams(
            dimension_semantics=("parallel", "arbitrary"),
            vmem_limit_bytes=vmem_limit),
    )(x, inv, w, b, g, be)


def _final_proj(h, w, *, mode, vmem_limit, tn_target, tk_target,
                out_dtype=jnp.float32):
    N, K = h.shape
    _, B = w.shape
    budget = int(vmem_limit * 0.7)
    out_isize = jnp.dtype(out_dtype).itemsize

    def resident_bytes(tn_):
        return (2 * N * K * h.dtype.itemsize
                + 2 * K * tn_ * w.dtype.itemsize
                + 2 * N * tn_ * out_isize
                + N * tn_ * 4)

    use_resident = (mode == "resident"
                    or (mode == "auto" and resident_bytes(128) <= budget))

    if use_resident:
        tn = _pick_out_tile(B, tn_target)   # >=2 tiles when possible (v7x megacore)
        while resident_bytes(tn) > budget and tn > 128:
            cand = _tile(B, tn // 2)
            if cand == tn:
                break
            tn = cand
        return pl.pallas_call(
            _proj_resident_kernel,
            out_shape=jax.ShapeDtypeStruct((N, B), out_dtype),
            grid_spec=pltpu.PrefetchScalarGridSpec(
                num_scalar_prefetch=0,
                grid=(B // tn,),
                in_specs=[
                    pl.BlockSpec((N, K), lambda j: (0, 0)),
                    pl.BlockSpec((K, tn), lambda j: (0, j)),
                ],
                out_specs=pl.BlockSpec((N, tn), lambda j: (0, j)),
            ),
            compiler_params=pltpu.CompilerParams(
                dimension_semantics=("parallel",),
                vmem_limit_bytes=vmem_limit),
        )(h, w)

    tn = _tile(B, tn_target)
    tk = _tile(K, tk_target)
    return pl.pallas_call(
        _proj_streamed_kernel,
        out_shape=jax.ShapeDtypeStruct((N, B), out_dtype),
        grid_spec=pltpu.PrefetchScalarGridSpec(
            num_scalar_prefetch=0,
            grid=(B // tn, K // tk),
            in_specs=[
                pl.BlockSpec((N, tk), lambda j, k: (0, k)),
                pl.BlockSpec((tk, tn), lambda j, k: (k, j)),
            ],
            out_specs=pl.BlockSpec((N, tn), lambda j, k: (0, j)),
            scratch_shapes=[pltpu.VMEM((N, tn), jnp.float32)],
        ),
        compiler_params=pltpu.CompilerParams(
            dimension_semantics=("parallel", "arbitrary"),
            vmem_limit_bytes=vmem_limit),
    )(h, w)


# --------------------------------------------------------------------------- #
# Top-level forward
# --------------------------------------------------------------------------- #
def trex_projector(x, params, *, mode="auto", input_l2_norm=True,
                   out_dtype=jnp.float32):
    """mode: "auto" | "fused" | "resident" | "streamed" (latter two force the
    tiled per-layer paths; "auto" picks the cheapest fitting path)."""
    (w1, b1, g1, be1, w2, b2, g2, be2, w3, b3, g3, be3, w4) = params
    N, ft = x.shape
    H = w1.shape[1]
    B = w4.shape[1]

    vmem_limit = _vmem_limit_bytes()
    tn_target, tk_target = _tile_targets(vmem_limit)

    # L2 norm hoisted out of the kernels (f32), applied as a per-row scale in
    # the layer-1 epilogue: F.normalize(p=2, eps=1e-12) == x * rsqrt(max(||x||^2, eps^2)).
    xf = x.astype(jnp.float32)
    if input_l2_norm:
        inv = lax.rsqrt(jnp.maximum(jnp.sum(xf * xf, axis=1, keepdims=True),
                                    L2_EPS * L2_EPS))
    else:
        inv = jnp.ones((N, 1), jnp.float32)
    ones = jnp.ones((N, 1), jnp.float32)
    x_bf = x.astype(jnp.bfloat16)   # bf16 MXU operand; halves layer-1 DMA

    if mode == "fused" or (mode == "auto" and _fused_fits(N, ft, H, B, vmem_limit)):
        return _fused_forward(x_bf, inv, params, out_dtype, vmem_limit)

    layer_mode = mode if mode in ("resident", "streamed") else "auto"
    common = dict(mode=layer_mode, vmem_limit=vmem_limit,
                  tn_target=tn_target, tk_target=tk_target)
    h = _mlp_layer(x_bf, inv, w1, b1, g1, be1, apply_inv=input_l2_norm, **common)
    h = _mlp_layer(h, ones, w2, b2, g2, be2, apply_inv=False, **common)
    h = _mlp_layer(h, ones, w3, b3, g3, be3, apply_inv=False, **common)
    return _final_proj(h, w4, out_dtype=out_dtype, **common)


# --------------------------------------------------------------------------- #
# Parameters & pure-JAX reference
# --------------------------------------------------------------------------- #
def make_params(key, ft_dim, hidden_dim, bottleneck_dim, hidden_layers=3):
    """Deterministic synthetic params. Weights bf16 (MXU operands); bias / BN
    affine stay f32 (VPU/EUP math stays f32)."""
    params = []
    in_dim = ft_dim
    for _ in range(hidden_layers):
        key, kw, kb, kg, kbe = jax.random.split(key, 5)
        bound = 1.0 / np.sqrt(in_dim)
        w = jax.random.uniform(kw, (in_dim, hidden_dim), jnp.float32,
                               -bound, bound).astype(jnp.bfloat16)
        b = jax.random.uniform(kb, (1, hidden_dim), jnp.float32, -bound, bound)
        g = 1.0 + 0.1 * jax.random.normal(kg, (1, hidden_dim), jnp.float32)
        be = 0.1 * jax.random.normal(kbe, (1, hidden_dim), jnp.float32)
        params += [w, b, g, be]
        in_dim = hidden_dim
    key, kw = jax.random.split(key)
    bound = 1.0 / np.sqrt(in_dim)
    w4 = jax.random.uniform(kw, (in_dim, bottleneck_dim), jnp.float32,
                            -bound, bound).astype(jnp.bfloat16)
    params.append(w4)
    return params


def trex_reference(x, params):
    """Pure-JAX reference using the same bf16-operand / f32-accumulate matmuls
    and the same (x @ W) * inv_norm ordering as the kernels."""
    (w1, b1, g1, be1, w2, b2, g2, be2, w3, b3, g3, be3, w4) = params

    def mm(a, w):
        return jnp.dot(a.astype(jnp.bfloat16), w.astype(jnp.bfloat16),
                       preferred_element_type=jnp.float32)

    xf = x.astype(jnp.float32)
    inv = lax.rsqrt(jnp.maximum(jnp.sum(xf * xf, axis=1, keepdims=True),
                                L2_EPS * L2_EPS))
    h = _bn_gelu(mm(x, w1) * inv + b1, g1, be1)
    h = _bn_gelu(mm(h, w2) + b2, g2, be2)
    h = _bn_gelu(mm(h, w3) + b3, g3, be3)
    return mm(h, w4)


if __name__ == "__main__":
    # Small-but-representative shapes: full batch per layer (BatchNorm couples
    # rows), hidden=512 exercises multiple output-feature tiles.
    N, FT_DIM, HIDDEN_DIM, BOTTLENECK_DIM = 64, 256, 512, 128

    key = jax.random.PRNGKey(0)
    kx, kp = jax.random.split(key)
    x = jax.random.normal(kx, (N, FT_DIM), jnp.float32)
    params = make_params(kp, FT_DIM, HIDDEN_DIM, BOTTLENECK_DIM)

    ref = jax.block_until_ready(trex_reference(x, params))

    # Exercise every execution path (fused single-call, VMEM-resident tiled,
    # K-streamed tiled) plus the auto dispatcher; check all against the
    # pure-JAX reference.
    for run_mode in ("fused", "resident", "streamed", "auto"):
        fn = jax.jit(functools.partial(trex_projector, mode=run_mode))
        out = jax.block_until_ready(fn(x, params))
        np.testing.assert_allclose(np.asarray(out), np.asarray(ref),
                                   rtol=2e-3, atol=2e-3)

    # TODO(synk): BatchNorm1d running-mean/var buffer updates (training-mode
    # side effect) are not materialized; only the forward activation is.
    print("KERNEL_OK")
</pallas_src>

<mosaic_0001>
module attributes {stable_mosaic.version = 11 : i64} {
  func.func @_fused_kernel(%arg0: memref<64x256xbf16, #tpu.memory_space<vmem>>, %arg1: memref<64x1xf32, #tpu.memory_space<vmem>>, %arg2: memref<256x512xbf16, #tpu.memory_space<vmem>>, %arg3: memref<1x512xf32, #tpu.memory_space<vmem>>, %arg4: memref<1x512xf32, #tpu.memory_space<vmem>>, %arg5: memref<1x512xf32, #tpu.memory_space<vmem>>, %arg6: memref<512x512xbf16, #tpu.memory_space<vmem>>, %arg7: memref<1x512xf32, #tpu.memory_space<vmem>>, %arg8: memref<1x512xf32, #tpu.memory_space<vmem>>, %arg9: memref<1x512xf32, #tpu.memory_space<vmem>>, %arg10: memref<512x512xbf16, #tpu.memory_space<vmem>>, %arg11: memref<1x512xf32, #tpu.memory_space<vmem>>, %arg12: memref<1x512xf32, #tpu.memory_space<vmem>>, %arg13: memref<1x512xf32, #tpu.memory_space<vmem>>, %arg14: memref<512x128xbf16, #tpu.memory_space<vmem>>, %arg15: memref<64x128xf32, #tpu.memory_space<vmem>>) attributes {dimension_semantics = [], scalar_prefetch = 0 : i64, scratch_operands = 0 : i64, tpu.core_type = #tpu.core_type<tc>} {
    %c0 = arith.constant 0 : index
    %c0_0 = arith.constant 0 : index
    %0 = vector.load %arg0[%c0, %c0_0] : memref<64x256xbf16, #tpu.memory_space<vmem>>, vector<64x256xbf16>
    %c0_1 = arith.constant 0 : index
    %c0_2 = arith.constant 0 : index
    %1 = vector.load %arg2[%c0_1, %c0_2] : memref<256x512xbf16, #tpu.memory_space<vmem>>, vector<256x512xbf16>
    %cst = arith.constant dense<0.000000e+00> : vector<64x512xf32>
    %2 = tpu.matmul %0, %1, %cst {dimension_numbers = #tpu.dot_dimension_numbers<[1], [0], [0], [1], [0, 0, 1, 1], [], []>} : vector<64x256xbf16>, vector<256x512xbf16>, vector<64x512xf32> -> vector<64x512xf32>
    %c0_3 = arith.constant 0 : index
    %c0_4 = arith.constant 0 : index
    %3 = vector.load %arg1[%c0_3, %c0_4] : memref<64x1xf32, #tpu.memory_space<vmem>>, vector<64x1xf32>
    %4 = vector.broadcast %3 : vector<64x1xf32> to vector<64x512xf32>
    %5 = arith.mulf %2, %4 : vector<64x512xf32>
    %c0_5 = arith.constant 0 : index
    %c0_6 = arith.constant 0 : index
    %6 = vector.load %arg3[%c0_5, %c0_6] : memref<1x512xf32, #tpu.memory_space<vmem>>, vector<1x512xf32>
    %7 = vector.broadcast %6 : vector<1x512xf32> to vector<64x512xf32>
    %8 = arith.addf %5, %7 : vector<64x512xf32>
    %c0_7 = arith.constant 0 : index
    %c0_8 = arith.constant 0 : index
    %9 = vector.load %arg4[%c0_7, %c0_8] : memref<1x512xf32, #tpu.memory_space<vmem>>, vector<1x512xf32>
    %c0_9 = arith.constant 0 : index
    %c0_10 = arith.constant 0 : index
    %10 = vector.load %arg5[%c0_9, %c0_10] : memref<1x512xf32, #tpu.memory_space<vmem>>, vector<1x512xf32>
    %cst_11 = arith.constant dense<0.000000e+00> : vector<512xf32>
    %11 = vector.multi_reduction <add>, %8, %cst_11 [0] : vector<64x512xf32> to vector<512xf32>
    %12 = vector.shape_cast %11 : vector<512xf32> to vector<1x512xf32>
    %cst_12 = arith.constant 6.400000e+01 : f32
    %13 = vector.broadcast %cst_12 : f32 to vector<1x512xf32>
    %14 = arith.divf %12, %13 : vector<1x512xf32>
    %15 = vector.broadcast %14 : vector<1x512xf32> to vector<64x512xf32>
    %16 = arith.subf %8, %15 : vector<64x512xf32>
    %17 = arith.mulf %16, %16 : vector<64x512xf32>
    %cst_13 = arith.constant dense<0.000000e+00> : vector<512xf32>
    %18 = vector.multi_reduction <add>, %17, %cst_13 [0] : vector<64x512xf32> to vector<512xf32>
    %19 = vector.shape_cast %18 : vector<512xf32> to vector<1x512xf32>
    %cst_14 = arith.constant 6.400000e+01 : f32
    %20 = vector.broadcast %cst_14 : f32 to vector<1x512xf32>
    %21 = arith.divf %19, %20 : vector<1x512xf32>
    %cst_15 = arith.constant 9.99999974E-6 : f32
    %22 = vector.broadcast %cst_15 : f32 to vector<1x512xf32>
    %23 = arith.addf %21, %22 : vector<1x512xf32>
    %24 = math.rsqrt %23 : vector<1x512xf32>
    %25 = arith.mulf %24, %9 : vector<1x512xf32>
    %26 = vector.broadcast %25 : vector<1x512xf32> to vector<64x512xf32>
    %27 = arith.mulf %16, %26 : vector<64x512xf32>
    %28 = vector.broadcast %10 : vector<1x512xf32> to vector<64x512xf32>
    %29 = arith.addf %27, %28 : vector<64x512xf32>
    %cst_16 = arith.constant 5.000000e-01 : f32
    %30 = vector.broadcast %cst_16 : f32 to vector<64x512xf32>
    %31 = arith.mulf %30, %29 : vector<64x512xf32>
    %cst_17 = arith.constant 0.707106769 : f32
    %32 = vector.broadcast %cst_17 : f32 to vector<64x512xf32>
    %33 = arith.mulf %29, %32 : vector<64x512xf32>
    %34 = math.erf %33 : vector<64x512xf32>
    %cst_18 = arith.constant 1.000000e+00 : f32
    %35 = vector.broadcast %cst_18 : f32 to vector<64x512xf32>
    %36 = arith.addf %35, %34 : vector<64x512xf32>
    %37 = arith.mulf %31, %36 : vector<64x512xf32>
    %38 = arith.truncf %37 : vector<64x512xf32> to vector<64x512xbf16>
    %c0_19 = arith.constant 0 : index
    %c0_20 = arith.constant 0 : index
    %39 = vector.load %arg6[%c0_19, %c0_20] : memref<512x512xbf16, #tpu.memory_space<vmem>>, vector<512x512xbf16>
    %cst_21 = arith.constant dense<0.000000e+00> : vector<64x512xf32>
    %40 = tpu.matmul %38, %39, %cst_21 {dimension_numbers = #tpu.dot_dimension_numbers<[1], [0], [0], [1], [0, 0, 1, 1], [], []>} : vector<64x512xbf16>, vector<512x512xbf16>, vector<64x512xf32> -> vector<64x512xf32>
    %c0_22 = arith.constant 0 : index
    %c0_23 = arith.constant 0 : index
    %41 = vector.load %arg7[%c0_22, %c0_23] : memref<1x512xf32, #tpu.memory_space<vmem>>, vector<1x512xf32>
    %42 = vector.broadcast %41 : vector<1x512xf32> to vector<64x512xf32>
    %43 = arith.addf %40, %42 : vector<64x512xf32>
    %c0_24 = arith.constant 0 : index
    %c0_25 = arith.constant 0 : index
    %44 = vector.load %arg8[%c0_24, %c0_25] : memref<1x512xf32, #tpu.memory_space<vmem>>, vector<1x512xf32>
    %c0_26 = arith.constant 0 : index
    %c0_27 = arith.constant 0 : index
    %45 = vector.load %arg9[%c0_26, %c0_27] : memref<1x512xf32, #tpu.memory_space<vmem>>, vector<1x512xf32>
    %cst_28 = arith.constant dense<0.000000e+00> : vector<512xf32>
    %46 = vector.multi_reduction <add>, %43, %cst_28 [0] : vector<64x512xf32> to vector<512xf32>
    %47 = vector.shape_cast %46 : vector<512xf32> to vector<1x512xf32>
    %cst_29 = arith.constant 6.400000e+01 : f32
    %48 = vector.broadcast %cst_29 : f32 to vector<1x512xf32>
    %49 = arith.divf %47, %48 : vector<1x512xf32>
    %50 = vector.broadcast %49 : vector<1x512xf32> to vector<64x512xf32>
    %51 = arith.subf %43, %50 : vector<64x512xf32>
    %52 = arith.mulf %51, %51 : vector<64x512xf32>
    %cst_30 = arith.constant dense<0.000000e+00> : vector<512xf32>
    %53 = vector.multi_reduction <add>, %52, %cst_30 [0] : vector<64x512xf32> to vector<512xf32>
    %54 = vector.shape_cast %53 : vector<512xf32> to vector<1x512xf32>
    %cst_31 = arith.constant 6.400000e+01 : f32
    %55 = vector.broadcast %cst_31 : f32 to vector<1x512xf32>
    %56 = arith.divf %54, %55 : vector<1x512xf32>
    %cst_32 = arith.constant 9.99999974E-6 : f32
    %57 = vector.broadcast %cst_32 : f32 to vector<1x512xf32>
    %58 = arith.addf %56, %57 : vector<1x512xf32>
    %59 = math.rsqrt %58 : vector<1x512xf32>
    %60 = arith.mulf %59, %44 : vector<1x512xf32>
    %61 = vector.broadcast %60 : vector<1x512xf32> to vector<64x512xf32>
    %62 = arith.mulf %51, %61 : vector<64x512xf32>
    %63 = vector.broadcast %45 : vector<1x512xf32> to vector<64x512xf32>
    %64 = arith.addf %62, %63 : vector<64x512xf32>
    %cst_33 = arith.constant 5.000000e-01 : f32
    %65 = vector.broadcast %cst_33 : f32 to vector<64x512xf32>
    %66 = arith.mulf %65, %64 : vector<64x512xf32>
    %cst_34 = arith.constant 0.707106769 : f32
    %67 = vector.broadcast %cst_34 : f32 to vector<64x512xf32>
    %68 = arith.mulf %64, %67 : vector<64x512xf32>
    %69 = math.erf %68 : vector<64x512xf32>
    %cst_35 = arith.constant 1.000000e+00 : f32
    %70 = vector.broadcast %cst_35 : f32 to vector<64x512xf32>
    %71 = arith.addf %70, %69 : vector<64x512xf32>
    %72 = arith.mulf %66, %71 : vector<64x512xf32>
    %73 = arith.truncf %72 : vector<64x512xf32> to vector<64x512xbf16>
    %c0_36 = arith.constant 0 : index
    %c0_37 = arith.constant 0 : index
    %74 = vector.load %arg10[%c0_36, %c0_37] : memref<512x512xbf16, #tpu.memory_space<vmem>>, vector<512x512xbf16>
    %cst_38 = arith.constant dense<0.000000e+00> : vector<64x512xf32>
    %75 = tpu.matmul %73, %74, %cst_38 {dimension_numbers = #tpu.dot_dimension_numbers<[1], [0], [0], [1], [0, 0, 1, 1], [], []>} : vector<64x512xbf16>, vector<512x512xbf16>, vector<64x512xf32> -> vector<64x512xf32>
    %c0_39 = arith.constant 0 : index
    %c0_40 = arith.constant 0 : index
    %76 = vector.load %arg11[%c0_39, %c0_40] : memref<1x512xf32, #tpu.memory_space<vmem>>, vector<1x512xf32>
    %77 = vector.broadcast %76 : vector<1x512xf32> to vector<64x512xf32>
    %78 = arith.addf %75, %77 : vector<64x512xf32>
    %c0_41 = arith.constant 0 : index
    %c0_42 = arith.constant 0 : index
    %79 = vector.load %arg12[%c0_41, %c0_42] : memref<1x512xf32, #tpu.memory_space<vmem>>, vector<1x512xf32>
    %c0_43 = arith.constant 0 : index
    %c0_44 = arith.constant 0 : index
    %80 = vector.load %arg13[%c0_43, %c0_44] : memref<1x512xf32, #tpu.memory_space<vmem>>, vector<1x512xf32>
    %cst_45 = arith.constant dense<0.000000e+00> : vector<512xf32>
    %81 = vector.multi_reduction <add>, %78, %cst_45 [0] : vector<64x512xf32> to vector<512xf32>
    %82 = vector.shape_cast %81 : vector<512xf32> to vector<1x512xf32>
    %cst_46 = arith.constant 6.400000e+01 : f32
    %83 = vector.broadcast %cst_46 : f32 to vector<1x512xf32>
    %84 = arith.divf %82, %83 : vector<1x512xf32>
    %85 = vector.broadcast %84 : vector<1x512xf32> to vector<64x512xf32>
    %86 = arith.subf %78, %85 : vector<64x512xf32>
    %87 = arith.mulf %86, %86 : vector<64x512xf32>
    %cst_47 = arith.constant dense<0.000000e+00> : vector<512xf32>
    %88 = vector.multi_reduction <add>, %87, %cst_47 [0] : vector<64x512xf32> to vector<512xf32>
    %89 = vector.shape_cast %88 : vector<512xf32> to vector<1x512xf32>
    %cst_48 = arith.constant 6.400000e+01 : f32
    %90 = vector.broadcast %cst_48 : f32 to vector<1x512xf32>
    %91 = arith.divf %89, %90 : vector<1x512xf32>
    %cst_49 = arith.constant 9.99999974E-6 : f32
    %92 = vector.broadcast %cst_49 : f32 to vector<1x512xf32>
    %93 = arith.addf %91, %92 : vector<1x512xf32>
    %94 = math.rsqrt %93 : vector<1x512xf32>
    %95 = arith.mulf %94, %79 : vector<1x512xf32>
    %96 = vector.broadcast %95 : vector<1x512xf32> to vector<64x512xf32>
    %97 = arith.mulf %86, %96 : vector<64x512xf32>
    %98 = vector.broadcast %80 : vector<1x512xf32> to vector<64x512xf32>
    %99 = arith.addf %97, %98 : vector<64x512xf32>
    %cst_50 = arith.constant 5.000000e-01 : f32
    %100 = vector.broadcast %cst_50 : f32 to vector<64x512xf32>
    %101 = arith.mulf %100, %99 : vector<64x512xf32>
    %cst_51 = arith.constant 0.707106769 : f32
    %102 = vector.broadcast %cst_51 : f32 to vector<64x512xf32>
    %103 = arith.mulf %99, %102 : vector<64x512xf32>
    %104 = math.erf %103 : vector<64x512xf32>
    %cst_52 = arith.constant 1.000000e+00 : f32
    %105 = vector.broadcast %cst_52 : f32 to vector<64x512xf32>
    %106 = arith.addf %105, %104 : vector<64x512xf32>
    %107 = arith.mulf %101, %106 : vector<64x512xf32>
    %108 = arith.truncf %107 : vector<64x512xf32> to vector<64x512xbf16>
    %c0_53 = arith.constant 0 : index
    %c0_54 = arith.constant 0 : index
    %109 = vector.load %arg14[%c0_53, %c0_54] : memref<512x128xbf16, #tpu.memory_space<vmem>>, vector<512x128xbf16>
    %cst_55 = arith.constant dense<0.000000e+00> : vector<64x128xf32>
    %110 = tpu.matmul %108, %109, %cst_55 {dimension_numbers = #tpu.dot_dimension_numbers<[1], [0], [0], [1], [0, 0, 1, 1], [], []>} : vector<64x512xbf16>, vector<512x128xbf16>, vector<64x128xf32> -> vector<64x128xf32>
    %c0_56 = arith.constant 0 : index
    %c0_57 = arith.constant 0 : index
    %111 = vector.load %arg15[%c0_56, %c0_57] : memref<64x128xf32, #tpu.memory_space<vmem>>, vector<64x128xf32>
    tpu.vector_store %arg15[%c0_56, %c0_57], %110 {strides = array<i32>} : memref<64x128xf32, #tpu.memory_space<vmem>>, vector<64x128xf32>,
    return
  }
}

</mosaic_0001>

<llo_original>
// kernel: trex_projector.1
$region0: #{trex_projector.1}
  #allocation0 [shape = 'u32[]', space=smem, size = 0x4, offset = 0x4, fixed_abs, tag = 'smem constant byte address 0x4 - core index']
  #allocation1 [shape = 'u32[72,128]{1,0:T(1,128)}', space=vmem, size = 0x9000, scoped, tag = 'internal scratch']
  %s0 = inlined_call_operand.vmem [shape: bf16[64,256], index: 0, kind: input, shape index: {}]
  %s1 = inlined_call_operand.vmem [shape: f32[64,1], index: 1, kind: input, shape index: {}]
  %s2 = inlined_call_operand.hbm [shape: bf16[256,512], index: 2, kind: input, shape index: {}]
  %s3 = inlined_call_operand.vmem [shape: f32[1,512], index: 3, kind: input, shape index: {}]
  %s4 = inlined_call_operand.vmem [shape: f32[1,512], index: 4, kind: input, shape index: {}]
  %s5 = inlined_call_operand.vmem [shape: f32[1,512], index: 5, kind: input, shape index: {}]
  %s6 = inlined_call_operand.hbm [shape: bf16[512,512], index: 6, kind: input, shape index: {}]
  %s7 = inlined_call_operand.vmem [shape: f32[1,512], index: 7, kind: input, shape index: {}]
  %s8 = inlined_call_operand.hbm [shape: f32[1,512], index: 8, kind: input, shape index: {}]
  %s9 = inlined_call_operand.hbm [shape: f32[1,512], index: 9, kind: input, shape index: {}]
  %s10 = inlined_call_operand.hbm [shape: bf16[512,512], index: 10, kind: input, shape index: {}]
  %s11 = inlined_call_operand.hbm [shape: f32[1,512], index: 11, kind: input, shape index: {}]
  %s12 = inlined_call_operand.hbm [shape: f32[1,512], index: 12, kind: input, shape index: {}]
  %s13 = inlined_call_operand.hbm [shape: f32[1,512], index: 13, kind: input, shape index: {}]
  %s14 = inlined_call_operand.vmem [shape: bf16[512,128], index: 14, kind: input, shape index: {}]
  %s15 = inlined_call_operand.hbm [shape: f32[64,128], index: 15, kind: output, shape index: {}]
  %s16 = sld [smem:[#allocation0]]
  $region102: #{trex_projector.1} parent=0
    _
  %s18 = ssub.s32 1, %s16
  %s19 = scalar_select 0, %s18, %s16
  $region1: #{trex_projector.1} parent=0
    #allocation2 [shape = 'u8[262144]{0}', space=vmem, size = 0x40000, scoped, tag = 'input window, operand 2, single buffered']
    #allocation3 [shape = 's32[1]{0}', space=sflag, size = 0x4, scoped, tag = 'scoped memory for trex_projector.1']
    #allocation4 [shape = 's32[1]{0}', space=sflag, size = 0x4, scoped, tag = 'scoped memory for trex_projector.1']
    #allocation5 [shape = 'u8[524288]{0}', space=vmem, size = 0x80000, scoped, tag = 'input window, operand 6, single buffered']
    #allocation6 [shape = 's32[1]{0}', space=sflag, size = 0x4, scoped, tag = 'scoped memory for trex_projector.1']
    #allocation7 [shape = 'u8[2048]{0}', space=vmem, size = 0x800, scoped, tag = 'input window, operand 8, single buffered']
    #allocation8 [shape = 'u8[2048]{0}', space=vmem, size = 0x800, scoped, tag = 'input window, operand 9, single buffered']
    #allocation9 [shape = 's32[1]{0}', space=sflag, size = 0x4, scoped, tag = 'scoped memory for trex_projector.1']
    #allocation10 [shape = 'u8[524288]{0}', space=vmem, size = 0x80000, scoped, tag = 'input window, operand 10, single buffered']
    #allocation11 [shape = 'u8[2048]{0}', space=vmem, size = 0x800, scoped, tag = 'input window, operand 11, single buffered']
    #allocation12 [shape = 's32[1]{0}', space=sflag, size = 0x4, scoped, tag = 'scoped memory for trex_projector.1']
    #allocation13 [shape = 'u8[2048]{0}', space=vmem, size = 0x800, scoped, tag = 'input window, operand 12, single buffered']
    #allocation14 [shape = 'u8[2048]{0}', space=vmem, size = 0x800, scoped, tag = 'input window, operand 13, single buffered']
    #allocation15 [shape = 's32[1]{0}', space=sflag, size = 0x4, scoped, tag = 'scoped memory for trex_projector.1']
    #allocation16 [shape = 'u8[32768]{0}', space=vmem, size = 0x8000, scoped, tag = 'output window, operand 0, single buffered']
    %20 = vsyncpa [#allocation3], 0
    %21 = vsyncpa [#allocation6], 0
    %22 = vsyncpa [#allocation9], 0
    %23 = vsyncpa [#allocation12], 0
    %24 = vsyncpa [#allocation15], 0
    %25 = vsyncpa [#allocation4], 0
    // Predicated region
    $region2: #{trex_projector.1} parent=1 // pred_check
      _
    $region3: #{trex_projector.1} parent=1 // pred_check_branch
      %27 = sbr.rel (0) target = $region5
    $region4: #{trex_projector.1} parent=1 // pred_region
      _
    $region5: #{trex_projector.1} parent=1 // pred_fallthru
      _
    // Predicated region
    $region6: #{trex_projector.1} parent=1 // pred_check
      _
    $region7: #{trex_projector.1} parent=1 // pred_check_branch
      %29 = sbr.rel (0) target = $region9
    $region8: #{trex_projector.1} parent=1 // pred_region
      _
    $region9: #{trex_projector.1} parent=1 // pred_fallthru
      _
    // Predicated region
    $region10: #{trex_projector.1} parent=1 // pred_check
      _
    $region11: #{trex_projector.1} parent=1 // pred_check_branch
      %31 = sbr.rel (0) target = $region13
    $region12: #{trex_projector.1} parent=1 // pred_region
      %33 = vsyncadd [#allocation3], 0
      %s34 = sshll.u32 %s2, 4
      %s35 = int_to_ptr.hbm [resolvable:$true] %s34
      %s36 = sshll.u32 [#allocation2], 4
      %s37 = int_to_ptr.vmem [resolvable:$true] %s36
      %42 = dma.hbm_to_vmem [thread:$0]  %s35, 8192, %s37, [#allocation3], 256, 256, 16
    $region13: #{trex_projector.1} parent=1 // pred_fallthru
      _
    // Predicated region
    $region14: #{trex_projector.1} parent=1 // pred_check
      _
    $region15: #{trex_projector.1} parent=1 // pred_check_branch
      %44 = sbr.rel (0) target = $region17
    $region16: #{trex_projector.1} parent=1 // pred_region
      _
    $region17: #{trex_projector.1} parent=1 // pred_fallthru
      _
    // Predicated region
    $region18: #{trex_projector.1} parent=1 // pred_check
      _
    $region19: #{trex_projector.1} parent=1 // pred_check_branch
      %46 = sbr.rel (0) target = $region21
    $region20: #{trex_projector.1} parent=1 // pred_region
      _
    $region21: #{trex_projector.1} parent=1 // pred_fallthru
      _
    // Predicated region
    $region22: #{trex_projector.1} parent=1 // pred_check
      _
    $region23: #{trex_projector.1} parent=1 // pred_check_branch
      %48 = sbr.rel (0) target = $region25
    $region24: #{trex_projector.1} parent=1 // pred_region
      _
    $region25: #{trex_projector.1} parent=1 // pred_fallthru
      _
    // Predicated region
    $region26: #{trex_projector.1} parent=1 // pred_check
      _
    $region27: #{trex_projector.1} parent=1 // pred_check_branch
      %50 = sbr.rel (0) target = $region29
    $region28: #{trex_projector.1} parent=1 // pred_region
      %52 = vsyncadd [#allocation6], 0
      %s53 = sshll.u32 %s6, 4
      %s54 = int_to_ptr.hbm [resolvable:$true] %s53
      %s55 = sshll.u32 [#allocation5], 4
      %s56 = int_to_ptr.vmem [resolvable:$true] %s55
      %61 = dma.hbm_to_vmem [thread:$0]  %s54, 16384, %s56, [#allocation6], 256, 256, 16
    $region29: #{trex_projector.1} parent=1 // pred_fallthru
      _
    // Predicated region
    $region30: #{trex_projector.1} parent=1 // pred_check
      _
    $region31: #{trex_projector.1} parent=1 // pred_check_branch
      %63 = sbr.rel (0) target = $region33
    $region32: #{trex_projector.1} parent=1 // pred_region
      _
    $region33: #{trex_projector.1} parent=1 // pred_fallthru
      _
    // Predicated region
    $region34: #{trex_projector.1} parent=1 // pred_check
      _
    $region35: #{trex_projector.1} parent=1 // pred_check_branch
      %65 = sbr.rel (0) target = $region37
    $region36: #{trex_projector.1} parent=1 // pred_region
      %67 = vsyncadd [#allocation6], 0
      %s69 = sshll.u32 %s8, 4
      %s70 = int_to_ptr.hbm [resolvable:$true] %s69
      %s71 = sshll.u32 [#allocation7], 4
      %s72 = int_to_ptr.vmem [resolvable:$true] %s71
      %74 = dma.hbm_to_vmem [thread:$0]  %s70, 64, %s72, [#allocation6]
    $region37: #{trex_projector.1} parent=1 // pred_fallthru
      _
    // Predicated region
    $region38: #{trex_projector.1} parent=1 // pred_check
      _
    $region39: #{trex_projector.1} parent=1 // pred_check_branch
      %76 = sbr.rel (0) target = $region41
    $region40: #{trex_projector.1} parent=1 // pred_region
      %78 = vsyncadd [#allocation9], 0
      %s80 = sshll.u32 %s9, 4
      %s81 = int_to_ptr.hbm [resolvable:$true] %s80
      %s82 = sshll.u32 [#allocation8], 4
      %s83 = int_to_ptr.vmem [resolvable:$true] %s82
      %85 = dma.hbm_to_vmem [thread:$0]  %s81, 64, %s83, [#allocation9]
    $region41: #{trex_projector.1} parent=1 // pred_fallthru
      _
    // Predicated region
    $region42: #{trex_projector.1} parent=1 // pred_check
      _
    $region43: #{trex_projector.1} parent=1 // pred_check_branch
      %87 = sbr.rel (0) target = $region45
    $region44: #{trex_projector.1} parent=1 // pred_region
      %89 = vsyncadd [#allocation9], 0
      %s90 = sshll.u32 %s10, 4
      %s91 = int_to_ptr.hbm [resolvable:$true] %s90
      %s92 = sshll.u32 [#allocation10], 4
      %s93 = int_to_ptr.vmem [resolvable:$true] %s92
      %98 = dma.hbm_to_vmem [thread:$0]  %s91, 16384, %s93, [#allocation9], 256, 256, 16
    $region45: #{trex_projector.1} parent=1 // pred_fallthru
      _
    // Predicated region
    $region46: #{trex_projector.1} parent=1 // pred_check
      _
    $region47: #{trex_projector.1} parent=1 // pred_check_branch
      %100 = sbr.rel (0) target = $region49
    $region48: #{trex_projector.1} parent=1 // pred_region
      %102 = vsyncadd [#allocation12], 0
      %s104 = sshll.u32 %s11, 4
      %s105 = int_to_ptr.hbm [resolvable:$true] %s104
      %s106 = sshll.u32 [#allocation11], 4
      %s107 = int_to_ptr.vmem [resolvable:$true] %s106
      %109 = dma.hbm_to_vmem [thread:$0]  %s105, 64, %s107, [#allocation12]
    $region49: #{trex_projector.1} parent=1 // pred_fallthru
      _
    // Predicated region
    $region50: #{trex_projector.1} parent=1 // pred_check
      _
    $region51: #{trex_projector.1} parent=1 // pred_check_branch
      %111 = sbr.rel (0) target = $region53
    $region52: #{trex_projector.1} parent=1 // pred_region
      %113 = vsyncadd [#allocation12], 0
      %s115 = sshll.u32 %s12, 4
      %s116 = int_to_ptr.hbm [resolvable:$true] %s115
      %s117 = sshll.u32 [#allocation13], 4
      %s118 = int_to_ptr.vmem [resolvable:$true] %s117
      %120 = dma.hbm_to_vmem [thread:$0]  %s116, 64, %s118, [#allocation12]
    $region53: #{trex_projector.1} parent=1 // pred_fallthru
      _
    // Predicated region
    $region54: #{trex_projector.1} parent=1 // pred_check
      _
    $region55: #{trex_projector.1} parent=1 // pred_check_branch
      %122 = sbr.rel (0) target = $region57
    $region56: #{trex_projector.1} parent=1 // pred_region
      %124 = vsyncadd [#allocation15], 0
      %s126 = sshll.u32 %s13, 4
      %s127 = int_to_ptr.hbm [resolvable:$true] %s126
      %s128 = sshll.u32 [#allocation14], 4
      %s129 = int_to_ptr.vmem [resolvable:$true] %s128
      %131 = dma.hbm_to_vmem [thread:$0]  %s127, 64, %s129, [#allocation15]
    $region57: #{trex_projector.1} parent=1 // pred_fallthru
      _
    // Predicated region
    $region58: #{trex_projector.1} parent=1 // pred_check
      _
    $region59: #{trex_projector.1} parent=1 // pred_check_branch
      %133 = sbr.rel (0) target = $region61
    $region60: #{trex_projector.1} parent=1 // pred_region
      _
    $region61: #{trex_projector.1} parent=1 // pred_fallthru
      _
    // Predicated region
    $region62: #{trex_projector.1} parent=1 // pred_check
      _
    $region63: #{trex_projector.1} parent=1 // pred_check_branch
      %135 = sbr.rel (0) target = $region65
    $region64: #{trex_projector.1} parent=1 // pred_region
      %137 = dma.done [#allocation3], 8192
    $region65: #{trex_projector.1} parent=1 // pred_fallthru
      _
    // Predicated region
    $region66: #{trex_projector.1} parent=1 // pred_check
      _
    $region67: #{trex_projector.1} parent=1 // pred_check_branch
      %139 = sbr.rel (0) target = $region69
    $region68: #{trex_projector.1} parent=1 // pred_region
      %141 = dma.done [#allocation6], 16384
    $region69: #{trex_projector.1} parent=1 // pred_fallthru
      _
    // Predicated region
    $region70: #{trex_projector.1} parent=1 // pred_check
      _
    $region71: #{trex_projector.1} parent=1 // pred_check_branch
      %143 = sbr.rel (0) target = $region73
    $region72: #{trex_projector.1} parent=1 // pred_region
      %145 = dma.done [#allocation6], 64
    $region73: #{trex_projector.1} parent=1 // pred_fallthru
      _
    // Predicated region
    $region74: #{trex_projector.1} parent=1 // pred_check
      _
    $region75: #{trex_projector.1} parent=1 // pred_check_branch
      %147 = sbr.rel (0) target = $region77
    $region76: #{trex_projector.1} parent=1 // pred_region
      %149 = dma.done [#allocation9], 64
    $region77: #{trex_projector.1} parent=1 // pred_fallthru
      _
    // Predicated region
    $region78: #{trex_projector.1} parent=1 // pred_check
      _
    $region79: #{trex_projector.1} parent=1 // pred_check_branch
      %151 = sbr.rel (0) target = $region81
    $region80: #{trex_projector.1} parent=1 // pred_region
      %153 = dma.done [#allocation9], 16384
    $region81: #{trex_projector.1} parent=1 // pred_fallthru
      _
    // Predicated region
    $region82: #{trex_projector.1} parent=1 // pred_check
      _
    $region83: #{trex_projector.1} parent=1 // pred_check_branch
      %155 = sbr.rel (0) target = $region85
    $region84: #{trex_projector.1} parent=1 // pred_region
      %157 = dma.done [#allocation12], 64
    $region85: #{trex_projector.1} parent=1 // pred_fallthru
      _
    // Predicated region
    $region86: #{trex_projector.1} parent=1 // pred_check
      _
    $region87: #{trex_projector.1} parent=1 // pred_check_branch
      %159 = sbr.rel (0) target = $region89
    $region88: #{trex_projector.1} parent=1 // pred_region
      %161 = dma.done [#allocation12], 64
    $region89: #{trex_projector.1} parent=1 // pred_fallthru
      _
    // Predicated region
    $region90: #{trex_projector.1} parent=1 // pred_check
      _
    $region91: #{trex_projector.1} parent=1 // pred_check_branch
      %163 = sbr.rel (0) target = $region93
    $region92: #{trex_projector.1} parent=1 // pred_region
      %165 = dma.done [#allocation15], 64
    $region93: #{trex_projector.1} parent=1 // pred_fallthru
      _
    %v166 = vld [vmem:[%s0] sm:$0xff]
    %v167 = vld [vmem:[%s0 + $0x8] sm:$0xff]
    %v168 = vld [vmem:[%s0 + $0x10] sm:$0xff]
    %v169 = vld [vmem:[%s0 + $0x18] sm:$0xff]
    %v170 = vld [vmem:[%s0 + $0x20] sm:$0xff]
    %v171 = vld [vmem:[%s0 + $0x28] sm:$0xff]
    %v172 = vld [vmem:[%s0 + $0x30] sm:$0xff]
    %v173 = vld [vmem:[%s0 + $0x38] sm:$0xff]
    %v174 = vld [vmem:[#allocation2] sm:$0xff]
    %v175 = vld [vmem:[#allocation2 + $0x8] sm:$0xff]
    %v176 = vld [vmem:[#allocation2 + $0x10] sm:$0xff]
    %v177 = vld [vmem:[#allocation2 + $0x18] sm:$0xff]
    %v178 = vld [vmem:[#allocation2 + $0x20] sm:$0xff]
    %v179 = vld [vmem:[#allocation2 + $0x28] sm:$0xff]
    %v180 = vld [vmem:[#allocation2 + $0x30] sm:$0xff]
    %v181 = vld [vmem:[#allocation2 + $0x38] sm:$0xff]
    %v182 = vld [vmem:[#allocation2 + $0x40] sm:$0xff]
    %v183 = vld [vmem:[#allocation2 + $0x48] sm:$0xff]
    %v184 = vld [vmem:[#allocation2 + $0x50] sm:$0xff]
    %v185 = vld [vmem:[#allocation2 + $0x58] sm:$0xff]
    %v186 = vld [vmem:[#allocation2 + $0x60] sm:$0xff]
    %v187 = vld [vmem:[#allocation2 + $0x68] sm:$0xff]
    %v188 = vld [vmem:[#allocation2 + $0x70] sm:$0xff]
    %v189 = vld [vmem:[#allocation2 + $0x78] sm:$0xff]
    %v190 = vld [vmem:[#allocation2 + $0x80] sm:$0xff]
    %v191 = vld [vmem:[#allocation2 + $0x88] sm:$0xff]
    %v192 = vld [vmem:[#allocation2 + $0x90] sm:$0xff]
    %v193 = vld [vmem:[#allocation2 + $0x98] sm:$0xff]
    %v194 = vld [vmem:[#allocation2 + $0xa0] sm:$0xff]
    %v195 = vld [vmem:[#allocation2 + $0xa8] sm:$0xff]
    %v196 = vld [vmem:[#allocation2 + $0xb0] sm:$0xff]
    %v197 = vld [vmem:[#allocation2 + $0xb8] sm:$0xff]
    %v198 = vld [vmem:[#allocation2 + $0xc0] sm:$0xff]
    %v199 = vld [vmem:[#allocation2 + $0xc8] sm:$0xff]
    %v200 = vld [vmem:[#allocation2 + $0xd0] sm:$0xff]
    %v201 = vld [vmem:[#allocation2 + $0xd8] sm:$0xff]
    %v202 = vld [vmem:[#allocation2 + $0xe0] sm:$0xff]
    %v203 = vld [vmem:[#allocation2 + $0xe8] sm:$0xff]
    %v204 = vld [vmem:[#allocation2 + $0xf0] sm:$0xff]
    %v205 = vld [vmem:[#allocation2 + $0xf8] sm:$0xff]
    %v206 = vld [vmem:[#allocation2 + $0x100] sm:$0xff]
    %v207 = vld [vmem:[#allocation2 + $0x108] sm:$0xff]
    %v208 = vld [vmem:[#allocation2 + $0x110] sm:$0xff]
    %v209 = vld [vmem:[#allocation2 + $0x118] sm:$0xff]
    %v210 = vld [vmem:[#allocation2 + $0x120] sm:$0xff]
    %v211 = vld [vmem:[#allocation2 + $0x128] sm:$0xff]
    %v212 = vld [vmem:[#allocation2 + $0x130] sm:$0xff]
    %v213 = vld [vmem:[#allocation2 + $0x138] sm:$0xff]
    %v214 = vld [vmem:[#allocation2 + $0x140] sm:$0xff]
    %v215 = vld [vmem:[#allocation2 + $0x148] sm:$0xff]
    %v216 = vld [vmem:[#allocation2 + $0x150] sm:$0xff]
    %v217 = vld [vmem:[#allocation2 + $0x158] sm:$0xff]
    %v218 = vld [vmem:[#allocation2 + $0x160] sm:$0xff]
    %v219 = vld [vmem:[#allocation2 + $0x168] sm:$0xff]
    %v220 = vld [vmem:[#allocation2 + $0x170] sm:$0xff]
    %v221 = vld [vmem:[#allocation2 + $0x178] sm:$0xff]
    %v222 = vld [vmem:[#allocation2 + $0x180] sm:$0xff]
    %v223 = vld [vmem:[#allocation2 + $0x188] sm:$0xff]
    %v224 = vld [vmem:[#allocation2 + $0x190] sm:$0xff]
    %v225 = vld [vmem:[#allocation2 + $0x198] sm:$0xff]
    %v226 = vld [vmem:[#allocation2 + $0x1a0] sm:$0xff]
    %v227 = vld [vmem:[#allocation2 + $0x1a8] sm:$0xff]
    %v228 = vld [vmem:[#allocation2 + $0x1b0] sm:$0xff]
    %v229 = vld [vmem:[#allocation2 + $0x1b8] sm:$0xff]
    %v230 = vld [vmem:[#allocation2 + $0x1c0] sm:$0xff]
    %v231 = vld [vmem:[#allocation2 + $0x1c8] sm:$0xff]
    %v232 = vld [vmem:[#allocation2 + $0x1d0] sm:$0xff]
    %v233 = vld [vmem:[#allocation2 + $0x1d8] sm:$0xff]
    %v234 = vld [vmem:[#allocation2 + $0x1e0] sm:$0xff]
    %v235 = vld [vmem:[#allocation2 + $0x1e8] sm:$0xff]
    %v236 = vld [vmem:[#allocation2 + $0x1f0] sm:$0xff]
    %v237 = vld [vmem:[#allocation2 + $0x1f8] sm:$0xff]
    %v246 = vunpack.c.l.b16 %v166
    %v247 = vunpack.c.h.b16 %v166
    %v248 = vunpack.c.l.b16 %v167
    %v249 = vunpack.c.h.b16 %v167
    %v250 = vunpack.c.l.b16 %v168
    %v251 = vunpack.c.h.b16 %v168
    %v252 = vunpack.c.l.b16 %v169
    %v253 = vunpack.c.h.b16 %v169
    %v254 = vunpack.c.l.b16 %v170
    %v255 = vunpack.c.h.b16 %v170
    %v256 = vunpack.c.l.b16 %v171
    %v257 = vunpack.c.h.b16 %v171
    %v258 = vunpack.c.l.b16 %v172
    %v259 = vunpack.c.h.b16 %v172
    %v260 = vunpack.c.l.b16 %v173
    %v261 = vunpack.c.h.b16 %v173
    %v262 = vpack.c.b16 %v248, %v246
    %v263 = vpack.c.b16 %v249, %v247
    %v264 = vpack.c.b16 %v252, %v250
    %v265 = vpack.c.b16 %v253, %v251
    %v266 = vpack.c.b16 %v256, %v254
    %v267 = vpack.c.b16 %v257, %v255
    %v268 = vpack.c.b16 %v260, %v258
    %v269 = vpack.c.b16 %v261, %v259
    %v342 = vunpack.c.l.b16 %v174
    %v343 = vunpack.c.h.b16 %v174
    %v344 = vunpack.c.l.b16 %v175
    %v345 = vunpack.c.h.b16 %v175
    %v346 = vunpack.c.l.b16 %v176
    %v347 = vunpack.c.h.b16 %v176
    %v348 = vunpack.c.l.b16 %v177
    %v349 = vunpack.c.h.b16 %v177
    %v350 = vunpack.c.l.b16 %v178
    %v351 = vunpack.c.h.b16 %v178
    %v352 = vunpack.c.l.b16 %v179
    %v353 = vunpack.c.h.b16 %v179
    %v354 = vunpack.c.l.b16 %v180
    %v355 = vunpack.c.h.b16 %v180
    %v356 = vunpack.c.l.b16 %v181
    %v357 = vunpack.c.h.b16 %v181
    %v358 = vunpack.c.l.b16 %v182
    %v359 = vunpack.c.h.b16 %v182
    %v360 = vunpack.c.l.b16 %v183
    %v361 = vunpack.c.h.b16 %v183
    %v362 = vunpack.c.l.b16 %v184
    %v363 = vunpack.c.h.b16 %v184
    %v364 = vunpack.c.l.b16 %v185
    %v365 = vunpack.c.h.b16 %v185
    %v366 = vunpack.c.l.b16 %v186
    %v367 = vunpack.c.h.b16 %v186
    %v368 = vunpack.c.l.b16 %v187
    %v369 = vunpack.c.h.b16 %v187
    %v370 = vunpack.c.l.b16 %v188
    %v371 = vunpack.c.h.b16 %v188
    %v372 = vunpack.c.l.b16 %v189
    %v373 = vunpack.c.h.b16 %v189
    %v374 = vunpack.c.l.b16 %v190
    %v375 = vunpack.c.h.b16 %v190
    %v376 = vunpack.c.l.b16 %v191
    %v377 = vunpack.c.h.b16 %v191
    %v378 = vunpack.c.l.b16 %v192
    %v379 = vunpack.c.h.b16 %v192
    %v380 = vunpack.c.l.b16 %v193
    %v381 = vunpack.c.h.b16 %v193
    %v382 = vunpack.c.l.b16 %v194
    %v383 = vunpack.c.h.b16 %v194
    %v384 = vunpack.c.l.b16 %v195
    %v385 = vunpack.c.h.b16 %v195
    %v386 = vunpack.c.l.b16 %v196
    %v387 = vunpack.c.h.b16 %v196
    %v388 = vunpack.c.l.b16 %v197
    %v389 = vunpack.c.h.b16 %v197
    %v390 = vunpack.c.l.b16 %v198
    %v391 = vunpack.c.h.b16 %v198
    %v392 = vunpack.c.l.b16 %v199
    %v393 = vunpack.c.h.b16 %v199
    %v394 = vunpack.c.l.b16 %v200
    %v395 = vunpack.c.h.b16 %v200
    %v396 = vunpack.c.l.b16 %v201
    %v397 = vunpack.c.h.b16 %v201
    %v398 = vunpack.c.l.b16 %v202
    %v399 = vunpack.c.h.b16 %v202
    %v400 = vunpack.c.l.b16 %v203
    %v401 = vunpack.c.h.b16 %v203
    %v402 = vunpack.c.l.b16 %v204
    %v403 = vunpack.c.h.b16 %v204
    %v404 = vunpack.c.l.b16 %v205
    %v405 = vunpack.c.h.b16 %v205
    %v406 = vunpack.c.l.b16 %v206
    %v407 = vunpack.c.h.b16 %v206
    %v408 = vunpack.c.l.b16 %v207
    %v409 = vunpack.c.h.b16 %v207
    %v410 = vunpack.c.l.b16 %v208
    %v411 = vunpack.c.h.b16 %v208
    %v412 = vunpack.c.l.b16 %v209
    %v413 = vunpack.c.h.b16 %v209
    %v414 = vunpack.c.l.b16 %v210
    %v415 = vunpack.c.h.b16 %v210
    %v416 = vunpack.c.l.b16 %v211
    %v417 = vunpack.c.h.b16 %v211
    %v418 = vunpack.c.l.b16 %v212
    %v419 = vunpack.c.h.b16 %v212
    %v420 = vunpack.c.l.b16 %v213
    %v421 = vunpack.c.h.b16 %v213
    %v422 = vunpack.c.l.b16 %v214
    %v423 = vunpack.c.h.b16 %v214
    %v424 = vunpack.c.l.b16 %v215
    %v425 = vunpack.c.h.b16 %v215
    %v426 = vunpack.c.l.b16 %v216
    %v427 = vunpack.c.h.b16 %v216
    %v428 = vunpack.c.l.b16 %v217
    %v429 = vunpack.c.h.b16 %v217
    %v430 = vunpack.c.l.b16 %v218
    %v431 = vunpack.c.h.b16 %v218
    %v432 = vunpack.c.l.b16 %v219
    %v433 = vunpack.c.h.b16 %v219
    %v434 = vunpack.c.l.b16 %v220
    %v435 = vunpack.c.h.b16 %v220
    %v436 = vunpack.c.l.b16 %v221
    %v437 = vunpack.c.h.b16 %v221
    %v438 = vunpack.c.l.b16 %v222
    %v439 = vunpack.c.h.b16 %v222
    %v440 = vunpack.c.l.b16 %v223
    %v441 = vunpack.c.h.b16 %v223
    %v442 = vunpack.c.l.b16 %v224
    %v443 = vunpack.c.h.b16 %v224
    %v444 = vunpack.c.l.b16 %v225
    %v445 = vunpack.c.h.b16 %v225
    %v446 = vunpack.c.l.b16 %v226
    %v447 = vunpack.c.h.b16 %v226
    %v448 = vunpack.c.l.b16 %v227
    %v449 = vunpack.c.h.b16 %v227
    %v450 = vunpack.c.l.b16 %v228
    %v451 = vunpack.c.h.b16 %v228
    %v452 = vunpack.c.l.b16 %v229
    %v453 = vunpack.c.h.b16 %v229
    %v454 = vunpack.c.l.b16 %v230
    %v455 = vunpack.c.h.b16 %v230
    %v456 = vunpack.c.l.b16 %v231
    %v457 = vunpack.c.h.b16 %v231
    %v458 = vunpack.c.l.b16 %v232
    %v459 = vunpack.c.h.b16 %v232
    %v460 = vunpack.c.l.b16 %v233
    %v461 = vunpack.c.h.b16 %v233
    %v462 = vunpack.c.l.b16 %v234
    %v463 = vunpack.c.h.b16 %v234
    %v464 = vunpack.c.l.b16 %v235
    %v465 = vunpack.c.h.b16 %v235
    %v466 = vunpack.c.l.b16 %v236
    %v467 = vunpack.c.h.b16 %v236
    %v468 = vunpack.c.l.b16 %v237
    %v469 = vunpack.c.h.b16 %v237
    %v470 = vpack.c.b16 %v346, %v342
    %v471 = vpack.c.b16 %v347, %v343
    %v472 = vpack.c.b16 %v348, %v344
    %v473 = vpack.c.b16 %v349, %v345
    %v474 = vpack.c.b16 %v354, %v350
    %v475 = vpack.c.b16 %v355, %v351
    %v476 = vpack.c.b16 %v356, %v352
    %v477 = vpack.c.b16 %v357, %v353
    %v478 = vpack.c.b16 %v362, %v358
    %v479 = vpack.c.b16 %v363, %v359
    %v480 = vpack.c.b16 %v364, %v360
    %v481 = vpack.c.b16 %v365, %v361
    %v482 = vpack.c.b16 %v370, %v366
    %v483 = vpack.c.b16 %v371, %v367
    %v484 = vpack.c.b16 %v372, %v368
    %v485 = vpack.c.b16 %v373, %v369
    %v486 = vpack.c.b16 %v378, %v374
    %v487 = vpack.c.b16 %v379, %v375
    %v488 = vpack.c.b16 %v380, %v376
    %v489 = vpack.c.b16 %v381, %v377
    %v490 = vpack.c.b16 %v386, %v382
    %v491 = vpack.c.b16 %v387, %v383
    %v492 = vpack.c.b16 %v388, %v384
    %v493 = vpack.c.b16 %v389, %v385
    %v494 = vpack.c.b16 %v394, %v390
    %v495 = vpack.c.b16 %v395, %v391
    %v496 = vpack.c.b16 %v396, %v392
    %v497 = vpack.c.b16 %v397, %v393
    %v498 = vpack.c.b16 %v402, %v398
    %v499 = vpack.c.b16 %v403, %v399
    %v500 = vpack.c.b16 %v404, %v400
    %v501 = vpack.c.b16 %v405, %v401
    %v502 = vpack.c.b16 %v410, %v406
    %v503 = vpack.c.b16 %v411, %v407
    %v504 = vpack.c.b16 %v412, %v408
    %v505 = vpack.c.b16 %v413, %v409
    %v506 = vpack.c.b16 %v418, %v414
    %v507 = vpack.c.b16 %v419, %v415
    %v508 = vpack.c.b16 %v420, %v416
    %v509 = vpack.c.b16 %v421, %v417
    %v510 = vpack.c.b16 %v426, %v422
    %v511 = vpack.c.b16 %v427, %v423
    %v512 = vpack.c.b16 %v428, %v424
    %v513 = vpack.c.b16 %v429, %v425
    %v514 = vpack.c.b16 %v434, %v430
    %v515 = vpack.c.b16 %v435, %v431
    %v516 = vpack.c.b16 %v436, %v432
    %v517 = vpack.c.b16 %v437, %v433
    %v518 = vpack.c.b16 %v442, %v438
    %v519 = vpack.c.b16 %v443, %v439
    %v520 = vpack.c.b16 %v444, %v440
    %v521 = vpack.c.b16 %v445, %v441
    %v522 = vpack.c.b16 %v450, %v446
    %v523 = vpack.c.b16 %v451, %v447
    %v524 = vpack.c.b16 %v452, %v448
    %v525 = vpack.c.b16 %v453, %v449
    %v526 = vpack.c.b16 %v458, %v454
    %v527 = vpack.c.b16 %v459, %v455
    %v528 = vpack.c.b16 %v460, %v456
    %v529 = vpack.c.b16 %v461, %v457
    %v530 = vpack.c.b16 %v466, %v462
    %v531 = vpack.c.b16 %v467, %v463
    %v532 = vpack.c.b16 %v468, %v464
    %v533 = vpack.c.b16 %v469, %v465
    %598 = vmatpush.bf16.msra.mxu0 %v498
    %599 = vmatpush.bf16.msra.mxu0 %v494
    %600 = vmatpush.bf16.msra.mxu0 %v490
    %601 = vmatpush.bf16.msra.mxu0 %v486
    %602 = vmatpush.bf16.msra.mxu0 %v482
    %603 = vmatpush.bf16.msra.mxu0 %v478
    %604 = vmatpush.bf16.msra.mxu0 %v474
    %605 = vmatpush.bf16.msra.mxu0 %v470
    %606 = vmatmul.bf16.gmra.mxu0 %v262
    %v607 = vpop.f32.mrf.mxu0
    %v608 = vadd.f32 0.0, %v607
    %v609 = vpop.f32.mrf.mxu0
    %v610 = vadd.f32 0.0, %v609
    %611 = vmatmul.bf16.gmra.mxu0 %v264
    %v612 = vpop.f32.mrf.mxu0
    %v613 = vadd.f32 0.0, %v612
    %v614 = vpop.f32.mrf.mxu0
    %v615 = vadd.f32 0.0, %v614
    %616 = vmatmul.bf16.gmra.mxu0 %v266
    %v617 = vpop.f32.mrf.mxu0
    %v618 = vadd.f32 0.0, %v617
    %v619 = vpop.f32.mrf.mxu0
    %v620 = vadd.f32 0.0, %v619
    %621 = vmatmul.bf16.gmra.mxu0 %v268
    %v622 = vpop.f32.mrf.mxu0
    %v623 = vadd.f32 0.0, %v622
    %v624 = vpop.f32.mrf.mxu0
    %v625 = vadd.f32 0.0, %v624
    %626 = vdwg.mxu0
    %627 = vmatpush.bf16.msra.mxu0 %v530
    %628 = vmatpush.bf16.msra.mxu0 %v526
    %629 = vmatpush.bf16.msra.mxu0 %v522
    %630 = vmatpush.bf16.msra.mxu0 %v518
    %631 = vmatpush.bf16.msra.mxu0 %v514
    %632 = vmatpush.bf16.msra.mxu0 %v510
    %633 = vmatpush.bf16.msra.mxu0 %v506
    %634 = vmatpush.bf16.msra.mxu0 %v502
    %635 = vmatmul.bf16.gmra.mxu0 %v263
    %v636 = vpop.f32.mrf.mxu0
    %v637 = vadd.f32 %v608, %v636
    %v638 = vpop.f32.mrf.mxu0
    %v639 = vadd.f32 %v610, %v638
    %640 = vmatmul.bf16.gmra.mxu0 %v265
    %v641 = vpop.f32.mrf.mxu0
    %v642 = vadd.f32 %v613, %v641
    %v643 = vpop.f32.mrf.mxu0
    %v644 = vadd.f32 %v615, %v643
    %645 = vmatmul.bf16.gmra.mxu0 %v267
    %v646 = vpop.f32.mrf.mxu0
    %v647 = vadd.f32 %v618, %v646
    %v648 = vpop.f32.mrf.mxu0
    %v649 = vadd.f32 %v620, %v648
    %650 = vmatmul.bf16.gmra.mxu0 %v269
    %v651 = vpop.f32.mrf.mxu0
    %v652 = vadd.f32 %v623, %v651
    %v653 = vpop.f32.mrf.mxu0
    %v654 = vadd.f32 %v625, %v653
    %655 = vdwg.mxu0
    %656 = vmatpush.bf16.msra.mxu0 %v499
    %657 = vmatpush.bf16.msra.mxu0 %v495
    %658 = vmatpush.bf16.msra.mxu0 %v491
    %659 = vmatpush.bf16.msra.mxu0 %v487
    %660 = vmatpush.bf16.msra.mxu0 %v483
    %661 = vmatpush.bf16.msra.mxu0 %v479
    %662 = vmatpush.bf16.msra.mxu0 %v475
    %663 = vmatpush.bf16.msra.mxu0 %v471
    %664 = vmatmul.bf16.gmra.mxu0 %v262
    %v665 = vpop.f32.mrf.mxu0
    %v666 = vadd.f32 0.0, %v665
    %v667 = vpop.f32.mrf.mxu0
    %v668 = vadd.f32 0.0, %v667
    %669 = vmatmul.bf16.gmra.mxu0 %v264
    %v670 = vpop.f32.mrf.mxu0
    %v671 = vadd.f32 0.0, %v670
    %v672 = vpop.f32.mrf.mxu0
    %v673 = vadd.f32 0.0, %v672
    %674 = vmatmul.bf16.gmra.mxu0 %v266
    %v675 = vpop.f32.mrf.mxu0
    %v676 = vadd.f32 0.0, %v675
    %v677 = vpop.f32.mrf.mxu0
    %v678 = vadd.f32 0.0, %v677
    %679 = vmatmul.bf16.gmra.mxu0 %v268
    %v680 = vpop.f32.mrf.mxu0
    %v681 = vadd.f32 0.0, %v680
    %v682 = vpop.f32.mrf.mxu0
    %v683 = vadd.f32 0.0, %v682
    %684 = vdwg.mxu0
    %685 = vmatpush.bf16.msra.mxu0 %v531
    %686 = vmatpush.bf16.msra.mxu0 %v527
    %687 = vmatpush.bf16.msra.mxu0 %v523
    %688 = vmatpush.bf16.msra.mxu0 %v519
    %689 = vmatpush.bf16.msra.mxu0 %v515
    %690 = vmatpush.bf16.msra.mxu0 %v511
    %691 = vmatpush.bf16.msra.mxu0 %v507
    %692 = vmatpush.bf16.msra.mxu0 %v503
    %693 = vmatmul.bf16.gmra.mxu0 %v263
    %v694 = vpop.f32.mrf.mxu0
    %v695 = vadd.f32 %v666, %v694
    %v696 = vpop.f32.mrf.mxu0
    %v697 = vadd.f32 %v668, %v696
    %698 = vmatmul.bf16.gmra.mxu0 %v265
    %v699 = vpop.f32.mrf.mxu0
    %v700 = vadd.f32 %v671, %v699
    %v701 = vpop.f32.mrf.mxu0
    %v702 = vadd.f32 %v673, %v701
    %703 = vmatmul.bf16.gmra.mxu0 %v267
    %v704 = vpop.f32.mrf.mxu0
    %v705 = vadd.f32 %v676, %v704
    %v706 = vpop.f32.mrf.mxu0
    %v707 = vadd.f32 %v678, %v706
    %708 = vmatmul.bf16.gmra.mxu0 %v269
    %v709 = vpop.f32.mrf.mxu0
    %v710 = vadd.f32 %v681, %v709
    %v711 = vpop.f32.mrf.mxu0
    %v712 = vadd.f32 %v683, %v711
    %713 = vdwg.mxu0
    %714 = vmatpush.bf16.msra.mxu0 %v500
    %715 = vmatpush.bf16.msra.mxu0 %v496
    %716 = vmatpush.bf16.msra.mxu0 %v492
    %717 = vmatpush.bf16.msra.mxu0 %v488
    %718 = vmatpush.bf16.msra.mxu0 %v484
    %719 = vmatpush.bf16.msra.mxu0 %v480
    %720 = vmatpush.bf16.msra.mxu0 %v476
    %721 = vmatpush.bf16.msra.mxu0 %v472
    %722 = vmatmul.bf16.gmra.mxu0 %v262
    %v723 = vpop.f32.mrf.mxu0
    %v724 = vadd.f32 0.0, %v723
    %v725 = vpop.f32.mrf.mxu0
    %v726 = vadd.f32 0.0, %v725
    %727 = vmatmul.bf16.gmra.mxu0 %v264
    %v728 = vpop.f32.mrf.mxu0
    %v729 = vadd.f32 0.0, %v728
    %v730 = vpop.f32.mrf.mxu0
    %v731 = vadd.f32 0.0, %v730
    %732 = vmatmul.bf16.gmra.mxu0 %v266
    %v733 = vpop.f32.mrf.mxu0
    %v734 = vadd.f32 0.0, %v733
    %v735 = vpop.f32.mrf.mxu0
    %v736 = vadd.f32 0.0, %v735
    %737 = vmatmul.bf16.gmra.mxu0 %v268
    %v738 = vpop.f32.mrf.mxu0
    %v739 = vadd.f32 0.0, %v738
    %v740 = vpop.f32.mrf.mxu0
    %v741 = vadd.f32 0.0, %v740
    %742 = vdwg.mxu0
    %743 = vmatpush.bf16.msra.mxu0 %v532
    %744 = vmatpush.bf16.msra.mxu0 %v528
    %745 = vmatpush.bf16.msra.mxu0 %v524
    %746 = vmatpush.bf16.msra.mxu0 %v520
    %747 = vmatpush.bf16.msra.mxu0 %v516
    %748 = vmatpush.bf16.msra.mxu0 %v512
    %749 = vmatpush.bf16.msra.mxu0 %v508
    %750 = vmatpush.bf16.msra.mxu0 %v504
    %751 = vmatmul.bf16.gmra.mxu0 %v263
    %v752 = vpop.f32.mrf.mxu0
    %v753 = vadd.f32 %v724, %v752
    %v754 = vpop.f32.mrf.mxu0
    %v755 = vadd.f32 %v726, %v754
    %756 = vmatmul.bf16.gmra.mxu0 %v265
    %v757 = vpop.f32.mrf.mxu0
    %v758 = vadd.f32 %v729, %v757
    %v759 = vpop.f32.mrf.mxu0
    %v760 = vadd.f32 %v731, %v759
    %761 = vmatmul.bf16.gmra.mxu0 %v267
    %v762 = vpop.f32.mrf.mxu0
    %v763 = vadd.f32 %v734, %v762
    %v764 = vpop.f32.mrf.mxu0
    %v765 = vadd.f32 %v736, %v764
    %766 = vmatmul.bf16.gmra.mxu0 %v269
    %v767 = vpop.f32.mrf.mxu0
    %v768 = vadd.f32 %v739, %v767
    %v769 = vpop.f32.mrf.mxu0
    %v770 = vadd.f32 %v741, %v769
    %771 = vdwg.mxu0
    %772 = vmatpush.bf16.msra.mxu0 %v501
    %773 = vmatpush.bf16.msra.mxu0 %v497
    %774 = vmatpush.bf16.msra.mxu0 %v493
    %775 = vmatpush.bf16.msra.mxu0 %v489
    %776 = vmatpush.bf16.msra.mxu0 %v485
    %777 = vmatpush.bf16.msra.mxu0 %v481
    %778 = vmatpush.bf16.msra.mxu0 %v477
    %779 = vmatpush.bf16.msra.mxu0 %v473
    %780 = vmatmul.bf16.gmra.mxu0 %v262
    %v781 = vpop.f32.mrf.mxu0
    %v782 = vadd.f32 0.0, %v781
    %v783 = vpop.f32.mrf.mxu0
    %v784 = vadd.f32 0.0, %v783
    %785 = vmatmul.bf16.gmra.mxu0 %v264
    %v786 = vpop.f32.mrf.mxu0
    %v787 = vadd.f32 0.0, %v786
    %v788 = vpop.f32.mrf.mxu0
    %v789 = vadd.f32 0.0, %v788
    %790 = vmatmul.bf16.gmra.mxu0 %v266
    %v791 = vpop.f32.mrf.mxu0
    %v792 = vadd.f32 0.0, %v791
    %v793 = vpop.f32.mrf.mxu0
    %v794 = vadd.f32 0.0, %v793
    %795 = vmatmul.bf16.gmra.mxu0 %v268
    %v796 = vpop.f32.mrf.mxu0
    %v797 = vadd.f32 0.0, %v796
    %v798 = vpop.f32.mrf.mxu0
    %v799 = vadd.f32 0.0, %v798
    %800 = vdwg.mxu0
    %801 = vmatpush.bf16.msra.mxu0 %v533
    %802 = vmatpush.bf16.msra.mxu0 %v529
    %803 = vmatpush.bf16.msra.mxu0 %v525
    %804 = vmatpush.bf16.msra.mxu0 %v521
    %805 = vmatpush.bf16.msra.mxu0 %v517
    %806 = vmatpush.bf16.msra.mxu0 %v513
    %807 = vmatpush.bf16.msra.mxu0 %v509
    %808 = vmatpush.bf16.msra.mxu0 %v505
    %809 = vmatmul.bf16.gmra.mxu0 %v263
    %v810 = vpop.f32.mrf.mxu0
    %v811 = vadd.f32 %v782, %v810
    %v812 = vpop.f32.mrf.mxu0
    %v813 = vadd.f32 %v784, %v812
    %814 = vmatmul.bf16.gmra.mxu0 %v265
    %v815 = vpop.f32.mrf.mxu0
    %v816 = vadd.f32 %v787, %v815
    %v817 = vpop.f32.mrf.mxu0
    %v818 = vadd.f32 %v789, %v817
    %819 = vmatmul.bf16.gmra.mxu0 %v267
    %v820 = vpop.f32.mrf.mxu0
    %v821 = vadd.f32 %v792, %v820
    %v822 = vpop.f32.mrf.mxu0
    %v823 = vadd.f32 %v794, %v822
    %824 = vmatmul.bf16.gmra.mxu0 %v269
    %v825 = vpop.f32.mrf.mxu0
    %v826 = vadd.f32 %v797, %v825
    %v827 = vpop.f32.mrf.mxu0
    %v828 = vadd.f32 %v799, %v827
    %829 = vdwg.mxu0
    %v830 = vld [vmem:[%s1] sm:$0xff]
    %v831 = vld [vmem:[%s1 + $0x8] sm:$0xff]
    %v832 = vld [vmem:[%s1 + $0x10] sm:$0xff]
    %v833 = vld [vmem:[%s1 + $0x18] sm:$0xff]
    %v834 = vld [vmem:[%s1 + $0x20] sm:$0xff]
    %v835 = vld [vmem:[%s1 + $0x28] sm:$0xff]
    %v836 = vld [vmem:[%s1 + $0x30] sm:$0xff]
    %v837 = vld [vmem:[%s1 + $0x38] sm:$0xff]
    %839 = vset.pattern.permute.xlu0 0
    %840 = vperm.xlu0 %839, %v830
    %v841 = vpop.permute.xlu0 %840
    %844 = vset.pattern.permute.xlu0 0
    %845 = vperm.xlu0 %844, %v831
    %v846 = vpop.permute.xlu0 %845
    %849 = vset.pattern.permute.xlu0 0
    %850 = vperm.xlu0 %849, %v832
    %v851 = vpop.permute.xlu0 %850
    %854 = vset.pattern.permute.xlu0 0
    %855 = vperm.xlu0 %854, %v833
    %v856 = vpop.permute.xlu0 %855
    %859 = vset.pattern.permute.xlu0 0
    %860 = vperm.xlu0 %859, %v834
    %v861 = vpop.permute.xlu0 %860
    %864 = vset.pattern.permute.xlu0 0
    %865 = vperm.xlu0 %864, %v835
    %v866 = vpop.permute.xlu0 %865
    %869 = vset.pattern.permute.xlu0 0
    %870 = vperm.xlu0 %869, %v836
    %v871 = vpop.permute.xlu0 %870
    %874 = vset.pattern.permute.xlu0 0
    %875 = vperm.xlu0 %874, %v837
    %v876 = vpop.permute.xlu0 %875
    %v878 = vmul.f32 %v637, %v841
    %v879 = vmul.f32 %v695, %v841
    %v880 = vmul.f32 %v753, %v841
    %v881 = vmul.f32 %v811, %v841
    %v882 = vmul.f32 %v639, %v846
    %v883 = vmul.f32 %v697, %v846
    %v884 = vmul.f32 %v755, %v846
    %v885 = vmul.f32 %v813, %v846
    %v886 = vmul.f32 %v642, %v851
    %v887 = vmul.f32 %v700, %v851
    %v888 = vmul.f32 %v758, %v851
    %v889 = vmul.f32 %v816, %v851
    %v890 = vmul.f32 %v644, %v856
    %v891 = vmul.f32 %v702, %v856
    %v892 = vmul.f32 %v760, %v856
    %v893 = vmul.f32 %v818, %v856
    %v894 = vmul.f32 %v647, %v861
    %v895 = vmul.f32 %v705, %v861
    %v896 = vmul.f32 %v763, %v861
    %v897 = vmul.f32 %v821, %v861
    %v898 = vmul.f32 %v649, %v866
    %v899 = vmul.f32 %v707, %v866
    %v900 = vmul.f32 %v765, %v866
    %v901 = vmul.f32 %v823, %v866
    %v902 = vmul.f32 %v652, %v871
    %v903 = vmul.f32 %v710, %v871
    %v904 = vmul.f32 %v768, %v871
    %v905 = vmul.f32 %v826, %v871
    %v906 = vmul.f32 %v654, %v876
    %v907 = vmul.f32 %v712, %v876
    %v908 = vmul.f32 %v770, %v876
    %v909 = vmul.f32 %v828, %v876
    %v910 = vld [vmem:[%s3] sm:$0xf]
    %v912 = vperm.slane %v910, 0
    %v913 = vperm.slane %v910, 1
    %v914 = vperm.slane %v910, 2
    %v915 = vperm.slane %v910, 3
    %v920 = vadd.f32 %v878, %v912
    %v921 = vadd.f32 %v879, %v913
    %v922 = vadd.f32 %v880, %v914
    %v923 = vadd.f32 %v881, %v915
    %v924 = vadd.f32 %v882, %v912
    %v925 = vadd.f32 %v883, %v913
    %v926 = vadd.f32 %v884, %v914
    %v927 = vadd.f32 %v885, %v915
    %v928 = vadd.f32 %v886, %v912
    %v929 = vadd.f32 %v887, %v913
    %v930 = vadd.f32 %v888, %v914
    %v931 = vadd.f32 %v889, %v915
    %v932 = vadd.f32 %v890, %v912
    %v933 = vadd.f32 %v891, %v913
    %v934 = vadd.f32 %v892, %v914
    %v935 = vadd.f32 %v893, %v915
    %v936 = vadd.f32 %v894, %v912
    %v937 = vadd.f32 %v895, %v913
    %v938 = vadd.f32 %v896, %v914
    %v939 = vadd.f32 %v897, %v915
    %v940 = vadd.f32 %v898, %v912
    %v941 = vadd.f32 %v899, %v913
    %v942 = vadd.f32 %v900, %v914
    %v943 = vadd.f32 %v901, %v915
    %v944 = vadd.f32 %v902, %v912
    %v945 = vadd.f32 %v903, %v913
    %v946 = vadd.f32 %v904, %v914
    %v947 = vadd.f32 %v905, %v915
    %v948 = vadd.f32 %v906, %v912
    %v949 = vadd.f32 %v907, %v913
    %v950 = vadd.f32 %v908, %v914
    %v951 = vadd.f32 %v909, %v915
    %v952 = vld [vmem:[%s4] sm:$0xf]
    %v953 = vld [vmem:[%s5] sm:$0xf]
    %v954 = vadd.f32 %v920, %v924
    %v955 = vadd.f32 %v954, %v928
    %v956 = vadd.f32 %v955, %v932
    %v957 = vadd.f32 %v956, %v936
    %v958 = vadd.f32 %v957, %v940
    %v959 = vadd.f32 %v958, %v944
    %v960 = vadd.f32 %v959, %v948
    %v961 = vrot.slane %v960, 4
    %v962 = vadd.f32 %v960, %v961
    %v963 = vrot.slane %v962, 2
    %v964 = vadd.f32 %v962, %v963
    %v965 = vrot.slane %v964, 1
    %v966 = vadd.f32 %v964, %v965
    %v967 = vadd.f32 %v921, %v925
    %v968 = vadd.f32 %v967, %v929
    %v969 = vadd.f32 %v968, %v933
    %v970 = vadd.f32 %v969, %v937
    %v971 = vadd.f32 %v970, %v941
    %v972 = vadd.f32 %v971, %v945
    %v973 = vadd.f32 %v972, %v949
    %v974 = vrot.slane %v973, 4
    %v975 = vadd.f32 %v973, %v974
    %v976 = vrot.slane %v975, 2
    %v977 = vadd.f32 %v975, %v976
    %v978 = vrot.slane %v977, 1
    %v979 = vadd.f32 %v977, %v978
    %v980 = vadd.f32 %v922, %v926
    %v981 = vadd.f32 %v980, %v930
    %v982 = vadd.f32 %v981, %v934
    %v983 = vadd.f32 %v982, %v938
    %v984 = vadd.f32 %v983, %v942
    %v985 = vadd.f32 %v984, %v946
    %v986 = vadd.f32 %v985, %v950
    %v987 = vrot.slane %v986, 4
    %v988 = vadd.f32 %v986, %v987
    %v989 = vrot.slane %v988, 2
    %v990 = vadd.f32 %v988, %v989
    %v991 = vrot.slane %v990, 1
    %v992 = vadd.f32 %v990, %v991
    %v993 = vadd.f32 %v923, %v927
    %v994 = vadd.f32 %v993, %v931
    %v995 = vadd.f32 %v994, %v935
    %v996 = vadd.f32 %v995, %v939
    %v997 = vadd.f32 %v996, %v943
    %v998 = vadd.f32 %v997, %v947
    %v999 = vadd.f32 %v998, %v951
    %v1000 = vrot.slane %v999, 4
    %v1001 = vadd.f32 %v999, %v1000
    %v1002 = vrot.slane %v1001, 2
    %v1003 = vadd.f32 %v1001, %v1002
    %v1004 = vrot.slane %v1003, 1
    %v1005 = vadd.f32 %v1003, %v1004
    %v1006 = vrcp.pop 64.0
    %v1007 = vmul.f32 64.0, %v1006
    %v1008 = vsub.f32 1.0, %v1007
    %v1009 = vmul.f32 %v1006, %v1008
    %v1010 = vadd.f32 %v1006, %v1009
    %vm1011 = vweird.f32 %v1006
    %v1012 = vsel %vm1011, %v1006, %v1010
    %v1013 = vmul.f32 %v966, %v1012
    %v1014 = vmul.f32 %v979, %v1012
    %v1015 = vmul.f32 %v992, %v1012
    %v1016 = vmul.f32 %v1005, %v1012
    %v1017 = vsub.f32 %v920, %v1013
    %v1018 = vsub.f32 %v921, %v1014
    %v1019 = vsub.f32 %v922, %v1015
    %v1020 = vsub.f32 %v923, %v1016
    %v1021 = vsub.f32 %v924, %v1013
    %v1022 = vsub.f32 %v925, %v1014
    %v1023 = vsub.f32 %v926, %v1015
    %v1024 = vsub.f32 %v927, %v1016
    %v1025 = vsub.f32 %v928, %v1013
    %v1026 = vsub.f32 %v929, %v1014
    %v1027 = vsub.f32 %v930, %v1015
    %v1028 = vsub.f32 %v931, %v1016
    %v1029 = vsub.f32 %v932, %v1013
    %v1030 = vsub.f32 %v933, %v1014
    %v1031 = vsub.f32 %v934, %v1015
    %v1032 = vsub.f32 %v935, %v1016
    %v1033 = vsub.f32 %v936, %v1013
    %v1034 = vsub.f32 %v937, %v1014
    %v1035 = vsub.f32 %v938, %v1015
    %v1036 = vsub.f32 %v939, %v1016
    %v1037 = vsub.f32 %v940, %v1013
    %v1038 = vsub.f32 %v941, %v1014
    %v1039 = vsub.f32 %v942, %v1015
    %v1040 = vsub.f32 %v943, %v1016
    %v1041 = vsub.f32 %v944, %v1013
    %v1042 = vsub.f32 %v945, %v1014
    %v1043 = vsub.f32 %v946, %v1015
    %v1044 = vsub.f32 %v947, %v1016
    %v1045 = vsub.f32 %v948, %v1013
    %v1046 = vsub.f32 %v949, %v1014
    %v1047 = vsub.f32 %v950, %v1015
    %v1048 = vsub.f32 %v951, %v1016
    %v1049 = vmul.f32 %v1017, %v1017
    %v1050 = vmul.f32 %v1018, %v1018
    %v1051 = vmul.f32 %v1019, %v1019
    %v1052 = vmul.f32 %v1020, %v1020
    %v1053 = vmul.f32 %v1021, %v1021
    %v1054 = vmul.f32 %v1022, %v1022
    %v1055 = vmul.f32 %v1023, %v1023
    %v1056 = vmul.f32 %v1024, %v1024
    %v1057 = vmul.f32 %v1025, %v1025
    %v1058 = vmul.f32 %v1026, %v1026
    %v1059 = vmul.f32 %v1027, %v1027
    %v1060 = vmul.f32 %v1028, %v1028
    %v1061 = vmul.f32 %v1029, %v1029
    %v1062 = vmul.f32 %v1030, %v1030
    %v1063 = vmul.f32 %v1031, %v1031
    %v1064 = vmul.f32 %v1032, %v1032
    %v1065 = vmul.f32 %v1033, %v1033
    %v1066 = vmul.f32 %v1034, %v1034
    %v1067 = vmul.f32 %v1035, %v1035
    %v1068 = vmul.f32 %v1036, %v1036
    %v1069 = vmul.f32 %v1037, %v1037
    %v1070 = vmul.f32 %v1038, %v1038
    %v1071 = vmul.f32 %v1039, %v1039
    %v1072 = vmul.f32 %v1040, %v1040
    %v1073 = vmul.f32 %v1041, %v1041
    %v1074 = vmul.f32 %v1042, %v1042
    %v1075 = vmul.f32 %v1043, %v1043
    %v1076 = vmul.f32 %v1044, %v1044
    %v1077 = vmul.f32 %v1045, %v1045
    %v1078 = vmul.f32 %v1046, %v1046
    %v1079 = vmul.f32 %v1047, %v1047
    %v1080 = vmul.f32 %v1048, %v1048
    %v1081 = vadd.f32 %v1049, %v1053
    %v1082 = vadd.f32 %v1081, %v1057
    %v1083 = vadd.f32 %v1082, %v1061
    %v1084 = vadd.f32 %v1083, %v1065
    %v1085 = vadd.f32 %v1084, %v1069
    %v1086 = vadd.f32 %v1085, %v1073
    %v1087 = vadd.f32 %v1086, %v1077
    %v1088 = vrot.slane %v1087, 4
    %v1089 = vadd.f32 %v1087, %v1088
    %v1090 = vrot.slane %v1089, 2
    %v1091 = vadd.f32 %v1089, %v1090
    %v1092 = vrot.slane %v1091, 1
    %v1093 = vadd.f32 %v1091, %v1092
    %v1094 = vadd.f32 %v1050, %v1054
    %v1095 = vadd.f32 %v1094, %v1058
    %v1096 = vadd.f32 %v1095, %v1062
    %v1097 = vadd.f32 %v1096, %v1066
    %v1098 = vadd.f32 %v1097, %v1070
    %v1099 = vadd.f32 %v1098, %v1074
    %v1100 = vadd.f32 %v1099, %v1078
    %v1101 = vrot.slane %v1100, 4
    %v1102 = vadd.f32 %v1100, %v1101
    %v1103 = vrot.slane %v1102, 2
    %v1104 = vadd.f32 %v1102, %v1103
    %v1105 = vrot.slane %v1104, 1
    %v1106 = vadd.f32 %v1104, %v1105
    %v1107 = vadd.f32 %v1051, %v1055
    %v1108 = vadd.f32 %v1107, %v1059
    %v1109 = vadd.f32 %v1108, %v1063
    %v1110 = vadd.f32 %v1109, %v1067
    %v1111 = vadd.f32 %v1110, %v1071
    %v1112 = vadd.f32 %v1111, %v1075
    %v1113 = vadd.f32 %v1112, %v1079
    %v1114 = vrot.slane %v1113, 4
    %v1115 = vadd.f32 %v1113, %v1114
    %v1116 = vrot.slane %v1115, 2
    %v1117 = vadd.f32 %v1115, %v1116
    %v1118 = vrot.slane %v1117, 1
    %v1119 = vadd.f32 %v1117, %v1118
    %v1120 = vadd.f32 %v1052, %v1056
    %v1121 = vadd.f32 %v1120, %v1060
    %v1122 = vadd.f32 %v1121, %v1064
    %v1123 = vadd.f32 %v1122, %v1068
    %v1124 = vadd.f32 %v1123, %v1072
    %v1125 = vadd.f32 %v1124, %v1076
    %v1126 = vadd.f32 %v1125, %v1080
    %v1127 = vrot.slane %v1126, 4
    %v1128 = vadd.f32 %v1126, %v1127
    %v1129 = vrot.slane %v1128, 2
    %v1130 = vadd.f32 %v1128, %v1129
    %v1131 = vrot.slane %v1130, 1
    %v1132 = vadd.f32 %v1130, %v1131
    %v1133 = vmul.f32 %v1093, %v1012
    %v1134 = vmul.f32 %v1106, %v1012
    %v1135 = vmul.f32 %v1119, %v1012
    %v1136 = vmul.f32 %v1132, %v1012
    %v1137 = vadd.f32 %v1133, 1e-05
    %v1138 = vadd.f32 %v1134, 1e-05
    %v1139 = vadd.f32 %v1135, 1e-05
    %v1140 = vadd.f32 %v1136, 1e-05
    %v1141 = vrsqrt.pop %v1137
    %v1142 = vmul.f32 %v1141, %v1137
    %v1143 = vmul.f32 %v1142, %v1141
    %v1144 = vmul.f32 0.5, %v1143
    %v1145 = vsub.f32 1.5, %v1144
    %v1146 = vmul.f32 %v1141, %v1145
    %vm1147 = vweird.f32 %v1137
    %vm1148 = vweird.f32 %v1141
    %vm1149 = vmor %vm1147, %vm1148
    %v1150 = vsel %vm1149, %v1141, %v1146
    %v1151 = vrsqrt.pop %v1138
    %v1152 = vmul.f32 %v1151, %v1138
    %v1153 = vmul.f32 %v1152, %v1151
    %v1154 = vmul.f32 0.5, %v1153
    %v1155 = vsub.f32 1.5, %v1154
    %v1156 = vmul.f32 %v1151, %v1155
    %vm1157 = vweird.f32 %v1138
    %vm1158 = vweird.f32 %v1151
    %vm1159 = vmor %vm1157, %vm1158
    %v1160 = vsel %vm1159, %v1151, %v1156
    %v1161 = vrsqrt.pop %v1139
    %v1162 = vmul.f32 %v1161, %v1139
    %v1163 = vmul.f32 %v1162, %v1161
    %v1164 = vmul.f32 0.5, %v1163
    %v1165 = vsub.f32 1.5, %v1164
    %v1166 = vmul.f32 %v1161, %v1165
    %vm1167 = vweird.f32 %v1139
    %vm1168 = vweird.f32 %v1161
    %vm1169 = vmor %vm1167, %vm1168
    %v1170 = vsel %vm1169, %v1161, %v1166
    %v1171 = vrsqrt.pop %v1140
    %v1172 = vmul.f32 %v1171, %v1140
    %v1173 = vmul.f32 %v1172, %v1171
    %v1174 = vmul.f32 0.5, %v1173
    %v1175 = vsub.f32 1.5, %v1174
    %v1176 = vmul.f32 %v1171, %v1175
    %vm1177 = vweird.f32 %v1140
    %vm1178 = vweird.f32 %v1171
    %vm1179 = vmor %vm1177, %vm1178
    %v1180 = vsel %vm1179, %v1171, %v1176
    %v1182 = vperm.slane %v952, 0
    %v1183 = vperm.slane %v952, 1
    %v1184 = vperm.slane %v952, 2
    %v1185 = vperm.slane %v952, 3
    %v1190 = vmul.f32 %v1150, %v1182
    %v1191 = vmul.f32 %v1160, %v1183
    %v1192 = vmul.f32 %v1170, %v1184
    %v1193 = vmul.f32 %v1180, %v1185
    %v1194 = vperm.slane %v1190, 0
    %v1195 = vperm.slane %v1191, 0
    %v1196 = vperm.slane %v1192, 0
    %v1197 = vperm.slane %v1193, 0
    %v1198 = vmul.f32 %v1017, %v1194
    %v1199 = vmul.f32 %v1018, %v1195
    %v1200 = vmul.f32 %v1019, %v1196
    %v1201 = vmul.f32 %v1020, %v1197
    %v1202 = vmul.f32 %v1021, %v1194
    %v1203 = vmul.f32 %v1022, %v1195
    %v1204 = vmul.f32 %v1023, %v1196
    %v1205 = vmul.f32 %v1024, %v1197
    %v1206 = vmul.f32 %v1025, %v1194
    %v1207 = vmul.f32 %v1026, %v1195
    %v1208 = vmul.f32 %v1027, %v1196
    %v1209 = vmul.f32 %v1028, %v1197
    %v1210 = vmul.f32 %v1029, %v1194
    %v1211 = vmul.f32 %v1030, %v1195
    %v1212 = vmul.f32 %v1031, %v1196
    %v1213 = vmul.f32 %v1032, %v1197
    %v1214 = vmul.f32 %v1033, %v1194
    %v1215 = vmul.f32 %v1034, %v1195
    %v1216 = vmul.f32 %v1035, %v1196
    %v1217 = vmul.f32 %v1036, %v1197
    %v1218 = vmul.f32 %v1037, %v1194
    %v1219 = vmul.f32 %v1038, %v1195
    %v1220 = vmul.f32 %v1039, %v1196
    %v1221 = vmul.f32 %v1040, %v1197
    %v1222 = vmul.f32 %v1041, %v1194
    %v1223 = vmul.f32 %v1042, %v1195
    %v1224 = vmul.f32 %v1043, %v1196
    %v1225 = vmul.f32 %v1044, %v1197
    %v1226 = vmul.f32 %v1045, %v1194
    %v1227 = vmul.f32 %v1046, %v1195
    %v1228 = vmul.f32 %v1047, %v1196
    %v1229 = vmul.f32 %v1048, %v1197
    %v1231 = vperm.slane %v953, 0
    %v1232 = vperm.slane %v953, 1
    %v1233 = vperm.slane %v953, 2
    %v1234 = vperm.slane %v953, 3
    %v1239 = vadd.f32 %v1198, %v1231
    %v1240 = vadd.f32 %v1199, %v1232
    %v1241 = vadd.f32 %v1200, %v1233
    %v1242 = vadd.f32 %v1201, %v1234
    %v1243 = vadd.f32 %v1202, %v1231
    %v1244 = vadd.f32 %v1203, %v1232
    %v1245 = vadd.f32 %v1204, %v1233
    %v1246 = vadd.f32 %v1205, %v1234
    %v1247 = vadd.f32 %v1206, %v1231
    %v1248 = vadd.f32 %v1207, %v1232
    %v1249 = vadd.f32 %v1208, %v1233
    %v1250 = vadd.f32 %v1209, %v1234
    %v1251 = vadd.f32 %v1210, %v1231
    %v1252 = vadd.f32 %v1211, %v1232
    %v1253 = vadd.f32 %v1212, %v1233
    %v1254 = vadd.f32 %v1213, %v1234
    %v1255 = vadd.f32 %v1214, %v1231
    %v1256 = vadd.f32 %v1215, %v1232
    %v1257 = vadd.f32 %v1216, %v1233
    %v1258 = vadd.f32 %v1217, %v1234
    %v1259 = vadd.f32 %v1218, %v1231
    %v1260 = vadd.f32 %v1219, %v1232
    %v1261 = vadd.f32 %v1220, %v1233
    %v1262 = vadd.f32 %v1221, %v1234
    %v1263 = vadd.f32 %v1222, %v1231
    %v1264 = vadd.f32 %v1223, %v1232
    %v1265 = vadd.f32 %v1224, %v1233
    %v1266 = vadd.f32 %v1225, %v1234
    %v1267 = vadd.f32 %v1226, %v1231
    %v1268 = vadd.f32 %v1227, %v1232
    %v1269 = vadd.f32 %v1228, %v1233
    %v1270 = vadd.f32 %v1229, %v1234
    %v1271 = vmul.f32 %v1239, 0.5
    %v1272 = vmul.f32 %v1240, 0.5
    %v1273 = vmul.f32 %v1241, 0.5
    %v1274 = vmul.f32 %v1242, 0.5
    %v1275 = vmul.f32 %v1243, 0.5
    %v1276 = vmul.f32 %v1244, 0.5
    %v1277 = vmul.f32 %v1245, 0.5
    %v1278 = vmul.f32 %v1246, 0.5
    %v1279 = vmul.f32 %v1247, 0.5
    %v1280 = vmul.f32 %v1248, 0.5
    %v1281 = vmul.f32 %v1249, 0.5
    %v1282 = vmul.f32 %v1250, 0.5
    %v1283 = vmul.f32 %v1251, 0.5
    %v1284 = vmul.f32 %v1252, 0.5
    %v1285 = vmul.f32 %v1253, 0.5
    %v1286 = vmul.f32 %v1254, 0.5
    %v1287 = vmul.f32 %v1255, 0.5
    %v1288 = vmul.f32 %v1256, 0.5
    %v1289 = vmul.f32 %v1257, 0.5
    %v1290 = vmul.f32 %v1258, 0.5
    %v1291 = vmul.f32 %v1259, 0.5
    %v1292 = vmul.f32 %v1260, 0.5
    %v1293 = vmul.f32 %v1261, 0.5
    %v1294 = vmul.f32 %v1262, 0.5
    %v1295 = vmul.f32 %v1263, 0.5
    %v1296 = vmul.f32 %v1264, 0.5
    %v1297 = vmul.f32 %v1265, 0.5
    %v1298 = vmul.f32 %v1266, 0.5
    %v1299 = vmul.f32 %v1267, 0.5
    %v1300 = vmul.f32 %v1268, 0.5
    %v1301 = vmul.f32 %v1269, 0.5
    %v1302 = vmul.f32 %v1270, 0.5
    %v1303 = vmul.f32 %v1239, 0.70710677
    %v1304 = vmul.f32 %v1240, 0.70710677
    %v1305 = vmul.f32 %v1241, 0.70710677
    %v1306 = vmul.f32 %v1242, 0.70710677
    %v1307 = vmul.f32 %v1243, 0.70710677
    %v1308 = vmul.f32 %v1244, 0.70710677
    %v1309 = vmul.f32 %v1245, 0.70710677
    %v1310 = vmul.f32 %v1246, 0.70710677
    %v1311 = vmul.f32 %v1247, 0.70710677
    %v1312 = vmul.f32 %v1248, 0.70710677
    %v1313 = vmul.f32 %v1249, 0.70710677
    %v1314 = vmul.f32 %v1250, 0.70710677
    %v1315 = vmul.f32 %v1251, 0.70710677
    %v1316 = vmul.f32 %v1252, 0.70710677
    %v1317 = vmul.f32 %v1253, 0.70710677
    %v1318 = vmul.f32 %v1254, 0.70710677
    %v1319 = vmul.f32 %v1255, 0.70710677
    %v1320 = vmul.f32 %v1256, 0.70710677
    %v1321 = vmul.f32 %v1257, 0.70710677
    %v1322 = vmul.f32 %v1258, 0.70710677
    %v1323 = vmul.f32 %v1259, 0.70710677
    %v1324 = vmul.f32 %v1260, 0.70710677
    %v1325 = vmul.f32 %v1261, 0.70710677
    %v1326 = vmul.f32 %v1262, 0.70710677
    %v1327 = vmul.f32 %v1263, 0.70710677
    %v1328 = vmul.f32 %v1264, 0.70710677
    %v1329 = vmul.f32 %v1265, 0.70710677
    %v1330 = vmul.f32 %v1266, 0.70710677
    %v1331 = vmul.f32 %v1267, 0.70710677
    %v1332 = vmul.f32 %v1268, 0.70710677
    %v1333 = vmul.f32 %v1269, 0.70710677
    %v1334 = vmul.f32 %v1270, 0.70710677
    %v1335 = vmul.f32 %v1303, %v1303
    %v1336 = vmin.f32 16.0, %v1335
    %v1337 = vmul.f32 %v1336, 2.1237322e-06
    %v1338 = vadd.f32 %v1337, 0.00028619796
    %v1339 = vmul.f32 %v1336, %v1338
    %v1340 = vadd.f32 %v1339, 0.0036580483
    %v1341 = vmul.f32 %v1336, %v1340
    %v1342 = vadd.f32 %v1341, 0.05243302
    %v1343 = vmul.f32 %v1336, %v1342
    %v1344 = vadd.f32 %v1343, 0.18741608
    %v1345 = vmul.f32 %v1336, %v1344
    %v1346 = vadd.f32 %v1345, 1.1283791
    %v1347 = vmul.f32 %v1303, %v1346
    %v1348 = vmul.f32 %v1336, 3.8918573e-05
    %v1349 = vadd.f32 %v1348, 0.001143296
    %v1350 = vmul.f32 %v1336, %v1349
    %v1351 = vadd.f32 %v1350, 0.014752088
    %v1352 = vmul.f32 %v1336, %v1351
    %v1353 = vadd.f32 %v1352, 0.112945676
    %v1354 = vmul.f32 %v1336, %v1353
    %v1355 = vadd.f32 %v1354, 0.4994258
    %v1356 = vmul.f32 %v1336, %v1355
    %v1357 = vadd.f32 %v1356, 1.0
    %v1358 = vrcp.pop %v1357
    %v1359 = vmul.f32 %v1357, %v1358
    %v1360 = vsub.f32 1.0, %v1359
    %v1361 = vmul.f32 %v1358, %v1360
    %v1362 = vadd.f32 %v1358, %v1361
    %vm1363 = vweird.f32 %v1357
    %vm1364 = vweird.f32 %v1358
    %vm1365 = vmor %vm1363, %vm1364
    %v1366 = vsel %vm1365, %v1358, %v1362
    %v1367 = vand.u32 2147483647, %v1357
    %vm1368 = vcmp.eq.f32.partialorder %v1367, 8.507059e+37
    %v1369 = vand.u32 %v1357, 2147483648
    %v1370 = vor.u32 1.1754944e-38, %v1369
    %v1371 = vsel %vm1368, %v1370, %v1366
    %v1372 = vmul.f32 %v1347, %v1371
    %v1373 = vmin.f32 %v1372, 1.0
    %v1374 = vmax.f32 %v1373, -1.0
    %v1375 = vmul.f32 %v1304, %v1304
    %v1376 = vmin.f32 16.0, %v1375
    %v1377 = vmul.f32 %v1376, 2.1237322e-06
    %v1378 = vadd.f32 %v1377, 0.00028619796
    %v1379 = vmul.f32 %v1376, %v1378
    %v1380 = vadd.f32 %v1379, 0.0036580483
    %v1381 = vmul.f32 %v1376, %v1380
    %v1382 = vadd.f32 %v1381, 0.05243302
    %v1383 = vmul.f32 %v1376, %v1382
    %v1384 = vadd.f32 %v1383, 0.18741608
    %v1385 = vmul.f32 %v1376, %v1384
    %v1386 = vadd.f32 %v1385, 1.1283791
    %v1387 = vmul.f32 %v1304, %v1386
    %v1388 = vmul.f32 %v1376, 3.8918573e-05
    %v1389 = vadd.f32 %v1388, 0.001143296
    %v1390 = vmul.f32 %v1376, %v1389
    %v1391 = vadd.f32 %v1390, 0.014752088
    %v1392 = vmul.f32 %v1376, %v1391
    %v1393 = vadd.f32 %v1392, 0.112945676
    %v1394 = vmul.f32 %v1376, %v1393
    %v1395 = vadd.f32 %v1394, 0.4994258
    %v1396 = vmul.f32 %v1376, %v1395
    %v1397 = vadd.f32 %v1396, 1.0
    %v1398 = vrcp.pop %v1397
    %v1399 = vmul.f32 %v1397, %v1398
    %v1400 = vsub.f32 1.0, %v1399
    %v1401 = vmul.f32 %v1398, %v1400
    %v1402 = vadd.f32 %v1398, %v1401
    %vm1403 = vweird.f32 %v1397
    %vm1404 = vweird.f32 %v1398
    %vm1405 = vmor %vm1403, %vm1404
    %v1406 = vsel %vm1405, %v1398, %v1402
    %v1407 = vand.u32 2147483647, %v1397
    %vm1408 = vcmp.eq.f32.partialorder %v1407, 8.507059e+37
    %v1409 = vand.u32 %v1397, 2147483648
    %v1410 = vor.u32 1.1754944e-38, %v1409
    %v1411 = vsel %vm1408, %v1410, %v1406
    %v1412 = vmul.f32 %v1387, %v1411
    %v1413 = vmin.f32 %v1412, 1.0
    %v1414 = vmax.f32 %v1413, -1.0
    %v1415 = vmul.f32 %v1305, %v1305
    %v1416 = vmin.f32 16.0, %v1415
    %v1417 = vmul.f32 %v1416, 2.1237322e-06
    %v1418 = vadd.f32 %v1417, 0.00028619796
    %v1419 = vmul.f32 %v1416, %v1418
    %v1420 = vadd.f32 %v1419, 0.0036580483
    %v1421 = vmul.f32 %v1416, %v1420
    %v1422 = vadd.f32 %v1421, 0.05243302
    %v1423 = vmul.f32 %v1416, %v1422
    %v1424 = vadd.f32 %v1423, 0.18741608
    %v1425 = vmul.f32 %v1416, %v1424
    %v1426 = vadd.f32 %v1425, 1.1283791
    %v1427 = vmul.f32 %v1305, %v1426
    %v1428 = vmul.f32 %v1416, 3.8918573e-05
    %v1429 = vadd.f32 %v1428, 0.001143296
    %v1430 = vmul.f32 %v1416, %v1429
    %v1431 = vadd.f32 %v1430, 0.014752088
    %v1432 = vmul.f32 %v1416, %v1431
    %v1433 = vadd.f32 %v1432, 0.112945676
    %v1434 = vmul.f32 %v1416, %v1433
    %v1435 = vadd.f32 %v1434, 0.4994258
    %v1436 = vmul.f32 %v1416, %v1435
    %v1437 = vadd.f32 %v1436, 1.0
    %v1438 = vrcp.pop %v1437
    %v1439 = vmul.f32 %v1437, %v1438
    %v1440 = vsub.f32 1.0, %v1439
    %v1441 = vmul.f32 %v1438, %v1440
    %v1442 = vadd.f32 %v1438, %v1441
    %vm1443 = vweird.f32 %v1437
    %vm1444 = vweird.f32 %v1438
    %vm1445 = vmor %vm1443, %vm1444
    %v1446 = vsel %vm1445, %v1438, %v1442
    %v1447 = vand.u32 2147483647, %v1437
    %vm1448 = vcmp.eq.f32.partialorder %v1447, 8.507059e+37
    %v1449 = vand.u32 %v1437, 2147483648
    %v1450 = vor.u32 1.1754944e-38, %v1449
    %v1451 = vsel %vm1448, %v1450, %v1446
    %v1452 = vmul.f32 %v1427, %v1451
    %v1453 = vmin.f32 %v1452, 1.0
    %v1454 = vmax.f32 %v1453, -1.0
    %v1455 = vmul.f32 %v1306, %v1306
    %v1456 = vmin.f32 16.0, %v1455
    %v1457 = vmul.f32 %v1456, 2.1237322e-06
    %v1458 = vadd.f32 %v1457, 0.00028619796
    %v1459 = vmul.f32 %v1456, %v1458
    %v1460 = vadd.f32 %v1459, 0.0036580483
    %v1461 = vmul.f32 %v1456, %v1460
    %v1462 = vadd.f32 %v1461, 0.05243302
    %v1463 = vmul.f32 %v1456, %v1462
    %v1464 = vadd.f32 %v1463, 0.18741608
    %v1465 = vmul.f32 %v1456, %v1464
    %v1466 = vadd.f32 %v1465, 1.1283791
    %v1467 = vmul.f32 %v1306, %v1466
    %v1468 = vmul.f32 %v1456, 3.8918573e-05
    %v1469 = vadd.f32 %v1468, 0.001143296
    %v1470 = vmul.f32 %v1456, %v1469
    %v1471 = vadd.f32 %v1470, 0.014752088
    %v1472 = vmul.f32 %v1456, %v1471
    %v1473 = vadd.f32 %v1472, 0.112945676
    %v1474 = vmul.f32 %v1456, %v1473
    %v1475 = vadd.f32 %v1474, 0.4994258
    %v1476 = vmul.f32 %v1456, %v1475
    %v1477 = vadd.f32 %v1476, 1.0
    %v1478 = vrcp.pop %v1477
    %v1479 = vmul.f32 %v1477, %v1478
    %v1480 = vsub.f32 1.0, %v1479
    %v1481 = vmul.f32 %v1478, %v1480
    %v1482 = vadd.f32 %v1478, %v1481
    %vm1483 = vweird.f32 %v1477
    %vm1484 = vweird.f32 %v1478
    %vm1485 = vmor %vm1483, %vm1484
    %v1486 = vsel %vm1485, %v1478, %v1482
    %v1487 = vand.u32 2147483647, %v1477
    %vm1488 = vcmp.eq.f32.partialorder %v1487, 8.507059e+37
    %v1489 = vand.u32 %v1477, 2147483648
    %v1490 = vor.u32 1.1754944e-38, %v1489
    %v1491 = vsel %vm1488, %v1490, %v1486
    %v1492 = vmul.f32 %v1467, %v1491
    %v1493 = vmin.f32 %v1492, 1.0
    %v1494 = vmax.f32 %v1493, -1.0
    %v1495 = vmul.f32 %v1307, %v1307
    %v1496 = vmin.f32 16.0, %v1495
    %v1497 = vmul.f32 %v1496, 2.1237322e-06
    %v1498 = vadd.f32 %v1497, 0.00028619796
    %v1499 = vmul.f32 %v1496, %v1498
    %v1500 = vadd.f32 %v1499, 0.0036580483
    %v1501 = vmul.f32 %v1496, %v1500
    %v1502 = vadd.f32 %v1501, 0.05243302
    %v1503 = vmul.f32 %v1496, %v1502
    %v1504 = vadd.f32 %v1503, 0.18741608
    %v1505 = vmul.f32 %v1496, %v1504
    %v1506 = vadd.f32 %v1505, 1.1283791
    %v1507 = vmul.f32 %v1307, %v1506
    %v1508 = vmul.f32 %v1496, 3.8918573e-05
    %v1509 = vadd.f32 %v1508, 0.001143296
    %v1510 = vmul.f32 %v1496, %v1509
    %v1511 = vadd.f32 %v1510, 0.014752088
    %v1512 = vmul.f32 %v1496, %v1511
    %v1513 = vadd.f32 %v1512, 0.112945676
    %v1514 = vmul.f32 %v1496, %v1513
    %v1515 = vadd.f32 %v1514, 0.4994258
    %v1516 = vmul.f32 %v1496, %v1515
    %v1517 = vadd.f32 %v1516, 1.0
    %v1518 = vrcp.pop %v1517
    %v1519 = vmul.f32 %v1517, %v1518
    %v1520 = vsub.f32 1.0, %v1519
    %v1521 = vmul.f32 %v1518, %v1520
    %v1522 = vadd.f32 %v1518, %v1521
    %vm1523 = vweird.f32 %v1517
    %vm1524 = vweird.f32 %v1518
    %vm1525 = vmor %vm1523, %vm1524
    %v1526 = vsel %vm1525, %v1518, %v1522
    %v1527 = vand.u32 2147483647, %v1517
    %vm1528 = vcmp.eq.f32.partialorder %v1527, 8.507059e+37
    %v1529 = vand.u32 %v1517, 2147483648
    %v1530 = vor.u32 1.1754944e-38, %v1529
    %v1531 = vsel %vm1528, %v1530, %v1526
    %v1532 = vmul.f32 %v1507, %v1531
    %v1533 = vmin.f32 %v1532, 1.0
    %v1534 = vmax.f32 %v1533, -1.0
    %v1535 = vmul.f32 %v1308, %v1308
    %v1536 = vmin.f32 16.0, %v1535
    %v1537 = vmul.f32 %v1536, 2.1237322e-06
    %v1538 = vadd.f32 %v1537, 0.00028619796
    %v1539 = vmul.f32 %v1536, %v1538
    %v1540 = vadd.f32 %v1539, 0.0036580483
    %v1541 = vmul.f32 %v1536, %v1540
    %v1542 = vadd.f32 %v1541, 0.05243302
    %v1543 = vmul.f32 %v1536, %v1542
    %v1544 = vadd.f32 %v1543, 0.18741608
    %v1545 = vmul.f32 %v1536, %v1544
    %v1546 = vadd.f32 %v1545, 1.1283791
    %v1547 = vmul.f32 %v1308, %v1546
    %v1548 = vmul.f32 %v1536, 3.8918573e-05
    %v1549 = vadd.f32 %v1548, 0.001143296
    %v1550 = vmul.f32 %v1536, %v1549
    %v1551 = vadd.f32 %v1550, 0.014752088
    %v1552 = vmul.f32 %v1536, %v1551
    %v1553 = vadd.f32 %v1552, 0.112945676
    %v1554 = vmul.f32 %v1536, %v1553
    %v1555 = vadd.f32 %v1554, 0.4994258
    %v1556 = vmul.f32 %v1536, %v1555
    %v1557 = vadd.f32 %v1556, 1.0
    %v1558 = vrcp.pop %v1557
    %v1559 = vmul.f32 %v1557, %v1558
    %v1560 = vsub.f32 1.0, %v1559
    %v1561 = vmul.f32 %v1558, %v1560
    %v1562 = vadd.f32 %v1558, %v1561
    %vm1563 = vweird.f32 %v1557
    %vm1564 = vweird.f32 %v1558
    %vm1565 = vmor %vm1563, %vm1564
    %v1566 = vsel %vm1565, %v1558, %v1562
    %v1567 = vand.u32 2147483647, %v1557
    %vm1568 = vcmp.eq.f32.partialorder %v1567, 8.507059e+37
    %v1569 = vand.u32 %v1557, 2147483648
    %v1570 = vor.u32 1.1754944e-38, %v1569
    %v1571 = vsel %vm1568, %v1570, %v1566
    %v1572 = vmul.f32 %v1547, %v1571
    %v1573 = vmin.f32 %v1572, 1.0
    %v1574 = vmax.f32 %v1573, -1.0
    %v1575 = vmul.f32 %v1309, %v1309
    %v1576 = vmin.f32 16.0, %v1575
    %v1577 = vmul.f32 %v1576, 2.1237322e-06
    %v1578 = vadd.f32 %v1577, 0.00028619796
    %v1579 = vmul.f32 %v1576, %v1578
    %v1580 = vadd.f32 %v1579, 0.0036580483
    %v1581 = vmul.f32 %v1576, %v1580
    %v1582 = vadd.f32 %v1581, 0.05243302
    %v1583 = vmul.f32 %v1576, %v1582
    %v1584 = vadd.f32 %v1583, 0.18741608
    %v1585 = vmul.f32 %v1576, %v1584
    %v1586 = vadd.f32 %v1585, 1.1283791
    %v1587 = vmul.f32 %v1309, %v1586
    %v1588 = vmul.f32 %v1576, 3.8918573e-05
    %v1589 = vadd.f32 %v1588, 0.001143296
    %v1590 = vmul.f32 %v1576, %v1589
    %v1591 = vadd.f32 %v1590, 0.014752088
    %v1592 = vmul.f32 %v1576, %v1591
    %v1593 = vadd.f32 %v1592, 0.112945676
    %v1594 = vmul.f32 %v1576, %v1593
    %v1595 = vadd.f32 %v1594, 0.4994258
    %v1596 = vmul.f32 %v1576, %v1595
    %v1597 = vadd.f32 %v1596, 1.0
    %v1598 = vrcp.pop %v1597
    %v1599 = vmul.f32 %v1597, %v1598
    %v1600 = vsub.f32 1.0, %v1599
    %v1601 = vmul.f32 %v1598, %v1600
    %v1602 = vadd.f32 %v1598, %v1601
    %vm1603 = vweird.f32 %v1597
    %vm1604 = vweird.f32 %v1598
    %vm1605 = vmor %vm1603, %vm1604
    %v1606 = vsel %vm1605, %v1598, %v1602
    %v1607 = vand.u32 2147483647, %v1597
    %vm1608 = vcmp.eq.f32.partialorder %v1607, 8.507059e+37
    %v1609 = vand.u32 %v1597, 2147483648
    %v1610 = vor.u32 1.1754944e-38, %v1609
    %v1611 = vsel %vm1608, %v1610, %v1606
    %v1612 = vmul.f32 %v1587, %v1611
    %v1613 = vmin.f32 %v1612, 1.0
    %v1614 = vmax.f32 %v1613, -1.0
    %v1615 = vmul.f32 %v1310, %v1310
    %v1616 = vmin.f32 16.0, %v1615
    %v1617 = vmul.f32 %v1616, 2.1237322e-06
    %v1618 = vadd.f32 %v1617, 0.00028619796
    %v1619 = vmul.f32 %v1616, %v1618
    %v1620 = vadd.f32 %v1619, 0.0036580483
    %v1621 = vmul.f32 %v1616, %v1620
    %v1622 = vadd.f32 %v1621, 0.05243302
    %v1623 = vmul.f32 %v1616, %v1622
    %v1624 = vadd.f32 %v1623, 0.18741608
    %v1625 = vmul.f32 %v1616, %v1624
    %v1626 = vadd.f32 %v1625, 1.1283791
    %v1627 = vmul.f32 %v1310, %v1626
    %v1628 = vmul.f32 %v1616, 3.8918573e-05
    %v1629 = vadd.f32 %v1628, 0.001143296
    %v1630 = vmul.f32 %v1616, %v1629
    %v1631 = vadd.f32 %v1630, 0.014752088
    %v1632 = vmul.f32 %v1616, %v1631
    %v1633 = vadd.f32 %v1632, 0.112945676
    %v1634 = vmul.f32 %v1616, %v1633
    %v1635 = vadd.f32 %v1634, 0.4994258
    %v1636 = vmul.f32 %v1616, %v1635
    %v1637 = vadd.f32 %v1636, 1.0
    %v1638 = vrcp.pop %v1637
    %v1639 = vmul.f32 %v1637, %v1638
    %v1640 = vsub.f32 1.0, %v1639
    %v1641 = vmul.f32 %v1638, %v1640
    %v1642 = vadd.f32 %v1638, %v1641
    %vm1643 = vweird.f32 %v1637
    %vm1644 = vweird.f32 %v1638
    %vm1645 = vmor %vm1643, %vm1644
    %v1646 = vsel %vm1645, %v1638, %v1642
    %v1647 = vand.u32 2147483647, %v1637
    %vm1648 = vcmp.eq.f32.partialorder %v1647, 8.507059e+37
    %v1649 = vand.u32 %v1637, 2147483648
    %v1650 = vor.u32 1.1754944e-38, %v1649
    %v1651 = vsel %vm1648, %v1650, %v1646
    %v1652 = vmul.f32 %v1627, %v1651
    %v1653 = vmin.f32 %v1652, 1.0
    %v1654 = vmax.f32 %v1653, -1.0
    %v1655 = vmul.f32 %v1311, %v1311
    %v1656 = vmin.f32 16.0, %v1655
    %v1657 = vmul.f32 %v1656, 2.1237322e-06
    %v1658 = vadd.f32 %v1657, 0.00028619796
    %v1659 = vmul.f32 %v1656, %v1658
    %v1660 = vadd.f32 %v1659, 0.0036580483
    %v1661 = vmul.f32 %v1656, %v1660
    %v1662 = vadd.f32 %v1661, 0.05243302
    %v1663 = vmul.f32 %v1656, %v1662
    %v1664 = vadd.f32 %v1663, 0.18741608
    %v1665 = vmul.f32 %v1656, %v1664
    %v1666 = vadd.f32 %v1665, 1.1283791
    %v1667 = vmul.f32 %v1311, %v1666
    %v1668 = vmul.f32 %v1656, 3.8918573e-05
    %v1669 = vadd.f32 %v1668, 0.001143296
    %v1670 = vmul.f32 %v1656, %v1669
    %v1671 = vadd.f32 %v1670, 0.014752088
    %v1672 = vmul.f32 %v1656, %v1671
    %v1673 = vadd.f32 %v1672, 0.112945676
    %v1674 = vmul.f32 %v1656, %v1673
    %v1675 = vadd.f32 %v1674, 0.4994258
    %v1676 = vmul.f32 %v1656, %v1675
    %v1677 = vadd.f32 %v1676, 1.0
    %v1678 = vrcp.pop %v1677
    %v1679 = vmul.f32 %v1677, %v1678
    %v1680 = vsub.f32 1.0, %v1679
    %v1681 = vmul.f32 %v1678, %v1680
    %v1682 = vadd.f32 %v1678, %v1681
    %vm1683 = vweird.f32 %v1677
    %vm1684 = vweird.f32 %v1678
    %vm1685 = vmor %vm1683, %vm1684
    %v1686 = vsel %vm1685, %v1678, %v1682
    %v1687 = vand.u32 2147483647, %v1677
    %vm1688 = vcmp.eq.f32.partialorder %v1687, 8.507059e+37
    %v1689 = vand.u32 %v1677, 2147483648
    %v1690 = vor.u32 1.1754944e-38, %v1689
    %v1691 = vsel %vm1688, %v1690, %v1686
    %v1692 = vmul.f32 %v1667, %v1691
    %v1693 = vmin.f32 %v1692, 1.0
    %v1694 = vmax.f32 %v1693, -1.0
    %v1695 = vmul.f32 %v1312, %v1312
    %v1696 = vmin.f32 16.0, %v1695
    %v1697 = vmul.f32 %v1696, 2.1237322e-06
    %v1698 = vadd.f32 %v1697, 0.00028619796
    %v1699 = vmul.f32 %v1696, %v1698
    %v1700 = vadd.f32 %v1699, 0.0036580483
    %v1701 = vmul.f32 %v1696, %v1700
    %v1702 = vadd.f32 %v1701, 0.05243302
    %v1703 = vmul.f32 %v1696, %v1702
    %v1704 = vadd.f32 %v1703, 0.18741608
    %v1705 = vmul.f32 %v1696, %v1704
    %v1706 = vadd.f32 %v1705, 1.1283791
    %v1707 = vmul.f32 %v1312, %v1706
    %v1708 = vmul.f32 %v1696, 3.8918573e-05
    %v1709 = vadd.f32 %v1708, 0.001143296
    %v1710 = vmul.f32 %v1696, %v1709
    %v1711 = vadd.f32 %v1710, 0.014752088
    %v1712 = vmul.f32 %v1696, %v1711
    %v1713 = vadd.f32 %v1712, 0.112945676
    %v1714 = vmul.f32 %v1696, %v1713
    %v1715 = vadd.f32 %v1714, 0.4994258
    %v1716 = vmul.f32 %v1696, %v1715
    %v1717 = vadd.f32 %v1716, 1.0
    %v1718 = vrcp.pop %v1717
    %v1719 = vmul.f32 %v1717, %v1718
    %v1720 = vsub.f32 1.0, %v1719
    %v1721 = vmul.f32 %v1718, %v1720
    %v1722 = vadd.f32 %v1718, %v1721
    %vm1723 = vweird.f32 %v1717
    %vm1724 = vweird.f32 %v1718
    %vm1725 = vmor %vm1723, %vm1724
    %v1726 = vsel %vm1725, %v1718, %v1722
    %v1727 = vand.u32 2147483647, %v1717
    %vm1728 = vcmp.eq.f32.partialorder %v1727, 8.507059e+37
    %v1729 = vand.u32 %v1717, 2147483648
    %v1730 = vor.u32 1.1754944e-38, %v1729
    %v1731 = vsel %vm1728, %v1730, %v1726
    %v1732 = vmul.f32 %v1707, %v1731
    %v1733 = vmin.f32 %v1732, 1.0
    %v1734 = vmax.f32 %v1733, -1.0
    %v1735 = vmul.f32 %v1313, %v1313
    %v1736 = vmin.f32 16.0, %v1735
    %v1737 = vmul.f32 %v1736, 2.1237322e-06
    %v1738 = vadd.f32 %v1737, 0.00028619796
    %v1739 = vmul.f32 %v1736, %v1738
    %v1740 = vadd.f32 %v1739, 0.0036580483
    %v1741 = vmul.f32 %v1736, %v1740
    %v1742 = vadd.f32 %v1741, 0.05243302
    %v1743 = vmul.f32 %v1736, %v1742
    %v1744 = vadd.f32 %v1743, 0.18741608
    %v1745 = vmul.f32 %v1736, %v1744
    %v1746 = vadd.f32 %v1745, 1.1283791
    %v1747 = vmul.f32 %v1313, %v1746
    %v1748 = vmul.f32 %v1736, 3.8918573e-05
    %v1749 = vadd.f32 %v1748, 0.001143296
    %v1750 = vmul.f32 %v1736, %v1749
    %v1751 = vadd.f32 %v1750, 0.014752088
    %v1752 = vmul.f32 %v1736, %v1751
    %v1753 = vadd.f32 %v1752, 0.112945676
    %v1754 = vmul.f32 %v1736, %v1753
    %v1755 = vadd.f32 %v1754, 0.4994258
    %v1756 = vmul.f32 %v1736, %v1755
    %v1757 = vadd.f32 %v1756, 1.0
    %v1758 = vrcp.pop %v1757
    %v1759 = vmul.f32 %v1757, %v1758
    %v1760 = vsub.f32 1.0, %v1759
    %v1761 = vmul.f32 %v1758, %v1760
    %v1762 = vadd.f32 %v1758, %v1761
    %vm1763 = vweird.f32 %v1757
    %vm1764 = vweird.f32 %v1758
    %vm1765 = vmor %vm1763, %vm1764
    %v1766 = vsel %vm1765, %v1758, %v1762
    %v1767 = vand.u32 2147483647, %v1757
    %vm1768 = vcmp.eq.f32.partialorder %v1767, 8.507059e+37
    %v1769 = vand.u32 %v1757, 2147483648
    %v1770 = vor.u32 1.1754944e-38, %v1769
    %v1771 = vsel %vm1768, %v1770, %v1766
    %v1772 = vmul.f32 %v1747, %v1771
    %v1773 = vmin.f32 %v1772, 1.0
    %v1774 = vmax.f32 %v1773, -1.0
    %v1775 = vmul.f32 %v1314, %v1314
    %v1776 = vmin.f32 16.0, %v1775
    %v1777 = vmul.f32 %v1776, 2.1237322e-06
    %v1778 = vadd.f32 %v1777, 0.00028619796
    %v1779 = vmul.f32 %v1776, %v1778
    %v1780 = vadd.f32 %v1779, 0.0036580483
    %v1781 = vmul.f32 %v1776, %v1780
    %v1782 = vadd.f32 %v1781, 0.05243302
    %v1783 = vmul.f32 %v1776, %v1782
    %v1784 = vadd.f32 %v1783, 0.18741608
    %v1785 = vmul.f32 %v1776, %v1784
    %v1786 = vadd.f32 %v1785, 1.1283791
    %v1787 = vmul.f32 %v1314, %v1786
    %v1788 = vmul.f32 %v1776, 3.8918573e-05
    %v1789 = vadd.f32 %v1788, 0.001143296
    %v1790 = vmul.f32 %v1776, %v1789
    %v1791 = vadd.f32 %v1790, 0.014752088
    %v1792 = vmul.f32 %v1776, %v1791
    %v1793 = vadd.f32 %v1792, 0.112945676
    %v1794 = vmul.f32 %v1776, %v1793
    %v1795 = vadd.f32 %v1794, 0.4994258
    %v1796 = vmul.f32 %v1776, %v1795
    %v1797 = vadd.f32 %v1796, 1.0
    %v1798 = vrcp.pop %v1797
    %v1799 = vmul.f32 %v1797, %v1798
    %v1800 = vsub.f32 1.0, %v1799
    %v1801 = vmul.f32 %v1798, %v1800
    %v1802 = vadd.f32 %v1798, %v1801
    %vm1803 = vweird.f32 %v1797
    %vm1804 = vweird.f32 %v1798
    %vm1805 = vmor %vm1803, %vm1804
    %v1806 = vsel %vm1805, %v1798, %v1802
    %v1807 = vand.u32 2147483647, %v1797
    %vm1808 = vcmp.eq.f32.partialorder %v1807, 8.507059e+37
    %v1809 = vand.u32 %v1797, 2147483648
    %v1810 = vor.u32 1.1754944e-38, %v1809
    %v1811 = vsel %vm1808, %v1810, %v1806
    %v1812 = vmul.f32 %v1787, %v1811
    %v1813 = vmin.f32 %v1812, 1.0
    %v1814 = vmax.f32 %v1813, -1.0
    %v1815 = vmul.f32 %v1315, %v1315
    %v1816 = vmin.f32 16.0, %v1815
    %v1817 = vmul.f32 %v1816, 2.1237322e-06
    %v1818 = vadd.f32 %v1817, 0.00028619796
    %v1819 = vmul.f32 %v1816, %v1818
    %v1820 = vadd.f32 %v1819, 0.0036580483
    %v1821 = vmul.f32 %v1816, %v1820
    %v1822 = vadd.f32 %v1821, 0.05243302
    %v1823 = vmul.f32 %v1816, %v1822
    %v1824 = vadd.f32 %v1823, 0.18741608
    %v1825 = vmul.f32 %v1816, %v1824
    %v1826 = vadd.f32 %v1825, 1.1283791
    %v1827 = vmul.f32 %v1315, %v1826
    %v1828 = vmul.f32 %v1816, 3.8918573e-05
    %v1829 = vadd.f32 %v1828, 0.001143296
    %v1830 = vmul.f32 %v1816, %v1829
    %v1831 = vadd.f32 %v1830, 0.014752088
    %v1832 = vmul.f32 %v1816, %v1831
    %v1833 = vadd.f32 %v1832, 0.112945676
    %v1834 = vmul.f32 %v1816, %v1833
    %v1835 = vadd.f32 %v1834, 0.4994258
    %v1836 = vmul.f32 %v1816, %v1835
    %v1837 = vadd.f32 %v1836, 1.0
    %v1838 = vrcp.pop %v1837
    %v1839 = vmul.f32 %v1837, %v1838
    %v1840 = vsub.f32 1.0, %v1839
    %v1841 = vmul.f32 %v1838, %v1840
    %v1842 = vadd.f32 %v1838, %v1841
    %vm1843 = vweird.f32 %v1837
    %vm1844 = vweird.f32 %v1838
    %vm1845 = vmor %vm1843, %vm1844
    %v1846 = vsel %vm1845, %v1838, %v1842
    %v1847 = vand.u32 2147483647, %v1837
    %vm1848 = vcmp.eq.f32.partialorder %v1847, 8.507059e+37
    %v1849 = vand.u32 %v1837, 2147483648
    %v1850 = vor.u32 1.1754944e-38, %v1849
    %v1851 = vsel %vm1848, %v1850, %v1846
    %v1852 = vmul.f32 %v1827, %v1851
    %v1853 = vmin.f32 %v1852, 1.0
    %v1854 = vmax.f32 %v1853, -1.0
    %v1855 = vmul.f32 %v1316, %v1316
    %v1856 = vmin.f32 16.0, %v1855
    %v1857 = vmul.f32 %v1856, 2.1237322e-06
    %v1858 = vadd.f32 %v1857, 0.00028619796
    %v1859 = vmul.f32 %v1856, %v1858
    %v1860 = vadd.f32 %v1859, 0.0036580483
    %v1861 = vmul.f32 %v1856, %v1860
    %v1862 = vadd.f32 %v1861, 0.05243302
    %v1863 = vmul.f32 %v1856, %v1862
    %v1864 = vadd.f32 %v1863, 0.18741608
    %v1865 = vmul.f32 %v1856, %v1864
    %v1866 = vadd.f32 %v1865, 1.1283791
    %v1867 = vmul.f32 %v1316, %v1866
    %v1868 = vmul.f32 %v1856, 3.8918573e-05
    %v1869 = vadd.f32 %v1868, 0.001143296
    %v1870 = vmul.f32 %v1856, %v1869
    %v1871 = vadd.f32 %v1870, 0.014752088
    %v1872 = vmul.f32 %v1856, %v1871
    %v1873 = vadd.f32 %v1872, 0.112945676
    %v1874 = vmul.f32 %v1856, %v1873
    %v1875 = vadd.f32 %v1874, 0.4994258
    %v1876 = vmul.f32 %v1856, %v1875
    %v1877 = vadd.f32 %v1876, 1.0
    %v1878 = vrcp.pop %v1877
    %v1879 = vmul.f32 %v1877, %v1878
    %v1880 = vsub.f32 1.0, %v1879
    %v1881 = vmul.f32 %v1878, %v1880
    %v1882 = vadd.f32 %v1878, %v1881
    %vm1883 = vweird.f32 %v1877
    %vm1884 = vweird.f32 %v1878
    %vm1885 = vmor %vm1883, %vm1884
    %v1886 = vsel %vm1885, %v1878, %v1882
    %v1887 = vand.u32 2147483647, %v1877
    %vm1888 = vcmp.eq.f32.partialorder %v1887, 8.507059e+37
    %v1889 = vand.u32 %v1877, 2147483648
    %v1890 = vor.u32 1.1754944e-38, %v1889
    %v1891 = vsel %vm1888, %v1890, %v1886
    %v1892 = vmul.f32 %v1867, %v1891
    %v1893 = vmin.f32 %v1892, 1.0
    %v1894 = vmax.f32 %v1893, -1.0
    %v1895 = vmul.f32 %v1317, %v1317
    %v1896 = vmin.f32 16.0, %v1895
    %v1897 = vmul.f32 %v1896, 2.1237322e-06
    %v1898 = vadd.f32 %v1897, 0.00028619796
    %v1899 = vmul.f32 %v1896, %v1898
    %v1900 = vadd.f32 %v1899, 0.0036580483
    %v1901 = vmul.f32 %v1896, %v1900
    %v1902 = vadd.f32 %v1901, 0.05243302
    %v1903 = vmul.f32 %v1896, %v1902
    %v1904 = vadd.f32 %v1903, 0.18741608
    %v1905 = vmul.f32 %v1896, %v1904
    %v1906 = vadd.f32 %v1905, 1.1283791
    %v1907 = vmul.f32 %v1317, %v1906
    %v1908 = vmul.f32 %v1896, 3.8918573e-05
    %v1909 = vadd.f32 %v1908, 0.001143296
    %v1910 = vmul.f32 %v1896, %v1909
    %v1911 = vadd.f32 %v1910, 0.014752088
    %v1912 = vmul.f32 %v1896, %v1911
    %v1913 = vadd.f32 %v1912, 0.112945676
    %v1914 = vmul.f32 %v1896, %v1913
    %v1915 = vadd.f32 %v1914, 0.4994258
    %v1916 = vmul.f32 %v1896, %v1915
    %v1917 = vadd.f32 %v1916, 1.0
    %v1918 = vrcp.pop %v1917
    %v1919 = vmul.f32 %v1917, %v1918
    %v1920 = vsub.f32 1.0, %v1919
    %v1921 = vmul.f32 %v1918, %v1920
    %v1922 = vadd.f32 %v1918, %v1921
    %vm1923 = vweird.f32 %v1917
    %vm1924 = vweird.f32 %v1918
    %vm1925 = vmor %vm1923, %vm1924
    %v1926 = vsel %vm1925, %v1918, %v1922
    %v1927 = vand.u32 2147483647, %v1917
    %vm1928 = vcmp.eq.f32.partialorder %v1927, 8.507059e+37
    %v1929 = vand.u32 %v1917, 2147483648
    %v1930 = vor.u32 1.1754944e-38, %v1929
    %v1931 = vsel %vm1928, %v1930, %v1926
    %v1932 = vmul.f32 %v1907, %v1931
    %v1933 = vmin.f32 %v1932, 1.0
    %v1934 = vmax.f32 %v1933, -1.0
    %v1935 = vmul.f32 %v1318, %v1318
    %v1936 = vmin.f32 16.0, %v1935
    %v1937 = vmul.f32 %v1936, 2.1237322e-06
    %v1938 = vadd.f32 %v1937, 0.00028619796
    %v1939 = vmul.f32 %v1936, %v1938
    %v1940 = vadd.f32 %v1939, 0.0036580483
    %v1941 = vmul.f32 %v1936, %v1940
    %v1942 = vadd.f32 %v1941, 0.05243302
    %v1943 = vmul.f32 %v1936, %v1942
    %v1944 = vadd.f32 %v1943, 0.18741608
    %v1945 = vmul.f32 %v1936, %v1944
    %v1946 = vadd.f32 %v1945, 1.1283791
    %v1947 = vmul.f32 %v1318, %v1946
    %v1948 = vmul.f32 %v1936, 3.8918573e-05
    %v1949 = vadd.f32 %v1948, 0.001143296
    %v1950 = vmul.f32 %v1936, %v1949
    %v1951 = vadd.f32 %v1950, 0.014752088
    %v1952 = vmul.f32 %v1936, %v1951
    %v1953 = vadd.f32 %v1952, 0.112945676
    %v1954 = vmul.f32 %v1936, %v1953
    %v1955 = vadd.f32 %v1954, 0.4994258
    %v1956 = vmul.f32 %v1936, %v1955
    %v1957 = vadd.f32 %v1956, 1.0
    %v1958 = vrcp.pop %v1957
    %v1959 = vmul.f32 %v1957, %v1958
    %v1960 = vsub.f32 1.0, %v1959
    %v1961 = vmul.f32 %v1958, %v1960
    %v1962 = vadd.f32 %v1958, %v1961
    %vm1963 = vweird.f32 %v1957
    %vm1964 = vweird.f32 %v1958
    %vm1965 = vmor %vm1963, %vm1964
    %v1966 = vsel %vm1965, %v1958, %v1962
    %v1967 = vand.u32 2147483647, %v1957
    %vm1968 = vcmp.eq.f32.partialorder %v1967, 8.507059e+37
    %v1969 = vand.u32 %v1957, 2147483648
    %v1970 = vor.u32 1.1754944e-38, %v1969
    %v1971 = vsel %vm1968, %v1970, %v1966
    %v1972 = vmul.f32 %v1947, %v1971
    %v1973 = vmin.f32 %v1972, 1.0
    %v1974 = vmax.f32 %v1973, -1.0
    %v1975 = vmul.f32 %v1319, %v1319
    %v1976 = vmin.f32 16.0, %v1975
    %v1977 = vmul.f32 %v1976, 2.1237322e-06
    %v1978 = vadd.f32 %v1977, 0.00028619796
    %v1979 = vmul.f32 %v1976, %v1978
    %v1980 = vadd.f32 %v1979, 0.0036580483
    %v1981 = vmul.f32 %v1976, %v1980
    %v1982 = vadd.f32 %v1981, 0.05243302
    %v1983 = vmul.f32 %v1976, %v1982
    %v1984 = vadd.f32 %v1983, 0.18741608
    %v1985 = vmul.f32 %v1976, %v1984
    %v1986 = vadd.f32 %v1985, 1.1283791
    %v1987 = vmul.f32 %v1319, %v1986
    %v1988 = vmul.f32 %v1976, 3.8918573e-05
    %v1989 = vadd.f32 %v1988, 0.001143296
    %v1990 = vmul.f32 %v1976, %v1989
    %v1991 = vadd.f32 %v1990, 0.014752088
    %v1992 = vmul.f32 %v1976, %v1991
    %v1993 = vadd.f32 %v1992, 0.112945676
    %v1994 = vmul.f32 %v1976, %v1993
    %v1995 = vadd.f32 %v1994, 0.4994258
    %v1996 = vmul.f32 %v1976, %v1995
    %v1997 = vadd.f32 %v1996, 1.0
    %v1998 = vrcp.pop %v1997
    %v1999 = vmul.f32 %v1997, %v1998
    %v2000 = vsub.f32 1.0, %v1999
    %v2001 = vmul.f32 %v1998, %v2000
    %v2002 = vadd.f32 %v1998, %v2001
    %vm2003 = vweird.f32 %v1997
    %vm2004 = vweird.f32 %v1998
    %vm2005 = vmor %vm2003, %vm2004
    %v2006 = vsel %vm2005, %v1998, %v2002
    %v2007 = vand.u32 2147483647, %v1997
    %vm2008 = vcmp.eq.f32.partialorder %v2007, 8.507059e+37
    %v2009 = vand.u32 %v1997, 2147483648
    %v2010 = vor.u32 1.1754944e-38, %v2009
    %v2011 = vsel %vm2008, %v2010, %v2006
    %v2012 = vmul.f32 %v1987, %v2011
    %v2013 = vmin.f32 %v2012, 1.0
    %v2014 = vmax.f32 %v2013, -1.0
    %v2015 = vmul.f32 %v1320, %v1320
    %v2016 = vmin.f32 16.0, %v2015
    %v2017 = vmul.f32 %v2016, 2.1237322e-06
    %v2018 = vadd.f32 %v2017, 0.00028619796
    %v2019 = vmul.f32 %v2016, %v2018
    %v2020 = vadd.f32 %v2019, 0.0036580483
    %v2021 = vmul.f32 %v2016, %v2020
    %v2022 = vadd.f32 %v2021, 0.05243302
    %v2023 = vmul.f32 %v2016, %v2022
    %v2024 = vadd.f32 %v2023, 0.18741608
    %v2025 = vmul.f32 %v2016, %v2024
    %v2026 = vadd.f32 %v2025, 1.1283791
    %v2027 = vmul.f32 %v1320, %v2026
    %v2028 = vmul.f32 %v2016, 3.8918573e-05
    %v2029 = vadd.f32 %v2028, 0.001143296
    %v2030 = vmul.f32 %v2016, %v2029
    %v2031 = vadd.f32 %v2030, 0.014752088
    %v2032 = vmul.f32 %v2016, %v2031
    %v2033 = vadd.f32 %v2032, 0.112945676
    %v2034 = vmul.f32 %v2016, %v2033
    %v2035 = vadd.f32 %v2034, 0.4994258
    %v2036 = vmul.f32 %v2016, %v2035
    %v2037 = vadd.f32 %v2036, 1.0
    %v2038 = vrcp.pop %v2037
    %v2039 = vmul.f32 %v2037, %v2038
    %v2040 = vsub.f32 1.0, %v2039
    %v2041 = vmul.f32 %v2038, %v2040
    %v2042 = vadd.f32 %v2038, %v2041
    %vm2043 = vweird.f32 %v2037
    %vm2044 = vweird.f32 %v2038
    %vm2045 = vmor %vm2043, %vm2044
    %v2046 = vsel %vm2045, %v2038, %v2042
    %v2047 = vand.u32 2147483647, %v2037
    %vm2048 = vcmp.eq.f32.partialorder %v2047, 8.507059e+37
    %v2049 = vand.u32 %v2037, 2147483648
    %v2050 = vor.u32 1.1754944e-38, %v2049
    %v2051 = vsel %vm2048, %v2050, %v2046
    %v2052 = vmul.f32 %v2027, %v2051
    %v2053 = vmin.f32 %v2052, 1.0
    %v2054 = vmax.f32 %v2053, -1.0
    %v2055 = vmul.f32 %v1321, %v1321
    %v2056 = vmin.f32 16.0, %v2055
    %v2057 = vmul.f32 %v2056, 2.1237322e-06
    %v2058 = vadd.f32 %v2057, 0.00028619796
    %v2059 = vmul.f32 %v2056, %v2058
    %v2060 = vadd.f32 %v2059, 0.0036580483
    %v2061 = vmul.f32 %v2056, %v2060
    %v2062 = vadd.f32 %v2061, 0.05243302
    %v2063 = vmul.f32 %v2056, %v2062
    %v2064 = vadd.f32 %v2063, 0.18741608
    %v2065 = vmul.f32 %v2056, %v2064
    %v2066 = vadd.f32 %v2065, 1.1283791
    %v2067 = vmul.f32 %v1321, %v2066
    %v2068 = vmul.f32 %v2056, 3.8918573e-05
    %v2069 = vadd.f32 %v2068, 0.001143296
    %v2070 = vmul.f32 %v2056, %v2069
    %v2071 = vadd.f32 %v2070, 0.014752088
    %v2072 = vmul.f32 %v2056, %v2071
    %v2073 = vadd.f32 %v2072, 0.112945676
    %v2074 = vmul.f32 %v2056, %v2073
    %v2075 = vadd.f32 %v2074, 0.4994258
    %v2076 = vmul.f32 %v2056, %v2075
    %v2077 = vadd.f32 %v2076, 1.0
    %v2078 = vrcp.pop %v2077
    %v2079 = vmul.f32 %v2077, %v2078
    %v2080 = vsub.f32 1.0, %v2079
    %v2081 = vmul.f32 %v2078, %v2080
    %v2082 = vadd.f32 %v2078, %v2081
    %vm2083 = vweird.f32 %v2077
    %vm2084 = vweird.f32 %v2078
    %vm2085 = vmor %vm2083, %vm2084
    %v2086 = vsel %vm2085, %v2078, %v2082
    %v2087 = vand.u32 2147483647, %v2077
    %vm2088 = vcmp.eq.f32.partialorder %v2087, 8.507059e+37
    %v2089 = vand.u32 %v2077, 2147483648
    %v2090 = vor.u32 1.1754944e-38, %v2089
    %v2091 = vsel %vm2088, %v2090, %v2086
    %v2092 = vmul.f32 %v2067, %v2091
    %v2093 = vmin.f32 %v2092, 1.0
    %v2094 = vmax.f32 %v2093, -1.0
    %v2095 = vmul.f32 %v1322, %v1322
    %v2096 = vmin.f32 16.0, %v2095
    %v2097 = vmul.f32 %v2096, 2.1237322e-06
    %v2098 = vadd.f32 %v2097, 0.00028619796
    %v2099 = vmul.f32 %v2096, %v2098
    %v2100 = vadd.f32 %v2099, 0.0036580483
    %v2101 = vmul.f32 %v2096, %v2100
    %v2102 = vadd.f32 %v2101, 0.05243302
    %v2103 = vmul.f32 %v2096, %v2102
    %v2104 = vadd.f32 %v2103, 0.18741608
    %v2105 = vmul.f32 %v2096, %v2104
    %v2106 = vadd.f32 %v2105, 1.1283791
    %v2107 = vmul.f32 %v1322, %v2106
    %v2108 = vmul.f32 %v2096, 3.8918573e-05
    %v2109 = vadd.f32 %v2108, 0.001143296
    %v2110 = vmul.f32 %v2096, %v2109
    %v2111 = vadd.f32 %v2110, 0.014752088
    %v2112 = vmul.f32 %v2096, %v2111
    %v2113 = vadd.f32 %v2112, 0.112945676
    %v2114 = vmul.f32 %v2096, %v2113
    %v2115 = vadd.f32 %v2114, 0.4994258
    %v2116 = vmul.f32 %v2096, %v2115
    %v2117 = vadd.f32 %v2116, 1.0
    %v2118 = vrcp.pop %v2117
    %v2119 = vmul.f32 %v2117, %v2118
    %v2120 = vsub.f32 1.0, %v2119
    %v2121 = vmul.f32 %v2118, %v2120
    %v2122 = vadd.f32 %v2118, %v2121
    %vm2123 = vweird.f32 %v2117
    %vm2124 = vweird.f32 %v2118
    %vm2125 = vmor %vm2123, %vm2124
    %v2126 = vsel %vm2125, %v2118, %v2122
    %v2127 = vand.u32 2147483647, %v2117
    %vm2128 = vcmp.eq.f32.partialorder %v2127, 8.507059e+37
    %v2129 = vand.u32 %v2117, 2147483648
    %v2130 = vor.u32 1.1754944e-38, %v2129
    %v2131 = vsel %vm2128, %v2130, %v2126
    %v2132 = vmul.f32 %v2107, %v2131
    %v2133 = vmin.f32 %v2132, 1.0
    %v2134 = vmax.f32 %v2133, -1.0
    %v2135 = vmul.f32 %v1323, %v1323
    %v2136 = vmin.f32 16.0, %v2135
    %v2137 = vmul.f32 %v2136, 2.1237322e-06
    %v2138 = vadd.f32 %v2137, 0.00028619796
    %v2139 = vmul.f32 %v2136, %v2138
    %v2140 = vadd.f32 %v2139, 0.0036580483
    %v2141 = vmul.f32 %v2136, %v2140
    %v2142 = vadd.f32 %v2141, 0.05243302
    %v2143 = vmul.f32 %v2136, %v2142
    %v2144 = vadd.f32 %v2143, 0.18741608
    %v2145 = vmul.f32 %v2136, %v2144
    %v2146 = vadd.f32 %v2145, 1.1283791
    %v2147 = vmul.f32 %v1323, %v2146
    %v2148 = vmul.f32 %v2136, 3.8918573e-05
    %v2149 = vadd.f32 %v2148, 0.001143296
    %v2150 = vmul.f32 %v2136, %v2149
    %v2151 = vadd.f32 %v2150, 0.014752088
    %v2152 = vmul.f32 %v2136, %v2151
    %v2153 = vadd.f32 %v2152, 0.112945676
    %v2154 = vmul.f32 %v2136, %v2153
    %v2155 = vadd.f32 %v2154, 0.4994258
    %v2156 = vmul.f32 %v2136, %v2155
    %v2157 = vadd.f32 %v2156, 1.0
    %v2158 = vrcp.pop %v2157
    %v2159 = vmul.f32 %v2157, %v2158
    %v2160 = vsub.f32 1.0, %v2159
    %v2161 = vmul.f32 %v2158, %v2160
    %v2162 = vadd.f32 %v2158, %v2161
    %vm2163 = vweird.f32 %v2157
    %vm2164 = vweird.f32 %v2158
    %vm2165 = vmor %vm2163, %vm2164
    %v2166 = vsel %vm2165, %v2158, %v2162
    %v2167 = vand.u32 2147483647, %v2157
    %vm2168 = vcmp.eq.f32.partialorder %v2167, 8.507059e+37
    %v2169 = vand.u32 %v2157, 2147483648
    %v2170 = vor.u32 1.1754944e-38, %v2169
    %v2171 = vsel %vm2168, %v2170, %v2166
    %v2172 = vmul.f32 %v2147, %v2171
    %v2173 = vmin.f32 %v2172, 1.0
    %v2174 = vmax.f32 %v2173, -1.0
    %v2175 = vmul.f32 %v1324, %v1324
    %v2176 = vmin.f32 16.0, %v2175
    %v2177 = vmul.f32 %v2176, 2.1237322e-06
    %v2178 = vadd.f32 %v2177, 0.00028619796
    %v2179 = vmul.f32 %v2176, %v2178
    %v2180 = vadd.f32 %v2179, 0.0036580483
    %v2181 = vmul.f32 %v2176, %v2180
    %v2182 = vadd.f32 %v2181, 0.05243302
    %v2183 = vmul.f32 %v2176, %v2182
    %v2184 = vadd.f32 %v2183, 0.18741608
    %v2185 = vmul.f32 %v2176, %v2184
    %v2186 = vadd.f32 %v2185, 1.1283791
    %v2187 = vmul.f32 %v1324, %v2186
    %v2188 = vmul.f32 %v2176, 3.8918573e-05
    %v2189 = vadd.f32 %v2188, 0.001143296
    %v2190 = vmul.f32 %v2176, %v2189
    %v2191 = vadd.f32 %v2190, 0.014752088
    %v2192 = vmul.f32 %v2176, %v2191
    %v2193 = vadd.f32 %v2192, 0.112945676
    %v2194 = vmul.f32 %v2176, %v2193
    %v2195 = vadd.f32 %v2194, 0.4994258
    %v2196 = vmul.f32 %v2176, %v2195
    %v2197 = vadd.f32 %v2196, 1.0
    %v2198 = vrcp.pop %v2197
    %v2199 = vmul.f32 %v2197, %v2198
    %v2200 = vsub.f32 1.0, %v2199
    %v2201 = vmul.f32 %v2198, %v2200
    %v2202 = vadd.f32 %v2198, %v2201
    %vm2203 = vweird.f32 %v2197
    %vm2204 = vweird.f32 %v2198
    %vm2205 = vmor %vm2203, %vm2204
    %v2206 = vsel %vm2205, %v2198, %v2202
    %v2207 = vand.u32 2147483647, %v2197
    %vm2208 = vcmp.eq.f32.partialorder %v2207, 8.507059e+37
    %v2209 = vand.u32 %v2197, 2147483648
    %v2210 = vor.u32 1.1754944e-38, %v2209
    %v2211 = vsel %vm2208, %v2210, %v2206
    %v2212 = vmul.f32 %v2187, %v2211
    %v2213 = vmin.f32 %v2212, 1.0
    %v2214 = vmax.f32 %v2213, -1.0
    %v2215 = vmul.f32 %v1325, %v1325
    %v2216 = vmin.f32 16.0, %v2215
    %v2217 = vmul.f32 %v2216, 2.1237322e-06
    %v2218 = vadd.f32 %v2217, 0.00028619796
    %v2219 = vmul.f32 %v2216, %v2218
    %v2220 = vadd.f32 %v2219, 0.0036580483
    %v2221 = vmul.f32 %v2216, %v2220
    %v2222 = vadd.f32 %v2221, 0.05243302
    %v2223 = vmul.f32 %v2216, %v2222
    %v2224 = vadd.f32 %v2223, 0.18741608
    %v2225 = vmul.f32 %v2216, %v2224
    %v2226 = vadd.f32 %v2225, 1.1283791
    %v2227 = vmul.f32 %v1325, %v2226
    %v2228 = vmul.f32 %v2216, 3.8918573e-05
    %v2229 = vadd.f32 %v2228, 0.001143296
    %v2230 = vmul.f32 %v2216, %v2229
    %v2231 = vadd.f32 %v2230, 0.014752088
    %v2232 = vmul.f32 %v2216, %v2231
    %v2233 = vadd.f32 %v2232, 0.112945676
    %v2234 = vmul.f32 %v2216, %v2233
    %v2235 = vadd.f32 %v2234, 0.4994258
    %v2236 = vmul.f32 %v2216, %v2235
    %v2237 = vadd.f32 %v2236, 1.0
    %v2238 = vrcp.pop %v2237
    %v2239 = vmul.f32 %v2237, %v2238
    %v2240 = vsub.f32 1.0, %v2239
    %v2241 = vmul.f32 %v2238, %v2240
    %v2242 = vadd.f32 %v2238, %v2241
    %vm2243 = vweird.f32 %v2237
    %vm2244 = vweird.f32 %v2238
    %vm2245 = vmor %vm2243, %vm2244
    %v2246 = vsel %vm2245, %v2238, %v2242
    %v2247 = vand.u32 2147483647, %v2237
    %vm2248 = vcmp.eq.f32.partialorder %v2247, 8.507059e+37
    %v2249 = vand.u32 %v2237, 2147483648
    %v2250 = vor.u32 1.1754944e-38, %v2249
    %v2251 = vsel %vm2248, %v2250, %v2246
    %v2252 = vmul.f32 %v2227, %v2251
    %v2253 = vmin.f32 %v2252, 1.0
    %v2254 = vmax.f32 %v2253, -1.0
    %v2255 = vmul.f32 %v1326, %v1326
    %v2256 = vmin.f32 16.0, %v2255
    %v2257 = vmul.f32 %v2256, 2.1237322e-06
    %v2258 = vadd.f32 %v2257, 0.00028619796
    %v2259 = vmul.f32 %v2256, %v2258
    %v2260 = vadd.f32 %v2259, 0.0036580483
    %v2261 = vmul.f32 %v2256, %v2260
    %v2262 = vadd.f32 %v2261, 0.05243302
    %v2263 = vmul.f32 %v2256, %v2262
    %v2264 = vadd.f32 %v2263, 0.18741608
    %v2265 = vmul.f32 %v2256, %v2264
    %v2266 = vadd.f32 %v2265, 1.1283791
    %v2267 = vmul.f32 %v1326, %v2266
    %v2268 = vmul.f32 %v2256, 3.8918573e-05
    %v2269 = vadd.f32 %v2268, 0.001143296
    %v2270 = vmul.f32 %v2256, %v2269
    %v2271 = vadd.f32 %v2270, 0.014752088
    %v2272 = vmul.f32 %v2256, %v2271
    %v2273 = vadd.f32 %v2272, 0.112945676
    %v2274 = vmul.f32 %v2256, %v2273
    %v2275 = vadd.f32 %v2274, 0.4994258
    %v2276 = vmul.f32 %v2256, %v2275
    %v2277 = vadd.f32 %v2276, 1.0
    %v2278 = vrcp.pop %v2277
    %v2279 = vmul.f32 %v2277, %v2278
    %v2280 = vsub.f32 1.0, %v2279
    %v2281 = vmul.f32 %v2278, %v2280
    %v2282 = vadd.f32 %v2278, %v2281
    %vm2283 = vweird.f32 %v2277
    %vm2284 = vweird.f32 %v2278
    %vm2285 = vmor %vm2283, %vm2284
    %v2286 = vsel %vm2285, %v2278, %v2282
    %v2287 = vand.u32 2147483647, %v2277
    %vm2288 = vcmp.eq.f32.partialorder %v2287, 8.507059e+37
    %v2289 = vand.u32 %v2277, 2147483648
    %v2290 = vor.u32 1.1754944e-38, %v2289
    %v2291 = vsel %vm2288, %v2290, %v2286
    %v2292 = vmul.f32 %v2267, %v2291
    %v2293 = vmin.f32 %v2292, 1.0
    %v2294 = vmax.f32 %v2293, -1.0
    %v2295 = vmul.f32 %v1327, %v1327
    %v2296 = vmin.f32 16.0, %v2295
    %v2297 = vmul.f32 %v2296, 2.1237322e-06
    %v2298 = vadd.f32 %v2297, 0.00028619796
    %v2299 = vmul.f32 %v2296, %v2298
    %v2300 = vadd.f32 %v2299, 0.0036580483
    %v2301 = vmul.f32 %v2296, %v2300
    %v2302 = vadd.f32 %v2301, 0.05243302
    %v2303 = vmul.f32 %v2296, %v2302
    %v2304 = vadd.f32 %v2303, 0.18741608
    %v2305 = vmul.f32 %v2296, %v2304
    %v2306 = vadd.f32 %v2305, 1.1283791
    %v2307 = vmul.f32 %v1327, %v2306
    %v2308 = vmul.f32 %v2296, 3.8918573e-05
    %v2309 = vadd.f32 %v2308, 0.001143296
    %v2310 = vmul.f32 %v2296, %v2309
    %v2311 = vadd.f32 %v2310, 0.014752088
    %v2312 = vmul.f32 %v2296, %v2311
    %v2313 = vadd.f32 %v2312, 0.112945676
    %v2314 = vmul.f32 %v2296, %v2313
    %v2315 = vadd.f32 %v2314, 0.4994258
    %v2316 = vmul.f32 %v2296, %v2315
    %v2317 = vadd.f32 %v2316, 1.0
    %v2318 = vrcp.pop %v2317
    %v2319 = vmul.f32 %v2317, %v2318
    %v2320 = vsub.f32 1.0, %v2319
    %v2321 = vmul.f32 %v2318, %v2320
    %v2322 = vadd.f32 %v2318, %v2321
    %vm2323 = vweird.f32 %v2317
    %vm2324 = vweird.f32 %v2318
    %vm2325 = vmor %vm2323, %vm2324
    %v2326 = vsel %vm2325, %v2318, %v2322
    %v2327 = vand.u32 2147483647, %v2317
    %vm2328 = vcmp.eq.f32.partialorder %v2327, 8.507059e+37
    %v2329 = vand.u32 %v2317, 2147483648
    %v2330 = vor.u32 1.1754944e-38, %v2329
    %v2331 = vsel %vm2328, %v2330, %v2326
    %v2332 = vmul.f32 %v2307, %v2331
    %v2333 = vmin.f32 %v2332, 1.0
    %v2334 = vmax.f32 %v2333, -1.0
    %v2335 = vmul.f32 %v1328, %v1328
    %v2336 = vmin.f32 16.0, %v2335
    %v2337 = vmul.f32 %v2336, 2.1237322e-06
    %v2338 = vadd.f32 %v2337, 0.00028619796
    %v2339 = vmul.f32 %v2336, %v2338
    %v2340 = vadd.f32 %v2339, 0.0036580483
    %v2341 = vmul.f32 %v2336, %v2340
    %v2342 = vadd.f32 %v2341, 0.05243302
    %v2343 = vmul.f32 %v2336, %v2342
    %v2344 = vadd.f32 %v2343, 0.18741608
    %v2345 = vmul.f32 %v2336, %v2344
    %v2346 = vadd.f32 %v2345, 1.1283791
    %v2347 = vmul.f32 %v1328, %v2346
    %v2348 = vmul.f32 %v2336, 3.8918573e-05
    %v2349 = vadd.f32 %v2348, 0.001143296
    %v2350 = vmul.f32 %v2336, %v2349
    %v2351 = vadd.f32 %v2350, 0.014752088
    %v2352 = vmul.f32 %v2336, %v2351
    %v2353 = vadd.f32 %v2352, 0.112945676
    %v2354 = vmul.f32 %v2336, %v2353
    %v2355 = vadd.f32 %v2354, 0.4994258
    %v2356 = vmul.f32 %v2336, %v2355
    %v2357 = vadd.f32 %v2356, 1.0
    %v2358 = vrcp.pop %v2357
    %v2359 = vmul.f32 %v2357, %v2358
    %v2360 = vsub.f32 1.0, %v2359
    %v2361 = vmul.f32 %v2358, %v2360
    %v2362 = vadd.f32 %v2358, %v2361
    %vm2363 = vweird.f32 %v2357
    %vm2364 = vweird.f32 %v2358
    %vm2365 = vmor %vm2363, %vm2364
    %v2366 = vsel %vm2365, %v2358, %v2362
    %v2367 = vand.u32 2147483647, %v2357
    %vm2368 = vcmp.eq.f32.partialorder %v2367, 8.507059e+37
    %v2369 = vand.u32 %v2357, 2147483648
    %v2370 = vor.u32 1.1754944e-38, %v2369
    %v2371 = vsel %vm2368, %v2370, %v2366
    %v2372 = vmul.f32 %v2347, %v2371
    %v2373 = vmin.f32 %v2372, 1.0
    %v2374 = vmax.f32 %v2373, -1.0
    %v2375 = vmul.f32 %v1329, %v1329
    %v2376 = vmin.f32 16.0, %v2375
    %v2377 = vmul.f32 %v2376, 2.1237322e-06
    %v2378 = vadd.f32 %v2377, 0.00028619796
    %v2379 = vmul.f32 %v2376, %v2378
    %v2380 = vadd.f32 %v2379, 0.0036580483
    %v2381 = vmul.f32 %v2376, %v2380
    %v2382 = vadd.f32 %v2381, 0.05243302
    %v2383 = vmul.f32 %v2376, %v2382
    %v2384 = vadd.f32 %v2383, 0.18741608
    %v2385 = vmul.f32 %v2376, %v2384
    %v2386 = vadd.f32 %v2385, 1.1283791
    %v2387 = vmul.f32 %v1329, %v2386
    %v2388 = vmul.f32 %v2376, 3.8918573e-05
    %v2389 = vadd.f32 %v2388, 0.001143296
    %v2390 = vmul.f32 %v2376, %v2389
    %v2391 = vadd.f32 %v2390, 0.014752088
    %v2392 = vmul.f32 %v2376, %v2391
    %v2393 = vadd.f32 %v2392, 0.112945676
    %v2394 = vmul.f32 %v2376, %v2393
    %v2395 = vadd.f32 %v2394, 0.4994258
    %v2396 = vmul.f32 %v2376, %v2395
    %v2397 = vadd.f32 %v2396, 1.0
    %v2398 = vrcp.pop %v2397
    %v2399 = vmul.f32 %v2397, %v2398
    %v2400 = vsub.f32 1.0, %v2399
    %v2401 = vmul.f32 %v2398, %v2400
    %v2402 = vadd.f32 %v2398, %v2401
    %vm2403 = vweird.f32 %v2397
    %vm2404 = vweird.f32 %v2398
    %vm2405 = vmor %vm2403, %vm2404
    %v2406 = vsel %vm2405, %v2398, %v2402
    %v2407 = vand.u32 2147483647, %v2397
    %vm2408 = vcmp.eq.f32.partialorder %v2407, 8.507059e+37
    %v2409 = vand.u32 %v2397, 2147483648
    %v2410 = vor.u32 1.1754944e-38, %v2409
    %v2411 = vsel %vm2408, %v2410, %v2406
    %v2412 = vmul.f32 %v2387, %v2411
    %v2413 = vmin.f32 %v2412, 1.0
    %v2414 = vmax.f32 %v2413, -1.0
    %v2415 = vmul.f32 %v1330, %v1330
    %v2416 = vmin.f32 16.0, %v2415
    %v2417 = vmul.f32 %v2416, 2.1237322e-06
    %v2418 = vadd.f32 %v2417, 0.00028619796
    %v2419 = vmul.f32 %v2416, %v2418
    %v2420 = vadd.f32 %v2419, 0.0036580483
    %v2421 = vmul.f32 %v2416, %v2420
    %v2422 = vadd.f32 %v2421, 0.05243302
    %v2423 = vmul.f32 %v2416, %v2422
    %v2424 = vadd.f32 %v2423, 0.18741608
    %v2425 = vmul.f32 %v2416, %v2424
    %v2426 = vadd.f32 %v2425, 1.1283791
    %v2427 = vmul.f32 %v1330, %v2426
    %v2428 = vmul.f32 %v2416, 3.8918573e-05
    %v2429 = vadd.f32 %v2428, 0.001143296
    %v2430 = vmul.f32 %v2416, %v2429
    %v2431 = vadd.f32 %v2430, 0.014752088
    %v2432 = vmul.f32 %v2416, %v2431
    %v2433 = vadd.f32 %v2432, 0.112945676
    %v2434 = vmul.f32 %v2416, %v2433
    %v2435 = vadd.f32 %v2434, 0.4994258
    %v2436 = vmul.f32 %v2416, %v2435
    %v2437 = vadd.f32 %v2436, 1.0
    %v2438 = vrcp.pop %v2437
    %v2439 = vmul.f32 %v2437, %v2438
    %v2440 = vsub.f32 1.0, %v2439
    %v2441 = vmul.f32 %v2438, %v2440
    %v2442 = vadd.f32 %v2438, %v2441
    %vm2443 = vweird.f32 %v2437
    %vm2444 = vweird.f32 %v2438
    %vm2445 = vmor %vm2443, %vm2444
    %v2446 = vsel %vm2445, %v2438, %v2442
    %v2447 = vand.u32 2147483647, %v2437
    %vm2448 = vcmp.eq.f32.partialorder %v2447, 8.507059e+37
    %v2449 = vand.u32 %v2437, 2147483648
    %v2450 = vor.u32 1.1754944e-38, %v2449
    %v2451 = vsel %vm2448, %v2450, %v2446
    %v2452 = vmul.f32 %v2427, %v2451
    %v2453 = vmin.f32 %v2452, 1.0
    %v2454 = vmax.f32 %v2453, -1.0
    %v2455 = vmul.f32 %v1331, %v1331
    %v2456 = vmin.f32 16.0, %v2455
    %v2457 = vmul.f32 %v2456, 2.1237322e-06
    %v2458 = vadd.f32 %v2457, 0.00028619796
    %v2459 = vmul.f32 %v2456, %v2458
    %v2460 = vadd.f32 %v2459, 0.0036580483
    %v2461 = vmul.f32 %v2456, %v2460
    %v2462 = vadd.f32 %v2461, 0.05243302
    %v2463 = vmul.f32 %v2456, %v2462
    %v2464 = vadd.f32 %v2463, 0.18741608
    %v2465 = vmul.f32 %v2456, %v2464
    %v2466 = vadd.f32 %v2465, 1.1283791
    %v2467 = vmul.f32 %v1331, %v2466
    %v2468 = vmul.f32 %v2456, 3.8918573e-05
    %v2469 = vadd.f32 %v2468, 0.001143296
    %v2470 = vmul.f32 %v2456, %v2469
    %v2471 = vadd.f32 %v2470, 0.014752088
    %v2472 = vmul.f32 %v2456, %v2471
    %v2473 = vadd.f32 %v2472, 0.112945676
    %v2474 = vmul.f32 %v2456, %v2473
    %v2475 = vadd.f32 %v2474, 0.4994258
    %v2476 = vmul.f32 %v2456, %v2475
    %v2477 = vadd.f32 %v2476, 1.0
    %v2478 = vrcp.pop %v2477
    %v2479 = vmul.f32 %v2477, %v2478
    %v2480 = vsub.f32 1.0, %v2479
    %v2481 = vmul.f32 %v2478, %v2480
    %v2482 = vadd.f32 %v2478, %v2481
    %vm2483 = vweird.f32 %v2477
    %vm2484 = vweird.f32 %v2478
    %vm2485 = vmor %vm2483, %vm2484
    %v2486 = vsel %vm2485, %v2478, %v2482
    %v2487 = vand.u32 2147483647, %v2477
    %vm2488 = vcmp.eq.f32.partialorder %v2487, 8.507059e+37
    %v2489 = vand.u32 %v2477, 2147483648
    %v2490 = vor.u32 1.1754944e-38, %v2489
    %v2491 = vsel %vm2488, %v2490, %v2486
    %v2492 = vmul.f32 %v2467, %v2491
    %v2493 = vmin.f32 %v2492, 1.0
    %v2494 = vmax.f32 %v2493, -1.0
    %v2495 = vmul.f32 %v1332, %v1332
    %v2496 = vmin.f32 16.0, %v2495
    %v2497 = vmul.f32 %v2496, 2.1237322e-06
    %v2498 = vadd.f32 %v2497, 0.00028619796
    %v2499 = vmul.f32 %v2496, %v2498
    %v2500 = vadd.f32 %v2499, 0.0036580483
    %v2501 = vmul.f32 %v2496, %v2500
    %v2502 = vadd.f32 %v2501, 0.05243302
    %v2503 = vmul.f32 %v2496, %v2502
    %v2504 = vadd.f32 %v2503, 0.18741608
    %v2505 = vmul.f32 %v2496, %v2504
    %v2506 = vadd.f32 %v2505, 1.1283791
    %v2507 = vmul.f32 %v1332, %v2506
    %v2508 = vmul.f32 %v2496, 3.8918573e-05
    %v2509 = vadd.f32 %v2508, 0.001143296
    %v2510 = vmul.f32 %v2496, %v2509
    %v2511 = vadd.f32 %v2510, 0.014752088
    %v2512 = vmul.f32 %v2496, %v2511
    %v2513 = vadd.f32 %v2512, 0.112945676
    %v2514 = vmul.f32 %v2496, %v2513
    %v2515 = vadd.f32 %v2514, 0.4994258
    %v2516 = vmul.f32 %v2496, %v2515
    %v2517 = vadd.f32 %v2516, 1.0
    %v2518 = vrcp.pop %v2517
    %v2519 = vmul.f32 %v2517, %v2518
    %v2520 = vsub.f32 1.0, %v2519
    %v2521 = vmul.f32 %v2518, %v2520
    %v2522 = vadd.f32 %v2518, %v2521
    %vm2523 = vweird.f32 %v2517
    %vm2524 = vweird.f32 %v2518
    %vm2525 = vmor %vm2523, %vm2524
    %v2526 = vsel %vm2525, %v2518, %v2522
    %v2527 = vand.u32 2147483647, %v2517
    %vm2528 = vcmp.eq.f32.partialorder %v2527, 8.507059e+37
    %v2529 = vand.u32 %v2517, 2147483648
    %v2530 = vor.u32 1.1754944e-38, %v2529
    %v2531 = vsel %vm2528, %v2530, %v2526
    %v2532 = vmul.f32 %v2507, %v2531
    %v2533 = vmin.f32 %v2532, 1.0
    %v2534 = vmax.f32 %v2533, -1.0
    %v2535 = vmul.f32 %v1333, %v1333
    %v2536 = vmin.f32 16.0, %v2535
    %v2537 = vmul.f32 %v2536, 2.1237322e-06
    %v2538 = vadd.f32 %v2537, 0.00028619796
    %v2539 = vmul.f32 %v2536, %v2538
    %v2540 = vadd.f32 %v2539, 0.0036580483
    %v2541 = vmul.f32 %v2536, %v2540
    %v2542 = vadd.f32 %v2541, 0.05243302
    %v2543 = vmul.f32 %v2536, %v2542
    %v2544 = vadd.f32 %v2543, 0.18741608
    %v2545 = vmul.f32 %v2536, %v2544
    %v2546 = vadd.f32 %v2545, 1.1283791
    %v2547 = vmul.f32 %v1333, %v2546
    %v2548 = vmul.f32 %v2536, 3.8918573e-05
    %v2549 = vadd.f32 %v2548, 0.001143296
    %v2550 = vmul.f32 %v2536, %v2549
    %v2551 = vadd.f32 %v2550, 0.014752088
    %v2552 = vmul.f32 %v2536, %v2551
    %v2553 = vadd.f32 %v2552, 0.112945676
    %v2554 = vmul.f32 %v2536, %v2553
    %v2555 = vadd.f32 %v2554, 0.4994258
    %v2556 = vmul.f32 %v2536, %v2555
    %v2557 = vadd.f32 %v2556, 1.0
    %v2558 = vrcp.pop %v2557
    %v2559 = vmul.f32 %v2557, %v2558
    %v2560 = vsub.f32 1.0, %v2559
    %v2561 = vmul.f32 %v2558, %v2560
    %v2562 = vadd.f32 %v2558, %v2561
    %vm2563 = vweird.f32 %v2557
    %vm2564 = vweird.f32 %v2558
    %vm2565 = vmor %vm2563, %vm2564
    %v2566 = vsel %vm2565, %v2558, %v2562
    %v2567 = vand.u32 2147483647, %v2557
    %vm2568 = vcmp.eq.f32.partialorder %v2567, 8.507059e+37
    %v2569 = vand.u32 %v2557, 2147483648
    %v2570 = vor.u32 1.1754944e-38, %v2569
    %v2571 = vsel %vm2568, %v2570, %v2566
    %v2572 = vmul.f32 %v2547, %v2571
    %v2573 = vmin.f32 %v2572, 1.0
    %v2574 = vmax.f32 %v2573, -1.0
    %v2575 = vmul.f32 %v1334, %v1334
    %v2576 = vmin.f32 16.0, %v2575
    %v2577 = vmul.f32 %v2576, 2.1237322e-06
    %v2578 = vadd.f32 %v2577, 0.00028619796
    %v2579 = vmul.f32 %v2576, %v2578
    %v2580 = vadd.f32 %v2579, 0.0036580483
    %v2581 = vmul.f32 %v2576, %v2580
    %v2582 = vadd.f32 %v2581, 0.05243302
    %v2583 = vmul.f32 %v2576, %v2582
    %v2584 = vadd.f32 %v2583, 0.18741608
    %v2585 = vmul.f32 %v2576, %v2584
    %v2586 = vadd.f32 %v2585, 1.1283791
    %v2587 = vmul.f32 %v1334, %v2586
    %v2588 = vmul.f32 %v2576, 3.8918573e-05
    %v2589 = vadd.f32 %v2588, 0.001143296
    %v2590 = vmul.f32 %v2576, %v2589
    %v2591 = vadd.f32 %v2590, 0.014752088
    %v2592 = vmul.f32 %v2576, %v2591
    %v2593 = vadd.f32 %v2592, 0.112945676
    %v2594 = vmul.f32 %v2576, %v2593
    %v2595 = vadd.f32 %v2594, 0.4994258
    %v2596 = vmul.f32 %v2576, %v2595
    %v2597 = vadd.f32 %v2596, 1.0
    %v2598 = vrcp.pop %v2597
    %v2599 = vmul.f32 %v2597, %v2598
    %v2600 = vsub.f32 1.0, %v2599
    %v2601 = vmul.f32 %v2598, %v2600
    %v2602 = vadd.f32 %v2598, %v2601
    %vm2603 = vweird.f32 %v2597
    %vm2604 = vweird.f32 %v2598
    %vm2605 = vmor %vm2603, %vm2604
    %v2606 = vsel %vm2605, %v2598, %v2602
    %v2607 = vand.u32 2147483647, %v2597
    %vm2608 = vcmp.eq.f32.partialorder %v2607, 8.507059e+37
    %v2609 = vand.u32 %v2597, 2147483648
    %v2610 = vor.u32 1.1754944e-38, %v2609
    %v2611 = vsel %vm2608, %v2610, %v2606
    %v2612 = vmul.f32 %v2587, %v2611
    %v2613 = vmin.f32 %v2612, 1.0
    %v2614 = vmax.f32 %v2613, -1.0
    %v2615 = vadd.f32 %v1374, 1.0
    %v2616 = vadd.f32 %v1414, 1.0
    %v2617 = vadd.f32 %v1454, 1.0
    %v2618 = vadd.f32 %v1494, 1.0
    %v2619 = vadd.f32 %v1534, 1.0
    %v2620 = vadd.f32 %v1574, 1.0
    %v2621 = vadd.f32 %v1614, 1.0
    %v2622 = vadd.f32 %v1654, 1.0
    %v2623 = vadd.f32 %v1694, 1.0
    %v2624 = vadd.f32 %v1734, 1.0
    %v2625 = vadd.f32 %v1774, 1.0
    %v2626 = vadd.f32 %v1814, 1.0
    %v2627 = vadd.f32 %v1854, 1.0
    %v2628 = vadd.f32 %v1894, 1.0
    %v2629 = vadd.f32 %v1934, 1.0
    %v2630 = vadd.f32 %v1974, 1.0
    %v2631 = vadd.f32 %v2014, 1.0
    %v2632 = vadd.f32 %v2054, 1.0
    %v2633 = vadd.f32 %v2094, 1.0
    %v2634 = vadd.f32 %v2134, 1.0
    %v2635 = vadd.f32 %v2174, 1.0
    %v2636 = vadd.f32 %v2214, 1.0
    %v2637 = vadd.f32 %v2254, 1.0
    %v2638 = vadd.f32 %v2294, 1.0
    %v2639 = vadd.f32 %v2334, 1.0
    %v2640 = vadd.f32 %v2374, 1.0
    %v2641 = vadd.f32 %v2414, 1.0
    %v2642 = vadd.f32 %v2454, 1.0
    %v2643 = vadd.f32 %v2494, 1.0
    %v2644 = vadd.f32 %v2534, 1.0
    %v2645 = vadd.f32 %v2574, 1.0
    %v2646 = vadd.f32 %v2614, 1.0
    %v2647 = vmul.f32 %v1271, %v2615
    %v2648 = vmul.f32 %v1272, %v2616
    %v2649 = vmul.f32 %v1273, %v2617
    %v2650 = vmul.f32 %v1274, %v2618
    %v2651 = vmul.f32 %v1275, %v2619
    %v2652 = vmul.f32 %v1276, %v2620
    %v2653 = vmul.f32 %v1277, %v2621
    %v2654 = vmul.f32 %v1278, %v2622
    %v2655 = vmul.f32 %v1279, %v2623
    %v2656 = vmul.f32 %v1280, %v2624
    %v2657 = vmul.f32 %v1281, %v2625
    %v2658 = vmul.f32 %v1282, %v2626
    %v2659 = vmul.f32 %v1283, %v2627
    %v2660 = vmul.f32 %v1284, %v2628
    %v2661 = vmul.f32 %v1285, %v2629
    %v2662 = vmul.f32 %v1286, %v2630
    %v2663 = vmul.f32 %v1287, %v2631
    %v2664 = vmul.f32 %v1288, %v2632
    %v2665 = vmul.f32 %v1289, %v2633
    %v2666 = vmul.f32 %v1290, %v2634
    %v2667 = vmul.f32 %v1291, %v2635
    %v2668 = vmul.f32 %v1292, %v2636
    %v2669 = vmul.f32 %v1293, %v2637
    %v2670 = vmul.f32 %v1294, %v2638
    %v2671 = vmul.f32 %v1295, %v2639
    %v2672 = vmul.f32 %v1296, %v2640
    %v2673 = vmul.f32 %v1297, %v2641
    %v2674 = vmul.f32 %v1298, %v2642
    %v2675 = vmul.f32 %v1299, %v2643
    %v2676 = vmul.f32 %v1300, %v2644
    %v2677 = vmul.f32 %v1301, %v2645
    %v2678 = vmul.f32 %v1302, %v2646
    %v2679 = vpack.c.bf16 %v2651, %v2647
    %v2680 = vpack.c.bf16 %v2652, %v2648
    %v2681 = vpack.c.bf16 %v2653, %v2649
    %v2682 = vpack.c.bf16 %v2654, %v2650
    %v2683 = vpack.c.bf16 %v2659, %v2655
    %v2684 = vpack.c.bf16 %v2660, %v2656
    %v2685 = vpack.c.bf16 %v2661, %v2657
    %v2686 = vpack.c.bf16 %v2662, %v2658
    %v2687 = vpack.c.bf16 %v2667, %v2663
    %v2688 = vpack.c.bf16 %v2668, %v2664
    %v2689 = vpack.c.bf16 %v2669, %v2665
    %v2690 = vpack.c.bf16 %v2670, %v2666
    %v2691 = vpack.c.bf16 %v2675, %v2671
    %v2692 = vpack.c.bf16 %v2676, %v2672
    %v2693 = vpack.c.bf16 %v2677, %v2673
    %v2694 = vpack.c.bf16 %v2678, %v2674
    %v2695 = vld [vmem:[#allocation5] sm:$0xff]
    %v2696 = vld [vmem:[#allocation5 + $0x8] sm:$0xff]
    %v2697 = vld [vmem:[#allocation5 + $0x10] sm:$0xff]
    %v2698 = vld [vmem:[#allocation5 + $0x18] sm:$0xff]
    %v2699 = vld [vmem:[#allocation5 + $0x20] sm:$0xff]
    %v2700 = vld [vmem:[#allocation5 + $0x28] sm:$0xff]
    %v2701 = vld [vmem:[#allocation5 + $0x30] sm:$0xff]
    %v2702 = vld [vmem:[#allocation5 + $0x38] sm:$0xff]
    %v2703 = vld [vmem:[#allocation5 + $0x40] sm:$0xff]
    %v2704 = vld [vmem:[#allocation5 + $0x48] sm:$0xff]
    %v2705 = vld [vmem:[#allocation5 + $0x50] sm:$0xff]
    %v2706 = vld [vmem:[#allocation5 + $0x58] sm:$0xff]
    %v2707 = vld [vmem:[#allocation5 + $0x60] sm:$0xff]
    %v2708 = vld [vmem:[#allocation5 + $0x68] sm:$0xff]
    %v2709 = vld [vmem:[#allocation5 + $0x70] sm:$0xff]
    %v2710 = vld [vmem:[#allocation5 + $0x78] sm:$0xff]
    %v2711 = vld [vmem:[#allocation5 + $0x80] sm:$0xff]
    %v2712 = vld [vmem:[#allocation5 + $0x88] sm:$0xff]
    %v2713 = vld [vmem:[#allocation5 + $0x90] sm:$0xff]
    %v2714 = vld [vmem:[#allocation5 + $0x98] sm:$0xff]
    %v2715 = vld [vmem:[#allocation5 + $0xa0] sm:$0xff]
    %v2716 = vld [vmem:[#allocation5 + $0xa8] sm:$0xff]
    %v2717 = vld [vmem:[#allocation5 + $0xb0] sm:$0xff]
    %v2718 = vld [vmem:[#allocation5 + $0xb8] sm:$0xff]
    %v2719 = vld [vmem:[#allocation5 + $0xc0] sm:$0xff]
    %v2720 = vld [vmem:[#allocation5 + $0xc8] sm:$0xff]
    %v2721 = vld [vmem:[#allocation5 + $0xd0] sm:$0xff]
    %v2722 = vld [vmem:[#allocation5 + $0xd8] sm:$0xff]
    %v2723 = vld [vmem:[#allocation5 + $0xe0] sm:$0xff]
    %v2724 = vld [vmem:[#allocation5 + $0xe8] sm:$0xff]
    %v2725 = vld [vmem:[#allocation5 + $0xf0] sm:$0xff]
    %v2726 = vld [vmem:[#allocation5 + $0xf8] sm:$0xff]
    %v2727 = vld [vmem:[#allocation5 + $0x100] sm:$0xff]
    %v2728 = vld [vmem:[#allocation5 + $0x108] sm:$0xff]
    %v2729 = vld [vmem:[#allocation5 + $0x110] sm:$0xff]
    %v2730 = vld [vmem:[#allocation5 + $0x118] sm:$0xff]
    %v2731 = vld [vmem:[#allocation5 + $0x120] sm:$0xff]
    %v2732 = vld [vmem:[#allocation5 + $0x128] sm:$0xff]
    %v2733 = vld [vmem:[#allocation5 + $0x130] sm:$0xff]
    %v2734 = vld [vmem:[#allocation5 + $0x138] sm:$0xff]
    %v2735 = vld [vmem:[#allocation5 + $0x140] sm:$0xff]
    %v2736 = vld [vmem:[#allocation5 + $0x148] sm:$0xff]
    %v2737 = vld [vmem:[#allocation5 + $0x150] sm:$0xff]
    %v2738 = vld [vmem:[#allocation5 + $0x158] sm:$0xff]
    %v2739 = vld [vmem:[#allocation5 + $0x160] sm:$0xff]
    %v2740 = vld [vmem:[#allocation5 + $0x168] sm:$0xff]
    %v2741 = vld [vmem:[#allocation5 + $0x170] sm:$0xff]
    %v2742 = vld [vmem:[#allocation5 + $0x178] sm:$0xff]
    %v2743 = vld [vmem:[#allocation5 + $0x180] sm:$0xff]
    %v2744 = vld [vmem:[#allocation5 + $0x188] sm:$0xff]
    %v2745 = vld [vmem:[#allocation5 + $0x190] sm:$0xff]
    %v2746 = vld [vmem:[#allocation5 + $0x198] sm:$0xff]
    %v2747 = vld [vmem:[#allocation5 + $0x1a0] sm:$0xff]
    %v2748 = vld [vmem:[#allocation5 + $0x1a8] sm:$0xff]
    %v2749 = vld [vmem:[#allocation5 + $0x1b0] sm:$0xff]
    %v2750 = vld [vmem:[#allocation5 + $0x1b8] sm:$0xff]
    %v2751 = vld [vmem:[#allocation5 + $0x1c0] sm:$0xff]
    %v2752 = vld [vmem:[#allocation5 + $0x1c8] sm:$0xff]
    %v2753 = vld [vmem:[#allocation5 + $0x1d0] sm:$0xff]
    %v2754 = vld [vmem:[#allocation5 + $0x1d8] sm:$0xff]
    %v2755 = vld [vmem:[#allocation5 + $0x1e0] sm:$0xff]
    %v2756 = vld [vmem:[#allocation5 + $0x1e8] sm:$0xff]
    %v2757 = vld [vmem:[#allocation5 + $0x1f0] sm:$0xff]
    %v2758 = vld [vmem:[#allocation5 + $0x1f8] sm:$0xff]
    %v2759 = vld [vmem:[#allocation5 + $0x200] sm:$0xff]
    %v2760 = vld [vmem:[#allocation5 + $0x208] sm:$0xff]
    %v2761 = vld [vmem:[#allocation5 + $0x210] sm:$0xff]
    %v2762 = vld [vmem:[#allocation5 + $0x218] sm:$0xff]
    %v2763 = vld [vmem:[#allocation5 + $0x220] sm:$0xff]
    %v2764 = vld [vmem:[#allocation5 + $0x228] sm:$0xff]
    %v2765 = vld [vmem:[#allocation5 + $0x230] sm:$0xff]
    %v2766 = vld [vmem:[#allocation5 + $0x238] sm:$0xff]
    %v2767 = vld [vmem:[#allocation5 + $0x240] sm:$0xff]
    %v2768 = vld [vmem:[#allocation5 + $0x248] sm:$0xff]
    %v2769 = vld [vmem:[#allocation5 + $0x250] sm:$0xff]
    %v2770 = vld [vmem:[#allocation5 + $0x258] sm:$0xff]
    %v2771 = vld [vmem:[#allocation5 + $0x260] sm:$0xff]
    %v2772 = vld [vmem:[#allocation5 + $0x268] sm:$0xff]
    %v2773 = vld [vmem:[#allocation5 + $0x270] sm:$0xff]
    %v2774 = vld [vmem:[#allocation5 + $0x278] sm:$0xff]
    %v2775 = vld [vmem:[#allocation5 + $0x280] sm:$0xff]
    %v2776 = vld [vmem:[#allocation5 + $0x288] sm:$0xff]
    %v2777 = vld [vmem:[#allocation5 + $0x290] sm:$0xff]
    %v2778 = vld [vmem:[#allocation5 + $0x298] sm:$0xff]
    %v2779 = vld [vmem:[#allocation5 + $0x2a0] sm:$0xff]
    %v2780 = vld [vmem:[#allocation5 + $0x2a8] sm:$0xff]
    %v2781 = vld [vmem:[#allocation5 + $0x2b0] sm:$0xff]
    %v2782 = vld [vmem:[#allocation5 + $0x2b8] sm:$0xff]
    %v2783 = vld [vmem:[#allocation5 + $0x2c0] sm:$0xff]
    %v2784 = vld [vmem:[#allocation5 + $0x2c8] sm:$0xff]
    %v2785 = vld [vmem:[#allocation5 + $0x2d0] sm:$0xff]
    %v2786 = vld [vmem:[#allocation5 + $0x2d8] sm:$0xff]
    %v2787 = vld [vmem:[#allocation5 + $0x2e0] sm:$0xff]
    %v2788 = vld [vmem:[#allocation5 + $0x2e8] sm:$0xff]
    %v2789 = vld [vmem:[#allocation5 + $0x2f0] sm:$0xff]
    %v2790 = vld [vmem:[#allocation5 + $0x2f8] sm:$0xff]
    %v2791 = vld [vmem:[#allocation5 + $0x300] sm:$0xff]
    %v2792 = vld [vmem:[#allocation5 + $0x308] sm:$0xff]
    %v2793 = vld [vmem:[#allocation5 + $0x310] sm:$0xff]
    %v2794 = vld [vmem:[#allocation5 + $0x318] sm:$0xff]
    %v2795 = vld [vmem:[#allocation5 + $0x320] sm:$0xff]
    %v2796 = vld [vmem:[#allocation5 + $0x328] sm:$0xff]
    %v2797 = vld [vmem:[#allocation5 + $0x330] sm:$0xff]
    %v2798 = vld [vmem:[#allocation5 + $0x338] sm:$0xff]
    %v2799 = vld [vmem:[#allocation5 + $0x340] sm:$0xff]
    %v2800 = vld [vmem:[#allocation5 + $0x348] sm:$0xff]
    %v2801 = vld [vmem:[#allocation5 + $0x350] sm:$0xff]
    %v2802 = vld [vmem:[#allocation5 + $0x358] sm:$0xff]
    %v2803 = vld [vmem:[#allocation5 + $0x360] sm:$0xff]
    %v2804 = vld [vmem:[#allocation5 + $0x368] sm:$0xff]
    %v2805 = vld [vmem:[#allocation5 + $0x370] sm:$0xff]
    %v2806 = vld [vmem:[#allocation5 + $0x378] sm:$0xff]
    %v2807 = vld [vmem:[#allocation5 + $0x380] sm:$0xff]
    %v2808 = vld [vmem:[#allocation5 + $0x388] sm:$0xff]
    %v2809 = vld [vmem:[#allocation5 + $0x390] sm:$0xff]
    %v2810 = vld [vmem:[#allocation5 + $0x398] sm:$0xff]
    %v2811 = vld [vmem:[#allocation5 + $0x3a0] sm:$0xff]
    %v2812 = vld [vmem:[#allocation5 + $0x3a8] sm:$0xff]
    %v2813 = vld [vmem:[#allocation5 + $0x3b0] sm:$0xff]
    %v2814 = vld [vmem:[#allocation5 + $0x3b8] sm:$0xff]
    %v2815 = vld [vmem:[#allocation5 + $0x3c0] sm:$0xff]
    %v2816 = vld [vmem:[#allocation5 + $0x3c8] sm:$0xff]
    %v2817 = vld [vmem:[#allocation5 + $0x3d0] sm:$0xff]
    %v2818 = vld [vmem:[#allocation5 + $0x3d8] sm:$0xff]
    %v2819 = vld [vmem:[#allocation5 + $0x3e0] sm:$0xff]
    %v2820 = vld [vmem:[#allocation5 + $0x3e8] sm:$0xff]
    %v2821 = vld [vmem:[#allocation5 + $0x3f0] sm:$0xff]
    %v2822 = vld [vmem:[#allocation5 + $0x3f8] sm:$0xff]
    %v2823 = vld [vmem:[%s7] sm:$0xf]
    %v2825 = vperm.slane %v2823, 0
    %v2826 = vperm.slane %v2823, 1
    %v2827 = vperm.slane %v2823, 2
    %v2828 = vperm.slane %v2823, 3
    %v2961 = vunpack.c.l.b16 %v2695
    %v2962 = vunpack.c.h.b16 %v2695
    %v2963 = vunpack.c.l.b16 %v2696
    %v2964 = vunpack.c.h.b16 %v2696
    %v2965 = vunpack.c.l.b16 %v2697
    %v2966 = vunpack.c.h.b16 %v2697
    %v2967 = vunpack.c.l.b16 %v2698
    %v2968 = vunpack.c.h.b16 %v2698
    %v2969 = vunpack.c.l.b16 %v2699
    %v2970 = vunpack.c.h.b16 %v2699
    %v2971 = vunpack.c.l.b16 %v2700
    %v2972 = vunpack.c.h.b16 %v2700
    %v2973 = vunpack.c.l.b16 %v2701
    %v2974 = vunpack.c.h.b16 %v2701
    %v2975 = vunpack.c.l.b16 %v2702
    %v2976 = vunpack.c.h.b16 %v2702
    %v2977 = vunpack.c.l.b16 %v2703
    %v2978 = vunpack.c.h.b16 %v2703
    %v2979 = vunpack.c.l.b16 %v2704
    %v2980 = vunpack.c.h.b16 %v2704
    %v2981 = vunpack.c.l.b16 %v2705
    %v2982 = vunpack.c.h.b16 %v2705
    %v2983 = vunpack.c.l.b16 %v2706
    %v2984 = vunpack.c.h.b16 %v2706
    %v2985 = vunpack.c.l.b16 %v2707
    %v2986 = vunpack.c.h.b16 %v2707
    %v2987 = vunpack.c.l.b16 %v2708
    %v2988 = vunpack.c.h.b16 %v2708
    %v2989 = vunpack.c.l.b16 %v2709
    %v2990 = vunpack.c.h.b16 %v2709
    %v2991 = vunpack.c.l.b16 %v2710
    %v2992 = vunpack.c.h.b16 %v2710
    %v2993 = vunpack.c.l.b16 %v2711
    %v2994 = vunpack.c.h.b16 %v2711
    %v2995 = vunpack.c.l.b16 %v2712
    %v2996 = vunpack.c.h.b16 %v2712
    %v2997 = vunpack.c.l.b16 %v2713
    %v2998 = vunpack.c.h.b16 %v2713
    %v2999 = vunpack.c.l.b16 %v2714
    %v3000 = vunpack.c.h.b16 %v2714
    %v3001 = vunpack.c.l.b16 %v2715
    %v3002 = vunpack.c.h.b16 %v2715
    %v3003 = vunpack.c.l.b16 %v2716
    %v3004 = vunpack.c.h.b16 %v2716
    %v3005 = vunpack.c.l.b16 %v2717
    %v3006 = vunpack.c.h.b16 %v2717
    %v3007 = vunpack.c.l.b16 %v2718
    %v3008 = vunpack.c.h.b16 %v2718
    %v3009 = vunpack.c.l.b16 %v2719
    %v3010 = vunpack.c.h.b16 %v2719
    %v3011 = vunpack.c.l.b16 %v2720
    %v3012 = vunpack.c.h.b16 %v2720
    %v3013 = vunpack.c.l.b16 %v2721
    %v3014 = vunpack.c.h.b16 %v2721
    %v3015 = vunpack.c.l.b16 %v2722
    %v3016 = vunpack.c.h.b16 %v2722
    %v3017 = vunpack.c.l.b16 %v2723
    %v3018 = vunpack.c.h.b16 %v2723
    %v3019 = vunpack.c.l.b16 %v2724
    %v3020 = vunpack.c.h.b16 %v2724
    %v3021 = vunpack.c.l.b16 %v2725
    %v3022 = vunpack.c.h.b16 %v2725
    %v3023 = vunpack.c.l.b16 %v2726
    %v3024 = vunpack.c.h.b16 %v2726
    %v3025 = vunpack.c.l.b16 %v2727
    %v3026 = vunpack.c.h.b16 %v2727
    %v3027 = vunpack.c.l.b16 %v2728
    %v3028 = vunpack.c.h.b16 %v2728
    %v3029 = vunpack.c.l.b16 %v2729
    %v3030 = vunpack.c.h.b16 %v2729
    %v3031 = vunpack.c.l.b16 %v2730
    %v3032 = vunpack.c.h.b16 %v2730
    %v3033 = vunpack.c.l.b16 %v2731
    %v3034 = vunpack.c.h.b16 %v2731
    %v3035 = vunpack.c.l.b16 %v2732
    %v3036 = vunpack.c.h.b16 %v2732
    %v3037 = vunpack.c.l.b16 %v2733
    %v3038 = vunpack.c.h.b16 %v2733
    %v3039 = vunpack.c.l.b16 %v2734
    %v3040 = vunpack.c.h.b16 %v2734
    %v3041 = vunpack.c.l.b16 %v2735
    %v3042 = vunpack.c.h.b16 %v2735
    %v3043 = vunpack.c.l.b16 %v2736
    %v3044 = vunpack.c.h.b16 %v2736
    %v3045 = vunpack.c.l.b16 %v2737
    %v3046 = vunpack.c.h.b16 %v2737
    %v3047 = vunpack.c.l.b16 %v2738
    %v3048 = vunpack.c.h.b16 %v2738
    %v3049 = vunpack.c.l.b16 %v2739
    %v3050 = vunpack.c.h.b16 %v2739
    %v3051 = vunpack.c.l.b16 %v2740
    %v3052 = vunpack.c.h.b16 %v2740
    %v3053 = vunpack.c.l.b16 %v2741
    %v3054 = vunpack.c.h.b16 %v2741
    %v3055 = vunpack.c.l.b16 %v2742
    %v3056 = vunpack.c.h.b16 %v2742
    %v3057 = vunpack.c.l.b16 %v2743
    %v3058 = vunpack.c.h.b16 %v2743
    %v3059 = vunpack.c.l.b16 %v2744
    %v3060 = vunpack.c.h.b16 %v2744
    %v3061 = vunpack.c.l.b16 %v2745
    %v3062 = vunpack.c.h.b16 %v2745
    %v3063 = vunpack.c.l.b16 %v2746
    %v3064 = vunpack.c.h.b16 %v2746
    %v3065 = vunpack.c.l.b16 %v2747
    %v3066 = vunpack.c.h.b16 %v2747
    %v3067 = vunpack.c.l.b16 %v2748
    %v3068 = vunpack.c.h.b16 %v2748
    %v3069 = vunpack.c.l.b16 %v2749
    %v3070 = vunpack.c.h.b16 %v2749
    %v3071 = vunpack.c.l.b16 %v2750
    %v3072 = vunpack.c.h.b16 %v2750
    %v3073 = vunpack.c.l.b16 %v2751
    %v3074 = vunpack.c.h.b16 %v2751
    %v3075 = vunpack.c.l.b16 %v2752
    %v3076 = vunpack.c.h.b16 %v2752
    %v3077 = vunpack.c.l.b16 %v2753
    %v3078 = vunpack.c.h.b16 %v2753
    %v3079 = vunpack.c.l.b16 %v2754
    %v3080 = vunpack.c.h.b16 %v2754
    %v3081 = vunpack.c.l.b16 %v2755
    %v3082 = vunpack.c.h.b16 %v2755
    %v3083 = vunpack.c.l.b16 %v2756
    %v3084 = vunpack.c.h.b16 %v2756
    %v3085 = vunpack.c.l.b16 %v2757
    %v3086 = vunpack.c.h.b16 %v2757
    %v3087 = vunpack.c.l.b16 %v2758
    %v3088 = vunpack.c.h.b16 %v2758
    %v3089 = vunpack.c.l.b16 %v2759
    %v3090 = vunpack.c.h.b16 %v2759
    %v3091 = vunpack.c.l.b16 %v2760
    %v3092 = vunpack.c.h.b16 %v2760
    %v3093 = vunpack.c.l.b16 %v2761
    %v3094 = vunpack.c.h.b16 %v2761
    %v3095 = vunpack.c.l.b16 %v2762
    %v3096 = vunpack.c.h.b16 %v2762
    %v3097 = vunpack.c.l.b16 %v2763
    %v3098 = vunpack.c.h.b16 %v2763
    %v3099 = vunpack.c.l.b16 %v2764
    %v3100 = vunpack.c.h.b16 %v2764
    %v3101 = vunpack.c.l.b16 %v2765
    %v3102 = vunpack.c.h.b16 %v2765
    %v3103 = vunpack.c.l.b16 %v2766
    %v3104 = vunpack.c.h.b16 %v2766
    %v3105 = vunpack.c.l.b16 %v2767
    %v3106 = vunpack.c.h.b16 %v2767
    %v3107 = vunpack.c.l.b16 %v2768
    %v3108 = vunpack.c.h.b16 %v2768
    %v3109 = vunpack.c.l.b16 %v2769
    %v3110 = vunpack.c.h.b16 %v2769
    %v3111 = vunpack.c.l.b16 %v2770
    %v3112 = vunpack.c.h.b16 %v2770
    %v3113 = vunpack.c.l.b16 %v2771
    %v3114 = vunpack.c.h.b16 %v2771
    %v3115 = vunpack.c.l.b16 %v2772
    %v3116 = vunpack.c.h.b16 %v2772
    %v3117 = vunpack.c.l.b16 %v2773
    %v3118 = vunpack.c.h.b16 %v2773
    %v3119 = vunpack.c.l.b16 %v2774
    %v3120 = vunpack.c.h.b16 %v2774
    %v3121 = vunpack.c.l.b16 %v2775
    %v3122 = vunpack.c.h.b16 %v2775
    %v3123 = vunpack.c.l.b16 %v2776
    %v3124 = vunpack.c.h.b16 %v2776
    %v3125 = vunpack.c.l.b16 %v2777
    %v3126 = vunpack.c.h.b16 %v2777
    %v3127 = vunpack.c.l.b16 %v2778
    %v3128 = vunpack.c.h.b16 %v2778
    %v3129 = vunpack.c.l.b16 %v2779
    %v3130 = vunpack.c.h.b16 %v2779
    %v3131 = vunpack.c.l.b16 %v2780
    %v3132 = vunpack.c.h.b16 %v2780
    %v3133 = vunpack.c.l.b16 %v2781
    %v3134 = vunpack.c.h.b16 %v2781
    %v3135 = vunpack.c.l.b16 %v2782
    %v3136 = vunpack.c.h.b16 %v2782
    %v3137 = vunpack.c.l.b16 %v2783
    %v3138 = vunpack.c.h.b16 %v2783
    %v3139 = vunpack.c.l.b16 %v2784
    %v3140 = vunpack.c.h.b16 %v2784
    %v3141 = vunpack.c.l.b16 %v2785
    %v3142 = vunpack.c.h.b16 %v2785
    %v3143 = vunpack.c.l.b16 %v2786
    %v3144 = vunpack.c.h.b16 %v2786
    %v3145 = vunpack.c.l.b16 %v2787
    %v3146 = vunpack.c.h.b16 %v2787
    %v3147 = vunpack.c.l.b16 %v2788
    %v3148 = vunpack.c.h.b16 %v2788
    %v3149 = vunpack.c.l.b16 %v2789
    %v3150 = vunpack.c.h.b16 %v2789
    %v3151 = vunpack.c.l.b16 %v2790
    %v3152 = vunpack.c.h.b16 %v2790
    %v3153 = vunpack.c.l.b16 %v2791
    %v3154 = vunpack.c.h.b16 %v2791
    %v3155 = vunpack.c.l.b16 %v2792
    %v3156 = vunpack.c.h.b16 %v2792
    %v3157 = vunpack.c.l.b16 %v2793
    %v3158 = vunpack.c.h.b16 %v2793
    %v3159 = vunpack.c.l.b16 %v2794
    %v3160 = vunpack.c.h.b16 %v2794
    %v3161 = vunpack.c.l.b16 %v2795
    %v3162 = vunpack.c.h.b16 %v2795
    %v3163 = vunpack.c.l.b16 %v2796
    %v3164 = vunpack.c.h.b16 %v2796
    %v3165 = vunpack.c.l.b16 %v2797
    %v3166 = vunpack.c.h.b16 %v2797
    %v3167 = vunpack.c.l.b16 %v2798
    %v3168 = vunpack.c.h.b16 %v2798
    %v3169 = vunpack.c.l.b16 %v2799
    %v3170 = vunpack.c.h.b16 %v2799
    %v3171 = vunpack.c.l.b16 %v2800
    %v3172 = vunpack.c.h.b16 %v2800
    %v3173 = vunpack.c.l.b16 %v2801
    %v3174 = vunpack.c.h.b16 %v2801
    %v3175 = vunpack.c.l.b16 %v2802
    %v3176 = vunpack.c.h.b16 %v2802
    %v3177 = vunpack.c.l.b16 %v2803
    %v3178 = vunpack.c.h.b16 %v2803
    %v3179 = vunpack.c.l.b16 %v2804
    %v3180 = vunpack.c.h.b16 %v2804
    %v3181 = vunpack.c.l.b16 %v2805
    %v3182 = vunpack.c.h.b16 %v2805
    %v3183 = vunpack.c.l.b16 %v2806
    %v3184 = vunpack.c.h.b16 %v2806
    %v3185 = vunpack.c.l.b16 %v2807
    %v3186 = vunpack.c.h.b16 %v2807
    %v3187 = vunpack.c.l.b16 %v2808
    %v3188 = vunpack.c.h.b16 %v2808
    %v3189 = vunpack.c.l.b16 %v2809
    %v3190 = vunpack.c.h.b16 %v2809
    %v3191 = vunpack.c.l.b16 %v2810
    %v3192 = vunpack.c.h.b16 %v2810
    %v3193 = vunpack.c.l.b16 %v2811
    %v3194 = vunpack.c.h.b16 %v2811
    %v3195 = vunpack.c.l.b16 %v2812
    %v3196 = vunpack.c.h.b16 %v2812
    %v3197 = vunpack.c.l.b16 %v2813
    %v3198 = vunpack.c.h.b16 %v2813
    %v3199 = vunpack.c.l.b16 %v2814
    %v3200 = vunpack.c.h.b16 %v2814
    %v3201 = vunpack.c.l.b16 %v2815
    %v3202 = vunpack.c.h.b16 %v2815
    %v3203 = vunpack.c.l.b16 %v2816
    %v3204 = vunpack.c.h.b16 %v2816
    %v3205 = vunpack.c.l.b16 %v2817
    %v3206 = vunpack.c.h.b16 %v2817
    %v3207 = vunpack.c.l.b16 %v2818
    %v3208 = vunpack.c.h.b16 %v2818
    %v3209 = vunpack.c.l.b16 %v2819
    %v3210 = vunpack.c.h.b16 %v2819
    %v3211 = vunpack.c.l.b16 %v2820
    %v3212 = vunpack.c.h.b16 %v2820
    %v3213 = vunpack.c.l.b16 %v2821
    %v3214 = vunpack.c.h.b16 %v2821
    %v3215 = vunpack.c.l.b16 %v2822
    %v3216 = vunpack.c.h.b16 %v2822
    %v3217 = vpack.c.b16 %v2965, %v2961
    %v3218 = vpack.c.b16 %v2966, %v2962
    %v3219 = vpack.c.b16 %v2967, %v2963
    %v3220 = vpack.c.b16 %v2968, %v2964
    %v3221 = vpack.c.b16 %v2973, %v2969
    %v3222 = vpack.c.b16 %v2974, %v2970
    %v3223 = vpack.c.b16 %v2975, %v2971
    %v3224 = vpack.c.b16 %v2976, %v2972
    %v3225 = vpack.c.b16 %v2981, %v2977
    %v3226 = vpack.c.b16 %v2982, %v2978
    %v3227 = vpack.c.b16 %v2983, %v2979
    %v3228 = vpack.c.b16 %v2984, %v2980
    %v3229 = vpack.c.b16 %v2989, %v2985
    %v3230 = vpack.c.b16 %v2990, %v2986
    %v3231 = vpack.c.b16 %v2991, %v2987
    %v3232 = vpack.c.b16 %v2992, %v2988
    %v3233 = vpack.c.b16 %v2997, %v2993
    %v3234 = vpack.c.b16 %v2998, %v2994
    %v3235 = vpack.c.b16 %v2999, %v2995
    %v3236 = vpack.c.b16 %v3000, %v2996
    %v3237 = vpack.c.b16 %v3005, %v3001
    %v3238 = vpack.c.b16 %v3006, %v3002
    %v3239 = vpack.c.b16 %v3007, %v3003
    %v3240 = vpack.c.b16 %v3008, %v3004
    %v3241 = vpack.c.b16 %v3013, %v3009
    %v3242 = vpack.c.b16 %v3014, %v3010
    %v3243 = vpack.c.b16 %v3015, %v3011
    %v3244 = vpack.c.b16 %v3016, %v3012
    %v3245 = vpack.c.b16 %v3021, %v3017
    %v3246 = vpack.c.b16 %v3022, %v3018
    %v3247 = vpack.c.b16 %v3023, %v3019
    %v3248 = vpack.c.b16 %v3024, %v3020
    %v3249 = vpack.c.b16 %v3029, %v3025
    %v3250 = vpack.c.b16 %v3030, %v3026
    %v3251 = vpack.c.b16 %v3031, %v3027
    %v3252 = vpack.c.b16 %v3032, %v3028
    %v3253 = vpack.c.b16 %v3037, %v3033
    %v3254 = vpack.c.b16 %v3038, %v3034
    %v3255 = vpack.c.b16 %v3039, %v3035
    %v3256 = vpack.c.b16 %v3040, %v3036
    %v3257 = vpack.c.b16 %v3045, %v3041
    %v3258 = vpack.c.b16 %v3046, %v3042
    %v3259 = vpack.c.b16 %v3047, %v3043
    %v3260 = vpack.c.b16 %v3048, %v3044
    %v3261 = vpack.c.b16 %v3053, %v3049
    %v3262 = vpack.c.b16 %v3054, %v3050
    %v3263 = vpack.c.b16 %v3055, %v3051
    %v3264 = vpack.c.b16 %v3056, %v3052
    %v3265 = vpack.c.b16 %v3061, %v3057
    %v3266 = vpack.c.b16 %v3062, %v3058
    %v3267 = vpack.c.b16 %v3063, %v3059
    %v3268 = vpack.c.b16 %v3064, %v3060
    %v3269 = vpack.c.b16 %v3069, %v3065
    %v3270 = vpack.c.b16 %v3070, %v3066
    %v3271 = vpack.c.b16 %v3071, %v3067
    %v3272 = vpack.c.b16 %v3072, %v3068
    %v3273 = vpack.c.b16 %v3077, %v3073
    %v3274 = vpack.c.b16 %v3078, %v3074
    %v3275 = vpack.c.b16 %v3079, %v3075
    %v3276 = vpack.c.b16 %v3080, %v3076
    %v3277 = vpack.c.b16 %v3085, %v3081
    %v3278 = vpack.c.b16 %v3086, %v3082
    %v3279 = vpack.c.b16 %v3087, %v3083
    %v3280 = vpack.c.b16 %v3088, %v3084
    %v3281 = vpack.c.b16 %v3093, %v3089
    %v3282 = vpack.c.b16 %v3094, %v3090
    %v3283 = vpack.c.b16 %v3095, %v3091
    %v3284 = vpack.c.b16 %v3096, %v3092
    %v3285 = vpack.c.b16 %v3101, %v3097
    %v3286 = vpack.c.b16 %v3102, %v3098
    %v3287 = vpack.c.b16 %v3103, %v3099
    %v3288 = vpack.c.b16 %v3104, %v3100
    %v3289 = vpack.c.b16 %v3109, %v3105
    %v3290 = vpack.c.b16 %v3110, %v3106
    %v3291 = vpack.c.b16 %v3111, %v3107
    %v3292 = vpack.c.b16 %v3112, %v3108
    %v3293 = vpack.c.b16 %v3117, %v3113
    %v3294 = vpack.c.b16 %v3118, %v3114
    %v3295 = vpack.c.b16 %v3119, %v3115
    %v3296 = vpack.c.b16 %v3120, %v3116
    %v3297 = vpack.c.b16 %v3125, %v3121
    %v3298 = vpack.c.b16 %v3126, %v3122
    %v3299 = vpack.c.b16 %v3127, %v3123
    %v3300 = vpack.c.b16 %v3128, %v3124
    %v3301 = vpack.c.b16 %v3133, %v3129
    %v3302 = vpack.c.b16 %v3134, %v3130
    %v3303 = vpack.c.b16 %v3135, %v3131
    %v3304 = vpack.c.b16 %v3136, %v3132
    %v3305 = vpack.c.b16 %v3141, %v3137
    %v3306 = vpack.c.b16 %v3142, %v3138
    %v3307 = vpack.c.b16 %v3143, %v3139
    %v3308 = vpack.c.b16 %v3144, %v3140
    %v3309 = vpack.c.b16 %v3149, %v3145
    %v3310 = vpack.c.b16 %v3150, %v3146
    %v3311 = vpack.c.b16 %v3151, %v3147
    %v3312 = vpack.c.b16 %v3152, %v3148
    %v3313 = vpack.c.b16 %v3157, %v3153
    %v3314 = vpack.c.b16 %v3158, %v3154
    %v3315 = vpack.c.b16 %v3159, %v3155
    %v3316 = vpack.c.b16 %v3160, %v3156
    %v3317 = vpack.c.b16 %v3165, %v3161
    %v3318 = vpack.c.b16 %v3166, %v3162
    %v3319 = vpack.c.b16 %v3167, %v3163
    %v3320 = vpack.c.b16 %v3168, %v3164
    %v3321 = vpack.c.b16 %v3173, %v3169
    %v3322 = vpack.c.b16 %v3174, %v3170
    %v3323 = vpack.c.b16 %v3175, %v3171
    %v3324 = vpack.c.b16 %v3176, %v3172
    %v3325 = vpack.c.b16 %v3181, %v3177
    %v3326 = vpack.c.b16 %v3182, %v3178
    %v3327 = vpack.c.b16 %v3183, %v3179
    %v3328 = vpack.c.b16 %v3184, %v3180
    %v3329 = vpack.c.b16 %v3189, %v3185
    %v3330 = vpack.c.b16 %v3190, %v3186
    %v3331 = vpack.c.b16 %v3191, %v3187
    %v3332 = vpack.c.b16 %v3192, %v3188
    %v3333 = vpack.c.b16 %v3197, %v3193
    %v3334 = vpack.c.b16 %v3198, %v3194
    %v3335 = vpack.c.b16 %v3199, %v3195
    %v3336 = vpack.c.b16 %v3200, %v3196
    %v3337 = vpack.c.b16 %v3205, %v3201
    %v3338 = vpack.c.b16 %v3206, %v3202
    %v3339 = vpack.c.b16 %v3207, %v3203
    %v3340 = vpack.c.b16 %v3208, %v3204
    %v3341 = vpack.c.b16 %v3213, %v3209
    %v3342 = vpack.c.b16 %v3214, %v3210
    %v3343 = vpack.c.b16 %v3215, %v3211
    %v3344 = vpack.c.b16 %v3216, %v3212
    %3473 = vmatpush.bf16.msra.mxu0 %v3245
    %3474 = vmatpush.bf16.msra.mxu0 %v3241
    %3475 = vmatpush.bf16.msra.mxu0 %v3237
    %3476 = vmatpush.bf16.msra.mxu0 %v3233
    %3477 = vmatpush.bf16.msra.mxu0 %v3229
    %3478 = vmatpush.bf16.msra.mxu0 %v3225
    %3479 = vmatpush.bf16.msra.mxu0 %v3221
    %3480 = vmatpush.bf16.msra.mxu0 %v3217
    %3481 = vmatmul.bf16.gmra.mxu0 %v2679
    %v3482 = vpop.f32.mrf.mxu0
    %v3483 = vadd.f32 %v2825, %v3482
    %v3484 = vpop.f32.mrf.mxu0
    %v3485 = vadd.f32 %v2825, %v3484
    %3486 = vmatmul.bf16.gmra.mxu0 %v2683
    %v3487 = vpop.f32.mrf.mxu0
    %v3488 = vadd.f32 %v2825, %v3487
    %v3489 = vpop.f32.mrf.mxu0
    %v3490 = vadd.f32 %v2825, %v3489
    %3491 = vmatmul.bf16.gmra.mxu0 %v2687
    %v3492 = vpop.f32.mrf.mxu0
    %v3493 = vadd.f32 %v2825, %v3492
    %v3494 = vpop.f32.mrf.mxu0
    %v3495 = vadd.f32 %v2825, %v3494
    %3496 = vmatmul.bf16.gmra.mxu0 %v2691
    %v3497 = vpop.f32.mrf.mxu0
    %v3498 = vadd.f32 %v2825, %v3497
    %v3499 = vpop.f32.mrf.mxu0
    %v3500 = vadd.f32 %v2825, %v3499
    %3501 = vdwg.mxu0
    %3502 = vmatpush.bf16.msra.mxu0 %v3277
    %3503 = vmatpush.bf16.msra.mxu0 %v3273
    %3504 = vmatpush.bf16.msra.mxu0 %v3269
    %3505 = vmatpush.bf16.msra.mxu0 %v3265
    %3506 = vmatpush.bf16.msra.mxu0 %v3261
    %3507 = vmatpush.bf16.msra.mxu0 %v3257
    %3508 = vmatpush.bf16.msra.mxu0 %v3253
    %3509 = vmatpush.bf16.msra.mxu0 %v3249
    %3510 = vmatmul.bf16.gmra.mxu0 %v2680
    %v3511 = vpop.f32.mrf.mxu0
    %v3512 = vadd.f32 %v3483, %v3511
    %v3513 = vpop.f32.mrf.mxu0
    %v3514 = vadd.f32 %v3485, %v3513
    %3515 = vmatmul.bf16.gmra.mxu0 %v2684
    %v3516 = vpop.f32.mrf.mxu0
    %v3517 = vadd.f32 %v3488, %v3516
    %v3518 = vpop.f32.mrf.mxu0
    %v3519 = vadd.f32 %v3490, %v3518
    %3520 = vmatmul.bf16.gmra.mxu0 %v2688
    %v3521 = vpop.f32.mrf.mxu0
    %v3522 = vadd.f32 %v3493, %v3521
    %v3523 = vpop.f32.mrf.mxu0
    %v3524 = vadd.f32 %v3495, %v3523
    %3525 = vmatmul.bf16.gmra.mxu0 %v2692
    %v3526 = vpop.f32.mrf.mxu0
    %v3527 = vadd.f32 %v3498, %v3526
    %v3528 = vpop.f32.mrf.mxu0
    %v3529 = vadd.f32 %v3500, %v3528
    %3530 = vdwg.mxu0
    %3531 = vmatpush.bf16.msra.mxu0 %v3309
    %3532 = vmatpush.bf16.msra.mxu0 %v3305
    %3533 = vmatpush.bf16.msra.mxu0 %v3301
    %3534 = vmatpush.bf16.msra.mxu0 %v3297
    %3535 = vmatpush.bf16.msra.mxu0 %v3293
    %3536 = vmatpush.bf16.msra.mxu0 %v3289
    %3537 = vmatpush.bf16.msra.mxu0 %v3285
    %3538 = vmatpush.bf16.msra.mxu0 %v3281
    %3539 = vmatmul.bf16.gmra.mxu0 %v2681
    %v3540 = vpop.f32.mrf.mxu0
    %v3541 = vadd.f32 %v3512, %v3540
    %v3542 = vpop.f32.mrf.mxu0
    %v3543 = vadd.f32 %v3514, %v3542
    %3544 = vmatmul.bf16.gmra.mxu0 %v2685
    %v3545 = vpop.f32.mrf.mxu0
    %v3546 = vadd.f32 %v3517, %v3545
    %v3547 = vpop.f32.mrf.mxu0
    %v3548 = vadd.f32 %v3519, %v3547
    %3549 = vmatmul.bf16.gmra.mxu0 %v2689
    %v3550 = vpop.f32.mrf.mxu0
    %v3551 = vadd.f32 %v3522, %v3550
    %v3552 = vpop.f32.mrf.mxu0
    %v3553 = vadd.f32 %v3524, %v3552
    %3554 = vmatmul.bf16.gmra.mxu0 %v2693
    %v3555 = vpop.f32.mrf.mxu0
    %v3556 = vadd.f32 %v3527, %v3555
    %v3557 = vpop.f32.mrf.mxu0
    %v3558 = vadd.f32 %v3529, %v3557
    %3559 = vdwg.mxu0
    %3560 = vmatpush.bf16.msra.mxu0 %v3341
    %3561 = vmatpush.bf16.msra.mxu0 %v3337
    %3562 = vmatpush.bf16.msra.mxu0 %v3333
    %3563 = vmatpush.bf16.msra.mxu0 %v3329
    %3564 = vmatpush.bf16.msra.mxu0 %v3325
    %3565 = vmatpush.bf16.msra.mxu0 %v3321
    %3566 = vmatpush.bf16.msra.mxu0 %v3317
    %3567 = vmatpush.bf16.msra.mxu0 %v3313
    %3568 = vmatmul.bf16.gmra.mxu0 %v2682
    %v3569 = vpop.f32.mrf.mxu0
    %v3570 = vadd.f32 %v3541, %v3569
    %v3571 = vpop.f32.mrf.mxu0
    %v3572 = vadd.f32 %v3543, %v3571
    %3573 = vmatmul.bf16.gmra.mxu0 %v2686
    %v3574 = vpop.f32.mrf.mxu0
    %v3575 = vadd.f32 %v3546, %v3574
    %v3576 = vpop.f32.mrf.mxu0
    %v3577 = vadd.f32 %v3548, %v3576
    %3578 = vmatmul.bf16.gmra.mxu0 %v2690
    %v3579 = vpop.f32.mrf.mxu0
    %v3580 = vadd.f32 %v3551, %v3579
    %v3581 = vpop.f32.mrf.mxu0
    %v3582 = vadd.f32 %v3553, %v3581
    %3583 = vmatmul.bf16.gmra.mxu0 %v2694
    %v3584 = vpop.f32.mrf.mxu0
    %v3585 = vadd.f32 %v3556, %v3584
    %v3586 = vpop.f32.mrf.mxu0
    %v3587 = vadd.f32 %v3558, %v3586
    %3588 = vdwg.mxu0
    %3589 = vmatpush.bf16.msra.mxu0 %v3246
    %3590 = vmatpush.bf16.msra.mxu0 %v3242
    %3591 = vmatpush.bf16.msra.mxu0 %v3238
    %3592 = vmatpush.bf16.msra.mxu0 %v3234
    %3593 = vmatpush.bf16.msra.mxu0 %v3230
    %3594 = vmatpush.bf16.msra.mxu0 %v3226
    %3595 = vmatpush.bf16.msra.mxu0 %v3222
    %3596 = vmatpush.bf16.msra.mxu0 %v3218
    %3597 = vmatmul.bf16.gmra.mxu0 %v2679
    %v3598 = vpop.f32.mrf.mxu0
    %v3599 = vadd.f32 %v2826, %v3598
    %v3600 = vpop.f32.mrf.mxu0
    %v3601 = vadd.f32 %v2826, %v3600
    %3602 = vmatmul.bf16.gmra.mxu0 %v2683
    %v3603 = vpop.f32.mrf.mxu0
    %v3604 = vadd.f32 %v2826, %v3603
    %v3605 = vpop.f32.mrf.mxu0
    %v3606 = vadd.f32 %v2826, %v3605
    %3607 = vmatmul.bf16.gmra.mxu0 %v2687
    %v3608 = vpop.f32.mrf.mxu0
    %v3609 = vadd.f32 %v2826, %v3608
    %v3610 = vpop.f32.mrf.mxu0
    %v3611 = vadd.f32 %v2826, %v3610
    %3612 = vmatmul.bf16.gmra.mxu0 %v2691
    %v3613 = vpop.f32.mrf.mxu0
    %v3614 = vadd.f32 %v2826, %v3613
    %v3615 = vpop.f32.mrf.mxu0
    %v3616 = vadd.f32 %v2826, %v3615
    %3617 = vdwg.mxu0
    %3618 = vmatpush.bf16.msra.mxu0 %v3278
    %3619 = vmatpush.bf16.msra.mxu0 %v3274
    %3620 = vmatpush.bf16.msra.mxu0 %v3270
    %3621 = vmatpush.bf16.msra.mxu0 %v3266
    %3622 = vmatpush.bf16.msra.mxu0 %v3262
    %3623 = vmatpush.bf16.msra.mxu0 %v3258
    %3624 = vmatpush.bf16.msra.mxu0 %v3254
    %3625 = vmatpush.bf16.msra.mxu0 %v3250
    %3626 = vmatmul.bf16.gmra.mxu0 %v2680
    %v3627 = vpop.f32.mrf.mxu0
    %v3628 = vadd.f32 %v3599, %v3627
    %v3629 = vpop.f32.mrf.mxu0
    %v3630 = vadd.f32 %v3601, %v3629
    %3631 = vmatmul.bf16.gmra.mxu0 %v2684
    %v3632 = vpop.f32.mrf.mxu0
    %v3633 = vadd.f32 %v3604, %v3632
    %v3634 = vpop.f32.mrf.mxu0
    %v3635 = vadd.f32 %v3606, %v3634
    %3636 = vmatmul.bf16.gmra.mxu0 %v2688
    %v3637 = vpop.f32.mrf.mxu0
    %v3638 = vadd.f32 %v3609, %v3637
    %v3639 = vpop.f32.mrf.mxu0
    %v3640 = vadd.f32 %v3611, %v3639
    %3641 = vmatmul.bf16.gmra.mxu0 %v2692
    %v3642 = vpop.f32.mrf.mxu0
    %v3643 = vadd.f32 %v3614, %v3642
    %v3644 = vpop.f32.mrf.mxu0
    %v3645 = vadd.f32 %v3616, %v3644
    %3646 = vdwg.mxu0
    %3647 = vmatpush.bf16.msra.mxu0 %v3310
    %3648 = vmatpush.bf16.msra.mxu0 %v3306
    %3649 = vmatpush.bf16.msra.mxu0 %v3302
    %3650 = vmatpush.bf16.msra.mxu0 %v3298
    %3651 = vmatpush.bf16.msra.mxu0 %v3294
    %3652 = vmatpush.bf16.msra.mxu0 %v3290
    %3653 = vmatpush.bf16.msra.mxu0 %v3286
    %3654 = vmatpush.bf16.msra.mxu0 %v3282
    %3655 = vmatmul.bf16.gmra.mxu0 %v2681
    %v3656 = vpop.f32.mrf.mxu0
    %v3657 = vadd.f32 %v3628, %v3656
    %v3658 = vpop.f32.mrf.mxu0
    %v3659 = vadd.f32 %v3630, %v3658
    %3660 = vmatmul.bf16.gmra.mxu0 %v2685
    %v3661 = vpop.f32.mrf.mxu0
    %v3662 = vadd.f32 %v3633, %v3661
    %v3663 = vpop.f32.mrf.mxu0
    %v3664 = vadd.f32 %v3635, %v3663
    %3665 = vmatmul.bf16.gmra.mxu0 %v2689
    %v3666 = vpop.f32.mrf.mxu0
    %v3667 = vadd.f32 %v3638, %v3666
    %v3668 = vpop.f32.mrf.mxu0
    %v3669 = vadd.f32 %v3640, %v3668
    %3670 = vmatmul.bf16.gmra.mxu0 %v2693
    %v3671 = vpop.f32.mrf.mxu0
    %v3672 = vadd.f32 %v3643, %v3671
    %v3673 = vpop.f32.mrf.mxu0
    %v3674 = vadd.f32 %v3645, %v3673
    %3675 = vdwg.mxu0
    %3676 = vmatpush.bf16.msra.mxu0 %v3342
    %3677 = vmatpush.bf16.msra.mxu0 %v3338
    %3678 = vmatpush.bf16.msra.mxu0 %v3334
    %3679 = vmatpush.bf16.msra.mxu0 %v3330
    %3680 = vmatpush.bf16.msra.mxu0 %v3326
    %3681 = vmatpush.bf16.msra.mxu0 %v3322
    %3682 = vmatpush.bf16.msra.mxu0 %v3318
    %3683 = vmatpush.bf16.msra.mxu0 %v3314
    %3684 = vmatmul.bf16.gmra.mxu0 %v2682
    %v3685 = vpop.f32.mrf.mxu0
    %v3686 = vadd.f32 %v3657, %v3685
    %v3687 = vpop.f32.mrf.mxu0
    %v3688 = vadd.f32 %v3659, %v3687
    %3689 = vmatmul.bf16.gmra.mxu0 %v2686
    %v3690 = vpop.f32.mrf.mxu0
    %v3691 = vadd.f32 %v3662, %v3690
    %v3692 = vpop.f32.mrf.mxu0
    %v3693 = vadd.f32 %v3664, %v3692
    %3694 = vmatmul.bf16.gmra.mxu0 %v2690
    %v3695 = vpop.f32.mrf.mxu0
    %v3696 = vadd.f32 %v3667, %v3695
    %v3697 = vpop.f32.mrf.mxu0
    %v3698 = vadd.f32 %v3669, %v3697
    %3699 = vmatmul.bf16.gmra.mxu0 %v2694
    %v3700 = vpop.f32.mrf.mxu0
    %v3701 = vadd.f32 %v3672, %v3700
    %v3702 = vpop.f32.mrf.mxu0
    %v3703 = vadd.f32 %v3674, %v3702
    %3704 = vdwg.mxu0
    %3705 = vmatpush.bf16.msra.mxu0 %v3247
    %3706 = vmatpush.bf16.msra.mxu0 %v3243
    %3707 = vmatpush.bf16.msra.mxu0 %v3239
    %3708 = vmatpush.bf16.msra.mxu0 %v3235
    %3709 = vmatpush.bf16.msra.mxu0 %v3231
    %3710 = vmatpush.bf16.msra.mxu0 %v3227
    %3711 = vmatpush.bf16.msra.mxu0 %v3223
    %3712 = vmatpush.bf16.msra.mxu0 %v3219
    %3713 = vmatmul.bf16.gmra.mxu0 %v2679
    %v3714 = vpop.f32.mrf.mxu0
    %v3715 = vadd.f32 %v2827, %v3714
    %v3716 = vpop.f32.mrf.mxu0
    %v3717 = vadd.f32 %v2827, %v3716
    %3718 = vmatmul.bf16.gmra.mxu0 %v2683
    %v3719 = vpop.f32.mrf.mxu0
    %v3720 = vadd.f32 %v2827, %v3719
    %v3721 = vpop.f32.mrf.mxu0
    %v3722 = vadd.f32 %v2827, %v3721
    %3723 = vmatmul.bf16.gmra.mxu0 %v2687
    %v3724 = vpop.f32.mrf.mxu0
    %v3725 = vadd.f32 %v2827, %v3724
    %v3726 = vpop.f32.mrf.mxu0
    %v3727 = vadd.f32 %v2827, %v3726
    %3728 = vmatmul.bf16.gmra.mxu0 %v2691
    %v3729 = vpop.f32.mrf.mxu0
    %v3730 = vadd.f32 %v2827, %v3729
    %v3731 = vpop.f32.mrf.mxu0
    %v3732 = vadd.f32 %v2827, %v3731
    %3733 = vdwg.mxu0
    %3734 = vmatpush.bf16.msra.mxu0 %v3279
    %3735 = vmatpush.bf16.msra.mxu0 %v3275
    %3736 = vmatpush.bf16.msra.mxu0 %v3271
    %3737 = vmatpush.bf16.msra.mxu0 %v3267
    %3738 = vmatpush.bf16.msra.mxu0 %v3263
    %3739 = vmatpush.bf16.msra.mxu0 %v3259
    %3740 = vmatpush.bf16.msra.mxu0 %v3255
    %3741 = vmatpush.bf16.msra.mxu0 %v3251
    %3742 = vmatmul.bf16.gmra.mxu0 %v2680
    %v3743 = vpop.f32.mrf.mxu0
    %v3744 = vadd.f32 %v3715, %v3743
    %v3745 = vpop.f32.mrf.mxu0
    %v3746 = vadd.f32 %v3717, %v3745
    %3747 = vmatmul.bf16.gmra.mxu0 %v2684
    %v3748 = vpop.f32.mrf.mxu0
    %v3749 = vadd.f32 %v3720, %v3748
    %v3750 = vpop.f32.mrf.mxu0
    %v3751 = vadd.f32 %v3722, %v3750
    %3752 = vmatmul.bf16.gmra.mxu0 %v2688
    %v3753 = vpop.f32.mrf.mxu0
    %v3754 = vadd.f32 %v3725, %v3753
    %v3755 = vpop.f32.mrf.mxu0
    %v3756 = vadd.f32 %v3727, %v3755
    %3757 = vmatmul.bf16.gmra.mxu0 %v2692
    %v3758 = vpop.f32.mrf.mxu0
    %v3759 = vadd.f32 %v3730, %v3758
    %v3760 = vpop.f32.mrf.mxu0
    %v3761 = vadd.f32 %v3732, %v3760
    %3762 = vdwg.mxu0
    %3763 = vmatpush.bf16.msra.mxu0 %v3311
    %3764 = vmatpush.bf16.msra.mxu0 %v3307
    %3765 = vmatpush.bf16.msra.mxu0 %v3303
    %3766 = vmatpush.bf16.msra.mxu0 %v3299
    %3767 = vmatpush.bf16.msra.mxu0 %v3295
    %3768 = vmatpush.bf16.msra.mxu0 %v3291
    %3769 = vmatpush.bf16.msra.mxu0 %v3287
    %3770 = vmatpush.bf16.msra.mxu0 %v3283
    %3771 = vmatmul.bf16.gmra.mxu0 %v2681
    %v3772 = vpop.f32.mrf.mxu0
    %v3773 = vadd.f32 %v3744, %v3772
    %v3774 = vpop.f32.mrf.mxu0
    %v3775 = vadd.f32 %v3746, %v3774
    %3776 = vmatmul.bf16.gmra.mxu0 %v2685
    %v3777 = vpop.f32.mrf.mxu0
    %v3778 = vadd.f32 %v3749, %v3777
    %v3779 = vpop.f32.mrf.mxu0
    %v3780 = vadd.f32 %v3751, %v3779
    %3781 = vmatmul.bf16.gmra.mxu0 %v2689
    %v3782 = vpop.f32.mrf.mxu0
    %v3783 = vadd.f32 %v3754, %v3782
    %v3784 = vpop.f32.mrf.mxu0
    %v3785 = vadd.f32 %v3756, %v3784
    %3786 = vmatmul.bf16.gmra.mxu0 %v2693
    %v3787 = vpop.f32.mrf.mxu0
    %v3788 = vadd.f32 %v3759, %v3787
    %v3789 = vpop.f32.mrf.mxu0
    %v3790 = vadd.f32 %v3761, %v3789
    %3791 = vdwg.mxu0
    %3792 = vmatpush.bf16.msra.mxu0 %v3343
    %3793 = vmatpush.bf16.msra.mxu0 %v3339
    %3794 = vmatpush.bf16.msra.mxu0 %v3335
    %3795 = vmatpush.bf16.msra.mxu0 %v3331
    %3796 = vmatpush.bf16.msra.mxu0 %v3327
    %3797 = vmatpush.bf16.msra.mxu0 %v3323
    %3798 = vmatpush.bf16.msra.mxu0 %v3319
    %3799 = vmatpush.bf16.msra.mxu0 %v3315
    %3800 = vmatmul.bf16.gmra.mxu0 %v2682
    %v3801 = vpop.f32.mrf.mxu0
    %v3802 = vadd.f32 %v3773, %v3801
    %v3803 = vpop.f32.mrf.mxu0
    %v3804 = vadd.f32 %v3775, %v3803
    %3805 = vmatmul.bf16.gmra.mxu0 %v2686
    %v3806 = vpop.f32.mrf.mxu0
    %v3807 = vadd.f32 %v3778, %v3806
    %v3808 = vpop.f32.mrf.mxu0
    %v3809 = vadd.f32 %v3780, %v3808
    %3810 = vmatmul.bf16.gmra.mxu0 %v2690
    %v3811 = vpop.f32.mrf.mxu0
    %v3812 = vadd.f32 %v3783, %v3811
    %v3813 = vpop.f32.mrf.mxu0
    %v3814 = vadd.f32 %v3785, %v3813
    %3815 = vmatmul.bf16.gmra.mxu0 %v2694
    %v3816 = vpop.f32.mrf.mxu0
    %v3817 = vadd.f32 %v3788, %v3816
    %v3818 = vpop.f32.mrf.mxu0
    %v3819 = vadd.f32 %v3790, %v3818
    %3820 = vdwg.mxu0
    %3821 = vmatpush.bf16.msra.mxu0 %v3248
    %3822 = vmatpush.bf16.msra.mxu0 %v3244
    %3823 = vmatpush.bf16.msra.mxu0 %v3240
    %3824 = vmatpush.bf16.msra.mxu0 %v3236
    %3825 = vmatpush.bf16.msra.mxu0 %v3232
    %3826 = vmatpush.bf16.msra.mxu0 %v3228
    %3827 = vmatpush.bf16.msra.mxu0 %v3224
    %3828 = vmatpush.bf16.msra.mxu0 %v3220
    %3829 = vmatmul.bf16.gmra.mxu0 %v2679
    %v3830 = vpop.f32.mrf.mxu0
    %v3831 = vadd.f32 %v2828, %v3830
    %v3832 = vpop.f32.mrf.mxu0
    %v3833 = vadd.f32 %v2828, %v3832
    %3834 = vmatmul.bf16.gmra.mxu0 %v2683
    %v3835 = vpop.f32.mrf.mxu0
    %v3836 = vadd.f32 %v2828, %v3835
    %v3837 = vpop.f32.mrf.mxu0
    %v3838 = vadd.f32 %v2828, %v3837
    %3839 = vmatmul.bf16.gmra.mxu0 %v2687
    %v3840 = vpop.f32.mrf.mxu0
    %v3841 = vadd.f32 %v2828, %v3840
    %v3842 = vpop.f32.mrf.mxu0
    %v3843 = vadd.f32 %v2828, %v3842
    %3844 = vmatmul.bf16.gmra.mxu0 %v2691
    %v3845 = vpop.f32.mrf.mxu0
    %v3846 = vadd.f32 %v2828, %v3845
    %v3847 = vpop.f32.mrf.mxu0
    %v3848 = vadd.f32 %v2828, %v3847
    %3849 = vdwg.mxu0
    %3850 = vmatpush.bf16.msra.mxu0 %v3280
    %3851 = vmatpush.bf16.msra.mxu0 %v3276
    %3852 = vmatpush.bf16.msra.mxu0 %v3272
    %3853 = vmatpush.bf16.msra.mxu0 %v3268
    %3854 = vmatpush.bf16.msra.mxu0 %v3264
    %3855 = vmatpush.bf16.msra.mxu0 %v3260
    %3856 = vmatpush.bf16.msra.mxu0 %v3256
    %3857 = vmatpush.bf16.msra.mxu0 %v3252
    %3858 = vmatmul.bf16.gmra.mxu0 %v2680
    %v3859 = vpop.f32.mrf.mxu0
    %v3860 = vadd.f32 %v3831, %v3859
    %v3861 = vpop.f32.mrf.mxu0
    %v3862 = vadd.f32 %v3833, %v3861
    %3863 = vmatmul.bf16.gmra.mxu0 %v2684
    %v3864 = vpop.f32.mrf.mxu0
    %v3865 = vadd.f32 %v3836, %v3864
    %v3866 = vpop.f32.mrf.mxu0
    %v3867 = vadd.f32 %v3838, %v3866
    %3868 = vmatmul.bf16.gmra.mxu0 %v2688
    %v3869 = vpop.f32.mrf.mxu0
    %v3870 = vadd.f32 %v3841, %v3869
    %v3871 = vpop.f32.mrf.mxu0
    %v3872 = vadd.f32 %v3843, %v3871
    %3873 = vmatmul.bf16.gmra.mxu0 %v2692
    %v3874 = vpop.f32.mrf.mxu0
    %v3875 = vadd.f32 %v3846, %v3874
    %v3876 = vpop.f32.mrf.mxu0
    %v3877 = vadd.f32 %v3848, %v3876
    %3878 = vdwg.mxu0
    %3879 = vmatpush.bf16.msra.mxu0 %v3312
    %3880 = vmatpush.bf16.msra.mxu0 %v3308
    %3881 = vmatpush.bf16.msra.mxu0 %v3304
    %3882 = vmatpush.bf16.msra.mxu0 %v3300
    %3883 = vmatpush.bf16.msra.mxu0 %v3296
    %3884 = vmatpush.bf16.msra.mxu0 %v3292
    %3885 = vmatpush.bf16.msra.mxu0 %v3288
    %3886 = vmatpush.bf16.msra.mxu0 %v3284
    %3887 = vmatmul.bf16.gmra.mxu0 %v2681
    %v3888 = vpop.f32.mrf.mxu0
    %v3889 = vadd.f32 %v3860, %v3888
    %v3890 = vpop.f32.mrf.mxu0
    %v3891 = vadd.f32 %v3862, %v3890
    %3892 = vmatmul.bf16.gmra.mxu0 %v2685
    %v3893 = vpop.f32.mrf.mxu0
    %v3894 = vadd.f32 %v3865, %v3893
    %v3895 = vpop.f32.mrf.mxu0
    %v3896 = vadd.f32 %v3867, %v3895
    %3897 = vmatmul.bf16.gmra.mxu0 %v2689
    %v3898 = vpop.f32.mrf.mxu0
    %v3899 = vadd.f32 %v3870, %v3898
    %v3900 = vpop.f32.mrf.mxu0
    %v3901 = vadd.f32 %v3872, %v3900
    %3902 = vmatmul.bf16.gmra.mxu0 %v2693
    %v3903 = vpop.f32.mrf.mxu0
    %v3904 = vadd.f32 %v3875, %v3903
    %v3905 = vpop.f32.mrf.mxu0
    %v3906 = vadd.f32 %v3877, %v3905
    %3907 = vdwg.mxu0
    %3908 = vmatpush.bf16.msra.mxu0 %v3344
    %3909 = vmatpush.bf16.msra.mxu0 %v3340
    %3910 = vmatpush.bf16.msra.mxu0 %v3336
    %3911 = vmatpush.bf16.msra.mxu0 %v3332
    %3912 = vmatpush.bf16.msra.mxu0 %v3328
    %3913 = vmatpush.bf16.msra.mxu0 %v3324
    %3914 = vmatpush.bf16.msra.mxu0 %v3320
    %3915 = vmatpush.bf16.msra.mxu0 %v3316
    %3916 = vmatmul.bf16.gmra.mxu0 %v2682
    %v3917 = vpop.f32.mrf.mxu0
    %v3918 = vadd.f32 %v3889, %v3917
    %v3919 = vpop.f32.mrf.mxu0
    %v3920 = vadd.f32 %v3891, %v3919
    %3921 = vmatmul.bf16.gmra.mxu0 %v2686
    %v3922 = vpop.f32.mrf.mxu0
    %v3923 = vadd.f32 %v3894, %v3922
    %v3924 = vpop.f32.mrf.mxu0
    %v3925 = vadd.f32 %v3896, %v3924
    %3926 = vmatmul.bf16.gmra.mxu0 %v2690
    %v3927 = vpop.f32.mrf.mxu0
    %v3928 = vadd.f32 %v3899, %v3927
    %v3929 = vpop.f32.mrf.mxu0
    %v3930 = vadd.f32 %v3901, %v3929
    %3931 = vmatmul.bf16.gmra.mxu0 %v2694
    %v3932 = vpop.f32.mrf.mxu0
    %v3933 = vadd.f32 %v3904, %v3932
    %v3934 = vpop.f32.mrf.mxu0
    %v3935 = vadd.f32 %v3906, %v3934
    %3936 = vdwg.mxu0
    %v3937 = vld [vmem:[#allocation7] sm:$0xf]
    %v3938 = vld [vmem:[#allocation8] sm:$0xf]
    %v3939 = vadd.f32 %v3570, %v3572
    %v3940 = vadd.f32 %v3939, %v3575
    %v3941 = vadd.f32 %v3940, %v3577
    %v3942 = vadd.f32 %v3941, %v3580
    %v3943 = vadd.f32 %v3942, %v3582
    %v3944 = vadd.f32 %v3943, %v3585
    %v3945 = vadd.f32 %v3944, %v3587
    %v3946 = vrot.slane %v3945, 4
    %v3947 = vadd.f32 %v3945, %v3946
    %v3948 = vrot.slane %v3947, 2
    %v3949 = vadd.f32 %v3947, %v3948
    %v3950 = vrot.slane %v3949, 1
    %v3951 = vadd.f32 %v3949, %v3950
    %v3952 = vadd.f32 %v3686, %v3688
    %v3953 = vadd.f32 %v3952, %v3691
    %v3954 = vadd.f32 %v3953, %v3693
    %v3955 = vadd.f32 %v3954, %v3696
    %v3956 = vadd.f32 %v3955, %v3698
    %v3957 = vadd.f32 %v3956, %v3701
    %v3958 = vadd.f32 %v3957, %v3703
    %v3959 = vrot.slane %v3958, 4
    %v3960 = vadd.f32 %v3958, %v3959
    %v3961 = vrot.slane %v3960, 2
    %v3962 = vadd.f32 %v3960, %v3961
    %v3963 = vrot.slane %v3962, 1
    %v3964 = vadd.f32 %v3962, %v3963
    %v3965 = vadd.f32 %v3802, %v3804
    %v3966 = vadd.f32 %v3965, %v3807
    %v3967 = vadd.f32 %v3966, %v3809
    %v3968 = vadd.f32 %v3967, %v3812
    %v3969 = vadd.f32 %v3968, %v3814
    %v3970 = vadd.f32 %v3969, %v3817
    %v3971 = vadd.f32 %v3970, %v3819
    %v3972 = vrot.slane %v3971, 4
    %v3973 = vadd.f32 %v3971, %v3972
    %v3974 = vrot.slane %v3973, 2
    %v3975 = vadd.f32 %v3973, %v3974
    %v3976 = vrot.slane %v3975, 1
    %v3977 = vadd.f32 %v3975, %v3976
    %v3978 = vadd.f32 %v3918, %v3920
    %v3979 = vadd.f32 %v3978, %v3923
    %v3980 = vadd.f32 %v3979, %v3925
    %v3981 = vadd.f32 %v3980, %v3928
    %v3982 = vadd.f32 %v3981, %v3930
    %v3983 = vadd.f32 %v3982, %v3933
    %v3984 = vadd.f32 %v3983, %v3935
    %v3985 = vrot.slane %v3984, 4
    %v3986 = vadd.f32 %v3984, %v3985
    %v3987 = vrot.slane %v3986, 2
    %v3988 = vadd.f32 %v3986, %v3987
    %v3989 = vrot.slane %v3988, 1
    %v3990 = vadd.f32 %v3988, %v3989
    %v3991 = vmul.f32 %v3951, %v1012
    %v3992 = vmul.f32 %v3964, %v1012
    %v3993 = vmul.f32 %v3977, %v1012
    %v3994 = vmul.f32 %v3990, %v1012
    %v3995 = vsub.f32 %v3570, %v3991
    %v3996 = vsub.f32 %v3686, %v3992
    %v3997 = vsub.f32 %v3802, %v3993
    %v3998 = vsub.f32 %v3918, %v3994
    %v3999 = vsub.f32 %v3572, %v3991
    %v4000 = vsub.f32 %v3688, %v3992
    %v4001 = vsub.f32 %v3804, %v3993
    %v4002 = vsub.f32 %v3920, %v3994
    %v4003 = vsub.f32 %v3575, %v3991
    %v4004 = vsub.f32 %v3691, %v3992
    %v4005 = vsub.f32 %v3807, %v3993
    %v4006 = vsub.f32 %v3923, %v3994
    %v4007 = vsub.f32 %v3577, %v3991
    %v4008 = vsub.f32 %v3693, %v3992
    %v4009 = vsub.f32 %v3809, %v3993
    %v4010 = vsub.f32 %v3925, %v3994
    %v4011 = vsub.f32 %v3580, %v3991
    %v4012 = vsub.f32 %v3696, %v3992
    %v4013 = vsub.f32 %v3812, %v3993
    %v4014 = vsub.f32 %v3928, %v3994
    %v4015 = vsub.f32 %v3582, %v3991
    %v4016 = vsub.f32 %v3698, %v3992
    %v4017 = vsub.f32 %v3814, %v3993
    %v4018 = vsub.f32 %v3930, %v3994
    %v4019 = vsub.f32 %v3585, %v3991
    %v4020 = vsub.f32 %v3701, %v3992
    %v4021 = vsub.f32 %v3817, %v3993
    %v4022 = vsub.f32 %v3933, %v3994
    %v4023 = vsub.f32 %v3587, %v3991
    %v4024 = vsub.f32 %v3703, %v3992
    %v4025 = vsub.f32 %v3819, %v3993
    %v4026 = vsub.f32 %v3935, %v3994
    %v4027 = vmul.f32 %v3995, %v3995
    %v4028 = vmul.f32 %v3996, %v3996
    %v4029 = vmul.f32 %v3997, %v3997
    %v4030 = vmul.f32 %v3998, %v3998
    %v4031 = vmul.f32 %v3999, %v3999
    %v4032 = vmul.f32 %v4000, %v4000
    %v4033 = vmul.f32 %v4001, %v4001
    %v4034 = vmul.f32 %v4002, %v4002
    %v4035 = vmul.f32 %v4003, %v4003
    %v4036 = vmul.f32 %v4004, %v4004
    %v4037 = vmul.f32 %v4005, %v4005
    %v4038 = vmul.f32 %v4006, %v4006
    %v4039 = vmul.f32 %v4007, %v4007
    %v4040 = vmul.f32 %v4008, %v4008
    %v4041 = vmul.f32 %v4009, %v4009
    %v4042 = vmul.f32 %v4010, %v4010
    %v4043 = vmul.f32 %v4011, %v4011
    %v4044 = vmul.f32 %v4012, %v4012
    %v4045 = vmul.f32 %v4013, %v4013
    %v4046 = vmul.f32 %v4014, %v4014
    %v4047 = vmul.f32 %v4015, %v4015
    %v4048 = vmul.f32 %v4016, %v4016
    %v4049 = vmul.f32 %v4017, %v4017
    %v4050 = vmul.f32 %v4018, %v4018
    %v4051 = vmul.f32 %v4019, %v4019
    %v4052 = vmul.f32 %v4020, %v4020
    %v4053 = vmul.f32 %v4021, %v4021
    %v4054 = vmul.f32 %v4022, %v4022
    %v4055 = vmul.f32 %v4023, %v4023
    %v4056 = vmul.f32 %v4024, %v4024
    %v4057 = vmul.f32 %v4025, %v4025
    %v4058 = vmul.f32 %v4026, %v4026
    %v4059 = vadd.f32 %v4027, %v4031
    %v4060 = vadd.f32 %v4059, %v4035
    %v4061 = vadd.f32 %v4060, %v4039
    %v4062 = vadd.f32 %v4061, %v4043
    %v4063 = vadd.f32 %v4062, %v4047
    %v4064 = vadd.f32 %v4063, %v4051
    %v4065 = vadd.f32 %v4064, %v4055
    %v4066 = vrot.slane %v4065, 4
    %v4067 = vadd.f32 %v4065, %v4066
    %v4068 = vrot.slane %v4067, 2
    %v4069 = vadd.f32 %v4067, %v4068
    %v4070 = vrot.slane %v4069, 1
    %v4071 = vadd.f32 %v4069, %v4070
    %v4072 = vadd.f32 %v4028, %v4032
    %v4073 = vadd.f32 %v4072, %v4036
    %v4074 = vadd.f32 %v4073, %v4040
    %v4075 = vadd.f32 %v4074, %v4044
    %v4076 = vadd.f32 %v4075, %v4048
    %v4077 = vadd.f32 %v4076, %v4052
    %v4078 = vadd.f32 %v4077, %v4056
    %v4079 = vrot.slane %v4078, 4
    %v4080 = vadd.f32 %v4078, %v4079
    %v4081 = vrot.slane %v4080, 2
    %v4082 = vadd.f32 %v4080, %v4081
    %v4083 = vrot.slane %v4082, 1
    %v4084 = vadd.f32 %v4082, %v4083
    %v4085 = vadd.f32 %v4029, %v4033
    %v4086 = vadd.f32 %v4085, %v4037
    %v4087 = vadd.f32 %v4086, %v4041
    %v4088 = vadd.f32 %v4087, %v4045
    %v4089 = vadd.f32 %v4088, %v4049
    %v4090 = vadd.f32 %v4089, %v4053
    %v4091 = vadd.f32 %v4090, %v4057
    %v4092 = vrot.slane %v4091, 4
    %v4093 = vadd.f32 %v4091, %v4092
    %v4094 = vrot.slane %v4093, 2
    %v4095 = vadd.f32 %v4093, %v4094
    %v4096 = vrot.slane %v4095, 1
    %v4097 = vadd.f32 %v4095, %v4096
    %v4098 = vadd.f32 %v4030, %v4034
    %v4099 = vadd.f32 %v4098, %v4038
    %v4100 = vadd.f32 %v4099, %v4042
    %v4101 = vadd.f32 %v4100, %v4046
    %v4102 = vadd.f32 %v4101, %v4050
    %v4103 = vadd.f32 %v4102, %v4054
    %v4104 = vadd.f32 %v4103, %v4058
    %v4105 = vrot.slane %v4104, 4
    %v4106 = vadd.f32 %v4104, %v4105
    %v4107 = vrot.slane %v4106, 2
    %v4108 = vadd.f32 %v4106, %v4107
    %v4109 = vrot.slane %v4108, 1
    %v4110 = vadd.f32 %v4108, %v4109
    %v4111 = vmul.f32 %v4071, %v1012
    %v4112 = vmul.f32 %v4084, %v1012
    %v4113 = vmul.f32 %v4097, %v1012
    %v4114 = vmul.f32 %v4110, %v1012
    %v4115 = vadd.f32 %v4111, 1e-05
    %v4116 = vadd.f32 %v4112, 1e-05
    %v4117 = vadd.f32 %v4113, 1e-05
    %v4118 = vadd.f32 %v4114, 1e-05
    %v4119 = vrsqrt.pop %v4115
    %v4120 = vmul.f32 %v4119, %v4115
    %v4121 = vmul.f32 %v4120, %v4119
    %v4122 = vmul.f32 0.5, %v4121
    %v4123 = vsub.f32 1.5, %v4122
    %v4124 = vmul.f32 %v4119, %v4123
    %vm4125 = vweird.f32 %v4115
    %vm4126 = vweird.f32 %v4119
    %vm4127 = vmor %vm4125, %vm4126
    %v4128 = vsel %vm4127, %v4119, %v4124
    %v4129 = vrsqrt.pop %v4116
    %v4130 = vmul.f32 %v4129, %v4116
    %v4131 = vmul.f32 %v4130, %v4129
    %v4132 = vmul.f32 0.5, %v4131
    %v4133 = vsub.f32 1.5, %v4132
    %v4134 = vmul.f32 %v4129, %v4133
    %vm4135 = vweird.f32 %v4116
    %vm4136 = vweird.f32 %v4129
    %vm4137 = vmor %vm4135, %vm4136
    %v4138 = vsel %vm4137, %v4129, %v4134
    %v4139 = vrsqrt.pop %v4117
    %v4140 = vmul.f32 %v4139, %v4117
    %v4141 = vmul.f32 %v4140, %v4139
    %v4142 = vmul.f32 0.5, %v4141
    %v4143 = vsub.f32 1.5, %v4142
    %v4144 = vmul.f32 %v4139, %v4143
    %vm4145 = vweird.f32 %v4117
    %vm4146 = vweird.f32 %v4139
    %vm4147 = vmor %vm4145, %vm4146
    %v4148 = vsel %vm4147, %v4139, %v4144
    %v4149 = vrsqrt.pop %v4118
    %v4150 = vmul.f32 %v4149, %v4118
    %v4151 = vmul.f32 %v4150, %v4149
    %v4152 = vmul.f32 0.5, %v4151
    %v4153 = vsub.f32 1.5, %v4152
    %v4154 = vmul.f32 %v4149, %v4153
    %vm4155 = vweird.f32 %v4118
    %vm4156 = vweird.f32 %v4149
    %vm4157 = vmor %vm4155, %vm4156
    %v4158 = vsel %vm4157, %v4149, %v4154
    %v4160 = vperm.slane %v3937, 0
    %v4161 = vperm.slane %v3937, 1
    %v4162 = vperm.slane %v3937, 2
    %v4163 = vperm.slane %v3937, 3
    %v4168 = vmul.f32 %v4128, %v4160
    %v4169 = vmul.f32 %v4138, %v4161
    %v4170 = vmul.f32 %v4148, %v4162
    %v4171 = vmul.f32 %v4158, %v4163
    %v4172 = vperm.slane %v4168, 0
    %v4173 = vperm.slane %v4169, 0
    %v4174 = vperm.slane %v4170, 0
    %v4175 = vperm.slane %v4171, 0
    %v4176 = vmul.f32 %v3995, %v4172
    %v4177 = vmul.f32 %v3996, %v4173
    %v4178 = vmul.f32 %v3997, %v4174
    %v4179 = vmul.f32 %v3998, %v4175
    %v4180 = vmul.f32 %v3999, %v4172
    %v4181 = vmul.f32 %v4000, %v4173
    %v4182 = vmul.f32 %v4001, %v4174
    %v4183 = vmul.f32 %v4002, %v4175
    %v4184 = vmul.f32 %v4003, %v4172
    %v4185 = vmul.f32 %v4004, %v4173
    %v4186 = vmul.f32 %v4005, %v4174
    %v4187 = vmul.f32 %v4006, %v4175
    %v4188 = vmul.f32 %v4007, %v4172
    %v4189 = vmul.f32 %v4008, %v4173
    %v4190 = vmul.f32 %v4009, %v4174
    %v4191 = vmul.f32 %v4010, %v4175
    %v4192 = vmul.f32 %v4011, %v4172
    %v4193 = vmul.f32 %v4012, %v4173
    %v4194 = vmul.f32 %v4013, %v4174
    %v4195 = vmul.f32 %v4014, %v4175
    %v4196 = vmul.f32 %v4015, %v4172
    %v4197 = vmul.f32 %v4016, %v4173
    %v4198 = vmul.f32 %v4017, %v4174
    %v4199 = vmul.f32 %v4018, %v4175
    %v4200 = vmul.f32 %v4019, %v4172
    %v4201 = vmul.f32 %v4020, %v4173
    %v4202 = vmul.f32 %v4021, %v4174
    %v4203 = vmul.f32 %v4022, %v4175
    %v4204 = vmul.f32 %v4023, %v4172
    %v4205 = vmul.f32 %v4024, %v4173
    %v4206 = vmul.f32 %v4025, %v4174
    %v4207 = vmul.f32 %v4026, %v4175
    %v4209 = vperm.slane %v3938, 0
    %v4210 = vperm.slane %v3938, 1
    %v4211 = vperm.slane %v3938, 2
    %v4212 = vperm.slane %v3938, 3
    %v4217 = vadd.f32 %v4176, %v4209
    %v4218 = vadd.f32 %v4177, %v4210
    %v4219 = vadd.f32 %v4178, %v4211
    %v4220 = vadd.f32 %v4179, %v4212
    %v4221 = vadd.f32 %v4180, %v4209
    %v4222 = vadd.f32 %v4181, %v4210
    %v4223 = vadd.f32 %v4182, %v4211
    %v4224 = vadd.f32 %v4183, %v4212
    %v4225 = vadd.f32 %v4184, %v4209
    %v4226 = vadd.f32 %v4185, %v4210
    %v4227 = vadd.f32 %v4186, %v4211
    %v4228 = vadd.f32 %v4187, %v4212
    %v4229 = vadd.f32 %v4188, %v4209
    %v4230 = vadd.f32 %v4189, %v4210
    %v4231 = vadd.f32 %v4190, %v4211
    %v4232 = vadd.f32 %v4191, %v4212
    %v4233 = vadd.f32 %v4192, %v4209
    %v4234 = vadd.f32 %v4193, %v4210
    %v4235 = vadd.f32 %v4194, %v4211
    %v4236 = vadd.f32 %v4195, %v4212
    %v4237 = vadd.f32 %v4196, %v4209
    %v4238 = vadd.f32 %v4197, %v4210
    %v4239 = vadd.f32 %v4198, %v4211
    %v4240 = vadd.f32 %v4199, %v4212
    %v4241 = vadd.f32 %v4200, %v4209
    %v4242 = vadd.f32 %v4201, %v4210
    %v4243 = vadd.f32 %v4202, %v4211
    %v4244 = vadd.f32 %v4203, %v4212
    %v4245 = vadd.f32 %v4204, %v4209
    %v4246 = vadd.f32 %v4205, %v4210
    %v4247 = vadd.f32 %v4206, %v4211
    %v4248 = vadd.f32 %v4207, %v4212
    %v4249 = vmul.f32 %v4217, 0.5
    %v4250 = vmul.f32 %v4218, 0.5
    %v4251 = vmul.f32 %v4219, 0.5
    %v4252 = vmul.f32 %v4220, 0.5
    %v4253 = vmul.f32 %v4221, 0.5
    %v4254 = vmul.f32 %v4222, 0.5
    %v4255 = vmul.f32 %v4223, 0.5
    %v4256 = vmul.f32 %v4224, 0.5
    %v4257 = vmul.f32 %v4225, 0.5
    %v4258 = vmul.f32 %v4226, 0.5
    %v4259 = vmul.f32 %v4227, 0.5
    %v4260 = vmul.f32 %v4228, 0.5
    %v4261 = vmul.f32 %v4229, 0.5
    %v4262 = vmul.f32 %v4230, 0.5
    %v4263 = vmul.f32 %v4231, 0.5
    %v4264 = vmul.f32 %v4232, 0.5
    %v4265 = vmul.f32 %v4233, 0.5
    %v4266 = vmul.f32 %v4234, 0.5
    %v4267 = vmul.f32 %v4235, 0.5
    %v4268 = vmul.f32 %v4236, 0.5
    %v4269 = vmul.f32 %v4237, 0.5
    %v4270 = vmul.f32 %v4238, 0.5
    %v4271 = vmul.f32 %v4239, 0.5
    %v4272 = vmul.f32 %v4240, 0.5
    %v4273 = vmul.f32 %v4241, 0.5
    %v4274 = vmul.f32 %v4242, 0.5
    %v4275 = vmul.f32 %v4243, 0.5
    %v4276 = vmul.f32 %v4244, 0.5
    %v4277 = vmul.f32 %v4245, 0.5
    %v4278 = vmul.f32 %v4246, 0.5
    %v4279 = vmul.f32 %v4247, 0.5
    %v4280 = vmul.f32 %v4248, 0.5
    %v4281 = vmul.f32 %v4217, 0.70710677
    %v4282 = vmul.f32 %v4218, 0.70710677
    %v4283 = vmul.f32 %v4219, 0.70710677
    %v4284 = vmul.f32 %v4220, 0.70710677
    %v4285 = vmul.f32 %v4221, 0.70710677
    %v4286 = vmul.f32 %v4222, 0.70710677
    %v4287 = vmul.f32 %v4223, 0.70710677
    %v4288 = vmul.f32 %v4224, 0.70710677
    %v4289 = vmul.f32 %v4225, 0.70710677
    %v4290 = vmul.f32 %v4226, 0.70710677
    %v4291 = vmul.f32 %v4227, 0.70710677
    %v4292 = vmul.f32 %v4228, 0.70710677
    %v4293 = vmul.f32 %v4229, 0.70710677
    %v4294 = vmul.f32 %v4230, 0.70710677
    %v4295 = vmul.f32 %v4231, 0.70710677
    %v4296 = vmul.f32 %v4232, 0.70710677
    %v4297 = vmul.f32 %v4233, 0.70710677
    %v4298 = vmul.f32 %v4234, 0.70710677
    %v4299 = vmul.f32 %v4235, 0.70710677
    %v4300 = vmul.f32 %v4236, 0.70710677
    %v4301 = vmul.f32 %v4237, 0.70710677
    %v4302 = vmul.f32 %v4238, 0.70710677
    %v4303 = vmul.f32 %v4239, 0.70710677
    %v4304 = vmul.f32 %v4240, 0.70710677
    %v4305 = vmul.f32 %v4241, 0.70710677
    %v4306 = vmul.f32 %v4242, 0.70710677
    %v4307 = vmul.f32 %v4243, 0.70710677
    %v4308 = vmul.f32 %v4244, 0.70710677
    %v4309 = vmul.f32 %v4245, 0.70710677
    %v4310 = vmul.f32 %v4246, 0.70710677
    %v4311 = vmul.f32 %v4247, 0.70710677
    %v4312 = vmul.f32 %v4248, 0.70710677
    %v4313 = vmul.f32 %v4281, %v4281
    %v4314 = vmin.f32 16.0, %v4313
    %v4315 = vmul.f32 %v4314, 2.1237322e-06
    %v4316 = vadd.f32 %v4315, 0.00028619796
    %v4317 = vmul.f32 %v4314, %v4316
    %v4318 = vadd.f32 %v4317, 0.0036580483
    %v4319 = vmul.f32 %v4314, %v4318
    %v4320 = vadd.f32 %v4319, 0.05243302
    %v4321 = vmul.f32 %v4314, %v4320
    %v4322 = vadd.f32 %v4321, 0.18741608
    %v4323 = vmul.f32 %v4314, %v4322
    %v4324 = vadd.f32 %v4323, 1.1283791
    %v4325 = vmul.f32 %v4281, %v4324
    %v4326 = vmul.f32 %v4314, 3.8918573e-05
    %v4327 = vadd.f32 %v4326, 0.001143296
    %v4328 = vmul.f32 %v4314, %v4327
    %v4329 = vadd.f32 %v4328, 0.014752088
    %v4330 = vmul.f32 %v4314, %v4329
    %v4331 = vadd.f32 %v4330, 0.112945676
    %v4332 = vmul.f32 %v4314, %v4331
    %v4333 = vadd.f32 %v4332, 0.4994258
    %v4334 = vmul.f32 %v4314, %v4333
    %v4335 = vadd.f32 %v4334, 1.0
    %v4336 = vrcp.pop %v4335
    %v4337 = vmul.f32 %v4335, %v4336
    %v4338 = vsub.f32 1.0, %v4337
    %v4339 = vmul.f32 %v4336, %v4338
    %v4340 = vadd.f32 %v4336, %v4339
    %vm4341 = vweird.f32 %v4335
    %vm4342 = vweird.f32 %v4336
    %vm4343 = vmor %vm4341, %vm4342
    %v4344 = vsel %vm4343, %v4336, %v4340
    %v4345 = vand.u32 2147483647, %v4335
    %vm4346 = vcmp.eq.f32.partialorder %v4345, 8.507059e+37
    %v4347 = vand.u32 %v4335, 2147483648
    %v4348 = vor.u32 1.1754944e-38, %v4347
    %v4349 = vsel %vm4346, %v4348, %v4344
    %v4350 = vmul.f32 %v4325, %v4349
    %v4351 = vmin.f32 %v4350, 1.0
    %v4352 = vmax.f32 %v4351, -1.0
    %v4353 = vmul.f32 %v4282, %v4282
    %v4354 = vmin.f32 16.0, %v4353
    %v4355 = vmul.f32 %v4354, 2.1237322e-06
    %v4356 = vadd.f32 %v4355, 0.00028619796
    %v4357 = vmul.f32 %v4354, %v4356
    %v4358 = vadd.f32 %v4357, 0.0036580483
    %v4359 = vmul.f32 %v4354, %v4358
    %v4360 = vadd.f32 %v4359, 0.05243302
    %v4361 = vmul.f32 %v4354, %v4360
    %v4362 = vadd.f32 %v4361, 0.18741608
    %v4363 = vmul.f32 %v4354, %v4362
    %v4364 = vadd.f32 %v4363, 1.1283791
    %v4365 = vmul.f32 %v4282, %v4364
    %v4366 = vmul.f32 %v4354, 3.8918573e-05
    %v4367 = vadd.f32 %v4366, 0.001143296
    %v4368 = vmul.f32 %v4354, %v4367
    %v4369 = vadd.f32 %v4368, 0.014752088
    %v4370 = vmul.f32 %v4354, %v4369
    %v4371 = vadd.f32 %v4370, 0.112945676
    %v4372 = vmul.f32 %v4354, %v4371
    %v4373 = vadd.f32 %v4372, 0.4994258
    %v4374 = vmul.f32 %v4354, %v4373
    %v4375 = vadd.f32 %v4374, 1.0
    %v4376 = vrcp.pop %v4375
    %v4377 = vmul.f32 %v4375, %v4376
    %v4378 = vsub.f32 1.0, %v4377
    %v4379 = vmul.f32 %v4376, %v4378
    %v4380 = vadd.f32 %v4376, %v4379
    %vm4381 = vweird.f32 %v4375
    %vm4382 = vweird.f32 %v4376
    %vm4383 = vmor %vm4381, %vm4382
    %v4384 = vsel %vm4383, %v4376, %v4380
    %v4385 = vand.u32 2147483647, %v4375
    %vm4386 = vcmp.eq.f32.partialorder %v4385, 8.507059e+37
    %v4387 = vand.u32 %v4375, 2147483648
    %v4388 = vor.u32 1.1754944e-38, %v4387
    %v4389 = vsel %vm4386, %v4388, %v4384
    %v4390 = vmul.f32 %v4365, %v4389
    %v4391 = vmin.f32 %v4390, 1.0
    %v4392 = vmax.f32 %v4391, -1.0
    %v4393 = vmul.f32 %v4283, %v4283
    %v4394 = vmin.f32 16.0, %v4393
    %v4395 = vmul.f32 %v4394, 2.1237322e-06
    %v4396 = vadd.f32 %v4395, 0.00028619796
    %v4397 = vmul.f32 %v4394, %v4396
    %v4398 = vadd.f32 %v4397, 0.0036580483
    %v4399 = vmul.f32 %v4394, %v4398
    %v4400 = vadd.f32 %v4399, 0.05243302
    %v4401 = vmul.f32 %v4394, %v4400
    %v4402 = vadd.f32 %v4401, 0.18741608
    %v4403 = vmul.f32 %v4394, %v4402
    %v4404 = vadd.f32 %v4403, 1.1283791
    %v4405 = vmul.f32 %v4283, %v4404
    %v4406 = vmul.f32 %v4394, 3.8918573e-05
    %v4407 = vadd.f32 %v4406, 0.001143296
    %v4408 = vmul.f32 %v4394, %v4407
    %v4409 = vadd.f32 %v4408, 0.014752088
    %v4410 = vmul.f32 %v4394, %v4409
    %v4411 = vadd.f32 %v4410, 0.112945676
    %v4412 = vmul.f32 %v4394, %v4411
    %v4413 = vadd.f32 %v4412, 0.4994258
    %v4414 = vmul.f32 %v4394, %v4413
    %v4415 = vadd.f32 %v4414, 1.0
    %v4416 = vrcp.pop %v4415
    %v4417 = vmul.f32 %v4415, %v4416
    %v4418 = vsub.f32 1.0, %v4417
    %v4419 = vmul.f32 %v4416, %v4418
    %v4420 = vadd.f32 %v4416, %v4419
    %vm4421 = vweird.f32 %v4415
    %vm4422 = vweird.f32 %v4416
    %vm4423 = vmor %vm4421, %vm4422
    %v4424 = vsel %vm4423, %v4416, %v4420
    %v4425 = vand.u32 2147483647, %v4415
    %vm4426 = vcmp.eq.f32.partialorder %v4425, 8.507059e+37
    %v4427 = vand.u32 %v4415, 2147483648
    %v4428 = vor.u32 1.1754944e-38, %v4427
    %v4429 = vsel %vm4426, %v4428, %v4424
    %v4430 = vmul.f32 %v4405, %v4429
    %v4431 = vmin.f32 %v4430, 1.0
    %v4432 = vmax.f32 %v4431, -1.0
    %v4433 = vmul.f32 %v4284, %v4284
    %v4434 = vmin.f32 16.0, %v4433
    %v4435 = vmul.f32 %v4434, 2.1237322e-06
    %v4436 = vadd.f32 %v4435, 0.00028619796
    %v4437 = vmul.f32 %v4434, %v4436
    %v4438 = vadd.f32 %v4437, 0.0036580483
    %v4439 = vmul.f32 %v4434, %v4438
    %v4440 = vadd.f32 %v4439, 0.05243302
    %v4441 = vmul.f32 %v4434, %v4440
    %v4442 = vadd.f32 %v4441, 0.18741608
    %v4443 = vmul.f32 %v4434, %v4442
    %v4444 = vadd.f32 %v4443, 1.1283791
    %v4445 = vmul.f32 %v4284, %v4444
    %v4446 = vmul.f32 %v4434, 3.8918573e-05
    %v4447 = vadd.f32 %v4446, 0.001143296
    %v4448 = vmul.f32 %v4434, %v4447
    %v4449 = vadd.f32 %v4448, 0.014752088
    %v4450 = vmul.f32 %v4434, %v4449
    %v4451 = vadd.f32 %v4450, 0.112945676
    %v4452 = vmul.f32 %v4434, %v4451
    %v4453 = vadd.f32 %v4452, 0.4994258
    %v4454 = vmul.f32 %v4434, %v4453
    %v4455 = vadd.f32 %v4454, 1.0
    %v4456 = vrcp.pop %v4455
    %v4457 = vmul.f32 %v4455, %v4456
    %v4458 = vsub.f32 1.0, %v4457
    %v4459 = vmul.f32 %v4456, %v4458
    %v4460 = vadd.f32 %v4456, %v4459
    %vm4461 = vweird.f32 %v4455
    %vm4462 = vweird.f32 %v4456
    %vm4463 = vmor %vm4461, %vm4462
    %v4464 = vsel %vm4463, %v4456, %v4460
    %v4465 = vand.u32 2147483647, %v4455
    %vm4466 = vcmp.eq.f32.partialorder %v4465, 8.507059e+37
    %v4467 = vand.u32 %v4455, 2147483648
    %v4468 = vor.u32 1.1754944e-38, %v4467
    %v4469 = vsel %vm4466, %v4468, %v4464
    %v4470 = vmul.f32 %v4445, %v4469
    %v4471 = vmin.f32 %v4470, 1.0
    %v4472 = vmax.f32 %v4471, -1.0
    %v4473 = vmul.f32 %v4285, %v4285
    %v4474 = vmin.f32 16.0, %v4473
    %v4475 = vmul.f32 %v4474, 2.1237322e-06
    %v4476 = vadd.f32 %v4475, 0.00028619796
    %v4477 = vmul.f32 %v4474, %v4476
    %v4478 = vadd.f32 %v4477, 0.0036580483
    %v4479 = vmul.f32 %v4474, %v4478
    %v4480 = vadd.f32 %v4479, 0.05243302
    %v4481 = vmul.f32 %v4474, %v4480
    %v4482 = vadd.f32 %v4481, 0.18741608
    %v4483 = vmul.f32 %v4474, %v4482
    %v4484 = vadd.f32 %v4483, 1.1283791
    %v4485 = vmul.f32 %v4285, %v4484
    %v4486 = vmul.f32 %v4474, 3.8918573e-05
    %v4487 = vadd.f32 %v4486, 0.001143296
    %v4488 = vmul.f32 %v4474, %v4487
    %v4489 = vadd.f32 %v4488, 0.014752088
    %v4490 = vmul.f32 %v4474, %v4489
    %v4491 = vadd.f32 %v4490, 0.112945676
    %v4492 = vmul.f32 %v4474, %v4491
    %v4493 = vadd.f32 %v4492, 0.4994258
    %v4494 = vmul.f32 %v4474, %v4493
    %v4495 = vadd.f32 %v4494, 1.0
    %v4496 = vrcp.pop %v4495
    %v4497 = vmul.f32 %v4495, %v4496
    %v4498 = vsub.f32 1.0, %v4497
    %v4499 = vmul.f32 %v4496, %v4498
    %v4500 = vadd.f32 %v4496, %v4499
    %vm4501 = vweird.f32 %v4495
    %vm4502 = vweird.f32 %v4496
    %vm4503 = vmor %vm4501, %vm4502
    %v4504 = vsel %vm4503, %v4496, %v4500
    %v4505 = vand.u32 2147483647, %v4495
    %vm4506 = vcmp.eq.f32.partialorder %v4505, 8.507059e+37
    %v4507 = vand.u32 %v4495, 2147483648
    %v4508 = vor.u32 1.1754944e-38, %v4507
    %v4509 = vsel %vm4506, %v4508, %v4504
    %v4510 = vmul.f32 %v4485, %v4509
    %v4511 = vmin.f32 %v4510, 1.0
    %v4512 = vmax.f32 %v4511, -1.0
    %v4513 = vmul.f32 %v4286, %v4286
    %v4514 = vmin.f32 16.0, %v4513
    %v4515 = vmul.f32 %v4514, 2.1237322e-06
    %v4516 = vadd.f32 %v4515, 0.00028619796
    %v4517 = vmul.f32 %v4514, %v4516
    %v4518 = vadd.f32 %v4517, 0.0036580483
    %v4519 = vmul.f32 %v4514, %v4518
    %v4520 = vadd.f32 %v4519, 0.05243302
    %v4521 = vmul.f32 %v4514, %v4520
    %v4522 = vadd.f32 %v4521, 0.18741608
    %v4523 = vmul.f32 %v4514, %v4522
    %v4524 = vadd.f32 %v4523, 1.1283791
    %v4525 = vmul.f32 %v4286, %v4524
    %v4526 = vmul.f32 %v4514, 3.8918573e-05
    %v4527 = vadd.f32 %v4526, 0.001143296
    %v4528 = vmul.f32 %v4514, %v4527
    %v4529 = vadd.f32 %v4528, 0.014752088
    %v4530 = vmul.f32 %v4514, %v4529
    %v4531 = vadd.f32 %v4530, 0.112945676
    %v4532 = vmul.f32 %v4514, %v4531
    %v4533 = vadd.f32 %v4532, 0.4994258
    %v4534 = vmul.f32 %v4514, %v4533
    %v4535 = vadd.f32 %v4534, 1.0
    %v4536 = vrcp.pop %v4535
    %v4537 = vmul.f32 %v4535, %v4536
    %v4538 = vsub.f32 1.0, %v4537
    %v4539 = vmul.f32 %v4536, %v4538
    %v4540 = vadd.f32 %v4536, %v4539
    %vm4541 = vweird.f32 %v4535
    %vm4542 = vweird.f32 %v4536
    %vm4543 = vmor %vm4541, %vm4542
    %v4544 = vsel %vm4543, %v4536, %v4540
    %v4545 = vand.u32 2147483647, %v4535
    %vm4546 = vcmp.eq.f32.partialorder %v4545, 8.507059e+37
    %v4547 = vand.u32 %v4535, 2147483648
    %v4548 = vor.u32 1.1754944e-38, %v4547
    %v4549 = vsel %vm4546, %v4548, %v4544
    %v4550 = vmul.f32 %v4525, %v4549
    %v4551 = vmin.f32 %v4550, 1.0
    %v4552 = vmax.f32 %v4551, -1.0
    %v4553 = vmul.f32 %v4287, %v4287
    %v4554 = vmin.f32 16.0, %v4553
    %v4555 = vmul.f32 %v4554, 2.1237322e-06
    %v4556 = vadd.f32 %v4555, 0.00028619796
    %v4557 = vmul.f32 %v4554, %v4556
    %v4558 = vadd.f32 %v4557, 0.0036580483
    %v4559 = vmul.f32 %v4554, %v4558
    %v4560 = vadd.f32 %v4559, 0.05243302
    %v4561 = vmul.f32 %v4554, %v4560
    %v4562 = vadd.f32 %v4561, 0.18741608
    %v4563 = vmul.f32 %v4554, %v4562
    %v4564 = vadd.f32 %v4563, 1.1283791
    %v4565 = vmul.f32 %v4287, %v4564
    %v4566 = vmul.f32 %v4554, 3.8918573e-05
    %v4567 = vadd.f32 %v4566, 0.001143296
    %v4568 = vmul.f32 %v4554, %v4567
    %v4569 = vadd.f32 %v4568, 0.014752088
    %v4570 = vmul.f32 %v4554, %v4569
    %v4571 = vadd.f32 %v4570, 0.112945676
    %v4572 = vmul.f32 %v4554, %v4571
    %v4573 = vadd.f32 %v4572, 0.4994258
    %v4574 = vmul.f32 %v4554, %v4573
    %v4575 = vadd.f32 %v4574, 1.0
    %v4576 = vrcp.pop %v4575
    %v4577 = vmul.f32 %v4575, %v4576
    %v4578 = vsub.f32 1.0, %v4577
    %v4579 = vmul.f32 %v4576, %v4578
    %v4580 = vadd.f32 %v4576, %v4579
    %vm4581 = vweird.f32 %v4575
    %vm4582 = vweird.f32 %v4576
    %vm4583 = vmor %vm4581, %vm4582
    %v4584 = vsel %vm4583, %v4576, %v4580
    %v4585 = vand.u32 2147483647, %v4575
    %vm4586 = vcmp.eq.f32.partialorder %v4585, 8.507059e+37
    %v4587 = vand.u32 %v4575, 2147483648
    %v4588 = vor.u32 1.1754944e-38, %v4587
    %v4589 = vsel %vm4586, %v4588, %v4584
    %v4590 = vmul.f32 %v4565, %v4589
    %v4591 = vmin.f32 %v4590, 1.0
    %v4592 = vmax.f32 %v4591, -1.0
    %v4593 = vmul.f32 %v4288, %v4288
    %v4594 = vmin.f32 16.0, %v4593
    %v4595 = vmul.f32 %v4594, 2.1237322e-06
    %v4596 = vadd.f32 %v4595, 0.00028619796
    %v4597 = vmul.f32 %v4594, %v4596
    %v4598 = vadd.f32 %v4597, 0.0036580483
    %v4599 = vmul.f32 %v4594, %v4598
    %v4600 = vadd.f32 %v4599, 0.05243302
    %v4601 = vmul.f32 %v4594, %v4600
    %v4602 = vadd.f32 %v4601, 0.18741608
    %v4603 = vmul.f32 %v4594, %v4602
    %v4604 = vadd.f32 %v4603, 1.1283791
    %v4605 = vmul.f32 %v4288, %v4604
    %v4606 = vmul.f32 %v4594, 3.8918573e-05
    %v4607 = vadd.f32 %v4606, 0.001143296
    %v4608 = vmul.f32 %v4594, %v4607
    %v4609 = vadd.f32 %v4608, 0.014752088
    %v4610 = vmul.f32 %v4594, %v4609
    %v4611 = vadd.f32 %v4610, 0.112945676
    %v4612 = vmul.f32 %v4594, %v4611
    %v4613 = vadd.f32 %v4612, 0.4994258
    %v4614 = vmul.f32 %v4594, %v4613
    %v4615 = vadd.f32 %v4614, 1.0
    %v4616 = vrcp.pop %v4615
    %v4617 = vmul.f32 %v4615, %v4616
    %v4618 = vsub.f32 1.0, %v4617
    %v4619 = vmul.f32 %v4616, %v4618
    %v4620 = vadd.f32 %v4616, %v4619
    %vm4621 = vweird.f32 %v4615
    %vm4622 = vweird.f32 %v4616
    %vm4623 = vmor %vm4621, %vm4622
    %v4624 = vsel %vm4623, %v4616, %v4620
    %v4625 = vand.u32 2147483647, %v4615
    %vm4626 = vcmp.eq.f32.partialorder %v4625, 8.507059e+37
    %v4627 = vand.u32 %v4615, 2147483648
    %v4628 = vor.u32 1.1754944e-38, %v4627
    %v4629 = vsel %vm4626, %v4628, %v4624
    %v4630 = vmul.f32 %v4605, %v4629
    %v4631 = vmin.f32 %v4630, 1.0
    %v4632 = vmax.f32 %v4631, -1.0
    %v4633 = vmul.f32 %v4289, %v4289
    %v4634 = vmin.f32 16.0, %v4633
    %v4635 = vmul.f32 %v4634, 2.1237322e-06
    %v4636 = vadd.f32 %v4635, 0.00028619796
    %v4637 = vmul.f32 %v4634, %v4636
    %v4638 = vadd.f32 %v4637, 0.0036580483
    %v4639 = vmul.f32 %v4634, %v4638
    %v4640 = vadd.f32 %v4639, 0.05243302
    %v4641 = vmul.f32 %v4634, %v4640
    %v4642 = vadd.f32 %v4641, 0.18741608
    %v4643 = vmul.f32 %v4634, %v4642
    %v4644 = vadd.f32 %v4643, 1.1283791
    %v4645 = vmul.f32 %v4289, %v4644
    %v4646 = vmul.f32 %v4634, 3.8918573e-05
    %v4647 = vadd.f32 %v4646, 0.001143296
    %v4648 = vmul.f32 %v4634, %v4647
    %v4649 = vadd.f32 %v4648, 0.014752088
    %v4650 = vmul.f32 %v4634, %v4649
    %v4651 = vadd.f32 %v4650, 0.112945676
    %v4652 = vmul.f32 %v4634, %v4651
    %v4653 = vadd.f32 %v4652, 0.4994258
    %v4654 = vmul.f32 %v4634, %v4653
    %v4655 = vadd.f32 %v4654, 1.0
    %v4656 = vrcp.pop %v4655
    %v4657 = vmul.f32 %v4655, %v4656
    %v4658 = vsub.f32 1.0, %v4657
    %v4659 = vmul.f32 %v4656, %v4658
    %v4660 = vadd.f32 %v4656, %v4659
    %vm4661 = vweird.f32 %v4655
    %vm4662 = vweird.f32 %v4656
    %vm4663 = vmor %vm4661, %vm4662
    %v4664 = vsel %vm4663, %v4656, %v4660
    %v4665 = vand.u32 2147483647, %v4655
    %vm4666 = vcmp.eq.f32.partialorder %v4665, 8.507059e+37
    %v4667 = vand.u32 %v4655, 2147483648
    %v4668 = vor.u32 1.1754944e-38, %v4667
    %v4669 = vsel %vm4666, %v4668, %v4664
    %v4670 = vmul.f32 %v4645, %v4669
    %v4671 = vmin.f32 %v4670, 1.0
    %v4672 = vmax.f32 %v4671, -1.0
    %v4673 = vmul.f32 %v4290, %v4290
    %v4674 = vmin.f32 16.0, %v4673
    %v4675 = vmul.f32 %v4674, 2.1237322e-06
    %v4676 = vadd.f32 %v4675, 0.00028619796
    %v4677 = vmul.f32 %v4674, %v4676
    %v4678 = vadd.f32 %v4677, 0.0036580483
    %v4679 = vmul.f32 %v4674, %v4678
    %v4680 = vadd.f32 %v4679, 0.05243302
    %v4681 = vmul.f32 %v4674, %v4680
    %v4682 = vadd.f32 %v4681, 0.18741608
    %v4683 = vmul.f32 %v4674, %v4682
    %v4684 = vadd.f32 %v4683, 1.1283791
    %v4685 = vmul.f32 %v4290, %v4684
    %v4686 = vmul.f32 %v4674, 3.8918573e-05
    %v4687 = vadd.f32 %v4686, 0.001143296
    %v4688 = vmul.f32 %v4674, %v4687
    %v4689 = vadd.f32 %v4688, 0.014752088
    %v4690 = vmul.f32 %v4674, %v4689
    %v4691 = vadd.f32 %v4690, 0.112945676
    %v4692 = vmul.f32 %v4674, %v4691
    %v4693 = vadd.f32 %v4692, 0.4994258
    %v4694 = vmul.f32 %v4674, %v4693
    %v4695 = vadd.f32 %v4694, 1.0
    %v4696 = vrcp.pop %v4695
    %v4697 = vmul.f32 %v4695, %v4696
    %v4698 = vsub.f32 1.0, %v4697
    %v4699 = vmul.f32 %v4696, %v4698
    %v4700 = vadd.f32 %v4696, %v4699
    %vm4701 = vweird.f32 %v4695
    %vm4702 = vweird.f32 %v4696
    %vm4703 = vmor %vm4701, %vm4702
    %v4704 = vsel %vm4703, %v4696, %v4700
    %v4705 = vand.u32 2147483647, %v4695
    %vm4706 = vcmp.eq.f32.partialorder %v4705, 8.507059e+37
    %v4707 = vand.u32 %v4695, 2147483648
    %v4708 = vor.u32 1.1754944e-38, %v4707
    %v4709 = vsel %vm4706, %v4708, %v4704
    %v4710 = vmul.f32 %v4685, %v4709
    %v4711 = vmin.f32 %v4710, 1.0
    %v4712 = vmax.f32 %v4711, -1.0
    %v4713 = vmul.f32 %v4291, %v4291
    %v4714 = vmin.f32 16.0, %v4713
    %v4715 = vmul.f32 %v4714, 2.1237322e-06
    %v4716 = vadd.f32 %v4715, 0.00028619796
    %v4717 = vmul.f32 %v4714, %v4716
    %v4718 = vadd.f32 %v4717, 0.0036580483
    %v4719 = vmul.f32 %v4714, %v4718
    %v4720 = vadd.f32 %v4719, 0.05243302
    %v4721 = vmul.f32 %v4714, %v4720
    %v4722 = vadd.f32 %v4721, 0.18741608
    %v4723 = vmul.f32 %v4714, %v4722
    %v4724 = vadd.f32 %v4723, 1.1283791
    %v4725 = vmul.f32 %v4291, %v4724
    %v4726 = vmul.f32 %v4714, 3.8918573e-05
    %v4727 = vadd.f32 %v4726, 0.001143296
    %v4728 = vmul.f32 %v4714, %v4727
    %v4729 = vadd.f32 %v4728, 0.014752088
    %v4730 = vmul.f32 %v4714, %v4729
    %v4731 = vadd.f32 %v4730, 0.112945676
    %v4732 = vmul.f32 %v4714, %v4731
    %v4733 = vadd.f32 %v4732, 0.4994258
    %v4734 = vmul.f32 %v4714, %v4733
    %v4735 = vadd.f32 %v4734, 1.0
    %v4736 = vrcp.pop %v4735
    %v4737 = vmul.f32 %v4735, %v4736
    %v4738 = vsub.f32 1.0, %v4737
    %v4739 = vmul.f32 %v4736, %v4738
    %v4740 = vadd.f32 %v4736, %v4739
    %vm4741 = vweird.f32 %v4735
    %vm4742 = vweird.f32 %v4736
    %vm4743 = vmor %vm4741, %vm4742
    %v4744 = vsel %vm4743, %v4736, %v4740
    %v4745 = vand.u32 2147483647, %v4735
    %vm4746 = vcmp.eq.f32.partialorder %v4745, 8.507059e+37
    %v4747 = vand.u32 %v4735, 2147483648
    %v4748 = vor.u32 1.1754944e-38, %v4747
    %v4749 = vsel %vm4746, %v4748, %v4744
    %v4750 = vmul.f32 %v4725, %v4749
    %v4751 = vmin.f32 %v4750, 1.0
    %v4752 = vmax.f32 %v4751, -1.0
    %v4753 = vmul.f32 %v4292, %v4292
    %v4754 = vmin.f32 16.0, %v4753
    %v4755 = vmul.f32 %v4754, 2.1237322e-06
    %v4756 = vadd.f32 %v4755, 0.00028619796
    %v4757 = vmul.f32 %v4754, %v4756
    %v4758 = vadd.f32 %v4757, 0.0036580483
    %v4759 = vmul.f32 %v4754, %v4758
    %v4760 = vadd.f32 %v4759, 0.05243302
    %v4761 = vmul.f32 %v4754, %v4760
    %v4762 = vadd.f32 %v4761, 0.18741608
    %v4763 = vmul.f32 %v4754, %v4762
    %v4764 = vadd.f32 %v4763, 1.1283791
    %v4765 = vmul.f32 %v4292, %v4764
    %v4766 = vmul.f32 %v4754, 3.8918573e-05
    %v4767 = vadd.f32 %v4766, 0.001143296
    %v4768 = vmul.f32 %v4754, %v4767
    %v4769 = vadd.f32 %v4768, 0.014752088
    %v4770 = vmul.f32 %v4754, %v4769
    %v4771 = vadd.f32 %v4770, 0.112945676
    %v4772 = vmul.f32 %v4754, %v4771
    %v4773 = vadd.f32 %v4772, 0.4994258
    %v4774 = vmul.f32 %v4754, %v4773
    %v4775 = vadd.f32 %v4774, 1.0
    %v4776 = vrcp.pop %v4775
    %v4777 = vmul.f32 %v4775, %v4776
    %v4778 = vsub.f32 1.0, %v4777
    %v4779 = vmul.f32 %v4776, %v4778
    %v4780 = vadd.f32 %v4776, %v4779
    %vm4781 = vweird.f32 %v4775
    %vm4782 = vweird.f32 %v4776
    %vm4783 = vmor %vm4781, %vm4782
    %v4784 = vsel %vm4783, %v4776, %v4780
    %v4785 = vand.u32 2147483647, %v4775
    %vm4786 = vcmp.eq.f32.partialorder %v4785, 8.507059e+37
    %v4787 = vand.u32 %v4775, 2147483648
    %v4788 = vor.u32 1.1754944e-38, %v4787
    %v4789 = vsel %vm4786, %v4788, %v4784
    %v4790 = vmul.f32 %v4765, %v4789
    %v4791 = vmin.f32 %v4790, 1.0
    %v4792 = vmax.f32 %v4791, -1.0
    %v4793 = vmul.f32 %v4293, %v4293
    %v4794 = vmin.f32 16.0, %v4793
    %v4795 = vmul.f32 %v4794, 2.1237322e-06
    %v4796 = vadd.f32 %v4795, 0.00028619796
    %v4797 = vmul.f32 %v4794, %v4796
    %v4798 = vadd.f32 %v4797, 0.0036580483
    %v4799 = vmul.f32 %v4794, %v4798
    %v4800 = vadd.f32 %v4799, 0.05243302
    %v4801 = vmul.f32 %v4794, %v4800
    %v4802 = vadd.f32 %v4801, 0.18741608
    %v4803 = vmul.f32 %v4794, %v4802
    %v4804 = vadd.f32 %v4803, 1.1283791
    %v4805 = vmul.f32 %v4293, %v4804
    %v4806 = vmul.f32 %v4794, 3.8918573e-05
    %v4807 = vadd.f32 %v4806, 0.001143296
    %v4808 = vmul.f32 %v4794, %v4807
    %v4809 = vadd.f32 %v4808, 0.014752088
    %v4810 = vmul.f32 %v4794, %v4809
    %v4811 = vadd.f32 %v4810, 0.112945676
    %v4812 = vmul.f32 %v4794, %v4811
    %v4813 = vadd.f32 %v4812, 0.4994258
    %v4814 = vmul.f32 %v4794, %v4813
    %v4815 = vadd.f32 %v4814, 1.0
    %v4816 = vrcp.pop %v4815
    %v4817 = vmul.f32 %v4815, %v4816
    %v4818 = vsub.f32 1.0, %v4817
    %v4819 = vmul.f32 %v4816, %v4818
    %v4820 = vadd.f32 %v4816, %v4819
    %vm4821 = vweird.f32 %v4815
    %vm4822 = vweird.f32 %v4816
    %vm4823 = vmor %vm4821, %vm4822
    %v4824 = vsel %vm4823, %v4816, %v4820
    %v4825 = vand.u32 2147483647, %v4815
    %vm4826 = vcmp.eq.f32.partialorder %v4825, 8.507059e+37
    %v4827 = vand.u32 %v4815, 2147483648
    %v4828 = vor.u32 1.1754944e-38, %v4827
    %v4829 = vsel %vm4826, %v4828, %v4824
    %v4830 = vmul.f32 %v4805, %v4829
    %v4831 = vmin.f32 %v4830, 1.0
    %v4832 = vmax.f32 %v4831, -1.0
    %v4833 = vmul.f32 %v4294, %v4294
    %v4834 = vmin.f32 16.0, %v4833
    %v4835 = vmul.f32 %v4834, 2.1237322e-06
    %v4836 = vadd.f32 %v4835, 0.00028619796
    %v4837 = vmul.f32 %v4834, %v4836
    %v4838 = vadd.f32 %v4837, 0.0036580483
    %v4839 = vmul.f32 %v4834, %v4838
    %v4840 = vadd.f32 %v4839, 0.05243302
    %v4841 = vmul.f32 %v4834, %v4840
    %v4842 = vadd.f32 %v4841, 0.18741608
    %v4843 = vmul.f32 %v4834, %v4842
    %v4844 = vadd.f32 %v4843, 1.1283791
    %v4845 = vmul.f32 %v4294, %v4844
    %v4846 = vmul.f32 %v4834, 3.8918573e-05
    %v4847 = vadd.f32 %v4846, 0.001143296
    %v4848 = vmul.f32 %v4834, %v4847
    %v4849 = vadd.f32 %v4848, 0.014752088
    %v4850 = vmul.f32 %v4834, %v4849
    %v4851 = vadd.f32 %v4850, 0.112945676
    %v4852 = vmul.f32 %v4834, %v4851
    %v4853 = vadd.f32 %v4852, 0.4994258
    %v4854 = vmul.f32 %v4834, %v4853
    %v4855 = vadd.f32 %v4854, 1.0
    %v4856 = vrcp.pop %v4855
    %v4857 = vmul.f32 %v4855, %v4856
    %v4858 = vsub.f32 1.0, %v4857
    %v4859 = vmul.f32 %v4856, %v4858
    %v4860 = vadd.f32 %v4856, %v4859
    %vm4861 = vweird.f32 %v4855
    %vm4862 = vweird.f32 %v4856
    %vm4863 = vmor %vm4861, %vm4862
    %v4864 = vsel %vm4863, %v4856, %v4860
    %v4865 = vand.u32 2147483647, %v4855
    %vm4866 = vcmp.eq.f32.partialorder %v4865, 8.507059e+37
    %v4867 = vand.u32 %v4855, 2147483648
    %v4868 = vor.u32 1.1754944e-38, %v4867
    %v4869 = vsel %vm4866, %v4868, %v4864
    %v4870 = vmul.f32 %v4845, %v4869
    %v4871 = vmin.f32 %v4870, 1.0
    %v4872 = vmax.f32 %v4871, -1.0
    %v4873 = vmul.f32 %v4295, %v4295
    %v4874 = vmin.f32 16.0, %v4873
    %v4875 = vmul.f32 %v4874, 2.1237322e-06
    %v4876 = vadd.f32 %v4875, 0.00028619796
    %v4877 = vmul.f32 %v4874, %v4876
    %v4878 = vadd.f32 %v4877, 0.0036580483
    %v4879 = vmul.f32 %v4874, %v4878
    %v4880 = vadd.f32 %v4879, 0.05243302
    %v4881 = vmul.f32 %v4874, %v4880
    %v4882 = vadd.f32 %v4881, 0.18741608
    %v4883 = vmul.f32 %v4874, %v4882
    %v4884 = vadd.f32 %v4883, 1.1283791
    %v4885 = vmul.f32 %v4295, %v4884
    %v4886 = vmul.f32 %v4874, 3.8918573e-05
    %v4887 = vadd.f32 %v4886, 0.001143296
    %v4888 = vmul.f32 %v4874, %v4887
    %v4889 = vadd.f32 %v4888, 0.014752088
    %v4890 = vmul.f32 %v4874, %v4889
    %v4891 = vadd.f32 %v4890, 0.112945676
    %v4892 = vmul.f32 %v4874, %v4891
    %v4893 = vadd.f32 %v4892, 0.4994258
    %v4894 = vmul.f32 %v4874, %v4893
    %v4895 = vadd.f32 %v4894, 1.0
    %v4896 = vrcp.pop %v4895
    %v4897 = vmul.f32 %v4895, %v4896
    %v4898 = vsub.f32 1.0, %v4897
    %v4899 = vmul.f32 %v4896, %v4898
    %v4900 = vadd.f32 %v4896, %v4899
    %vm4901 = vweird.f32 %v4895
    %vm4902 = vweird.f32 %v4896
    %vm4903 = vmor %vm4901, %vm4902
    %v4904 = vsel %vm4903, %v4896, %v4900
    %v4905 = vand.u32 2147483647, %v4895
    %vm4906 = vcmp.eq.f32.partialorder %v4905, 8.507059e+37
    %v4907 = vand.u32 %v4895, 2147483648
    %v4908 = vor.u32 1.1754944e-38, %v4907
    %v4909 = vsel %vm4906, %v4908, %v4904
    %v4910 = vmul.f32 %v4885, %v4909
    %v4911 = vmin.f32 %v4910, 1.0
    %v4912 = vmax.f32 %v4911, -1.0
    %v4913 = vmul.f32 %v4296, %v4296
    %v4914 = vmin.f32 16.0, %v4913
    %v4915 = vmul.f32 %v4914, 2.1237322e-06
    %v4916 = vadd.f32 %v4915, 0.00028619796
    %v4917 = vmul.f32 %v4914, %v4916
    %v4918 = vadd.f32 %v4917, 0.0036580483
    %v4919 = vmul.f32 %v4914, %v4918
    %v4920 = vadd.f32 %v4919, 0.05243302
    %v4921 = vmul.f32 %v4914, %v4920
    %v4922 = vadd.f32 %v4921, 0.18741608
    %v4923 = vmul.f32 %v4914, %v4922
    %v4924 = vadd.f32 %v4923, 1.1283791
    %v4925 = vmul.f32 %v4296, %v4924
    %v4926 = vmul.f32 %v4914, 3.8918573e-05
    %v4927 = vadd.f32 %v4926, 0.001143296
    %v4928 = vmul.f32 %v4914, %v4927
    %v4929 = vadd.f32 %v4928, 0.014752088
    %v4930 = vmul.f32 %v4914, %v4929
    %v4931 = vadd.f32 %v4930, 0.112945676
    %v4932 = vmul.f32 %v4914, %v4931
    %v4933 = vadd.f32 %v4932, 0.4994258
    %v4934 = vmul.f32 %v4914, %v4933
    %v4935 = vadd.f32 %v4934, 1.0
    %v4936 = vrcp.pop %v4935
    %v4937 = vmul.f32 %v4935, %v4936
    %v4938 = vsub.f32 1.0, %v4937
    %v4939 = vmul.f32 %v4936, %v4938
    %v4940 = vadd.f32 %v4936, %v4939
    %vm4941 = vweird.f32 %v4935
    %vm4942 = vweird.f32 %v4936
    %vm4943 = vmor %vm4941, %vm4942
    %v4944 = vsel %vm4943, %v4936, %v4940
    %v4945 = vand.u32 2147483647, %v4935
    %vm4946 = vcmp.eq.f32.partialorder %v4945, 8.507059e+37
    %v4947 = vand.u32 %v4935, 2147483648
    %v4948 = vor.u32 1.1754944e-38, %v4947
    %v4949 = vsel %vm4946, %v4948, %v4944
    %v4950 = vmul.f32 %v4925, %v4949
    %v4951 = vmin.f32 %v4950, 1.0
    %v4952 = vmax.f32 %v4951, -1.0
    %v4953 = vmul.f32 %v4297, %v4297
    %v4954 = vmin.f32 16.0, %v4953
    %v4955 = vmul.f32 %v4954, 2.1237322e-06
    %v4956 = vadd.f32 %v4955, 0.00028619796
    %v4957 = vmul.f32 %v4954, %v4956
    %v4958 = vadd.f32 %v4957, 0.0036580483
    %v4959 = vmul.f32 %v4954, %v4958
    %v4960 = vadd.f32 %v4959, 0.05243302
    %v4961 = vmul.f32 %v4954, %v4960
    %v4962 = vadd.f32 %v4961, 0.18741608
    %v4963 = vmul.f32 %v4954, %v4962
    %v4964 = vadd.f32 %v4963, 1.1283791
    %v4965 = vmul.f32 %v4297, %v4964
    %v4966 = vmul.f32 %v4954, 3.8918573e-05
    %v4967 = vadd.f32 %v4966, 0.001143296
    %v4968 = vmul.f32 %v4954, %v4967
    %v4969 = vadd.f32 %v4968, 0.014752088
    %v4970 = vmul.f32 %v4954, %v4969
    %v4971 = vadd.f32 %v4970, 0.112945676
    %v4972 = vmul.f32 %v4954, %v4971
    %v4973 = vadd.f32 %v4972, 0.4994258
    %v4974 = vmul.f32 %v4954, %v4973
    %v4975 = vadd.f32 %v4974, 1.0
    %v4976 = vrcp.pop %v4975
    %v4977 = vmul.f32 %v4975, %v4976
    %v4978 = vsub.f32 1.0, %v4977
    %v4979 = vmul.f32 %v4976, %v4978
    %v4980 = vadd.f32 %v4976, %v4979
    %vm4981 = vweird.f32 %v4975
    %vm4982 = vweird.f32 %v4976
    %vm4983 = vmor %vm4981, %vm4982
    %v4984 = vsel %vm4983, %v4976, %v4980
    %v4985 = vand.u32 2147483647, %v4975
    %vm4986 = vcmp.eq.f32.partialorder %v4985, 8.507059e+37
    %v4987 = vand.u32 %v4975, 2147483648
    %v4988 = vor.u32 1.1754944e-38, %v4987
    %v4989 = vsel %vm4986, %v4988, %v4984
    %v4990 = vmul.f32 %v4965, %v4989
    %v4991 = vmin.f32 %v4990, 1.0
    %v4992 = vmax.f32 %v4991, -1.0
    %v4993 = vmul.f32 %v4298, %v4298
    %v4994 = vmin.f32 16.0, %v4993
    %v4995 = vmul.f32 %v4994, 2.1237322e-06
    %v4996 = vadd.f32 %v4995, 0.00028619796
    %v4997 = vmul.f32 %v4994, %v4996
    %v4998 = vadd.f32 %v4997, 0.0036580483
    %v4999 = vmul.f32 %v4994, %v4998
    %v5000 = vadd.f32 %v4999, 0.05243302
    %v5001 = vmul.f32 %v4994, %v5000
    %v5002 = vadd.f32 %v5001, 0.18741608
    %v5003 = vmul.f32 %v4994, %v5002
    %v5004 = vadd.f32 %v5003, 1.1283791
    %v5005 = vmul.f32 %v4298, %v5004
    %v5006 = vmul.f32 %v4994, 3.8918573e-05
    %v5007 = vadd.f32 %v5006, 0.001143296
    %v5008 = vmul.f32 %v4994, %v5007
    %v5009 = vadd.f32 %v5008, 0.014752088
    %v5010 = vmul.f32 %v4994, %v5009
    %v5011 = vadd.f32 %v5010, 0.112945676
    %v5012 = vmul.f32 %v4994, %v5011
    %v5013 = vadd.f32 %v5012, 0.4994258
    %v5014 = vmul.f32 %v4994, %v5013
    %v5015 = vadd.f32 %v5014, 1.0
    %v5016 = vrcp.pop %v5015
    %v5017 = vmul.f32 %v5015, %v5016
    %v5018 = vsub.f32 1.0, %v5017
    %v5019 = vmul.f32 %v5016, %v5018
    %v5020 = vadd.f32 %v5016, %v5019
    %vm5021 = vweird.f32 %v5015
    %vm5022 = vweird.f32 %v5016
    %vm5023 = vmor %vm5021, %vm5022
    %v5024 = vsel %vm5023, %v5016, %v5020
    %v5025 = vand.u32 2147483647, %v5015
    %vm5026 = vcmp.eq.f32.partialorder %v5025, 8.507059e+37
    %v5027 = vand.u32 %v5015, 2147483648
    %v5028 = vor.u32 1.1754944e-38, %v5027
    %v5029 = vsel %vm5026, %v5028, %v5024
    %v5030 = vmul.f32 %v5005, %v5029
    %v5031 = vmin.f32 %v5030, 1.0
    %v5032 = vmax.f32 %v5031, -1.0
    %v5033 = vmul.f32 %v4299, %v4299
    %v5034 = vmin.f32 16.0, %v5033
    %v5035 = vmul.f32 %v5034, 2.1237322e-06
    %v5036 = vadd.f32 %v5035, 0.00028619796
    %v5037 = vmul.f32 %v5034, %v5036
    %v5038 = vadd.f32 %v5037, 0.0036580483
    %v5039 = vmul.f32 %v5034, %v5038
    %v5040 = vadd.f32 %v5039, 0.05243302
    %v5041 = vmul.f32 %v5034, %v5040
    %v5042 = vadd.f32 %v5041, 0.18741608
    %v5043 = vmul.f32 %v5034, %v5042
    %v5044 = vadd.f32 %v5043, 1.1283791
    %v5045 = vmul.f32 %v4299, %v5044
    %v5046 = vmul.f32 %v5034, 3.8918573e-05
    %v5047 = vadd.f32 %v5046, 0.001143296
    %v5048 = vmul.f32 %v5034, %v5047
    %v5049 = vadd.f32 %v5048, 0.014752088
    %v5050 = vmul.f32 %v5034, %v5049
    %v5051 = vadd.f32 %v5050, 0.112945676
    %v5052 = vmul.f32 %v5034, %v5051
    %v5053 = vadd.f32 %v5052, 0.4994258
    %v5054 = vmul.f32 %v5034, %v5053
    %v5055 = vadd.f32 %v5054, 1.0
    %v5056 = vrcp.pop %v5055
    %v5057 = vmul.f32 %v5055, %v5056
    %v5058 = vsub.f32 1.0, %v5057
    %v5059 = vmul.f32 %v5056, %v5058
    %v5060 = vadd.f32 %v5056, %v5059
    %vm5061 = vweird.f32 %v5055
    %vm5062 = vweird.f32 %v5056
    %vm5063 = vmor %vm5061, %vm5062
    %v5064 = vsel %vm5063, %v5056, %v5060
    %v5065 = vand.u32 2147483647, %v5055
    %vm5066 = vcmp.eq.f32.partialorder %v5065, 8.507059e+37
    %v5067 = vand.u32 %v5055, 2147483648
    %v5068 = vor.u32 1.1754944e-38, %v5067
    %v5069 = vsel %vm5066, %v5068, %v5064
    %v5070 = vmul.f32 %v5045, %v5069
    %v5071 = vmin.f32 %v5070, 1.0
    %v5072 = vmax.f32 %v5071, -1.0
    %v5073 = vmul.f32 %v4300, %v4300
    %v5074 = vmin.f32 16.0, %v5073
    %v5075 = vmul.f32 %v5074, 2.1237322e-06
    %v5076 = vadd.f32 %v5075, 0.00028619796
    %v5077 = vmul.f32 %v5074, %v5076
    %v5078 = vadd.f32 %v5077, 0.0036580483
    %v5079 = vmul.f32 %v5074, %v5078
    %v5080 = vadd.f32 %v5079, 0.05243302
    %v5081 = vmul.f32 %v5074, %v5080
    %v5082 = vadd.f32 %v5081, 0.18741608
    %v5083 = vmul.f32 %v5074, %v5082
    %v5084 = vadd.f32 %v5083, 1.1283791
    %v5085 = vmul.f32 %v4300, %v5084
    %v5086 = vmul.f32 %v5074, 3.8918573e-05
    %v5087 = vadd.f32 %v5086, 0.001143296
    %v5088 = vmul.f32 %v5074, %v5087
    %v5089 = vadd.f32 %v5088, 0.014752088
    %v5090 = vmul.f32 %v5074, %v5089
    %v5091 = vadd.f32 %v5090, 0.112945676
    %v5092 = vmul.f32 %v5074, %v5091
    %v5093 = vadd.f32 %v5092, 0.4994258
    %v5094 = vmul.f32 %v5074, %v5093
    %v5095 = vadd.f32 %v5094, 1.0
    %v5096 = vrcp.pop %v5095
    %v5097 = vmul.f32 %v5095, %v5096
    %v5098 = vsub.f32 1.0, %v5097
    %v5099 = vmul.f32 %v5096, %v5098
    %v5100 = vadd.f32 %v5096, %v5099
    %vm5101 = vweird.f32 %v5095
    %vm5102 = vweird.f32 %v5096
    %vm5103 = vmor %vm5101, %vm5102
    %v5104 = vsel %vm5103, %v5096, %v5100
    %v5105 = vand.u32 2147483647, %v5095
    %vm5106 = vcmp.eq.f32.partialorder %v5105, 8.507059e+37
    %v5107 = vand.u32 %v5095, 2147483648
    %v5108 = vor.u32 1.1754944e-38, %v5107
    %v5109 = vsel %vm5106, %v5108, %v5104
    %v5110 = vmul.f32 %v5085, %v5109
    %v5111 = vmin.f32 %v5110, 1.0
    %v5112 = vmax.f32 %v5111, -1.0
    %v5113 = vmul.f32 %v4301, %v4301
    %v5114 = vmin.f32 16.0, %v5113
    %v5115 = vmul.f32 %v5114, 2.1237322e-06
    %v5116 = vadd.f32 %v5115, 0.00028619796
    %v5117 = vmul.f32 %v5114, %v5116
    %v5118 = vadd.f32 %v5117, 0.0036580483
    %v5119 = vmul.f32 %v5114, %v5118
    %v5120 = vadd.f32 %v5119, 0.05243302
    %v5121 = vmul.f32 %v5114, %v5120
    %v5122 = vadd.f32 %v5121, 0.18741608
    %v5123 = vmul.f32 %v5114, %v5122
    %v5124 = vadd.f32 %v5123, 1.1283791
    %v5125 = vmul.f32 %v4301, %v5124
    %v5126 = vmul.f32 %v5114, 3.8918573e-05
    %v5127 = vadd.f32 %v5126, 0.001143296
    %v5128 = vmul.f32 %v5114, %v5127
    %v5129 = vadd.f32 %v5128, 0.014752088
    %v5130 = vmul.f32 %v5114, %v5129
    %v5131 = vadd.f32 %v5130, 0.112945676
    %v5132 = vmul.f32 %v5114, %v5131
    %v5133 = vadd.f32 %v5132, 0.4994258
    %v5134 = vmul.f32 %v5114, %v5133
    %v5135 = vadd.f32 %v5134, 1.0
    %v5136 = vrcp.pop %v5135
    %v5137 = vmul.f32 %v5135, %v5136
    %v5138 = vsub.f32 1.0, %v5137
    %v5139 = vmul.f32 %v5136, %v5138
    %v5140 = vadd.f32 %v5136, %v5139
    %vm5141 = vweird.f32 %v5135
    %vm5142 = vweird.f32 %v5136
    %vm5143 = vmor %vm5141, %vm5142
    %v5144 = vsel %vm5143, %v5136, %v5140
    %v5145 = vand.u32 2147483647, %v5135
    %vm5146 = vcmp.eq.f32.partialorder %v5145, 8.507059e+37
    %v5147 = vand.u32 %v5135, 2147483648
    %v5148 = vor.u32 1.1754944e-38, %v5147
    %v5149 = vsel %vm5146, %v5148, %v5144
    %v5150 = vmul.f32 %v5125, %v5149
    %v5151 = vmin.f32 %v5150, 1.0
    %v5152 = vmax.f32 %v5151, -1.0
    %v5153 = vmul.f32 %v4302, %v4302
    %v5154 = vmin.f32 16.0, %v5153
    %v5155 = vmul.f32 %v5154, 2.1237322e-06
    %v5156 = vadd.f32 %v5155, 0.00028619796
    %v5157 = vmul.f32 %v5154, %v5156
    %v5158 = vadd.f32 %v5157, 0.0036580483
    %v5159 = vmul.f32 %v5154, %v5158
    %v5160 = vadd.f32 %v5159, 0.05243302
    %v5161 = vmul.f32 %v5154, %v5160
    %v5162 = vadd.f32 %v5161, 0.18741608
    %v5163 = vmul.f32 %v5154, %v5162
    %v5164 = vadd.f32 %v5163, 1.1283791
    %v5165 = vmul.f32 %v4302, %v5164
    %v5166 = vmul.f32 %v5154, 3.8918573e-05
    %v5167 = vadd.f32 %v5166, 0.001143296
    %v5168 = vmul.f32 %v5154, %v5167
    %v5169 = vadd.f32 %v5168, 0.014752088
    %v5170 = vmul.f32 %v5154, %v5169
    %v5171 = vadd.f32 %v5170, 0.112945676
    %v5172 = vmul.f32 %v5154, %v5171
    %v5173 = vadd.f32 %v5172, 0.4994258
    %v5174 = vmul.f32 %v5154, %v5173
    %v5175 = vadd.f32 %v5174, 1.0
    %v5176 = vrcp.pop %v5175
    %v5177 = vmul.f32 %v5175, %v5176
    %v5178 = vsub.f32 1.0, %v5177
    %v5179 = vmul.f32 %v5176, %v5178
    %v5180 = vadd.f32 %v5176, %v5179
    %vm5181 = vweird.f32 %v5175
    %vm5182 = vweird.f32 %v5176
    %vm5183 = vmor %vm5181, %vm5182
    %v5184 = vsel %vm5183, %v5176, %v5180
    %v5185 = vand.u32 2147483647, %v5175
    %vm5186 = vcmp.eq.f32.partialorder %v5185, 8.507059e+37
    %v5187 = vand.u32 %v5175, 2147483648
    %v5188 = vor.u32 1.1754944e-38, %v5187
    %v5189 = vsel %vm5186, %v5188, %v5184
    %v5190 = vmul.f32 %v5165, %v5189
    %v5191 = vmin.f32 %v5190, 1.0
    %v5192 = vmax.f32 %v5191, -1.0
    %v5193 = vmul.f32 %v4303, %v4303
    %v5194 = vmin.f32 16.0, %v5193
    %v5195 = vmul.f32 %v5194, 2.1237322e-06
    %v5196 = vadd.f32 %v5195, 0.00028619796
    %v5197 = vmul.f32 %v5194, %v5196
    %v5198 = vadd.f32 %v5197, 0.0036580483
    %v5199 = vmul.f32 %v5194, %v5198
    %v5200 = vadd.f32 %v5199, 0.05243302
    %v5201 = vmul.f32 %v5194, %v5200
    %v5202 = vadd.f32 %v5201, 0.18741608
    %v5203 = vmul.f32 %v5194, %v5202
    %v5204 = vadd.f32 %v5203, 1.1283791
    %v5205 = vmul.f32 %v4303, %v5204
    %v5206 = vmul.f32 %v5194, 3.8918573e-05
    %v5207 = vadd.f32 %v5206, 0.001143296
    %v5208 = vmul.f32 %v5194, %v5207
    %v5209 = vadd.f32 %v5208, 0.014752088
    %v5210 = vmul.f32 %v5194, %v5209
    %v5211 = vadd.f32 %v5210, 0.112945676
    %v5212 = vmul.f32 %v5194, %v5211
    %v5213 = vadd.f32 %v5212, 0.4994258
    %v5214 = vmul.f32 %v5194, %v5213
    %v5215 = vadd.f32 %v5214, 1.0
    %v5216 = vrcp.pop %v5215
    %v5217 = vmul.f32 %v5215, %v5216
    %v5218 = vsub.f32 1.0, %v5217
    %v5219 = vmul.f32 %v5216, %v5218
    %v5220 = vadd.f32 %v5216, %v5219
    %vm5221 = vweird.f32 %v5215
    %vm5222 = vweird.f32 %v5216
    %vm5223 = vmor %vm5221, %vm5222
    %v5224 = vsel %vm5223, %v5216, %v5220
    %v5225 = vand.u32 2147483647, %v5215
    %vm5226 = vcmp.eq.f32.partialorder %v5225, 8.507059e+37
    %v5227 = vand.u32 %v5215, 2147483648
    %v5228 = vor.u32 1.1754944e-38, %v5227
    %v5229 = vsel %vm5226, %v5228, %v5224
    %v5230 = vmul.f32 %v5205, %v5229
    %v5231 = vmin.f32 %v5230, 1.0
    %v5232 = vmax.f32 %v5231, -1.0
    %v5233 = vmul.f32 %v4304, %v4304
    %v5234 = vmin.f32 16.0, %v5233
    %v5235 = vmul.f32 %v5234, 2.1237322e-06
    %v5236 = vadd.f32 %v5235, 0.00028619796
    %v5237 = vmul.f32 %v5234, %v5236
    %v5238 = vadd.f32 %v5237, 0.0036580483
    %v5239 = vmul.f32 %v5234, %v5238
    %v5240 = vadd.f32 %v5239, 0.05243302
    %v5241 = vmul.f32 %v5234, %v5240
    %v5242 = vadd.f32 %v5241, 0.18741608
    %v5243 = vmul.f32 %v5234, %v5242
    %v5244 = vadd.f32 %v5243, 1.1283791
    %v5245 = vmul.f32 %v4304, %v5244
    %v5246 = vmul.f32 %v5234, 3.8918573e-05
    %v5247 = vadd.f32 %v5246, 0.001143296
    %v5248 = vmul.f32 %v5234, %v5247
    %v5249 = vadd.f32 %v5248, 0.014752088
    %v5250 = vmul.f32 %v5234, %v5249
    %v5251 = vadd.f32 %v5250, 0.112945676
    %v5252 = vmul.f32 %v5234, %v5251
    %v5253 = vadd.f32 %v5252, 0.4994258
    %v5254 = vmul.f32 %v5234, %v5253
    %v5255 = vadd.f32 %v5254, 1.0
    %v5256 = vrcp.pop %v5255
    %v5257 = vmul.f32 %v5255, %v5256
    %v5258 = vsub.f32 1.0, %v5257
    %v5259 = vmul.f32 %v5256, %v5258
    %v5260 = vadd.f32 %v5256, %v5259
    %vm5261 = vweird.f32 %v5255
    %vm5262 = vweird.f32 %v5256
    %vm5263 = vmor %vm5261, %vm5262
    %v5264 = vsel %vm5263, %v5256, %v5260
    %v5265 = vand.u32 2147483647, %v5255
    %vm5266 = vcmp.eq.f32.partialorder %v5265, 8.507059e+37
    %v5267 = vand.u32 %v5255, 2147483648
    %v5268 = vor.u32 1.1754944e-38, %v5267
    %v5269 = vsel %vm5266, %v5268, %v5264
    %v5270 = vmul.f32 %v5245, %v5269
    %v5271 = vmin.f32 %v5270, 1.0
    %v5272 = vmax.f32 %v5271, -1.0
    %v5273 = vmul.f32 %v4305, %v4305
    %v5274 = vmin.f32 16.0, %v5273
    %v5275 = vmul.f32 %v5274, 2.1237322e-06
    %v5276 = vadd.f32 %v5275, 0.00028619796
    %v5277 = vmul.f32 %v5274, %v5276
    %v5278 = vadd.f32 %v5277, 0.0036580483
    %v5279 = vmul.f32 %v5274, %v5278
    %v5280 = vadd.f32 %v5279, 0.05243302
    %v5281 = vmul.f32 %v5274, %v5280
    %v5282 = vadd.f32 %v5281, 0.18741608
    %v5283 = vmul.f32 %v5274, %v5282
    %v5284 = vadd.f32 %v5283, 1.1283791
    %v5285 = vmul.f32 %v4305, %v5284
    %v5286 = vmul.f32 %v5274, 3.8918573e-05
    %v5287 = vadd.f32 %v5286, 0.001143296
    %v5288 = vmul.f32 %v5274, %v5287
    %v5289 = vadd.f32 %v5288, 0.014752088
    %v5290 = vmul.f32 %v5274, %v5289
    %v5291 = vadd.f32 %v5290, 0.112945676
    %v5292 = vmul.f32 %v5274, %v5291
    %v5293 = vadd.f32 %v5292, 0.4994258
    %v5294 = vmul.f32 %v5274, %v5293
    %v5295 = vadd.f32 %v5294, 1.0
    %v5296 = vrcp.pop %v5295
    %v5297 = vmul.f32 %v5295, %v5296
    %v5298 = vsub.f32 1.0, %v5297
    %v5299 = vmul.f32 %v5296, %v5298
    %v5300 = vadd.f32 %v5296, %v5299
    %vm5301 = vweird.f32 %v5295
    %vm5302 = vweird.f32 %v5296
    %vm5303 = vmor %vm5301, %vm5302
    %v5304 = vsel %vm5303, %v5296, %v5300
    %v5305 = vand.u32 2147483647, %v5295
    %vm5306 = vcmp.eq.f32.partialorder %v5305, 8.507059e+37
    %v5307 = vand.u32 %v5295, 2147483648
    %v5308 = vor.u32 1.1754944e-38, %v5307
    %v5309 = vsel %vm5306, %v5308, %v5304
    %v5310 = vmul.f32 %v5285, %v5309
    %v5311 = vmin.f32 %v5310, 1.0
    %v5312 = vmax.f32 %v5311, -1.0
    %v5313 = vmul.f32 %v4306, %v4306
    %v5314 = vmin.f32 16.0, %v5313
    %v5315 = vmul.f32 %v5314, 2.1237322e-06
    %v5316 = vadd.f32 %v5315, 0.00028619796
    %v5317 = vmul.f32 %v5314, %v5316
    %v5318 = vadd.f32 %v5317, 0.0036580483
    %v5319 = vmul.f32 %v5314, %v5318
    %v5320 = vadd.f32 %v5319, 0.05243302
    %v5321 = vmul.f32 %v5314, %v5320
    %v5322 = vadd.f32 %v5321, 0.18741608
    %v5323 = vmul.f32 %v5314, %v5322
    %v5324 = vadd.f32 %v5323, 1.1283791
    %v5325 = vmul.f32 %v4306, %v5324
    %v5326 = vmul.f32 %v5314, 3.8918573e-05
    %v5327 = vadd.f32 %v5326, 0.001143296
    %v5328 = vmul.f32 %v5314, %v5327
    %v5329 = vadd.f32 %v5328, 0.014752088
    %v5330 = vmul.f32 %v5314, %v5329
    %v5331 = vadd.f32 %v5330, 0.112945676
    %v5332 = vmul.f32 %v5314, %v5331
    %v5333 = vadd.f32 %v5332, 0.4994258
    %v5334 = vmul.f32 %v5314, %v5333
    %v5335 = vadd.f32 %v5334, 1.0
    %v5336 = vrcp.pop %v5335
    %v5337 = vmul.f32 %v5335, %v5336
    %v5338 = vsub.f32 1.0, %v5337
    %v5339 = vmul.f32 %v5336, %v5338
    %v5340 = vadd.f32 %v5336, %v5339
    %vm5341 = vweird.f32 %v5335
    %vm5342 = vweird.f32 %v5336
    %vm5343 = vmor %vm5341, %vm5342
    %v5344 = vsel %vm5343, %v5336, %v5340
    %v5345 = vand.u32 2147483647, %v5335
    %vm5346 = vcmp.eq.f32.partialorder %v5345, 8.507059e+37
    %v5347 = vand.u32 %v5335, 2147483648
    %v5348 = vor.u32 1.1754944e-38, %v5347
    %v5349 = vsel %vm5346, %v5348, %v5344
    %v5350 = vmul.f32 %v5325, %v5349
    %v5351 = vmin.f32 %v5350, 1.0
    %v5352 = vmax.f32 %v5351, -1.0
    %v5353 = vmul.f32 %v4307, %v4307
    %v5354 = vmin.f32 16.0, %v5353
    %v5355 = vmul.f32 %v5354, 2.1237322e-06
    %v5356 = vadd.f32 %v5355, 0.00028619796
    %v5357 = vmul.f32 %v5354, %v5356
    %v5358 = vadd.f32 %v5357, 0.0036580483
    %v5359 = vmul.f32 %v5354, %v5358
    %v5360 = vadd.f32 %v5359, 0.05243302
    %v5361 = vmul.f32 %v5354, %v5360
    %v5362 = vadd.f32 %v5361, 0.18741608
    %v5363 = vmul.f32 %v5354, %v5362
    %v5364 = vadd.f32 %v5363, 1.1283791
    %v5365 = vmul.f32 %v4307, %v5364
    %v5366 = vmul.f32 %v5354, 3.8918573e-05
    %v5367 = vadd.f32 %v5366, 0.001143296
    %v5368 = vmul.f32 %v5354, %v5367
    %v5369 = vadd.f32 %v5368, 0.014752088
    %v5370 = vmul.f32 %v5354, %v5369
    %v5371 = vadd.f32 %v5370, 0.112945676
    %v5372 = vmul.f32 %v5354, %v5371
    %v5373 = vadd.f32 %v5372, 0.4994258
    %v5374 = vmul.f32 %v5354, %v5373
    %v5375 = vadd.f32 %v5374, 1.0
    %v5376 = vrcp.pop %v5375
    %v5377 = vmul.f32 %v5375, %v5376
    %v5378 = vsub.f32 1.0, %v5377
    %v5379 = vmul.f32 %v5376, %v5378
    %v5380 = vadd.f32 %v5376, %v5379
    %vm5381 = vweird.f32 %v5375
    %vm5382 = vweird.f32 %v5376
    %vm5383 = vmor %vm5381, %vm5382
    %v5384 = vsel %vm5383, %v5376, %v5380
    %v5385 = vand.u32 2147483647, %v5375
    %vm5386 = vcmp.eq.f32.partialorder %v5385, 8.507059e+37
    %v5387 = vand.u32 %v5375, 2147483648
    %v5388 = vor.u32 1.1754944e-38, %v5387
    %v5389 = vsel %vm5386, %v5388, %v5384
    %v5390 = vmul.f32 %v5365, %v5389
    %v5391 = vmin.f32 %v5390, 1.0
    %v5392 = vmax.f32 %v5391, -1.0
    %v5393 = vmul.f32 %v4308, %v4308
    %v5394 = vmin.f32 16.0, %v5393
    %v5395 = vmul.f32 %v5394, 2.1237322e-06
    %v5396 = vadd.f32 %v5395, 0.00028619796
    %v5397 = vmul.f32 %v5394, %v5396
    %v5398 = vadd.f32 %v5397, 0.0036580483
    %v5399 = vmul.f32 %v5394, %v5398
    %v5400 = vadd.f32 %v5399, 0.05243302
    %v5401 = vmul.f32 %v5394, %v5400
    %v5402 = vadd.f32 %v5401, 0.18741608
    %v5403 = vmul.f32 %v5394, %v5402
    %v5404 = vadd.f32 %v5403, 1.1283791
    %v5405 = vmul.f32 %v4308, %v5404
    %v5406 = vmul.f32 %v5394, 3.8918573e-05
    %v5407 = vadd.f32 %v5406, 0.001143296
    %v5408 = vmul.f32 %v5394, %v5407
    %v5409 = vadd.f32 %v5408, 0.014752088
    %v5410 = vmul.f32 %v5394, %v5409
    %v5411 = vadd.f32 %v5410, 0.112945676
    %v5412 = vmul.f32 %v5394, %v5411
    %v5413 = vadd.f32 %v5412, 0.4994258
    %v5414 = vmul.f32 %v5394, %v5413
    %v5415 = vadd.f32 %v5414, 1.0
    %v5416 = vrcp.pop %v5415
    %v5417 = vmul.f32 %v5415, %v5416
    %v5418 = vsub.f32 1.0, %v5417
    %v5419 = vmul.f32 %v5416, %v5418
    %v5420 = vadd.f32 %v5416, %v5419
    %vm5421 = vweird.f32 %v5415
    %vm5422 = vweird.f32 %v5416
    %vm5423 = vmor %vm5421, %vm5422
    %v5424 = vsel %vm5423, %v5416, %v5420
    %v5425 = vand.u32 2147483647, %v5415
    %vm5426 = vcmp.eq.f32.partialorder %v5425, 8.507059e+37
    %v5427 = vand.u32 %v5415, 2147483648
    %v5428 = vor.u32 1.1754944e-38, %v5427
    %v5429 = vsel %vm5426, %v5428, %v5424
    %v5430 = vmul.f32 %v5405, %v5429
    %v5431 = vmin.f32 %v5430, 1.0
    %v5432 = vmax.f32 %v5431, -1.0
    %v5433 = vmul.f32 %v4309, %v4309
    %v5434 = vmin.f32 16.0, %v5433
    %v5435 = vmul.f32 %v5434, 2.1237322e-06
    %v5436 = vadd.f32 %v5435, 0.00028619796
    %v5437 = vmul.f32 %v5434, %v5436
    %v5438 = vadd.f32 %v5437, 0.0036580483
    %v5439 = vmul.f32 %v5434, %v5438
    %v5440 = vadd.f32 %v5439, 0.05243302
    %v5441 = vmul.f32 %v5434, %v5440
    %v5442 = vadd.f32 %v5441, 0.18741608
    %v5443 = vmul.f32 %v5434, %v5442
    %v5444 = vadd.f32 %v5443, 1.1283791
    %v5445 = vmul.f32 %v4309, %v5444
    %v5446 = vmul.f32 %v5434, 3.8918573e-05
    %v5447 = vadd.f32 %v5446, 0.001143296
    %v5448 = vmul.f32 %v5434, %v5447
    %v5449 = vadd.f32 %v5448, 0.014752088
    %v5450 = vmul.f32 %v5434, %v5449
    %v5451 = vadd.f32 %v5450, 0.112945676
    %v5452 = vmul.f32 %v5434, %v5451
    %v5453 = vadd.f32 %v5452, 0.4994258
    %v5454 = vmul.f32 %v5434, %v5453
    %v5455 = vadd.f32 %v5454, 1.0
    %v5456 = vrcp.pop %v5455
    %v5457 = vmul.f32 %v5455, %v5456
    %v5458 = vsub.f32 1.0, %v5457
    %v5459 = vmul.f32 %v5456, %v5458
    %v5460 = vadd.f32 %v5456, %v5459
    %vm5461 = vweird.f32 %v5455
    %vm5462 = vweird.f32 %v5456
    %vm5463 = vmor %vm5461, %vm5462
    %v5464 = vsel %vm5463, %v5456, %v5460
    %v5465 = vand.u32 2147483647, %v5455
    %vm5466 = vcmp.eq.f32.partialorder %v5465, 8.507059e+37
    %v5467 = vand.u32 %v5455, 2147483648
    %v5468 = vor.u32 1.1754944e-38, %v5467
    %v5469 = vsel %vm5466, %v5468, %v5464
    %v5470 = vmul.f32 %v5445, %v5469
    %v5471 = vmin.f32 %v5470, 1.0
    %v5472 = vmax.f32 %v5471, -1.0
    %v5473 = vmul.f32 %v4310, %v4310
    %v5474 = vmin.f32 16.0, %v5473
    %v5475 = vmul.f32 %v5474, 2.1237322e-06
    %v5476 = vadd.f32 %v5475, 0.00028619796
    %v5477 = vmul.f32 %v5474, %v5476
    %v5478 = vadd.f32 %v5477, 0.0036580483
    %v5479 = vmul.f32 %v5474, %v5478
    %v5480 = vadd.f32 %v5479, 0.05243302
    %v5481 = vmul.f32 %v5474, %v5480
    %v5482 = vadd.f32 %v5481, 0.18741608
    %v5483 = vmul.f32 %v5474, %v5482
    %v5484 = vadd.f32 %v5483, 1.1283791
    %v5485 = vmul.f32 %v4310, %v5484
    %v5486 = vmul.f32 %v5474, 3.8918573e-05
    %v5487 = vadd.f32 %v5486, 0.001143296
    %v5488 = vmul.f32 %v5474, %v5487
    %v5489 = vadd.f32 %v5488, 0.014752088
    %v5490 = vmul.f32 %v5474, %v5489
    %v5491 = vadd.f32 %v5490, 0.112945676
    %v5492 = vmul.f32 %v5474, %v5491
    %v5493 = vadd.f32 %v5492, 0.4994258
    %v5494 = vmul.f32 %v5474, %v5493
    %v5495 = vadd.f32 %v5494, 1.0
    %v5496 = vrcp.pop %v5495
    %v5497 = vmul.f32 %v5495, %v5496
    %v5498 = vsub.f32 1.0, %v5497
    %v5499 = vmul.f32 %v5496, %v5498
    %v5500 = vadd.f32 %v5496, %v5499
    %vm5501 = vweird.f32 %v5495
    %vm5502 = vweird.f32 %v5496
    %vm5503 = vmor %vm5501, %vm5502
    %v5504 = vsel %vm5503, %v5496, %v5500
    %v5505 = vand.u32 2147483647, %v5495
    %vm5506 = vcmp.eq.f32.partialorder %v5505, 8.507059e+37
    %v5507 = vand.u32 %v5495, 2147483648
    %v5508 = vor.u32 1.1754944e-38, %v5507
    %v5509 = vsel %vm5506, %v5508, %v5504
    %v5510 = vmul.f32 %v5485, %v5509
    %v5511 = vmin.f32 %v5510, 1.0
    %v5512 = vmax.f32 %v5511, -1.0
    %v5513 = vmul.f32 %v4311, %v4311
    %v5514 = vmin.f32 16.0, %v5513
    %v5515 = vmul.f32 %v5514, 2.1237322e-06
    %v5516 = vadd.f32 %v5515, 0.00028619796
    %v5517 = vmul.f32 %v5514, %v5516
    %v5518 = vadd.f32 %v5517, 0.0036580483
    %v5519 = vmul.f32 %v5514, %v5518
    %v5520 = vadd.f32 %v5519, 0.05243302
    %v5521 = vmul.f32 %v5514, %v5520
    %v5522 = vadd.f32 %v5521, 0.18741608
    %v5523 = vmul.f32 %v5514, %v5522
    %v5524 = vadd.f32 %v5523, 1.1283791
    %v5525 = vmul.f32 %v4311, %v5524
    %v5526 = vmul.f32 %v5514, 3.8918573e-05
    %v5527 = vadd.f32 %v5526, 0.001143296
    %v5528 = vmul.f32 %v5514, %v5527
    %v5529 = vadd.f32 %v5528, 0.014752088
    %v5530 = vmul.f32 %v5514, %v5529
    %v5531 = vadd.f32 %v5530, 0.112945676
    %v5532 = vmul.f32 %v5514, %v5531
    %v5533 = vadd.f32 %v5532, 0.4994258
    %v5534 = vmul.f32 %v5514, %v5533
    %v5535 = vadd.f32 %v5534, 1.0
    %v5536 = vrcp.pop %v5535
    %v5537 = vmul.f32 %v5535, %v5536
    %v5538 = vsub.f32 1.0, %v5537
    %v5539 = vmul.f32 %v5536, %v5538
    %v5540 = vadd.f32 %v5536, %v5539
    %vm5541 = vweird.f32 %v5535
    %vm5542 = vweird.f32 %v5536
    %vm5543 = vmor %vm5541, %vm5542
    %v5544 = vsel %vm5543, %v5536, %v5540
    %v5545 = vand.u32 2147483647, %v5535
    %vm5546 = vcmp.eq.f32.partialorder %v5545, 8.507059e+37
    %v5547 = vand.u32 %v5535, 2147483648
    %v5548 = vor.u32 1.1754944e-38, %v5547
    %v5549 = vsel %vm5546, %v5548, %v5544
    %v5550 = vmul.f32 %v5525, %v5549
    %v5551 = vmin.f32 %v5550, 1.0
    %v5552 = vmax.f32 %v5551, -1.0
    %v5553 = vmul.f32 %v4312, %v4312
    %v5554 = vmin.f32 16.0, %v5553
    %v5555 = vmul.f32 %v5554, 2.1237322e-06
    %v5556 = vadd.f32 %v5555, 0.00028619796
    %v5557 = vmul.f32 %v5554, %v5556
    %v5558 = vadd.f32 %v5557, 0.0036580483
    %v5559 = vmul.f32 %v5554, %v5558
    %v5560 = vadd.f32 %v5559, 0.05243302
    %v5561 = vmul.f32 %v5554, %v5560
    %v5562 = vadd.f32 %v5561, 0.18741608
    %v5563 = vmul.f32 %v5554, %v5562
    %v5564 = vadd.f32 %v5563, 1.1283791
    %v5565 = vmul.f32 %v4312, %v5564
    %v5566 = vmul.f32 %v5554, 3.8918573e-05
    %v5567 = vadd.f32 %v5566, 0.001143296
    %v5568 = vmul.f32 %v5554, %v5567
    %v5569 = vadd.f32 %v5568, 0.014752088
    %v5570 = vmul.f32 %v5554, %v5569
    %v5571 = vadd.f32 %v5570, 0.112945676
    %v5572 = vmul.f32 %v5554, %v5571
    %v5573 = vadd.f32 %v5572, 0.4994258
    %v5574 = vmul.f32 %v5554, %v5573
    %v5575 = vadd.f32 %v5574, 1.0
    %v5576 = vrcp.pop %v5575
    %v5577 = vmul.f32 %v5575, %v5576
    %v5578 = vsub.f32 1.0, %v5577
    %v5579 = vmul.f32 %v5576, %v5578
    %v5580 = vadd.f32 %v5576, %v5579
    %vm5581 = vweird.f32 %v5575
    %vm5582 = vweird.f32 %v5576
    %vm5583 = vmor %vm5581, %vm5582
    %v5584 = vsel %vm5583, %v5576, %v5580
    %v5585 = vand.u32 2147483647, %v5575
    %vm5586 = vcmp.eq.f32.partialorder %v5585, 8.507059e+37
    %v5587 = vand.u32 %v5575, 2147483648
    %v5588 = vor.u32 1.1754944e-38, %v5587
    %v5589 = vsel %vm5586, %v5588, %v5584
    %v5590 = vmul.f32 %v5565, %v5589
    %v5591 = vmin.f32 %v5590, 1.0
    %v5592 = vmax.f32 %v5591, -1.0
    %v5593 = vadd.f32 %v4352, 1.0
    %v5594 = vadd.f32 %v4392, 1.0
    %v5595 = vadd.f32 %v4432, 1.0
    %v5596 = vadd.f32 %v4472, 1.0
    %v5597 = vadd.f32 %v4512, 1.0
    %v5598 = vadd.f32 %v4552, 1.0
    %v5599 = vadd.f32 %v4592, 1.0
    %v5600 = vadd.f32 %v4632, 1.0
    %v5601 = vadd.f32 %v4672, 1.0
    %v5602 = vadd.f32 %v4712, 1.0
    %v5603 = vadd.f32 %v4752, 1.0
    %v5604 = vadd.f32 %v4792, 1.0
    %v5605 = vadd.f32 %v4832, 1.0
    %v5606 = vadd.f32 %v4872, 1.0
    %v5607 = vadd.f32 %v4912, 1.0
    %v5608 = vadd.f32 %v4952, 1.0
    %v5609 = vadd.f32 %v4992, 1.0
    %v5610 = vadd.f32 %v5032, 1.0
    %v5611 = vadd.f32 %v5072, 1.0
    %v5612 = vadd.f32 %v5112, 1.0
    %v5613 = vadd.f32 %v5152, 1.0
    %v5614 = vadd.f32 %v5192, 1.0
    %v5615 = vadd.f32 %v5232, 1.0
    %v5616 = vadd.f32 %v5272, 1.0
    %v5617 = vadd.f32 %v5312, 1.0
    %v5618 = vadd.f32 %v5352, 1.0
    %v5619 = vadd.f32 %v5392, 1.0
    %v5620 = vadd.f32 %v5432, 1.0
    %v5621 = vadd.f32 %v5472, 1.0
    %v5622 = vadd.f32 %v5512, 1.0
    %v5623 = vadd.f32 %v5552, 1.0
    %v5624 = vadd.f32 %v5592, 1.0
    %v5625 = vmul.f32 %v4249, %v5593
    %v5626 = vmul.f32 %v4250, %v5594
    %v5627 = vmul.f32 %v4251, %v5595
    %v5628 = vmul.f32 %v4252, %v5596
    %v5629 = vmul.f32 %v4253, %v5597
    %v5630 = vmul.f32 %v4254, %v5598
    %v5631 = vmul.f32 %v4255, %v5599
    %v5632 = vmul.f32 %v4256, %v5600
    %v5633 = vmul.f32 %v4257, %v5601
    %v5634 = vmul.f32 %v4258, %v5602
    %v5635 = vmul.f32 %v4259, %v5603
    %v5636 = vmul.f32 %v4260, %v5604
    %v5637 = vmul.f32 %v4261, %v5605
    %v5638 = vmul.f32 %v4262, %v5606
    %v5639 = vmul.f32 %v4263, %v5607
    %v5640 = vmul.f32 %v4264, %v5608
    %v5641 = vmul.f32 %v4265, %v5609
    %v5642 = vmul.f32 %v4266, %v5610
    %v5643 = vmul.f32 %v4267, %v5611
    %v5644 = vmul.f32 %v4268, %v5612
    %v5645 = vmul.f32 %v4269, %v5613
    %v5646 = vmul.f32 %v4270, %v5614
    %v5647 = vmul.f32 %v4271, %v5615
    %v5648 = vmul.f32 %v4272, %v5616
    %v5649 = vmul.f32 %v4273, %v5617
    %v5650 = vmul.f32 %v4274, %v5618
    %v5651 = vmul.f32 %v4275, %v5619
    %v5652 = vmul.f32 %v4276, %v5620
    %v5653 = vmul.f32 %v4277, %v5621
    %v5654 = vmul.f32 %v4278, %v5622
    %v5655 = vmul.f32 %v4279, %v5623
    %v5656 = vmul.f32 %v4280, %v5624
    %v5657 = vpack.c.bf16 %v5629, %v5625
    %v5658 = vpack.c.bf16 %v5630, %v5626
    %v5659 = vpack.c.bf16 %v5631, %v5627
    %v5660 = vpack.c.bf16 %v5632, %v5628
    %v5661 = vpack.c.bf16 %v5637, %v5633
    %v5662 = vpack.c.bf16 %v5638, %v5634
    %v5663 = vpack.c.bf16 %v5639, %v5635
    %v5664 = vpack.c.bf16 %v5640, %v5636
    %v5665 = vpack.c.bf16 %v5645, %v5641
    %v5666 = vpack.c.bf16 %v5646, %v5642
    %v5667 = vpack.c.bf16 %v5647, %v5643
    %v5668 = vpack.c.bf16 %v5648, %v5644
    %v5669 = vpack.c.bf16 %v5653, %v5649
    %v5670 = vpack.c.bf16 %v5654, %v5650
    %v5671 = vpack.c.bf16 %v5655, %v5651
    %v5672 = vpack.c.bf16 %v5656, %v5652
    %v5673 = vld [vmem:[#allocation10] sm:$0xff]
    %v5674 = vld [vmem:[#allocation10 + $0x8] sm:$0xff]
    %v5675 = vld [vmem:[#allocation10 + $0x10] sm:$0xff]
    %v5676 = vld [vmem:[#allocation10 + $0x18] sm:$0xff]
    %v5677 = vld [vmem:[#allocation10 + $0x20] sm:$0xff]
    %v5678 = vld [vmem:[#allocation10 + $0x28] sm:$0xff]
    %v5679 = vld [vmem:[#allocation10 + $0x30] sm:$0xff]
    %v5680 = vld [vmem:[#allocation10 + $0x38] sm:$0xff]
    %v5681 = vld [vmem:[#allocation10 + $0x40] sm:$0xff]
    %v5682 = vld [vmem:[#allocation10 + $0x48] sm:$0xff]
    %v5683 = vld [vmem:[#allocation10 + $0x50] sm:$0xff]
    %v5684 = vld [vmem:[#allocation10 + $0x58] sm:$0xff]
    %v5685 = vld [vmem:[#allocation10 + $0x60] sm:$0xff]
    %v5686 = vld [vmem:[#allocation10 + $0x68] sm:$0xff]
    %v5687 = vld [vmem:[#allocation10 + $0x70] sm:$0xff]
    %v5688 = vld [vmem:[#allocation10 + $0x78] sm:$0xff]
    %v5689 = vld [vmem:[#allocation10 + $0x80] sm:$0xff]
    %v5690 = vld [vmem:[#allocation10 + $0x88] sm:$0xff]
    %v5691 = vld [vmem:[#allocation10 + $0x90] sm:$0xff]
    %v5692 = vld [vmem:[#allocation10 + $0x98] sm:$0xff]
    %v5693 = vld [vmem:[#allocation10 + $0xa0] sm:$0xff]
    %v5694 = vld [vmem:[#allocation10 + $0xa8] sm:$0xff]
    %v5695 = vld [vmem:[#allocation10 + $0xb0] sm:$0xff]
    %v5696 = vld [vmem:[#allocation10 + $0xb8] sm:$0xff]
    %v5697 = vld [vmem:[#allocation10 + $0xc0] sm:$0xff]
    %v5698 = vld [vmem:[#allocation10 + $0xc8] sm:$0xff]
    %v5699 = vld [vmem:[#allocation10 + $0xd0] sm:$0xff]
    %v5700 = vld [vmem:[#allocation10 + $0xd8] sm:$0xff]
    %v5701 = vld [vmem:[#allocation10 + $0xe0] sm:$0xff]
    %v5702 = vld [vmem:[#allocation10 + $0xe8] sm:$0xff]
    %v5703 = vld [vmem:[#allocation10 + $0xf0] sm:$0xff]
    %v5704 = vld [vmem:[#allocation10 + $0xf8] sm:$0xff]
    %v5705 = vld [vmem:[#allocation10 + $0x100] sm:$0xff]
    %v5706 = vld [vmem:[#allocation10 + $0x108] sm:$0xff]
    %v5707 = vld [vmem:[#allocation10 + $0x110] sm:$0xff]
    %v5708 = vld [vmem:[#allocation10 + $0x118] sm:$0xff]
    %v5709 = vld [vmem:[#allocation10 + $0x120] sm:$0xff]
    %v5710 = vld [vmem:[#allocation10 + $0x128] sm:$0xff]
    %v5711 = vld [vmem:[#allocation10 + $0x130] sm:$0xff]
    %v5712 = vld [vmem:[#allocation10 + $0x138] sm:$0xff]
    %v5713 = vld [vmem:[#allocation10 + $0x140] sm:$0xff]
    %v5714 = vld [vmem:[#allocation10 + $0x148] sm:$0xff]
    %v5715 = vld [vmem:[#allocation10 + $0x150] sm:$0xff]
    %v5716 = vld [vmem:[#allocation10 + $0x158] sm:$0xff]
    %v5717 = vld [vmem:[#allocation10 + $0x160] sm:$0xff]
    %v5718 = vld [vmem:[#allocation10 + $0x168] sm:$0xff]
    %v5719 = vld [vmem:[#allocation10 + $0x170] sm:$0xff]
    %v5720 = vld [vmem:[#allocation10 + $0x178] sm:$0xff]
    %v5721 = vld [vmem:[#allocation10 + $0x180] sm:$0xff]
    %v5722 = vld [vmem:[#allocation10 + $0x188] sm:$0xff]
    %v5723 = vld [vmem:[#allocation10 + $0x190] sm:$0xff]
    %v5724 = vld [vmem:[#allocation10 + $0x198] sm:$0xff]
    %v5725 = vld [vmem:[#allocation10 + $0x1a0] sm:$0xff]
    %v5726 = vld [vmem:[#allocation10 + $0x1a8] sm:$0xff]
    %v5727 = vld [vmem:[#allocation10 + $0x1b0] sm:$0xff]
    %v5728 = vld [vmem:[#allocation10 + $0x1b8] sm:$0xff]
    %v5729 = vld [vmem:[#allocation10 + $0x1c0] sm:$0xff]
    %v5730 = vld [vmem:[#allocation10 + $0x1c8] sm:$0xff]
    %v5731 = vld [vmem:[#allocation10 + $0x1d0] sm:$0xff]
    %v5732 = vld [vmem:[#allocation10 + $0x1d8] sm:$0xff]
    %v5733 = vld [vmem:[#allocation10 + $0x1e0] sm:$0xff]
    %v5734 = vld [vmem:[#allocation10 + $0x1e8] sm:$0xff]
    %v5735 = vld [vmem:[#allocation10 + $0x1f0] sm:$0xff]
    %v5736 = vld [vmem:[#allocation10 + $0x1f8] sm:$0xff]
    %v5737 = vld [vmem:[#allocation10 + $0x200] sm:$0xff]
    %v5738 = vld [vmem:[#allocation10 + $0x208] sm:$0xff]
    %v5739 = vld [vmem:[#allocation10 + $0x210] sm:$0xff]
    %v5740 = vld [vmem:[#allocation10 + $0x218] sm:$0xff]
    %v5741 = vld [vmem:[#allocation10 + $0x220] sm:$0xff]
    %v5742 = vld [vmem:[#allocation10 + $0x228] sm:$0xff]
    %v5743 = vld [vmem:[#allocation10 + $0x230] sm:$0xff]
    %v5744 = vld [vmem:[#allocation10 + $0x238] sm:$0xff]
    %v5745 = vld [vmem:[#allocation10 + $0x240] sm:$0xff]
    %v5746 = vld [vmem:[#allocation10 + $0x248] sm:$0xff]
    %v5747 = vld [vmem:[#allocation10 + $0x250] sm:$0xff]
    %v5748 = vld [vmem:[#allocation10 + $0x258] sm:$0xff]
    %v5749 = vld [vmem:[#allocation10 + $0x260] sm:$0xff]
    %v5750 = vld [vmem:[#allocation10 + $0x268] sm:$0xff]
    %v5751 = vld [vmem:[#allocation10 + $0x270] sm:$0xff]
    %v5752 = vld [vmem:[#allocation10 + $0x278] sm:$0xff]
    %v5753 = vld [vmem:[#allocation10 + $0x280] sm:$0xff]
    %v5754 = vld [vmem:[#allocation10 + $0x288] sm:$0xff]
    %v5755 = vld [vmem:[#allocation10 + $0x290] sm:$0xff]
    %v5756 = vld [vmem:[#allocation10 + $0x298] sm:$0xff]
    %v5757 = vld [vmem:[#allocation10 + $0x2a0] sm:$0xff]
    %v5758 = vld [vmem:[#allocation10 + $0x2a8] sm:$0xff]
    %v5759 = vld [vmem:[#allocation10 + $0x2b0] sm:$0xff]
    %v5760 = vld [vmem:[#allocation10 + $0x2b8] sm:$0xff]
    %v5761 = vld [vmem:[#allocation10 + $0x2c0] sm:$0xff]
    %v5762 = vld [vmem:[#allocation10 + $0x2c8] sm:$0xff]
    %v5763 = vld [vmem:[#allocation10 + $0x2d0] sm:$0xff]
    %v5764 = vld [vmem:[#allocation10 + $0x2d8] sm:$0xff]
    %v5765 = vld [vmem:[#allocation10 + $0x2e0] sm:$0xff]
    %v5766 = vld [vmem:[#allocation10 + $0x2e8] sm:$0xff]
    %v5767 = vld [vmem:[#allocation10 + $0x2f0] sm:$0xff]
    %v5768 = vld [vmem:[#allocation10 + $0x2f8] sm:$0xff]
    %v5769 = vld [vmem:[#allocation10 + $0x300] sm:$0xff]
    %v5770 = vld [vmem:[#allocation10 + $0x308] sm:$0xff]
    %v5771 = vld [vmem:[#allocation10 + $0x310] sm:$0xff]
    %v5772 = vld [vmem:[#allocation10 + $0x318] sm:$0xff]
    %v5773 = vld [vmem:[#allocation10 + $0x320] sm:$0xff]
    %v5774 = vld [vmem:[#allocation10 + $0x328] sm:$0xff]
    %v5775 = vld [vmem:[#allocation10 + $0x330] sm:$0xff]
    %v5776 = vld [vmem:[#allocation10 + $0x338] sm:$0xff]
    %v5777 = vld [vmem:[#allocation10 + $0x340] sm:$0xff]
    %v5778 = vld [vmem:[#allocation10 + $0x348] sm:$0xff]
    %v5779 = vld [vmem:[#allocation10 + $0x350] sm:$0xff]
    %v5780 = vld [vmem:[#allocation10 + $0x358] sm:$0xff]
    %v5781 = vld [vmem:[#allocation10 + $0x360] sm:$0xff]
    %v5782 = vld [vmem:[#allocation10 + $0x368] sm:$0xff]
    %v5783 = vld [vmem:[#allocation10 + $0x370] sm:$0xff]
    %v5784 = vld [vmem:[#allocation10 + $0x378] sm:$0xff]
    %v5785 = vld [vmem:[#allocation10 + $0x380] sm:$0xff]
    %v5786 = vld [vmem:[#allocation10 + $0x388] sm:$0xff]
    %v5787 = vld [vmem:[#allocation10 + $0x390] sm:$0xff]
    %v5788 = vld [vmem:[#allocation10 + $0x398] sm:$0xff]
    %v5789 = vld [vmem:[#allocation10 + $0x3a0] sm:$0xff]
    %v5790 = vld [vmem:[#allocation10 + $0x3a8] sm:$0xff]
    %v5791 = vld [vmem:[#allocation10 + $0x3b0] sm:$0xff]
    %v5792 = vld [vmem:[#allocation10 + $0x3b8] sm:$0xff]
    %v5793 = vld [vmem:[#allocation10 + $0x3c0] sm:$0xff]
    %v5794 = vld [vmem:[#allocation10 + $0x3c8] sm:$0xff]
    %v5795 = vld [vmem:[#allocation10 + $0x3d0] sm:$0xff]
    %v5796 = vld [vmem:[#allocation10 + $0x3d8] sm:$0xff]
    %v5797 = vld [vmem:[#allocation10 + $0x3e0] sm:$0xff]
    %v5798 = vld [vmem:[#allocation10 + $0x3e8] sm:$0xff]
    %v5799 = vld [vmem:[#allocation10 + $0x3f0] sm:$0xff]
    %v5800 = vld [vmem:[#allocation10 + $0x3f8] sm:$0xff]
    %v5801 = vld [vmem:[#allocation11] sm:$0xf]
    %v5803 = vperm.slane %v5801, 0
    %v5804 = vperm.slane %v5801, 1
    %v5805 = vperm.slane %v5801, 2
    %v5806 = vperm.slane %v5801, 3
    %v5939 = vunpack.c.l.b16 %v5673
    %v5940 = vunpack.c.h.b16 %v5673
    %v5941 = vunpack.c.l.b16 %v5674
    %v5942 = vunpack.c.h.b16 %v5674
    %v5943 = vunpack.c.l.b16 %v5675
    %v5944 = vunpack.c.h.b16 %v5675
    %v5945 = vunpack.c.l.b16 %v5676
    %v5946 = vunpack.c.h.b16 %v5676
    %v5947 = vunpack.c.l.b16 %v5677
    %v5948 = vunpack.c.h.b16 %v5677
    %v5949 = vunpack.c.l.b16 %v5678
    %v5950 = vunpack.c.h.b16 %v5678
    %v5951 = vunpack.c.l.b16 %v5679
    %v5952 = vunpack.c.h.b16 %v5679
    %v5953 = vunpack.c.l.b16 %v5680
    %v5954 = vunpack.c.h.b16 %v5680
    %v5955 = vunpack.c.l.b16 %v5681
    %v5956 = vunpack.c.h.b16 %v5681
    %v5957 = vunpack.c.l.b16 %v5682
    %v5958 = vunpack.c.h.b16 %v5682
    %v5959 = vunpack.c.l.b16 %v5683
    %v5960 = vunpack.c.h.b16 %v5683
    %v5961 = vunpack.c.l.b16 %v5684
    %v5962 = vunpack.c.h.b16 %v5684
    %v5963 = vunpack.c.l.b16 %v5685
    %v5964 = vunpack.c.h.b16 %v5685
    %v5965 = vunpack.c.l.b16 %v5686
    %v5966 = vunpack.c.h.b16 %v5686
    %v5967 = vunpack.c.l.b16 %v5687
    %v5968 = vunpack.c.h.b16 %v5687
    %v5969 = vunpack.c.l.b16 %v5688
    %v5970 = vunpack.c.h.b16 %v5688
    %v5971 = vunpack.c.l.b16 %v5689
    %v5972 = vunpack.c.h.b16 %v5689
    %v5973 = vunpack.c.l.b16 %v5690
    %v5974 = vunpack.c.h.b16 %v5690
    %v5975 = vunpack.c.l.b16 %v5691
    %v5976 = vunpack.c.h.b16 %v5691
    %v5977 = vunpack.c.l.b16 %v5692
    %v5978 = vunpack.c.h.b16 %v5692
    %v5979 = vunpack.c.l.b16 %v5693
    %v5980 = vunpack.c.h.b16 %v5693
    %v5981 = vunpack.c.l.b16 %v5694
    %v5982 = vunpack.c.h.b16 %v5694
    %v5983 = vunpack.c.l.b16 %v5695
    %v5984 = vunpack.c.h.b16 %v5695
    %v5985 = vunpack.c.l.b16 %v5696
    %v5986 = vunpack.c.h.b16 %v5696
    %v5987 = vunpack.c.l.b16 %v5697
    %v5988 = vunpack.c.h.b16 %v5697
    %v5989 = vunpack.c.l.b16 %v5698
    %v5990 = vunpack.c.h.b16 %v5698
    %v5991 = vunpack.c.l.b16 %v5699
    %v5992 = vunpack.c.h.b16 %v5699
    %v5993 = vunpack.c.l.b16 %v5700
    %v5994 = vunpack.c.h.b16 %v5700
    %v5995 = vunpack.c.l.b16 %v5701
    %v5996 = vunpack.c.h.b16 %v5701
    %v5997 = vunpack.c.l.b16 %v5702
    %v5998 = vunpack.c.h.b16 %v5702
    %v5999 = vunpack.c.l.b16 %v5703
    %v6000 = vunpack.c.h.b16 %v5703
    %v6001 = vunpack.c.l.b16 %v5704
    %v6002 = vunpack.c.h.b16 %v5704
    %v6003 = vunpack.c.l.b16 %v5705
    %v6004 = vunpack.c.h.b16 %v5705
    %v6005 = vunpack.c.l.b16 %v5706
    %v6006 = vunpack.c.h.b16 %v5706
    %v6007 = vunpack.c.l.b16 %v5707
    %v6008 = vunpack.c.h.b16 %v5707
    %v6009 = vunpack.c.l.b16 %v5708
    %v6010 = vunpack.c.h.b16 %v5708
    %v6011 = vunpack.c.l.b16 %v5709
    %v6012 = vunpack.c.h.b16 %v5709
    %v6013 = vunpack.c.l.b16 %v5710
    %v6014 = vunpack.c.h.b16 %v5710
    %v6015 = vunpack.c.l.b16 %v5711
    %v6016 = vunpack.c.h.b16 %v5711
    %v6017 = vunpack.c.l.b16 %v5712
    %v6018 = vunpack.c.h.b16 %v5712
    %v6019 = vunpack.c.l.b16 %v5713
    %v6020 = vunpack.c.h.b16 %v5713
    %v6021 = vunpack.c.l.b16 %v5714
    %v6022 = vunpack.c.h.b16 %v5714
    %v6023 = vunpack.c.l.b16 %v5715
    %v6024 = vunpack.c.h.b16 %v5715
    %v6025 = vunpack.c.l.b16 %v5716
    %v6026 = vunpack.c.h.b16 %v5716
    %v6027 = vunpack.c.l.b16 %v5717
    %v6028 = vunpack.c.h.b16 %v5717
    %v6029 = vunpack.c.l.b16 %v5718
    %v6030 = vunpack.c.h.b16 %v5718
    %v6031 = vunpack.c.l.b16 %v5719
    %v6032 = vunpack.c.h.b16 %v5719
    %v6033 = vunpack.c.l.b16 %v5720
    %v6034 = vunpack.c.h.b16 %v5720
    %v6035 = vunpack.c.l.b16 %v5721
    %v6036 = vunpack.c.h.b16 %v5721
    %v6037 = vunpack.c.l.b16 %v5722
    %v6038 = vunpack.c.h.b16 %v5722
    %v6039 = vunpack.c.l.b16 %v5723
    %v6040 = vunpack.c.h.b16 %v5723
    %v6041 = vunpack.c.l.b16 %v5724
    %v6042 = vunpack.c.h.b16 %v5724
    %v6043 = vunpack.c.l.b16 %v5725
    %v6044 = vunpack.c.h.b16 %v5725
    %v6045 = vunpack.c.l.b16 %v5726
    %v6046 = vunpack.c.h.b16 %v5726
    %v6047 = vunpack.c.l.b16 %v5727
    %v6048 = vunpack.c.h.b16 %v5727
    %v6049 = vunpack.c.l.b16 %v5728
    %v6050 = vunpack.c.h.b16 %v5728
    %v6051 = vunpack.c.l.b16 %v5729
    %v6052 = vunpack.c.h.b16 %v5729
    %v6053 = vunpack.c.l.b16 %v5730
    %v6054 = vunpack.c.h.b16 %v5730
    %v6055 = vunpack.c.l.b16 %v5731
    %v6056 = vunpack.c.h.b16 %v5731
    %v6057 = vunpack.c.l.b16 %v5732
    %v6058 = vunpack.c.h.b16 %v5732
    %v6059 = vunpack.c.l.b16 %v5733
    %v6060 = vunpack.c.h.b16 %v5733
    %v6061 = vunpack.c.l.b16 %v5734
    %v6062 = vunpack.c.h.b16 %v5734
    %v6063 = vunpack.c.l.b16 %v5735
    %v6064 = vunpack.c.h.b16 %v5735
    %v6065 = vunpack.c.l.b16 %v5736
    %v6066 = vunpack.c.h.b16 %v5736
    %v6067 = vunpack.c.l.b16 %v5737
    %v6068 = vunpack.c.h.b16 %v5737
    %v6069 = vunpack.c.l.b16 %v5738
    %v6070 = vunpack.c.h.b16 %v5738
    %v6071 = vunpack.c.l.b16 %v5739
    %v6072 = vunpack.c.h.b16 %v5739
    %v6073 = vunpack.c.l.b16 %v5740
    %v6074 = vunpack.c.h.b16 %v5740
    %v6075 = vunpack.c.l.b16 %v5741
    %v6076 = vunpack.c.h.b16 %v5741
    %v6077 = vunpack.c.l.b16 %v5742
    %v6078 = vunpack.c.h.b16 %v5742
    %v6079 = vunpack.c.l.b16 %v5743
    %v6080 = vunpack.c.h.b16 %v5743
    %v6081 = vunpack.c.l.b16 %v5744
    %v6082 = vunpack.c.h.b16 %v5744
    %v6083 = vunpack.c.l.b16 %v5745
    %v6084 = vunpack.c.h.b16 %v5745
    %v6085 = vunpack.c.l.b16 %v5746
    %v6086 = vunpack.c.h.b16 %v5746
    %v6087 = vunpack.c.l.b16 %v5747
    %v6088 = vunpack.c.h.b16 %v5747
    %v6089 = vunpack.c.l.b16 %v5748
    %v6090 = vunpack.c.h.b16 %v5748
    %v6091 = vunpack.c.l.b16 %v5749
    %v6092 = vunpack.c.h.b16 %v5749
    %v6093 = vunpack.c.l.b16 %v5750
    %v6094 = vunpack.c.h.b16 %v5750
    %v6095 = vunpack.c.l.b16 %v5751
    %v6096 = vunpack.c.h.b16 %v5751
    %v6097 = vunpack.c.l.b16 %v5752
    %v6098 = vunpack.c.h.b16 %v5752
    %v6099 = vunpack.c.l.b16 %v5753
    %v6100 = vunpack.c.h.b16 %v5753
    %v6101 = vunpack.c.l.b16 %v5754
    %v6102 = vunpack.c.h.b16 %v5754
    %v6103 = vunpack.c.l.b16 %v5755
    %v6104 = vunpack.c.h.b16 %v5755
    %v6105 = vunpack.c.l.b16 %v5756
    %v6106 = vunpack.c.h.b16 %v5756
    %v6107 = vunpack.c.l.b16 %v5757
    %v6108 = vunpack.c.h.b16 %v5757
    %v6109 = vunpack.c.l.b16 %v5758
    %v6110 = vunpack.c.h.b16 %v5758
    %v6111 = vunpack.c.l.b16 %v5759
    %v6112 = vunpack.c.h.b16 %v5759
    %v6113 = vunpack.c.l.b16 %v5760
    %v6114 = vunpack.c.h.b16 %v5760
    %v6115 = vunpack.c.l.b16 %v5761
    %v6116 = vunpack.c.h.b16 %v5761
    %v6117 = vunpack.c.l.b16 %v5762
    %v6118 = vunpack.c.h.b16 %v5762
    %v6119 = vunpack.c.l.b16 %v5763
    %v6120 = vunpack.c.h.b16 %v5763
    %v6121 = vunpack.c.l.b16 %v5764
    %v6122 = vunpack.c.h.b16 %v5764
    %v6123 = vunpack.c.l.b16 %v5765
    %v6124 = vunpack.c.h.b16 %v5765
    %v6125 = vunpack.c.l.b16 %v5766
    %v6126 = vunpack.c.h.b16 %v5766
    %v6127 = vunpack.c.l.b16 %v5767
    %v6128 = vunpack.c.h.b16 %v5767
    %v6129 = vunpack.c.l.b16 %v5768
    %v6130 = vunpack.c.h.b16 %v5768
    %v6131 = vunpack.c.l.b16 %v5769
    %v6132 = vunpack.c.h.b16 %v5769
    %v6133 = vunpack.c.l.b16 %v5770
    %v6134 = vunpack.c.h.b16 %v5770
    %v6135 = vunpack.c.l.b16 %v5771
    %v6136 = vunpack.c.h.b16 %v5771
    %v6137 = vunpack.c.l.b16 %v5772
    %v6138 = vunpack.c.h.b16 %v5772
    %v6139 = vunpack.c.l.b16 %v5773
    %v6140 = vunpack.c.h.b16 %v5773
    %v6141 = vunpack.c.l.b16 %v5774
    %v6142 = vunpack.c.h.b16 %v5774
    %v6143 = vunpack.c.l.b16 %v5775
    %v6144 = vunpack.c.h.b16 %v5775
    %v6145 = vunpack.c.l.b16 %v5776
    %v6146 = vunpack.c.h.b16 %v5776
    %v6147 = vunpack.c.l.b16 %v5777
    %v6148 = vunpack.c.h.b16 %v5777
    %v6149 = vunpack.c.l.b16 %v5778
    %v6150 = vunpack.c.h.b16 %v5778
    %v6151 = vunpack.c.l.b16 %v5779
    %v6152 = vunpack.c.h.b16 %v5779
    %v6153 = vunpack.c.l.b16 %v5780
    %v6154 = vunpack.c.h.b16 %v5780
    %v6155 = vunpack.c.l.b16 %v5781
    %v6156 = vunpack.c.h.b16 %v5781
    %v6157 = vunpack.c.l.b16 %v5782
    %v6158 = vunpack.c.h.b16 %v5782
    %v6159 = vunpack.c.l.b16 %v5783
    %v6160 = vunpack.c.h.b16 %v5783
    %v6161 = vunpack.c.l.b16 %v5784
    %v6162 = vunpack.c.h.b16 %v5784
    %v6163 = vunpack.c.l.b16 %v5785
    %v6164 = vunpack.c.h.b16 %v5785
    %v6165 = vunpack.c.l.b16 %v5786
    %v6166 = vunpack.c.h.b16 %v5786
    %v6167 = vunpack.c.l.b16 %v5787
    %v6168 = vunpack.c.h.b16 %v5787
    %v6169 = vunpack.c.l.b16 %v5788
    %v6170 = vunpack.c.h.b16 %v5788
    %v6171 = vunpack.c.l.b16 %v5789
    %v6172 = vunpack.c.h.b16 %v5789
    %v6173 = vunpack.c.l.b16 %v5790
    %v6174 = vunpack.c.h.b16 %v5790
    %v6175 = vunpack.c.l.b16 %v5791
    %v6176 = vunpack.c.h.b16 %v5791
    %v6177 = vunpack.c.l.b16 %v5792
    %v6178 = vunpack.c.h.b16 %v5792
    %v6179 = vunpack.c.l.b16 %v5793
    %v6180 = vunpack.c.h.b16 %v5793
    %v6181 = vunpack.c.l.b16 %v5794
    %v6182 = vunpack.c.h.b16 %v5794
    %v6183 = vunpack.c.l.b16 %v5795
    %v6184 = vunpack.c.h.b16 %v5795
    %v6185 = vunpack.c.l.b16 %v5796
    %v6186 = vunpack.c.h.b16 %v5796
    %v6187 = vunpack.c.l.b16 %v5797
    %v6188 = vunpack.c.h.b16 %v5797
    %v6189 = vunpack.c.l.b16 %v5798
    %v6190 = vunpack.c.h.b16 %v5798
    %v6191 = vunpack.c.l.b16 %v5799
    %v6192 = vunpack.c.h.b16 %v5799
    %v6193 = vunpack.c.l.b16 %v5800
    %v6194 = vunpack.c.h.b16 %v5800
    %v6195 = vpack.c.b16 %v5943, %v5939
    %v6196 = vpack.c.b16 %v5944, %v5940
    %v6197 = vpack.c.b16 %v5945, %v5941
    %v6198 = vpack.c.b16 %v5946, %v5942
    %v6199 = vpack.c.b16 %v5951, %v5947
    %v6200 = vpack.c.b16 %v5952, %v5948
    %v6201 = vpack.c.b16 %v5953, %v5949
    %v6202 = vpack.c.b16 %v5954, %v5950
    %v6203 = vpack.c.b16 %v5959, %v5955
    %v6204 = vpack.c.b16 %v5960, %v5956
    %v6205 = vpack.c.b16 %v5961, %v5957
    %v6206 = vpack.c.b16 %v5962, %v5958
    %v6207 = vpack.c.b16 %v5967, %v5963
    %v6208 = vpack.c.b16 %v5968, %v5964
    %v6209 = vpack.c.b16 %v5969, %v5965
    %v6210 = vpack.c.b16 %v5970, %v5966
    %v6211 = vpack.c.b16 %v5975, %v5971
    %v6212 = vpack.c.b16 %v5976, %v5972
    %v6213 = vpack.c.b16 %v5977, %v5973
    %v6214 = vpack.c.b16 %v5978, %v5974
    %v6215 = vpack.c.b16 %v5983, %v5979
    %v6216 = vpack.c.b16 %v5984, %v5980
    %v6217 = vpack.c.b16 %v5985, %v5981
    %v6218 = vpack.c.b16 %v5986, %v5982
    %v6219 = vpack.c.b16 %v5991, %v5987
    %v6220 = vpack.c.b16 %v5992, %v5988
    %v6221 = vpack.c.b16 %v5993, %v5989
    %v6222 = vpack.c.b16 %v5994, %v5990
    %v6223 = vpack.c.b16 %v5999, %v5995
    %v6224 = vpack.c.b16 %v6000, %v5996
    %v6225 = vpack.c.b16 %v6001, %v5997
    %v6226 = vpack.c.b16 %v6002, %v5998
    %v6227 = vpack.c.b16 %v6007, %v6003
    %v6228 = vpack.c.b16 %v6008, %v6004
    %v6229 = vpack.c.b16 %v6009, %v6005
    %v6230 = vpack.c.b16 %v6010, %v6006
    %v6231 = vpack.c.b16 %v6015, %v6011
    %v6232 = vpack.c.b16 %v6016, %v6012
    %v6233 = vpack.c.b16 %v6017, %v6013
    %v6234 = vpack.c.b16 %v6018, %v6014
    %v6235 = vpack.c.b16 %v6023, %v6019
    %v6236 = vpack.c.b16 %v6024, %v6020
    %v6237 = vpack.c.b16 %v6025, %v6021
    %v6238 = vpack.c.b16 %v6026, %v6022
    %v6239 = vpack.c.b16 %v6031, %v6027
    %v6240 = vpack.c.b16 %v6032, %v6028
    %v6241 = vpack.c.b16 %v6033, %v6029
    %v6242 = vpack.c.b16 %v6034, %v6030
    %v6243 = vpack.c.b16 %v6039, %v6035
    %v6244 = vpack.c.b16 %v6040, %v6036
    %v6245 = vpack.c.b16 %v6041, %v6037
    %v6246 = vpack.c.b16 %v6042, %v6038
    %v6247 = vpack.c.b16 %v6047, %v6043
    %v6248 = vpack.c.b16 %v6048, %v6044
    %v6249 = vpack.c.b16 %v6049, %v6045
    %v6250 = vpack.c.b16 %v6050, %v6046
    %v6251 = vpack.c.b16 %v6055, %v6051
    %v6252 = vpack.c.b16 %v6056, %v6052
    %v6253 = vpack.c.b16 %v6057, %v6053
    %v6254 = vpack.c.b16 %v6058, %v6054
    %v6255 = vpack.c.b16 %v6063, %v6059
    %v6256 = vpack.c.b16 %v6064, %v6060
    %v6257 = vpack.c.b16 %v6065, %v6061
    %v6258 = vpack.c.b16 %v6066, %v6062
    %v6259 = vpack.c.b16 %v6071, %v6067
    %v6260 = vpack.c.b16 %v6072, %v6068
    %v6261 = vpack.c.b16 %v6073, %v6069
    %v6262 = vpack.c.b16 %v6074, %v6070
    %v6263 = vpack.c.b16 %v6079, %v6075
    %v6264 = vpack.c.b16 %v6080, %v6076
    %v6265 = vpack.c.b16 %v6081, %v6077
    %v6266 = vpack.c.b16 %v6082, %v6078
    %v6267 = vpack.c.b16 %v6087, %v6083
    %v6268 = vpack.c.b16 %v6088, %v6084
    %v6269 = vpack.c.b16 %v6089, %v6085
    %v6270 = vpack.c.b16 %v6090, %v6086
    %v6271 = vpack.c.b16 %v6095, %v6091
    %v6272 = vpack.c.b16 %v6096, %v6092
    %v6273 = vpack.c.b16 %v6097, %v6093
    %v6274 = vpack.c.b16 %v6098, %v6094
    %v6275 = vpack.c.b16 %v6103, %v6099
    %v6276 = vpack.c.b16 %v6104, %v6100
    %v6277 = vpack.c.b16 %v6105, %v6101
    %v6278 = vpack.c.b16 %v6106, %v6102
    %v6279 = vpack.c.b16 %v6111, %v6107
    %v6280 = vpack.c.b16 %v6112, %v6108
    %v6281 = vpack.c.b16 %v6113, %v6109
    %v6282 = vpack.c.b16 %v6114, %v6110
    %v6283 = vpack.c.b16 %v6119, %v6115
    %v6284 = vpack.c.b16 %v6120, %v6116
    %v6285 = vpack.c.b16 %v6121, %v6117
    %v6286 = vpack.c.b16 %v6122, %v6118
    %v6287 = vpack.c.b16 %v6127, %v6123
    %v6288 = vpack.c.b16 %v6128, %v6124
    %v6289 = vpack.c.b16 %v6129, %v6125
    %v6290 = vpack.c.b16 %v6130, %v6126
    %v6291 = vpack.c.b16 %v6135, %v6131
    %v6292 = vpack.c.b16 %v6136, %v6132
    %v6293 = vpack.c.b16 %v6137, %v6133
    %v6294 = vpack.c.b16 %v6138, %v6134
    %v6295 = vpack.c.b16 %v6143, %v6139
    %v6296 = vpack.c.b16 %v6144, %v6140
    %v6297 = vpack.c.b16 %v6145, %v6141
    %v6298 = vpack.c.b16 %v6146, %v6142
    %v6299 = vpack.c.b16 %v6151, %v6147
    %v6300 = vpack.c.b16 %v6152, %v6148
    %v6301 = vpack.c.b16 %v6153, %v6149
    %v6302 = vpack.c.b16 %v6154, %v6150
    %v6303 = vpack.c.b16 %v6159, %v6155
    %v6304 = vpack.c.b16 %v6160, %v6156
    %v6305 = vpack.c.b16 %v6161, %v6157
    %v6306 = vpack.c.b16 %v6162, %v6158
    %v6307 = vpack.c.b16 %v6167, %v6163
    %v6308 = vpack.c.b16 %v6168, %v6164
    %v6309 = vpack.c.b16 %v6169, %v6165
    %v6310 = vpack.c.b16 %v6170, %v6166
    %v6311 = vpack.c.b16 %v6175, %v6171
    %v6312 = vpack.c.b16 %v6176, %v6172
    %v6313 = vpack.c.b16 %v6177, %v6173
    %v6314 = vpack.c.b16 %v6178, %v6174
    %v6315 = vpack.c.b16 %v6183, %v6179
    %v6316 = vpack.c.b16 %v6184, %v6180
    %v6317 = vpack.c.b16 %v6185, %v6181
    %v6318 = vpack.c.b16 %v6186, %v6182
    %v6319 = vpack.c.b16 %v6191, %v6187
    %v6320 = vpack.c.b16 %v6192, %v6188
    %v6321 = vpack.c.b16 %v6193, %v6189
    %v6322 = vpack.c.b16 %v6194, %v6190
    %6451 = vmatpush.bf16.msra.mxu0 %v6223
    %6452 = vmatpush.bf16.msra.mxu0 %v6219
    %6453 = vmatpush.bf16.msra.mxu0 %v6215
    %6454 = vmatpush.bf16.msra.mxu0 %v6211
    %6455 = vmatpush.bf16.msra.mxu0 %v6207
    %6456 = vmatpush.bf16.msra.mxu0 %v6203
    %6457 = vmatpush.bf16.msra.mxu0 %v6199
    %6458 = vmatpush.bf16.msra.mxu0 %v6195
    %6459 = vmatmul.bf16.gmra.mxu0 %v5657
    %v6460 = vpop.f32.mrf.mxu0
    %v6461 = vadd.f32 %v5803, %v6460
    %v6462 = vpop.f32.mrf.mxu0
    %v6463 = vadd.f32 %v5803, %v6462
    %6464 = vmatmul.bf16.gmra.mxu0 %v5661
    %v6465 = vpop.f32.mrf.mxu0
    %v6466 = vadd.f32 %v5803, %v6465
    %v6467 = vpop.f32.mrf.mxu0
    %v6468 = vadd.f32 %v5803, %v6467
    %6469 = vmatmul.bf16.gmra.mxu0 %v5665
    %v6470 = vpop.f32.mrf.mxu0
    %v6471 = vadd.f32 %v5803, %v6470
    %v6472 = vpop.f32.mrf.mxu0
    %v6473 = vadd.f32 %v5803, %v6472
    %6474 = vmatmul.bf16.gmra.mxu0 %v5669
    %v6475 = vpop.f32.mrf.mxu0
    %v6476 = vadd.f32 %v5803, %v6475
    %v6477 = vpop.f32.mrf.mxu0
    %v6478 = vadd.f32 %v5803, %v6477
    %6479 = vdwg.mxu0
    %6480 = vmatpush.bf16.msra.mxu0 %v6255
    %6481 = vmatpush.bf16.msra.mxu0 %v6251
    %6482 = vmatpush.bf16.msra.mxu0 %v6247
    %6483 = vmatpush.bf16.msra.mxu0 %v6243
    %6484 = vmatpush.bf16.msra.mxu0 %v6239
    %6485 = vmatpush.bf16.msra.mxu0 %v6235
    %6486 = vmatpush.bf16.msra.mxu0 %v6231
    %6487 = vmatpush.bf16.msra.mxu0 %v6227
    %6488 = vmatmul.bf16.gmra.mxu0 %v5658
    %v6489 = vpop.f32.mrf.mxu0
    %v6490 = vadd.f32 %v6461, %v6489
    %v6491 = vpop.f32.mrf.mxu0
    %v6492 = vadd.f32 %v6463, %v6491
    %6493 = vmatmul.bf16.gmra.mxu0 %v5662
    %v6494 = vpop.f32.mrf.mxu0
    %v6495 = vadd.f32 %v6466, %v6494
    %v6496 = vpop.f32.mrf.mxu0
    %v6497 = vadd.f32 %v6468, %v6496
    %6498 = vmatmul.bf16.gmra.mxu0 %v5666
    %v6499 = vpop.f32.mrf.mxu0
    %v6500 = vadd.f32 %v6471, %v6499
    %v6501 = vpop.f32.mrf.mxu0
    %v6502 = vadd.f32 %v6473, %v6501
    %6503 = vmatmul.bf16.gmra.mxu0 %v5670
    %v6504 = vpop.f32.mrf.mxu0
    %v6505 = vadd.f32 %v6476, %v6504
    %v6506 = vpop.f32.mrf.mxu0
    %v6507 = vadd.f32 %v6478, %v6506
    %6508 = vdwg.mxu0
    %6509 = vmatpush.bf16.msra.mxu0 %v6287
    %6510 = vmatpush.bf16.msra.mxu0 %v6283
    %6511 = vmatpush.bf16.msra.mxu0 %v6279
    %6512 = vmatpush.bf16.msra.mxu0 %v6275
    %6513 = vmatpush.bf16.msra.mxu0 %v6271
    %6514 = vmatpush.bf16.msra.mxu0 %v6267
    %6515 = vmatpush.bf16.msra.mxu0 %v6263
    %6516 = vmatpush.bf16.msra.mxu0 %v6259
    %6517 = vmatmul.bf16.gmra.mxu0 %v5659
    %v6518 = vpop.f32.mrf.mxu0
    %v6519 = vadd.f32 %v6490, %v6518
    %v6520 = vpop.f32.mrf.mxu0
    %v6521 = vadd.f32 %v6492, %v6520
    %6522 = vmatmul.bf16.gmra.mxu0 %v5663
    %v6523 = vpop.f32.mrf.mxu0
    %v6524 = vadd.f32 %v6495, %v6523
    %v6525 = vpop.f32.mrf.mxu0
    %v6526 = vadd.f32 %v6497, %v6525
    %6527 = vmatmul.bf16.gmra.mxu0 %v5667
    %v6528 = vpop.f32.mrf.mxu0
    %v6529 = vadd.f32 %v6500, %v6528
    %v6530 = vpop.f32.mrf.mxu0
    %v6531 = vadd.f32 %v6502, %v6530
    %6532 = vmatmul.bf16.gmra.mxu0 %v5671
    %v6533 = vpop.f32.mrf.mxu0
    %v6534 = vadd.f32 %v6505, %v6533
    %v6535 = vpop.f32.mrf.mxu0
    %v6536 = vadd.f32 %v6507, %v6535
    %6537 = vdwg.mxu0
    %6538 = vmatpush.bf16.msra.mxu0 %v6319
    %6539 = vmatpush.bf16.msra.mxu0 %v6315
    %6540 = vmatpush.bf16.msra.mxu0 %v6311
    %6541 = vmatpush.bf16.msra.mxu0 %v6307
    %6542 = vmatpush.bf16.msra.mxu0 %v6303
    %6543 = vmatpush.bf16.msra.mxu0 %v6299
    %6544 = vmatpush.bf16.msra.mxu0 %v6295
    %6545 = vmatpush.bf16.msra.mxu0 %v6291
    %6546 = vmatmul.bf16.gmra.mxu0 %v5660
    %v6547 = vpop.f32.mrf.mxu0
    %v6548 = vadd.f32 %v6519, %v6547
    %v6549 = vpop.f32.mrf.mxu0
    %v6550 = vadd.f32 %v6521, %v6549
    %6551 = vmatmul.bf16.gmra.mxu0 %v5664
    %v6552 = vpop.f32.mrf.mxu0
    %v6553 = vadd.f32 %v6524, %v6552
    %v6554 = vpop.f32.mrf.mxu0
    %v6555 = vadd.f32 %v6526, %v6554
    %6556 = vmatmul.bf16.gmra.mxu0 %v5668
    %v6557 = vpop.f32.mrf.mxu0
    %v6558 = vadd.f32 %v6529, %v6557
    %v6559 = vpop.f32.mrf.mxu0
    %v6560 = vadd.f32 %v6531, %v6559
    %6561 = vmatmul.bf16.gmra.mxu0 %v5672
    %v6562 = vpop.f32.mrf.mxu0
    %v6563 = vadd.f32 %v6534, %v6562
    %v6564 = vpop.f32.mrf.mxu0
    %v6565 = vadd.f32 %v6536, %v6564
    %6566 = vdwg.mxu0
    %6567 = vmatpush.bf16.msra.mxu0 %v6224
    %6568 = vmatpush.bf16.msra.mxu0 %v6220
    %6569 = vmatpush.bf16.msra.mxu0 %v6216
    %6570 = vmatpush.bf16.msra.mxu0 %v6212
    %6571 = vmatpush.bf16.msra.mxu0 %v6208
    %6572 = vmatpush.bf16.msra.mxu0 %v6204
    %6573 = vmatpush.bf16.msra.mxu0 %v6200
    %6574 = vmatpush.bf16.msra.mxu0 %v6196
    %6575 = vmatmul.bf16.gmra.mxu0 %v5657
    %v6576 = vpop.f32.mrf.mxu0
    %v6577 = vadd.f32 %v5804, %v6576
    %v6578 = vpop.f32.mrf.mxu0
    %v6579 = vadd.f32 %v5804, %v6578
    %6580 = vmatmul.bf16.gmra.mxu0 %v5661
    %v6581 = vpop.f32.mrf.mxu0
    %v6582 = vadd.f32 %v5804, %v6581
    %v6583 = vpop.f32.mrf.mxu0
    %v6584 = vadd.f32 %v5804, %v6583
    %6585 = vmatmul.bf16.gmra.mxu0 %v5665
    %v6586 = vpop.f32.mrf.mxu0
    %v6587 = vadd.f32 %v5804, %v6586
    %v6588 = vpop.f32.mrf.mxu0
    %v6589 = vadd.f32 %v5804, %v6588
    %6590 = vmatmul.bf16.gmra.mxu0 %v5669
    %v6591 = vpop.f32.mrf.mxu0
    %v6592 = vadd.f32 %v5804, %v6591
    %v6593 = vpop.f32.mrf.mxu0
    %v6594 = vadd.f32 %v5804, %v6593
    %6595 = vdwg.mxu0
    %6596 = vmatpush.bf16.msra.mxu0 %v6256
    %6597 = vmatpush.bf16.msra.mxu0 %v6252
    %6598 = vmatpush.bf16.msra.mxu0 %v6248
    %6599 = vmatpush.bf16.msra.mxu0 %v6244
    %6600 = vmatpush.bf16.msra.mxu0 %v6240
    %6601 = vmatpush.bf16.msra.mxu0 %v6236
    %6602 = vmatpush.bf16.msra.mxu0 %v6232
    %6603 = vmatpush.bf16.msra.mxu0 %v6228
    %6604 = vmatmul.bf16.gmra.mxu0 %v5658
    %v6605 = vpop.f32.mrf.mxu0
    %v6606 = vadd.f32 %v6577, %v6605
    %v6607 = vpop.f32.mrf.mxu0
    %v6608 = vadd.f32 %v6579, %v6607
    %6609 = vmatmul.bf16.gmra.mxu0 %v5662
    %v6610 = vpop.f32.mrf.mxu0
    %v6611 = vadd.f32 %v6582, %v6610
    %v6612 = vpop.f32.mrf.mxu0
    %v6613 = vadd.f32 %v6584, %v6612
    %6614 = vmatmul.bf16.gmra.mxu0 %v5666
    %v6615 = vpop.f32.mrf.mxu0
    %v6616 = vadd.f32 %v6587, %v6615
    %v6617 = vpop.f32.mrf.mxu0
    %v6618 = vadd.f32 %v6589, %v6617
    %6619 = vmatmul.bf16.gmra.mxu0 %v5670
    %v6620 = vpop.f32.mrf.mxu0
    %v6621 = vadd.f32 %v6592, %v6620
    %v6622 = vpop.f32.mrf.mxu0
    %v6623 = vadd.f32 %v6594, %v6622
    %6624 = vdwg.mxu0
    %6625 = vmatpush.bf16.msra.mxu0 %v6288
    %6626 = vmatpush.bf16.msra.mxu0 %v6284
    %6627 = vmatpush.bf16.msra.mxu0 %v6280
    %6628 = vmatpush.bf16.msra.mxu0 %v6276
    %6629 = vmatpush.bf16.msra.mxu0 %v6272
    %6630 = vmatpush.bf16.msra.mxu0 %v6268
    %6631 = vmatpush.bf16.msra.mxu0 %v6264
    %6632 = vmatpush.bf16.msra.mxu0 %v6260
    %6633 = vmatmul.bf16.gmra.mxu0 %v5659
    %v6634 = vpop.f32.mrf.mxu0
    %v6635 = vadd.f32 %v6606, %v6634
    %v6636 = vpop.f32.mrf.mxu0
    %v6637 = vadd.f32 %v6608, %v6636
    %6638 = vmatmul.bf16.gmra.mxu0 %v5663
    %v6639 = vpop.f32.mrf.mxu0
    %v6640 = vadd.f32 %v6611, %v6639
    %v6641 = vpop.f32.mrf.mxu0
    %v6642 = vadd.f32 %v6613, %v6641
    %6643 = vmatmul.bf16.gmra.mxu0 %v5667
    %v6644 = vpop.f32.mrf.mxu0
    %v6645 = vadd.f32 %v6616, %v6644
    %v6646 = vpop.f32.mrf.mxu0
    %v6647 = vadd.f32 %v6618, %v6646
    %6648 = vmatmul.bf16.gmra.mxu0 %v5671
    %v6649 = vpop.f32.mrf.mxu0
    %v6650 = vadd.f32 %v6621, %v6649
    %v6651 = vpop.f32.mrf.mxu0
    %v6652 = vadd.f32 %v6623, %v6651
    %6653 = vdwg.mxu0
    %6654 = vmatpush.bf16.msra.mxu0 %v6320
    %6655 = vmatpush.bf16.msra.mxu0 %v6316
    %6656 = vmatpush.bf16.msra.mxu0 %v6312
    %6657 = vmatpush.bf16.msra.mxu0 %v6308
    %6658 = vmatpush.bf16.msra.mxu0 %v6304
    %6659 = vmatpush.bf16.msra.mxu0 %v6300
    %6660 = vmatpush.bf16.msra.mxu0 %v6296
    %6661 = vmatpush.bf16.msra.mxu0 %v6292
    %6662 = vmatmul.bf16.gmra.mxu0 %v5660
    %v6663 = vpop.f32.mrf.mxu0
    %v6664 = vadd.f32 %v6635, %v6663
    %v6665 = vpop.f32.mrf.mxu0
    %v6666 = vadd.f32 %v6637, %v6665
    %6667 = vmatmul.bf16.gmra.mxu0 %v5664
    %v6668 = vpop.f32.mrf.mxu0
    %v6669 = vadd.f32 %v6640, %v6668
    %v6670 = vpop.f32.mrf.mxu0
    %v6671 = vadd.f32 %v6642, %v6670
    %6672 = vmatmul.bf16.gmra.mxu0 %v5668
    %v6673 = vpop.f32.mrf.mxu0
    %v6674 = vadd.f32 %v6645, %v6673
    %v6675 = vpop.f32.mrf.mxu0
    %v6676 = vadd.f32 %v6647, %v6675
    %6677 = vmatmul.bf16.gmra.mxu0 %v5672
    %v6678 = vpop.f32.mrf.mxu0
    %v6679 = vadd.f32 %v6650, %v6678
    %v6680 = vpop.f32.mrf.mxu0
    %v6681 = vadd.f32 %v6652, %v6680
    %6682 = vdwg.mxu0
    %6683 = vmatpush.bf16.msra.mxu0 %v6225
    %6684 = vmatpush.bf16.msra.mxu0 %v6221
    %6685 = vmatpush.bf16.msra.mxu0 %v6217
    %6686 = vmatpush.bf16.msra.mxu0 %v6213
    %6687 = vmatpush.bf16.msra.mxu0 %v6209
    %6688 = vmatpush.bf16.msra.mxu0 %v6205
    %6689 = vmatpush.bf16.msra.mxu0 %v6201
    %6690 = vmatpush.bf16.msra.mxu0 %v6197
    %6691 = vmatmul.bf16.gmra.mxu0 %v5657
    %v6692 = vpop.f32.mrf.mxu0
    %v6693 = vadd.f32 %v5805, %v6692
    %v6694 = vpop.f32.mrf.mxu0
    %v6695 = vadd.f32 %v5805, %v6694
    %6696 = vmatmul.bf16.gmra.mxu0 %v5661
    %v6697 = vpop.f32.mrf.mxu0
    %v6698 = vadd.f32 %v5805, %v6697
    %v6699 = vpop.f32.mrf.mxu0
    %v6700 = vadd.f32 %v5805, %v6699
    %6701 = vmatmul.bf16.gmra.mxu0 %v5665
    %v6702 = vpop.f32.mrf.mxu0
    %v6703 = vadd.f32 %v5805, %v6702
    %v6704 = vpop.f32.mrf.mxu0
    %v6705 = vadd.f32 %v5805, %v6704
    %6706 = vmatmul.bf16.gmra.mxu0 %v5669
    %v6707 = vpop.f32.mrf.mxu0
    %v6708 = vadd.f32 %v5805, %v6707
    %v6709 = vpop.f32.mrf.mxu0
    %v6710 = vadd.f32 %v5805, %v6709
    %6711 = vdwg.mxu0
    %6712 = vmatpush.bf16.msra.mxu0 %v6257
    %6713 = vmatpush.bf16.msra.mxu0 %v6253
    %6714 = vmatpush.bf16.msra.mxu0 %v6249
    %6715 = vmatpush.bf16.msra.mxu0 %v6245
    %6716 = vmatpush.bf16.msra.mxu0 %v6241
    %6717 = vmatpush.bf16.msra.mxu0 %v6237
    %6718 = vmatpush.bf16.msra.mxu0 %v6233
    %6719 = vmatpush.bf16.msra.mxu0 %v6229
    %6720 = vmatmul.bf16.gmra.mxu0 %v5658
    %v6721 = vpop.f32.mrf.mxu0
    %v6722 = vadd.f32 %v6693, %v6721
    %v6723 = vpop.f32.mrf.mxu0
    %v6724 = vadd.f32 %v6695, %v6723
    %6725 = vmatmul.bf16.gmra.mxu0 %v5662
    %v6726 = vpop.f32.mrf.mxu0
    %v6727 = vadd.f32 %v6698, %v6726
    %v6728 = vpop.f32.mrf.mxu0
    %v6729 = vadd.f32 %v6700, %v6728
    %6730 = vmatmul.bf16.gmra.mxu0 %v5666
    %v6731 = vpop.f32.mrf.mxu0
    %v6732 = vadd.f32 %v6703, %v6731
    %v6733 = vpop.f32.mrf.mxu0
    %v6734 = vadd.f32 %v6705, %v6733
    %6735 = vmatmul.bf16.gmra.mxu0 %v5670
    %v6736 = vpop.f32.mrf.mxu0
    %v6737 = vadd.f32 %v6708, %v6736
    %v6738 = vpop.f32.mrf.mxu0
    %v6739 = vadd.f32 %v6710, %v6738
    %6740 = vdwg.mxu0
    %6741 = vmatpush.bf16.msra.mxu0 %v6289
    %6742 = vmatpush.bf16.msra.mxu0 %v6285
    %6743 = vmatpush.bf16.msra.mxu0 %v6281
    %6744 = vmatpush.bf16.msra.mxu0 %v6277
    %6745 = vmatpush.bf16.msra.mxu0 %v6273
    %6746 = vmatpush.bf16.msra.mxu0 %v6269
    %6747 = vmatpush.bf16.msra.mxu0 %v6265
    %6748 = vmatpush.bf16.msra.mxu0 %v6261
    %6749 = vmatmul.bf16.gmra.mxu0 %v5659
    %v6750 = vpop.f32.mrf.mxu0
    %v6751 = vadd.f32 %v6722, %v6750
    %v6752 = vpop.f32.mrf.mxu0
    %v6753 = vadd.f32 %v6724, %v6752
    %6754 = vmatmul.bf16.gmra.mxu0 %v5663
    %v6755 = vpop.f32.mrf.mxu0
    %v6756 = vadd.f32 %v6727, %v6755
    %v6757 = vpop.f32.mrf.mxu0
    %v6758 = vadd.f32 %v6729, %v6757
    %6759 = vmatmul.bf16.gmra.mxu0 %v5667
    %v6760 = vpop.f32.mrf.mxu0
    %v6761 = vadd.f32 %v6732, %v6760
    %v6762 = vpop.f32.mrf.mxu0
    %v6763 = vadd.f32 %v6734, %v6762
    %6764 = vmatmul.bf16.gmra.mxu0 %v5671
    %v6765 = vpop.f32.mrf.mxu0
    %v6766 = vadd.f32 %v6737, %v6765
    %v6767 = vpop.f32.mrf.mxu0
    %v6768 = vadd.f32 %v6739, %v6767
    %6769 = vdwg.mxu0
    %6770 = vmatpush.bf16.msra.mxu0 %v6321
    %6771 = vmatpush.bf16.msra.mxu0 %v6317
    %6772 = vmatpush.bf16.msra.mxu0 %v6313
    %6773 = vmatpush.bf16.msra.mxu0 %v6309
    %6774 = vmatpush.bf16.msra.mxu0 %v6305
    %6775 = vmatpush.bf16.msra.mxu0 %v6301
    %6776 = vmatpush.bf16.msra.mxu0 %v6297
    %6777 = vmatpush.bf16.msra.mxu0 %v6293
    %6778 = vmatmul.bf16.gmra.mxu0 %v5660
    %v6779 = vpop.f32.mrf.mxu0
    %v6780 = vadd.f32 %v6751, %v6779
    %v6781 = vpop.f32.mrf.mxu0
    %v6782 = vadd.f32 %v6753, %v6781
    %6783 = vmatmul.bf16.gmra.mxu0 %v5664
    %v6784 = vpop.f32.mrf.mxu0
    %v6785 = vadd.f32 %v6756, %v6784
    %v6786 = vpop.f32.mrf.mxu0
    %v6787 = vadd.f32 %v6758, %v6786
    %6788 = vmatmul.bf16.gmra.mxu0 %v5668
    %v6789 = vpop.f32.mrf.mxu0
    %v6790 = vadd.f32 %v6761, %v6789
    %v6791 = vpop.f32.mrf.mxu0
    %v6792 = vadd.f32 %v6763, %v6791
    %6793 = vmatmul.bf16.gmra.mxu0 %v5672
    %v6794 = vpop.f32.mrf.mxu0
    %v6795 = vadd.f32 %v6766, %v6794
    %v6796 = vpop.f32.mrf.mxu0
    %v6797 = vadd.f32 %v6768, %v6796
    %6798 = vdwg.mxu0
    %6799 = vmatpush.bf16.msra.mxu0 %v6226
    %6800 = vmatpush.bf16.msra.mxu0 %v6222
    %6801 = vmatpush.bf16.msra.mxu0 %v6218
    %6802 = vmatpush.bf16.msra.mxu0 %v6214
    %6803 = vmatpush.bf16.msra.mxu0 %v6210
    %6804 = vmatpush.bf16.msra.mxu0 %v6206
    %6805 = vmatpush.bf16.msra.mxu0 %v6202
    %6806 = vmatpush.bf16.msra.mxu0 %v6198
    %6807 = vmatmul.bf16.gmra.mxu0 %v5657
    %v6808 = vpop.f32.mrf.mxu0
    %v6809 = vadd.f32 %v5806, %v6808
    %v6810 = vpop.f32.mrf.mxu0
    %v6811 = vadd.f32 %v5806, %v6810
    %6812 = vmatmul.bf16.gmra.mxu0 %v5661
    %v6813 = vpop.f32.mrf.mxu0
    %v6814 = vadd.f32 %v5806, %v6813
    %v6815 = vpop.f32.mrf.mxu0
    %v6816 = vadd.f32 %v5806, %v6815
    %6817 = vmatmul.bf16.gmra.mxu0 %v5665
    %v6818 = vpop.f32.mrf.mxu0
    %v6819 = vadd.f32 %v5806, %v6818
    %v6820 = vpop.f32.mrf.mxu0
    %v6821 = vadd.f32 %v5806, %v6820
    %6822 = vmatmul.bf16.gmra.mxu0 %v5669
    %v6823 = vpop.f32.mrf.mxu0
    %v6824 = vadd.f32 %v5806, %v6823
    %v6825 = vpop.f32.mrf.mxu0
    %v6826 = vadd.f32 %v5806, %v6825
    %6827 = vdwg.mxu0
    %6828 = vmatpush.bf16.msra.mxu0 %v6258
    %6829 = vmatpush.bf16.msra.mxu0 %v6254
    %6830 = vmatpush.bf16.msra.mxu0 %v6250
    %6831 = vmatpush.bf16.msra.mxu0 %v6246
    %6832 = vmatpush.bf16.msra.mxu0 %v6242
    %6833 = vmatpush.bf16.msra.mxu0 %v6238
    %6834 = vmatpush.bf16.msra.mxu0 %v6234
    %6835 = vmatpush.bf16.msra.mxu0 %v6230
    %6836 = vmatmul.bf16.gmra.mxu0 %v5658
    %v6837 = vpop.f32.mrf.mxu0
    %v6838 = vadd.f32 %v6809, %v6837
    %v6839 = vpop.f32.mrf.mxu0
    %v6840 = vadd.f32 %v6811, %v6839
    %6841 = vmatmul.bf16.gmra.mxu0 %v5662
    %v6842 = vpop.f32.mrf.mxu0
    %v6843 = vadd.f32 %v6814, %v6842
    %v6844 = vpop.f32.mrf.mxu0
    %v6845 = vadd.f32 %v6816, %v6844
    %6846 = vmatmul.bf16.gmra.mxu0 %v5666
    %v6847 = vpop.f32.mrf.mxu0
    %v6848 = vadd.f32 %v6819, %v6847
    %v6849 = vpop.f32.mrf.mxu0
    %v6850 = vadd.f32 %v6821, %v6849
    %6851 = vmatmul.bf16.gmra.mxu0 %v5670
    %v6852 = vpop.f32.mrf.mxu0
    %v6853 = vadd.f32 %v6824, %v6852
    %v6854 = vpop.f32.mrf.mxu0
    %v6855 = vadd.f32 %v6826, %v6854
    %6856 = vdwg.mxu0
    %6857 = vmatpush.bf16.msra.mxu0 %v6290
    %6858 = vmatpush.bf16.msra.mxu0 %v6286
    %6859 = vmatpush.bf16.msra.mxu0 %v6282
    %6860 = vmatpush.bf16.msra.mxu0 %v6278
    %6861 = vmatpush.bf16.msra.mxu0 %v6274
    %6862 = vmatpush.bf16.msra.mxu0 %v6270
    %6863 = vmatpush.bf16.msra.mxu0 %v6266
    %6864 = vmatpush.bf16.msra.mxu0 %v6262
    %6865 = vmatmul.bf16.gmra.mxu0 %v5659
    %v6866 = vpop.f32.mrf.mxu0
    %v6867 = vadd.f32 %v6838, %v6866
    %v6868 = vpop.f32.mrf.mxu0
    %v6869 = vadd.f32 %v6840, %v6868
    %6870 = vmatmul.bf16.gmra.mxu0 %v5663
    %v6871 = vpop.f32.mrf.mxu0
    %v6872 = vadd.f32 %v6843, %v6871
    %v6873 = vpop.f32.mrf.mxu0
    %v6874 = vadd.f32 %v6845, %v6873
    %6875 = vmatmul.bf16.gmra.mxu0 %v5667
    %v6876 = vpop.f32.mrf.mxu0
    %v6877 = vadd.f32 %v6848, %v6876
    %v6878 = vpop.f32.mrf.mxu0
    %v6879 = vadd.f32 %v6850, %v6878
    %6880 = vmatmul.bf16.gmra.mxu0 %v5671
    %v6881 = vpop.f32.mrf.mxu0
    %v6882 = vadd.f32 %v6853, %v6881
    %v6883 = vpop.f32.mrf.mxu0
    %v6884 = vadd.f32 %v6855, %v6883
    %6885 = vdwg.mxu0
    %6886 = vmatpush.bf16.msra.mxu0 %v6322
    %6887 = vmatpush.bf16.msra.mxu0 %v6318
    %6888 = vmatpush.bf16.msra.mxu0 %v6314
    %6889 = vmatpush.bf16.msra.mxu0 %v6310
    %6890 = vmatpush.bf16.msra.mxu0 %v6306
    %6891 = vmatpush.bf16.msra.mxu0 %v6302
    %6892 = vmatpush.bf16.msra.mxu0 %v6298
    %6893 = vmatpush.bf16.msra.mxu0 %v6294
    %6894 = vmatmul.bf16.gmra.mxu0 %v5660
    %v6895 = vpop.f32.mrf.mxu0
    %v6896 = vadd.f32 %v6867, %v6895
    %v6897 = vpop.f32.mrf.mxu0
    %v6898 = vadd.f32 %v6869, %v6897
    %6899 = vmatmul.bf16.gmra.mxu0 %v5664
    %v6900 = vpop.f32.mrf.mxu0
    %v6901 = vadd.f32 %v6872, %v6900
    %v6902 = vpop.f32.mrf.mxu0
    %v6903 = vadd.f32 %v6874, %v6902
    %6904 = vmatmul.bf16.gmra.mxu0 %v5668
    %v6905 = vpop.f32.mrf.mxu0
    %v6906 = vadd.f32 %v6877, %v6905
    %v6907 = vpop.f32.mrf.mxu0
    %v6908 = vadd.f32 %v6879, %v6907
    %6909 = vmatmul.bf16.gmra.mxu0 %v5672
    %v6910 = vpop.f32.mrf.mxu0
    %v6911 = vadd.f32 %v6882, %v6910
    %v6912 = vpop.f32.mrf.mxu0
    %v6913 = vadd.f32 %v6884, %v6912
    %6914 = vdwg.mxu0
    %v6915 = vld [vmem:[#allocation13] sm:$0xf]
    %v6916 = vld [vmem:[#allocation14] sm:$0xf]
    %v6917 = vadd.f32 %v6548, %v6550
    %v6918 = vadd.f32 %v6917, %v6553
    %v6919 = vadd.f32 %v6918, %v6555
    %v6920 = vadd.f32 %v6919, %v6558
    %v6921 = vadd.f32 %v6920, %v6560
    %v6922 = vadd.f32 %v6921, %v6563
    %v6923 = vadd.f32 %v6922, %v6565
    %v6924 = vrot.slane %v6923, 4
    %v6925 = vadd.f32 %v6923, %v6924
    %v6926 = vrot.slane %v6925, 2
    %v6927 = vadd.f32 %v6925, %v6926
    %v6928 = vrot.slane %v6927, 1
    %v6929 = vadd.f32 %v6927, %v6928
    %v6930 = vadd.f32 %v6664, %v6666
    %v6931 = vadd.f32 %v6930, %v6669
    %v6932 = vadd.f32 %v6931, %v6671
    %v6933 = vadd.f32 %v6932, %v6674
    %v6934 = vadd.f32 %v6933, %v6676
    %v6935 = vadd.f32 %v6934, %v6679
    %v6936 = vadd.f32 %v6935, %v6681
    %v6937 = vrot.slane %v6936, 4
    %v6938 = vadd.f32 %v6936, %v6937
    %v6939 = vrot.slane %v6938, 2
    %v6940 = vadd.f32 %v6938, %v6939
    %v6941 = vrot.slane %v6940, 1
    %v6942 = vadd.f32 %v6940, %v6941
    %v6943 = vadd.f32 %v6780, %v6782
    %v6944 = vadd.f32 %v6943, %v6785
    %v6945 = vadd.f32 %v6944, %v6787
    %v6946 = vadd.f32 %v6945, %v6790
    %v6947 = vadd.f32 %v6946, %v6792
    %v6948 = vadd.f32 %v6947, %v6795
    %v6949 = vadd.f32 %v6948, %v6797
    %v6950 = vrot.slane %v6949, 4
    %v6951 = vadd.f32 %v6949, %v6950
    %v6952 = vrot.slane %v6951, 2
    %v6953 = vadd.f32 %v6951, %v6952
    %v6954 = vrot.slane %v6953, 1
    %v6955 = vadd.f32 %v6953, %v6954
    %v6956 = vadd.f32 %v6896, %v6898
    %v6957 = vadd.f32 %v6956, %v6901
    %v6958 = vadd.f32 %v6957, %v6903
    %v6959 = vadd.f32 %v6958, %v6906
    %v6960 = vadd.f32 %v6959, %v6908
    %v6961 = vadd.f32 %v6960, %v6911
    %v6962 = vadd.f32 %v6961, %v6913
    %v6963 = vrot.slane %v6962, 4
    %v6964 = vadd.f32 %v6962, %v6963
    %v6965 = vrot.slane %v6964, 2
    %v6966 = vadd.f32 %v6964, %v6965
    %v6967 = vrot.slane %v6966, 1
    %v6968 = vadd.f32 %v6966, %v6967
    %v6969 = vmul.f32 %v6929, %v1012
    %v6970 = vmul.f32 %v6942, %v1012
    %v6971 = vmul.f32 %v6955, %v1012
    %v6972 = vmul.f32 %v6968, %v1012
    %v6973 = vsub.f32 %v6548, %v6969
    %v6974 = vsub.f32 %v6664, %v6970
    %v6975 = vsub.f32 %v6780, %v6971
    %v6976 = vsub.f32 %v6896, %v6972
    %v6977 = vsub.f32 %v6550, %v6969
    %v6978 = vsub.f32 %v6666, %v6970
    %v6979 = vsub.f32 %v6782, %v6971
    %v6980 = vsub.f32 %v6898, %v6972
    %v6981 = vsub.f32 %v6553, %v6969
    %v6982 = vsub.f32 %v6669, %v6970
    %v6983 = vsub.f32 %v6785, %v6971
    %v6984 = vsub.f32 %v6901, %v6972
    %v6985 = vsub.f32 %v6555, %v6969
    %v6986 = vsub.f32 %v6671, %v6970
    %v6987 = vsub.f32 %v6787, %v6971
    %v6988 = vsub.f32 %v6903, %v6972
    %v6989 = vsub.f32 %v6558, %v6969
    %v6990 = vsub.f32 %v6674, %v6970
    %v6991 = vsub.f32 %v6790, %v6971
    %v6992 = vsub.f32 %v6906, %v6972
    %v6993 = vsub.f32 %v6560, %v6969
    %v6994 = vsub.f32 %v6676, %v6970
    %v6995 = vsub.f32 %v6792, %v6971
    %v6996 = vsub.f32 %v6908, %v6972
    %v6997 = vsub.f32 %v6563, %v6969
    %v6998 = vsub.f32 %v6679, %v6970
    %v6999 = vsub.f32 %v6795, %v6971
    %v7000 = vsub.f32 %v6911, %v6972
    %v7001 = vsub.f32 %v6565, %v6969
    %v7002 = vsub.f32 %v6681, %v6970
    %v7003 = vsub.f32 %v6797, %v6971
    %v7004 = vsub.f32 %v6913, %v6972
    %v7005 = vmul.f32 %v6973, %v6973
    %v7006 = vmul.f32 %v6974, %v6974
    %v7007 = vmul.f32 %v6975, %v6975
    %v7008 = vmul.f32 %v6976, %v6976
    %v7009 = vmul.f32 %v6977, %v6977
    %v7010 = vmul.f32 %v6978, %v6978
    %v7011 = vmul.f32 %v6979, %v6979
    %v7012 = vmul.f32 %v6980, %v6980
    %v7013 = vmul.f32 %v6981, %v6981
    %v7014 = vmul.f32 %v6982, %v6982
    %v7015 = vmul.f32 %v6983, %v6983
    %v7016 = vmul.f32 %v6984, %v6984
    %v7017 = vmul.f32 %v6985, %v6985
    %v7018 = vmul.f32 %v6986, %v6986
    %v7019 = vmul.f32 %v6987, %v6987
    %v7020 = vmul.f32 %v6988, %v6988
    %v7021 = vmul.f32 %v6989, %v6989
    %v7022 = vmul.f32 %v6990, %v6990
    %v7023 = vmul.f32 %v6991, %v6991
    %v7024 = vmul.f32 %v6992, %v6992
    %v7025 = vmul.f32 %v6993, %v6993
    %v7026 = vmul.f32 %v6994, %v6994
    %v7027 = vmul.f32 %v6995, %v6995
    %v7028 = vmul.f32 %v6996, %v6996
    %v7029 = vmul.f32 %v6997, %v6997
    %v7030 = vmul.f32 %v6998, %v6998
    %v7031 = vmul.f32 %v6999, %v6999
    %v7032 = vmul.f32 %v7000, %v7000
    %v7033 = vmul.f32 %v7001, %v7001
    %v7034 = vmul.f32 %v7002, %v7002
    %v7035 = vmul.f32 %v7003, %v7003
    %v7036 = vmul.f32 %v7004, %v7004
    %v7037 = vadd.f32 %v7005, %v7009
    %v7038 = vadd.f32 %v7037, %v7013
    %v7039 = vadd.f32 %v7038, %v7017
    %v7040 = vadd.f32 %v7039, %v7021
    %v7041 = vadd.f32 %v7040, %v7025
    %v7042 = vadd.f32 %v7041, %v7029
    %v7043 = vadd.f32 %v7042, %v7033
    %v7044 = vrot.slane %v7043, 4
    %v7045 = vadd.f32 %v7043, %v7044
    %v7046 = vrot.slane %v7045, 2
    %v7047 = vadd.f32 %v7045, %v7046
    %v7048 = vrot.slane %v7047, 1
    %v7049 = vadd.f32 %v7047, %v7048
    %v7050 = vadd.f32 %v7006, %v7010
    %v7051 = vadd.f32 %v7050, %v7014
    %v7052 = vadd.f32 %v7051, %v7018
    %v7053 = vadd.f32 %v7052, %v7022
    %v7054 = vadd.f32 %v7053, %v7026
    %v7055 = vadd.f32 %v7054, %v7030
    %v7056 = vadd.f32 %v7055, %v7034
    %v7057 = vrot.slane %v7056, 4
    %v7058 = vadd.f32 %v7056, %v7057
    %v7059 = vrot.slane %v7058, 2
    %v7060 = vadd.f32 %v7058, %v7059
    %v7061 = vrot.slane %v7060, 1
    %v7062 = vadd.f32 %v7060, %v7061
    %v7063 = vadd.f32 %v7007, %v7011
    %v7064 = vadd.f32 %v7063, %v7015
    %v7065 = vadd.f32 %v7064, %v7019
    %v7066 = vadd.f32 %v7065, %v7023
    %v7067 = vadd.f32 %v7066, %v7027
    %v7068 = vadd.f32 %v7067, %v7031
    %v7069 = vadd.f32 %v7068, %v7035
    %v7070 = vrot.slane %v7069, 4
    %v7071 = vadd.f32 %v7069, %v7070
    %v7072 = vrot.slane %v7071, 2
    %v7073 = vadd.f32 %v7071, %v7072
    %v7074 = vrot.slane %v7073, 1
    %v7075 = vadd.f32 %v7073, %v7074
    %v7076 = vadd.f32 %v7008, %v7012
    %v7077 = vadd.f32 %v7076, %v7016
    %v7078 = vadd.f32 %v7077, %v7020
    %v7079 = vadd.f32 %v7078, %v7024
    %v7080 = vadd.f32 %v7079, %v7028
    %v7081 = vadd.f32 %v7080, %v7032
    %v7082 = vadd.f32 %v7081, %v7036
    %v7083 = vrot.slane %v7082, 4
    %v7084 = vadd.f32 %v7082, %v7083
    %v7085 = vrot.slane %v7084, 2
    %v7086 = vadd.f32 %v7084, %v7085
    %v7087 = vrot.slane %v7086, 1
    %v7088 = vadd.f32 %v7086, %v7087
    %v7089 = vmul.f32 %v7049, %v1012
    %v7090 = vmul.f32 %v7062, %v1012
    %v7091 = vmul.f32 %v7075, %v1012
    %v7092 = vmul.f32 %v7088, %v1012
    %v7093 = vadd.f32 %v7089, 1e-05
    %v7094 = vadd.f32 %v7090, 1e-05
    %v7095 = vadd.f32 %v7091, 1e-05
    %v7096 = vadd.f32 %v7092, 1e-05
    %v7097 = vrsqrt.pop %v7093
    %v7098 = vmul.f32 %v7097, %v7093
    %v7099 = vmul.f32 %v7098, %v7097
    %v7100 = vmul.f32 0.5, %v7099
    %v7101 = vsub.f32 1.5, %v7100
    %v7102 = vmul.f32 %v7097, %v7101
    %vm7103 = vweird.f32 %v7093
    %vm7104 = vweird.f32 %v7097
    %vm7105 = vmor %vm7103, %vm7104
    %v7106 = vsel %vm7105, %v7097, %v7102
    %v7107 = vrsqrt.pop %v7094
    %v7108 = vmul.f32 %v7107, %v7094
    %v7109 = vmul.f32 %v7108, %v7107
    %v7110 = vmul.f32 0.5, %v7109
    %v7111 = vsub.f32 1.5, %v7110
    %v7112 = vmul.f32 %v7107, %v7111
    %vm7113 = vweird.f32 %v7094
    %vm7114 = vweird.f32 %v7107
    %vm7115 = vmor %vm7113, %vm7114
    %v7116 = vsel %vm7115, %v7107, %v7112
    %v7117 = vrsqrt.pop %v7095
    %v7118 = vmul.f32 %v7117, %v7095
    %v7119 = vmul.f32 %v7118, %v7117
    %v7120 = vmul.f32 0.5, %v7119
    %v7121 = vsub.f32 1.5, %v7120
    %v7122 = vmul.f32 %v7117, %v7121
    %vm7123 = vweird.f32 %v7095
    %vm7124 = vweird.f32 %v7117
    %vm7125 = vmor %vm7123, %vm7124
    %v7126 = vsel %vm7125, %v7117, %v7122
    %v7127 = vrsqrt.pop %v7096
    %v7128 = vmul.f32 %v7127, %v7096
    %v7129 = vmul.f32 %v7128, %v7127
    %v7130 = vmul.f32 0.5, %v7129
    %v7131 = vsub.f32 1.5, %v7130
    %v7132 = vmul.f32 %v7127, %v7131
    %vm7133 = vweird.f32 %v7096
    %vm7134 = vweird.f32 %v7127
    %vm7135 = vmor %vm7133, %vm7134
    %v7136 = vsel %vm7135, %v7127, %v7132
    %v7138 = vperm.slane %v6915, 0
    %v7139 = vperm.slane %v6915, 1
    %v7140 = vperm.slane %v6915, 2
    %v7141 = vperm.slane %v6915, 3
    %v7146 = vmul.f32 %v7106, %v7138
    %v7147 = vmul.f32 %v7116, %v7139
    %v7148 = vmul.f32 %v7126, %v7140
    %v7149 = vmul.f32 %v7136, %v7141
    %v7150 = vperm.slane %v7146, 0
    %v7151 = vperm.slane %v7147, 0
    %v7152 = vperm.slane %v7148, 0
    %v7153 = vperm.slane %v7149, 0
    %v7154 = vmul.f32 %v6973, %v7150
    %v7155 = vmul.f32 %v6974, %v7151
    %v7156 = vmul.f32 %v6975, %v7152
    %v7157 = vmul.f32 %v6976, %v7153
    %v7158 = vmul.f32 %v6977, %v7150
    %v7159 = vmul.f32 %v6978, %v7151
    %v7160 = vmul.f32 %v6979, %v7152
    %v7161 = vmul.f32 %v6980, %v7153
    %v7162 = vmul.f32 %v6981, %v7150
    %v7163 = vmul.f32 %v6982, %v7151
    %v7164 = vmul.f32 %v6983, %v7152
    %v7165 = vmul.f32 %v6984, %v7153
    %v7166 = vmul.f32 %v6985, %v7150
    %v7167 = vmul.f32 %v6986, %v7151
    %v7168 = vmul.f32 %v6987, %v7152
    %v7169 = vmul.f32 %v6988, %v7153
    %v7170 = vmul.f32 %v6989, %v7150
    %v7171 = vmul.f32 %v6990, %v7151
    %v7172 = vmul.f32 %v6991, %v7152
    %v7173 = vmul.f32 %v6992, %v7153
    %v7174 = vmul.f32 %v6993, %v7150
    %v7175 = vmul.f32 %v6994, %v7151
    %v7176 = vmul.f32 %v6995, %v7152
    %v7177 = vmul.f32 %v6996, %v7153
    %v7178 = vmul.f32 %v6997, %v7150
    %v7179 = vmul.f32 %v6998, %v7151
    %v7180 = vmul.f32 %v6999, %v7152
    %v7181 = vmul.f32 %v7000, %v7153
    %v7182 = vmul.f32 %v7001, %v7150
    %v7183 = vmul.f32 %v7002, %v7151
    %v7184 = vmul.f32 %v7003, %v7152
    %v7185 = vmul.f32 %v7004, %v7153
    %v7187 = vperm.slane %v6916, 0
    %v7188 = vperm.slane %v6916, 1
    %v7189 = vperm.slane %v6916, 2
    %v7190 = vperm.slane %v6916, 3
    %v7195 = vadd.f32 %v7154, %v7187
    %v7196 = vadd.f32 %v7155, %v7188
    %v7197 = vadd.f32 %v7156, %v7189
    %v7198 = vadd.f32 %v7157, %v7190
    %v7199 = vadd.f32 %v7158, %v7187
    %v7200 = vadd.f32 %v7159, %v7188
    %v7201 = vadd.f32 %v7160, %v7189
    %v7202 = vadd.f32 %v7161, %v7190
    %v7203 = vadd.f32 %v7162, %v7187
    %v7204 = vadd.f32 %v7163, %v7188
    %v7205 = vadd.f32 %v7164, %v7189
    %v7206 = vadd.f32 %v7165, %v7190
    %v7207 = vadd.f32 %v7166, %v7187
    %v7208 = vadd.f32 %v7167, %v7188
    %v7209 = vadd.f32 %v7168, %v7189
    %v7210 = vadd.f32 %v7169, %v7190
    %v7211 = vadd.f32 %v7170, %v7187
    %v7212 = vadd.f32 %v7171, %v7188
    %v7213 = vadd.f32 %v7172, %v7189
    %v7214 = vadd.f32 %v7173, %v7190
    %v7215 = vadd.f32 %v7174, %v7187
    %v7216 = vadd.f32 %v7175, %v7188
    %v7217 = vadd.f32 %v7176, %v7189
    %v7218 = vadd.f32 %v7177, %v7190
    %v7219 = vadd.f32 %v7178, %v7187
    %v7220 = vadd.f32 %v7179, %v7188
    %v7221 = vadd.f32 %v7180, %v7189
    %v7222 = vadd.f32 %v7181, %v7190
    %v7223 = vadd.f32 %v7182, %v7187
    %v7224 = vadd.f32 %v7183, %v7188
    %v7225 = vadd.f32 %v7184, %v7189
    %v7226 = vadd.f32 %v7185, %v7190
    %v7227 = vmul.f32 %v7195, 0.5
    %v7228 = vmul.f32 %v7196, 0.5
    %v7229 = vmul.f32 %v7197, 0.5
    %v7230 = vmul.f32 %v7198, 0.5
    %v7231 = vmul.f32 %v7199, 0.5
    %v7232 = vmul.f32 %v7200, 0.5
    %v7233 = vmul.f32 %v7201, 0.5
    %v7234 = vmul.f32 %v7202, 0.5
    %v7235 = vmul.f32 %v7203, 0.5
    %v7236 = vmul.f32 %v7204, 0.5
    %v7237 = vmul.f32 %v7205, 0.5
    %v7238 = vmul.f32 %v7206, 0.5
    %v7239 = vmul.f32 %v7207, 0.5
    %v7240 = vmul.f32 %v7208, 0.5
    %v7241 = vmul.f32 %v7209, 0.5
    %v7242 = vmul.f32 %v7210, 0.5
    %v7243 = vmul.f32 %v7211, 0.5
    %v7244 = vmul.f32 %v7212, 0.5
    %v7245 = vmul.f32 %v7213, 0.5
    %v7246 = vmul.f32 %v7214, 0.5
    %v7247 = vmul.f32 %v7215, 0.5
    %v7248 = vmul.f32 %v7216, 0.5
    %v7249 = vmul.f32 %v7217, 0.5
    %v7250 = vmul.f32 %v7218, 0.5
    %v7251 = vmul.f32 %v7219, 0.5
    %v7252 = vmul.f32 %v7220, 0.5
    %v7253 = vmul.f32 %v7221, 0.5
    %v7254 = vmul.f32 %v7222, 0.5
    %v7255 = vmul.f32 %v7223, 0.5
    %v7256 = vmul.f32 %v7224, 0.5
    %v7257 = vmul.f32 %v7225, 0.5
    %v7258 = vmul.f32 %v7226, 0.5
    %v7259 = vmul.f32 %v7195, 0.70710677
    %v7260 = vmul.f32 %v7196, 0.70710677
    %v7261 = vmul.f32 %v7197, 0.70710677
    %v7262 = vmul.f32 %v7198, 0.70710677
    %v7263 = vmul.f32 %v7199, 0.70710677
    %v7264 = vmul.f32 %v7200, 0.70710677
    %v7265 = vmul.f32 %v7201, 0.70710677
    %v7266 = vmul.f32 %v7202, 0.70710677
    %v7267 = vmul.f32 %v7203, 0.70710677
    %v7268 = vmul.f32 %v7204, 0.70710677
    %v7269 = vmul.f32 %v7205, 0.70710677
    %v7270 = vmul.f32 %v7206, 0.70710677
    %v7271 = vmul.f32 %v7207, 0.70710677
    %v7272 = vmul.f32 %v7208, 0.70710677
    %v7273 = vmul.f32 %v7209, 0.70710677
    %v7274 = vmul.f32 %v7210, 0.70710677
    %v7275 = vmul.f32 %v7211, 0.70710677
    %v7276 = vmul.f32 %v7212, 0.70710677
    %v7277 = vmul.f32 %v7213, 0.70710677
    %v7278 = vmul.f32 %v7214, 0.70710677
    %v7279 = vmul.f32 %v7215, 0.70710677
    %v7280 = vmul.f32 %v7216, 0.70710677
    %v7281 = vmul.f32 %v7217, 0.70710677
    %v7282 = vmul.f32 %v7218, 0.70710677
    %v7283 = vmul.f32 %v7219, 0.70710677
    %v7284 = vmul.f32 %v7220, 0.70710677
    %v7285 = vmul.f32 %v7221, 0.70710677
    %v7286 = vmul.f32 %v7222, 0.70710677
    %v7287 = vmul.f32 %v7223, 0.70710677
    %v7288 = vmul.f32 %v7224, 0.70710677
    %v7289 = vmul.f32 %v7225, 0.70710677
    %v7290 = vmul.f32 %v7226, 0.70710677
    %v7291 = vmul.f32 %v7259, %v7259
    %v7292 = vmin.f32 16.0, %v7291
    %v7293 = vmul.f32 %v7292, 2.1237322e-06
    %v7294 = vadd.f32 %v7293, 0.00028619796
    %v7295 = vmul.f32 %v7292, %v7294
    %v7296 = vadd.f32 %v7295, 0.0036580483
    %v7297 = vmul.f32 %v7292, %v7296
    %v7298 = vadd.f32 %v7297, 0.05243302
    %v7299 = vmul.f32 %v7292, %v7298
    %v7300 = vadd.f32 %v7299, 0.18741608
    %v7301 = vmul.f32 %v7292, %v7300
    %v7302 = vadd.f32 %v7301, 1.1283791
    %v7303 = vmul.f32 %v7259, %v7302
    %v7304 = vmul.f32 %v7292, 3.8918573e-05
    %v7305 = vadd.f32 %v7304, 0.001143296
    %v7306 = vmul.f32 %v7292, %v7305
    %v7307 = vadd.f32 %v7306, 0.014752088
    %v7308 = vmul.f32 %v7292, %v7307
    %v7309 = vadd.f32 %v7308, 0.112945676
    %v7310 = vmul.f32 %v7292, %v7309
    %v7311 = vadd.f32 %v7310, 0.4994258
    %v7312 = vmul.f32 %v7292, %v7311
    %v7313 = vadd.f32 %v7312, 1.0
    %v7314 = vrcp.pop %v7313
    %v7315 = vmul.f32 %v7313, %v7314
    %v7316 = vsub.f32 1.0, %v7315
    %v7317 = vmul.f32 %v7314, %v7316
    %v7318 = vadd.f32 %v7314, %v7317
    %vm7319 = vweird.f32 %v7313
    %vm7320 = vweird.f32 %v7314
    %vm7321 = vmor %vm7319, %vm7320
    %v7322 = vsel %vm7321, %v7314, %v7318
    %v7323 = vand.u32 2147483647, %v7313
    %vm7324 = vcmp.eq.f32.partialorder %v7323, 8.507059e+37
    %v7325 = vand.u32 %v7313, 2147483648
    %v7326 = vor.u32 1.1754944e-38, %v7325
    %v7327 = vsel %vm7324, %v7326, %v7322
    %v7328 = vmul.f32 %v7303, %v7327
    %v7329 = vmin.f32 %v7328, 1.0
    %v7330 = vmax.f32 %v7329, -1.0
    %v7331 = vmul.f32 %v7260, %v7260
    %v7332 = vmin.f32 16.0, %v7331
    %v7333 = vmul.f32 %v7332, 2.1237322e-06
    %v7334 = vadd.f32 %v7333, 0.00028619796
    %v7335 = vmul.f32 %v7332, %v7334
    %v7336 = vadd.f32 %v7335, 0.0036580483
    %v7337 = vmul.f32 %v7332, %v7336
    %v7338 = vadd.f32 %v7337, 0.05243302
    %v7339 = vmul.f32 %v7332, %v7338
    %v7340 = vadd.f32 %v7339, 0.18741608
    %v7341 = vmul.f32 %v7332, %v7340
    %v7342 = vadd.f32 %v7341, 1.1283791
    %v7343 = vmul.f32 %v7260, %v7342
    %v7344 = vmul.f32 %v7332, 3.8918573e-05
    %v7345 = vadd.f32 %v7344, 0.001143296
    %v7346 = vmul.f32 %v7332, %v7345
    %v7347 = vadd.f32 %v7346, 0.014752088
    %v7348 = vmul.f32 %v7332, %v7347
    %v7349 = vadd.f32 %v7348, 0.112945676
    %v7350 = vmul.f32 %v7332, %v7349
    %v7351 = vadd.f32 %v7350, 0.4994258
    %v7352 = vmul.f32 %v7332, %v7351
    %v7353 = vadd.f32 %v7352, 1.0
    %v7354 = vrcp.pop %v7353
    %v7355 = vmul.f32 %v7353, %v7354
    %v7356 = vsub.f32 1.0, %v7355
    %v7357 = vmul.f32 %v7354, %v7356
    %v7358 = vadd.f32 %v7354, %v7357
    %vm7359 = vweird.f32 %v7353
    %vm7360 = vweird.f32 %v7354
    %vm7361 = vmor %vm7359, %vm7360
    %v7362 = vsel %vm7361, %v7354, %v7358
    %v7363 = vand.u32 2147483647, %v7353
    %vm7364 = vcmp.eq.f32.partialorder %v7363, 8.507059e+37
    %v7365 = vand.u32 %v7353, 2147483648
    %v7366 = vor.u32 1.1754944e-38, %v7365
    %v7367 = vsel %vm7364, %v7366, %v7362
    %v7368 = vmul.f32 %v7343, %v7367
    %v7369 = vmin.f32 %v7368, 1.0
    %v7370 = vmax.f32 %v7369, -1.0
    %v7371 = vmul.f32 %v7261, %v7261
    %v7372 = vmin.f32 16.0, %v7371
    %v7373 = vmul.f32 %v7372, 2.1237322e-06
    %v7374 = vadd.f32 %v7373, 0.00028619796
    %v7375 = vmul.f32 %v7372, %v7374
    %v7376 = vadd.f32 %v7375, 0.0036580483
    %v7377 = vmul.f32 %v7372, %v7376
    %v7378 = vadd.f32 %v7377, 0.05243302
    %v7379 = vmul.f32 %v7372, %v7378
    %v7380 = vadd.f32 %v7379, 0.18741608
    %v7381 = vmul.f32 %v7372, %v7380
    %v7382 = vadd.f32 %v7381, 1.1283791
    %v7383 = vmul.f32 %v7261, %v7382
    %v7384 = vmul.f32 %v7372, 3.8918573e-05
    %v7385 = vadd.f32 %v7384, 0.001143296
    %v7386 = vmul.f32 %v7372, %v7385
    %v7387 = vadd.f32 %v7386, 0.014752088
    %v7388 = vmul.f32 %v7372, %v7387
    %v7389 = vadd.f32 %v7388, 0.112945676
    %v7390 = vmul.f32 %v7372, %v7389
    %v7391 = vadd.f32 %v7390, 0.4994258
    %v7392 = vmul.f32 %v7372, %v7391
    %v7393 = vadd.f32 %v7392, 1.0
    %v7394 = vrcp.pop %v7393
    %v7395 = vmul.f32 %v7393, %v7394
    %v7396 = vsub.f32 1.0, %v7395
    %v7397 = vmul.f32 %v7394, %v7396
    %v7398 = vadd.f32 %v7394, %v7397
    %vm7399 = vweird.f32 %v7393
    %vm7400 = vweird.f32 %v7394
    %vm7401 = vmor %vm7399, %vm7400
    %v7402 = vsel %vm7401, %v7394, %v7398
    %v7403 = vand.u32 2147483647, %v7393
    %vm7404 = vcmp.eq.f32.partialorder %v7403, 8.507059e+37
    %v7405 = vand.u32 %v7393, 2147483648
    %v7406 = vor.u32 1.1754944e-38, %v7405
    %v7407 = vsel %vm7404, %v7406, %v7402
    %v7408 = vmul.f32 %v7383, %v7407
    %v7409 = vmin.f32 %v7408, 1.0
    %v7410 = vmax.f32 %v7409, -1.0
    %v7411 = vmul.f32 %v7262, %v7262
    %v7412 = vmin.f32 16.0, %v7411
    %v7413 = vmul.f32 %v7412, 2.1237322e-06
    %v7414 = vadd.f32 %v7413, 0.00028619796
    %v7415 = vmul.f32 %v7412, %v7414
    %v7416 = vadd.f32 %v7415, 0.0036580483
    %v7417 = vmul.f32 %v7412, %v7416
    %v7418 = vadd.f32 %v7417, 0.05243302
    %v7419 = vmul.f32 %v7412, %v7418
    %v7420 = vadd.f32 %v7419, 0.18741608
    %v7421 = vmul.f32 %v7412, %v7420
    %v7422 = vadd.f32 %v7421, 1.1283791
    %v7423 = vmul.f32 %v7262, %v7422
    %v7424 = vmul.f32 %v7412, 3.8918573e-05
    %v7425 = vadd.f32 %v7424, 0.001143296
    %v7426 = vmul.f32 %v7412, %v7425
    %v7427 = vadd.f32 %v7426, 0.014752088
    %v7428 = vmul.f32 %v7412, %v7427
    %v7429 = vadd.f32 %v7428, 0.112945676
    %v7430 = vmul.f32 %v7412, %v7429
    %v7431 = vadd.f32 %v7430, 0.4994258
    %v7432 = vmul.f32 %v7412, %v7431
    %v7433 = vadd.f32 %v7432, 1.0
    %v7434 = vrcp.pop %v7433
    %v7435 = vmul.f32 %v7433, %v7434
    %v7436 = vsub.f32 1.0, %v7435
    %v7437 = vmul.f32 %v7434, %v7436
    %v7438 = vadd.f32 %v7434, %v7437
    %vm7439 = vweird.f32 %v7433
    %vm7440 = vweird.f32 %v7434
    %vm7441 = vmor %vm7439, %vm7440
    %v7442 = vsel %vm7441, %v7434, %v7438
    %v7443 = vand.u32 2147483647, %v7433
    %vm7444 = vcmp.eq.f32.partialorder %v7443, 8.507059e+37
    %v7445 = vand.u32 %v7433, 2147483648
    %v7446 = vor.u32 1.1754944e-38, %v7445
    %v7447 = vsel %vm7444, %v7446, %v7442
    %v7448 = vmul.f32 %v7423, %v7447
    %v7449 = vmin.f32 %v7448, 1.0
    %v7450 = vmax.f32 %v7449, -1.0
    %v7451 = vmul.f32 %v7263, %v7263
    %v7452 = vmin.f32 16.0, %v7451
    %v7453 = vmul.f32 %v7452, 2.1237322e-06
    %v7454 = vadd.f32 %v7453, 0.00028619796
    %v7455 = vmul.f32 %v7452, %v7454
    %v7456 = vadd.f32 %v7455, 0.0036580483
    %v7457 = vmul.f32 %v7452, %v7456
    %v7458 = vadd.f32 %v7457, 0.05243302
    %v7459 = vmul.f32 %v7452, %v7458
    %v7460 = vadd.f32 %v7459, 0.18741608
    %v7461 = vmul.f32 %v7452, %v7460
    %v7462 = vadd.f32 %v7461, 1.1283791
    %v7463 = vmul.f32 %v7263, %v7462
    %v7464 = vmul.f32 %v7452, 3.8918573e-05
    %v7465 = vadd.f32 %v7464, 0.001143296
    %v7466 = vmul.f32 %v7452, %v7465
    %v7467 = vadd.f32 %v7466, 0.014752088
    %v7468 = vmul.f32 %v7452, %v7467
    %v7469 = vadd.f32 %v7468, 0.112945676
    %v7470 = vmul.f32 %v7452, %v7469
    %v7471 = vadd.f32 %v7470, 0.4994258
    %v7472 = vmul.f32 %v7452, %v7471
    %v7473 = vadd.f32 %v7472, 1.0
    %v7474 = vrcp.pop %v7473
    %v7475 = vmul.f32 %v7473, %v7474
    %v7476 = vsub.f32 1.0, %v7475
    %v7477 = vmul.f32 %v7474, %v7476
    %v7478 = vadd.f32 %v7474, %v7477
    %vm7479 = vweird.f32 %v7473
    %vm7480 = vweird.f32 %v7474
    %vm7481 = vmor %vm7479, %vm7480
    %v7482 = vsel %vm7481, %v7474, %v7478
    %v7483 = vand.u32 2147483647, %v7473
    %vm7484 = vcmp.eq.f32.partialorder %v7483, 8.507059e+37
    %v7485 = vand.u32 %v7473, 2147483648
    %v7486 = vor.u32 1.1754944e-38, %v7485
    %v7487 = vsel %vm7484, %v7486, %v7482
    %v7488 = vmul.f32 %v7463, %v7487
    %v7489 = vmin.f32 %v7488, 1.0
    %v7490 = vmax.f32 %v7489, -1.0
    %v7491 = vmul.f32 %v7264, %v7264
    %v7492 = vmin.f32 16.0, %v7491
    %v7493 = vmul.f32 %v7492, 2.1237322e-06
    %v7494 = vadd.f32 %v7493, 0.00028619796
    %v7495 = vmul.f32 %v7492, %v7494
    %v7496 = vadd.f32 %v7495, 0.0036580483
    %v7497 = vmul.f32 %v7492, %v7496
    %v7498 = vadd.f32 %v7497, 0.05243302
    %v7499 = vmul.f32 %v7492, %v7498
    %v7500 = vadd.f32 %v7499, 0.18741608
    %v7501 = vmul.f32 %v7492, %v7500
    %v7502 = vadd.f32 %v7501, 1.1283791
    %v7503 = vmul.f32 %v7264, %v7502
    %v7504 = vmul.f32 %v7492, 3.8918573e-05
    %v7505 = vadd.f32 %v7504, 0.001143296
    %v7506 = vmul.f32 %v7492, %v7505
    %v7507 = vadd.f32 %v7506, 0.014752088
    %v7508 = vmul.f32 %v7492, %v7507
    %v7509 = vadd.f32 %v7508, 0.112945676
    %v7510 = vmul.f32 %v7492, %v7509
    %v7511 = vadd.f32 %v7510, 0.4994258
    %v7512 = vmul.f32 %v7492, %v7511
    %v7513 = vadd.f32 %v7512, 1.0
    %v7514 = vrcp.pop %v7513
    %v7515 = vmul.f32 %v7513, %v7514
    %v7516 = vsub.f32 1.0, %v7515
    %v7517 = vmul.f32 %v7514, %v7516
    %v7518 = vadd.f32 %v7514, %v7517
    %vm7519 = vweird.f32 %v7513
    %vm7520 = vweird.f32 %v7514
    %vm7521 = vmor %vm7519, %vm7520
    %v7522 = vsel %vm7521, %v7514, %v7518
    %v7523 = vand.u32 2147483647, %v7513
    %vm7524 = vcmp.eq.f32.partialorder %v7523, 8.507059e+37
    %v7525 = vand.u32 %v7513, 2147483648
    %v7526 = vor.u32 1.1754944e-38, %v7525
    %v7527 = vsel %vm7524, %v7526, %v7522
    %v7528 = vmul.f32 %v7503, %v7527
    %v7529 = vmin.f32 %v7528, 1.0
    %v7530 = vmax.f32 %v7529, -1.0
    %v7531 = vmul.f32 %v7265, %v7265
    %v7532 = vmin.f32 16.0, %v7531
    %v7533 = vmul.f32 %v7532, 2.1237322e-06
    %v7534 = vadd.f32 %v7533, 0.00028619796
    %v7535 = vmul.f32 %v7532, %v7534
    %v7536 = vadd.f32 %v7535, 0.0036580483
    %v7537 = vmul.f32 %v7532, %v7536
    %v7538 = vadd.f32 %v7537, 0.05243302
    %v7539 = vmul.f32 %v7532, %v7538
    %v7540 = vadd.f32 %v7539, 0.18741608
    %v7541 = vmul.f32 %v7532, %v7540
    %v7542 = vadd.f32 %v7541, 1.1283791
    %v7543 = vmul.f32 %v7265, %v7542
    %v7544 = vmul.f32 %v7532, 3.8918573e-05
    %v7545 = vadd.f32 %v7544, 0.001143296
    %v7546 = vmul.f32 %v7532, %v7545
    %v7547 = vadd.f32 %v7546, 0.014752088
    %v7548 = vmul.f32 %v7532, %v7547
    %v7549 = vadd.f32 %v7548, 0.112945676
    %v7550 = vmul.f32 %v7532, %v7549
    %v7551 = vadd.f32 %v7550, 0.4994258
    %v7552 = vmul.f32 %v7532, %v7551
    %v7553 = vadd.f32 %v7552, 1.0
    %v7554 = vrcp.pop %v7553
    %v7555 = vmul.f32 %v7553, %v7554
    %v7556 = vsub.f32 1.0, %v7555
    %v7557 = vmul.f32 %v7554, %v7556
    %v7558 = vadd.f32 %v7554, %v7557
    %vm7559 = vweird.f32 %v7553
    %vm7560 = vweird.f32 %v7554
    %vm7561 = vmor %vm7559, %vm7560
    %v7562 = vsel %vm7561, %v7554, %v7558
    %v7563 = vand.u32 2147483647, %v7553
    %vm7564 = vcmp.eq.f32.partialorder %v7563, 8.507059e+37
    %v7565 = vand.u32 %v7553, 2147483648
    %v7566 = vor.u32 1.1754944e-38, %v7565
    %v7567 = vsel %vm7564, %v7566, %v7562
    %v7568 = vmul.f32 %v7543, %v7567
    %v7569 = vmin.f32 %v7568, 1.0
    %v7570 = vmax.f32 %v7569, -1.0
    %v7571 = vmul.f32 %v7266, %v7266
    %v7572 = vmin.f32 16.0, %v7571
    %v7573 = vmul.f32 %v7572, 2.1237322e-06
    %v7574 = vadd.f32 %v7573, 0.00028619796
    %v7575 = vmul.f32 %v7572, %v7574
    %v7576 = vadd.f32 %v7575, 0.0036580483
    %v7577 = vmul.f32 %v7572, %v7576
    %v7578 = vadd.f32 %v7577, 0.05243302
    %v7579 = vmul.f32 %v7572, %v7578
    %v7580 = vadd.f32 %v7579, 0.18741608
    %v7581 = vmul.f32 %v7572, %v7580
    %v7582 = vadd.f32 %v7581, 1.1283791
    %v7583 = vmul.f32 %v7266, %v7582
    %v7584 = vmul.f32 %v7572, 3.8918573e-05
    %v7585 = vadd.f32 %v7584, 0.001143296
    %v7586 = vmul.f32 %v7572, %v7585
    %v7587 = vadd.f32 %v7586, 0.014752088
    %v7588 = vmul.f32 %v7572, %v7587
    %v7589 = vadd.f32 %v7588, 0.112945676
    %v7590 = vmul.f32 %v7572, %v7589
    %v7591 = vadd.f32 %v7590, 0.4994258
    %v7592 = vmul.f32 %v7572, %v7591
    %v7593 = vadd.f32 %v7592, 1.0
    %v7594 = vrcp.pop %v7593
    %v7595 = vmul.f32 %v7593, %v7594
    %v7596 = vsub.f32 1.0, %v7595
    %v7597 = vmul.f32 %v7594, %v7596
    %v7598 = vadd.f32 %v7594, %v7597
    %vm7599 = vweird.f32 %v7593
    %vm7600 = vweird.f32 %v7594
    %vm7601 = vmor %vm7599, %vm7600
    %v7602 = vsel %vm7601, %v7594, %v7598
    %v7603 = vand.u32 2147483647, %v7593
    %vm7604 = vcmp.eq.f32.partialorder %v7603, 8.507059e+37
    %v7605 = vand.u32 %v7593, 2147483648
    %v7606 = vor.u32 1.1754944e-38, %v7605
    %v7607 = vsel %vm7604, %v7606, %v7602
    %v7608 = vmul.f32 %v7583, %v7607
    %v7609 = vmin.f32 %v7608, 1.0
    %v7610 = vmax.f32 %v7609, -1.0
    %v7611 = vmul.f32 %v7267, %v7267
    %v7612 = vmin.f32 16.0, %v7611
    %v7613 = vmul.f32 %v7612, 2.1237322e-06
    %v7614 = vadd.f32 %v7613, 0.00028619796
    %v7615 = vmul.f32 %v7612, %v7614
    %v7616 = vadd.f32 %v7615, 0.0036580483
    %v7617 = vmul.f32 %v7612, %v7616
    %v7618 = vadd.f32 %v7617, 0.05243302
    %v7619 = vmul.f32 %v7612, %v7618
    %v7620 = vadd.f32 %v7619, 0.18741608
    %v7621 = vmul.f32 %v7612, %v7620
    %v7622 = vadd.f32 %v7621, 1.1283791
    %v7623 = vmul.f32 %v7267, %v7622
    %v7624 = vmul.f32 %v7612, 3.8918573e-05
    %v7625 = vadd.f32 %v7624, 0.001143296
    %v7626 = vmul.f32 %v7612, %v7625
    %v7627 = vadd.f32 %v7626, 0.014752088
    %v7628 = vmul.f32 %v7612, %v7627
    %v7629 = vadd.f32 %v7628, 0.112945676
    %v7630 = vmul.f32 %v7612, %v7629
    %v7631 = vadd.f32 %v7630, 0.4994258
    %v7632 = vmul.f32 %v7612, %v7631
    %v7633 = vadd.f32 %v7632, 1.0
    %v7634 = vrcp.pop %v7633
    %v7635 = vmul.f32 %v7633, %v7634
    %v7636 = vsub.f32 1.0, %v7635
    %v7637 = vmul.f32 %v7634, %v7636
    %v7638 = vadd.f32 %v7634, %v7637
    %vm7639 = vweird.f32 %v7633
    %vm7640 = vweird.f32 %v7634
    %vm7641 = vmor %vm7639, %vm7640
    %v7642 = vsel %vm7641, %v7634, %v7638
    %v7643 = vand.u32 2147483647, %v7633
    %vm7644 = vcmp.eq.f32.partialorder %v7643, 8.507059e+37
    %v7645 = vand.u32 %v7633, 2147483648
    %v7646 = vor.u32 1.1754944e-38, %v7645
    %v7647 = vsel %vm7644, %v7646, %v7642
    %v7648 = vmul.f32 %v7623, %v7647
    %v7649 = vmin.f32 %v7648, 1.0
    %v7650 = vmax.f32 %v7649, -1.0
    %v7651 = vmul.f32 %v7268, %v7268
    %v7652 = vmin.f32 16.0, %v7651
    %v7653 = vmul.f32 %v7652, 2.1237322e-06
    %v7654 = vadd.f32 %v7653, 0.00028619796
    %v7655 = vmul.f32 %v7652, %v7654
    %v7656 = vadd.f32 %v7655, 0.0036580483
    %v7657 = vmul.f32 %v7652, %v7656
    %v7658 = vadd.f32 %v7657, 0.05243302
    %v7659 = vmul.f32 %v7652, %v7658
    %v7660 = vadd.f32 %v7659, 0.18741608
    %v7661 = vmul.f32 %v7652, %v7660
    %v7662 = vadd.f32 %v7661, 1.1283791
    %v7663 = vmul.f32 %v7268, %v7662
    %v7664 = vmul.f32 %v7652, 3.8918573e-05
    %v7665 = vadd.f32 %v7664, 0.001143296
    %v7666 = vmul.f32 %v7652, %v7665
    %v7667 = vadd.f32 %v7666, 0.014752088
    %v7668 = vmul.f32 %v7652, %v7667
    %v7669 = vadd.f32 %v7668, 0.112945676
    %v7670 = vmul.f32 %v7652, %v7669
    %v7671 = vadd.f32 %v7670, 0.4994258
    %v7672 = vmul.f32 %v7652, %v7671
    %v7673 = vadd.f32 %v7672, 1.0
    %v7674 = vrcp.pop %v7673
    %v7675 = vmul.f32 %v7673, %v7674
    %v7676 = vsub.f32 1.0, %v7675
    %v7677 = vmul.f32 %v7674, %v7676
    %v7678 = vadd.f32 %v7674, %v7677
    %vm7679 = vweird.f32 %v7673
    %vm7680 = vweird.f32 %v7674
    %vm7681 = vmor %vm7679, %vm7680
    %v7682 = vsel %vm7681, %v7674, %v7678
    %v7683 = vand.u32 2147483647, %v7673
    %vm7684 = vcmp.eq.f32.partialorder %v7683, 8.507059e+37
    %v7685 = vand.u32 %v7673, 2147483648
    %v7686 = vor.u32 1.1754944e-38, %v7685
    %v7687 = vsel %vm7684, %v7686, %v7682
    %v7688 = vmul.f32 %v7663, %v7687
    %v7689 = vmin.f32 %v7688, 1.0
    %v7690 = vmax.f32 %v7689, -1.0
    %v7691 = vmul.f32 %v7269, %v7269
    %v7692 = vmin.f32 16.0, %v7691
    %v7693 = vmul.f32 %v7692, 2.1237322e-06
    %v7694 = vadd.f32 %v7693, 0.00028619796
    %v7695 = vmul.f32 %v7692, %v7694
    %v7696 = vadd.f32 %v7695, 0.0036580483
    %v7697 = vmul.f32 %v7692, %v7696
    %v7698 = vadd.f32 %v7697, 0.05243302
    %v7699 = vmul.f32 %v7692, %v7698
    %v7700 = vadd.f32 %v7699, 0.18741608
    %v7701 = vmul.f32 %v7692, %v7700
    %v7702 = vadd.f32 %v7701, 1.1283791
    %v7703 = vmul.f32 %v7269, %v7702
    %v7704 = vmul.f32 %v7692, 3.8918573e-05
    %v7705 = vadd.f32 %v7704, 0.001143296
    %v7706 = vmul.f32 %v7692, %v7705
    %v7707 = vadd.f32 %v7706, 0.014752088
    %v7708 = vmul.f32 %v7692, %v7707
    %v7709 = vadd.f32 %v7708, 0.112945676
    %v7710 = vmul.f32 %v7692, %v7709
    %v7711 = vadd.f32 %v7710, 0.4994258
    %v7712 = vmul.f32 %v7692, %v7711
    %v7713 = vadd.f32 %v7712, 1.0
    %v7714 = vrcp.pop %v7713
    %v7715 = vmul.f32 %v7713, %v7714
    %v7716 = vsub.f32 1.0, %v7715
    %v7717 = vmul.f32 %v7714, %v7716
    %v7718 = vadd.f32 %v7714, %v7717
    %vm7719 = vweird.f32 %v7713
    %vm7720 = vweird.f32 %v7714
    %vm7721 = vmor %vm7719, %vm7720
    %v7722 = vsel %vm7721, %v7714, %v7718
    %v7723 = vand.u32 2147483647, %v7713
    %vm7724 = vcmp.eq.f32.partialorder %v7723, 8.507059e+37
    %v7725 = vand.u32 %v7713, 2147483648
    %v7726 = vor.u32 1.1754944e-38, %v7725
    %v7727 = vsel %vm7724, %v7726, %v7722
    %v7728 = vmul.f32 %v7703, %v7727
    %v7729 = vmin.f32 %v7728, 1.0
    %v7730 = vmax.f32 %v7729, -1.0
    %v7731 = vmul.f32 %v7270, %v7270
    %v7732 = vmin.f32 16.0, %v7731
    %v7733 = vmul.f32 %v7732, 2.1237322e-06
    %v7734 = vadd.f32 %v7733, 0.00028619796
    %v7735 = vmul.f32 %v7732, %v7734
    %v7736 = vadd.f32 %v7735, 0.0036580483
    %v7737 = vmul.f32 %v7732, %v7736
    %v7738 = vadd.f32 %v7737, 0.05243302
    %v7739 = vmul.f32 %v7732, %v7738
    %v7740 = vadd.f32 %v7739, 0.18741608
    %v7741 = vmul.f32 %v7732, %v7740
    %v7742 = vadd.f32 %v7741, 1.1283791
    %v7743 = vmul.f32 %v7270, %v7742
    %v7744 = vmul.f32 %v7732, 3.8918573e-05
    %v7745 = vadd.f32 %v7744, 0.001143296
    %v7746 = vmul.f32 %v7732, %v7745
    %v7747 = vadd.f32 %v7746, 0.014752088
    %v7748 = vmul.f32 %v7732, %v7747
    %v7749 = vadd.f32 %v7748, 0.112945676
    %v7750 = vmul.f32 %v7732, %v7749
    %v7751 = vadd.f32 %v7750, 0.4994258
    %v7752 = vmul.f32 %v7732, %v7751
    %v7753 = vadd.f32 %v7752, 1.0
    %v7754 = vrcp.pop %v7753
    %v7755 = vmul.f32 %v7753, %v7754
    %v7756 = vsub.f32 1.0, %v7755
    %v7757 = vmul.f32 %v7754, %v7756
    %v7758 = vadd.f32 %v7754, %v7757
    %vm7759 = vweird.f32 %v7753
    %vm7760 = vweird.f32 %v7754
    %vm7761 = vmor %vm7759, %vm7760
    %v7762 = vsel %vm7761, %v7754, %v7758
    %v7763 = vand.u32 2147483647, %v7753
    %vm7764 = vcmp.eq.f32.partialorder %v7763, 8.507059e+37
    %v7765 = vand.u32 %v7753, 2147483648
    %v7766 = vor.u32 1.1754944e-38, %v7765
    %v7767 = vsel %vm7764, %v7766, %v7762
    %v7768 = vmul.f32 %v7743, %v7767
    %v7769 = vmin.f32 %v7768, 1.0
    %v7770 = vmax.f32 %v7769, -1.0
    %v7771 = vmul.f32 %v7271, %v7271
    %v7772 = vmin.f32 16.0, %v7771
    %v7773 = vmul.f32 %v7772, 2.1237322e-06
    %v7774 = vadd.f32 %v7773, 0.00028619796
    %v7775 = vmul.f32 %v7772, %v7774
    %v7776 = vadd.f32 %v7775, 0.0036580483
    %v7777 = vmul.f32 %v7772, %v7776
    %v7778 = vadd.f32 %v7777, 0.05243302
    %v7779 = vmul.f32 %v7772, %v7778
    %v7780 = vadd.f32 %v7779, 0.18741608
    %v7781 = vmul.f32 %v7772, %v7780
    %v7782 = vadd.f32 %v7781, 1.1283791
    %v7783 = vmul.f32 %v7271, %v7782
    %v7784 = vmul.f32 %v7772, 3.8918573e-05
    %v7785 = vadd.f32 %v7784, 0.001143296
    %v7786 = vmul.f32 %v7772, %v7785
    %v7787 = vadd.f32 %v7786, 0.014752088
    %v7788 = vmul.f32 %v7772, %v7787
    %v7789 = vadd.f32 %v7788, 0.112945676
    %v7790 = vmul.f32 %v7772, %v7789
    %v7791 = vadd.f32 %v7790, 0.4994258
    %v7792 = vmul.f32 %v7772, %v7791
    %v7793 = vadd.f32 %v7792, 1.0
    %v7794 = vrcp.pop %v7793
    %v7795 = vmul.f32 %v7793, %v7794
    %v7796 = vsub.f32 1.0, %v7795
    %v7797 = vmul.f32 %v7794, %v7796
    %v7798 = vadd.f32 %v7794, %v7797
    %vm7799 = vweird.f32 %v7793
    %vm7800 = vweird.f32 %v7794
    %vm7801 = vmor %vm7799, %vm7800
    %v7802 = vsel %vm7801, %v7794, %v7798
    %v7803 = vand.u32 2147483647, %v7793
    %vm7804 = vcmp.eq.f32.partialorder %v7803, 8.507059e+37
    %v7805 = vand.u32 %v7793, 2147483648
    %v7806 = vor.u32 1.1754944e-38, %v7805
    %v7807 = vsel %vm7804, %v7806, %v7802
    %v7808 = vmul.f32 %v7783, %v7807
    %v7809 = vmin.f32 %v7808, 1.0
    %v7810 = vmax.f32 %v7809, -1.0
    %v7811 = vmul.f32 %v7272, %v7272
    %v7812 = vmin.f32 16.0, %v7811
    %v7813 = vmul.f32 %v7812, 2.1237322e-06
    %v7814 = vadd.f32 %v7813, 0.00028619796
    %v7815 = vmul.f32 %v7812, %v7814
    %v7816 = vadd.f32 %v7815, 0.0036580483
    %v7817 = vmul.f32 %v7812, %v7816
    %v7818 = vadd.f32 %v7817, 0.05243302
    %v7819 = vmul.f32 %v7812, %v7818
    %v7820 = vadd.f32 %v7819, 0.18741608
    %v7821 = vmul.f32 %v7812, %v7820
    %v7822 = vadd.f32 %v7821, 1.1283791
    %v7823 = vmul.f32 %v7272, %v7822
    %v7824 = vmul.f32 %v7812, 3.8918573e-05
    %v7825 = vadd.f32 %v7824, 0.001143296
    %v7826 = vmul.f32 %v7812, %v7825
    %v7827 = vadd.f32 %v7826, 0.014752088
    %v7828 = vmul.f32 %v7812, %v7827
    %v7829 = vadd.f32 %v7828, 0.112945676
    %v7830 = vmul.f32 %v7812, %v7829
    %v7831 = vadd.f32 %v7830, 0.4994258
    %v7832 = vmul.f32 %v7812, %v7831
    %v7833 = vadd.f32 %v7832, 1.0
    %v7834 = vrcp.pop %v7833
    %v7835 = vmul.f32 %v7833, %v7834
    %v7836 = vsub.f32 1.0, %v7835
    %v7837 = vmul.f32 %v7834, %v7836
    %v7838 = vadd.f32 %v7834, %v7837
    %vm7839 = vweird.f32 %v7833
    %vm7840 = vweird.f32 %v7834
    %vm7841 = vmor %vm7839, %vm7840
    %v7842 = vsel %vm7841, %v7834, %v7838
    %v7843 = vand.u32 2147483647, %v7833
    %vm7844 = vcmp.eq.f32.partialorder %v7843, 8.507059e+37
    %v7845 = vand.u32 %v7833, 2147483648
    %v7846 = vor.u32 1.1754944e-38, %v7845
    %v7847 = vsel %vm7844, %v7846, %v7842
    %v7848 = vmul.f32 %v7823, %v7847
    %v7849 = vmin.f32 %v7848, 1.0
    %v7850 = vmax.f32 %v7849, -1.0
    %v7851 = vmul.f32 %v7273, %v7273
    %v7852 = vmin.f32 16.0, %v7851
    %v7853 = vmul.f32 %v7852, 2.1237322e-06
    %v7854 = vadd.f32 %v7853, 0.00028619796
    %v7855 = vmul.f32 %v7852, %v7854
    %v7856 = vadd.f32 %v7855, 0.0036580483
    %v7857 = vmul.f32 %v7852, %v7856
    %v7858 = vadd.f32 %v7857, 0.05243302
    %v7859 = vmul.f32 %v7852, %v7858
    %v7860 = vadd.f32 %v7859, 0.18741608
    %v7861 = vmul.f32 %v7852, %v7860
    %v7862 = vadd.f32 %v7861, 1.1283791
    %v7863 = vmul.f32 %v7273, %v7862
    %v7864 = vmul.f32 %v7852, 3.8918573e-05
    %v7865 = vadd.f32 %v7864, 0.001143296
    %v7866 = vmul.f32 %v7852, %v7865
    %v7867 = vadd.f32 %v7866, 0.014752088
    %v7868 = vmul.f32 %v7852, %v7867
    %v7869 = vadd.f32 %v7868, 0.112945676
    %v7870 = vmul.f32 %v7852, %v7869
    %v7871 = vadd.f32 %v7870, 0.4994258
    %v7872 = vmul.f32 %v7852, %v7871
    %v7873 = vadd.f32 %v7872, 1.0
    %v7874 = vrcp.pop %v7873
    %v7875 = vmul.f32 %v7873, %v7874
    %v7876 = vsub.f32 1.0, %v7875
    %v7877 = vmul.f32 %v7874, %v7876
    %v7878 = vadd.f32 %v7874, %v7877
    %vm7879 = vweird.f32 %v7873
    %vm7880 = vweird.f32 %v7874
    %vm7881 = vmor %vm7879, %vm7880
    %v7882 = vsel %vm7881, %v7874, %v7878
    %v7883 = vand.u32 2147483647, %v7873
    %vm7884 = vcmp.eq.f32.partialorder %v7883, 8.507059e+37
    %v7885 = vand.u32 %v7873, 2147483648
    %v7886 = vor.u32 1.1754944e-38, %v7885
    %v7887 = vsel %vm7884, %v7886, %v7882
    %v7888 = vmul.f32 %v7863, %v7887
    %v7889 = vmin.f32 %v7888, 1.0
    %v7890 = vmax.f32 %v7889, -1.0
    %v7891 = vmul.f32 %v7274, %v7274
    %v7892 = vmin.f32 16.0, %v7891
    %v7893 = vmul.f32 %v7892, 2.1237322e-06
    %v7894 = vadd.f32 %v7893, 0.00028619796
    %v7895 = vmul.f32 %v7892, %v7894
    %v7896 = vadd.f32 %v7895, 0.0036580483
    %v7897 = vmul.f32 %v7892, %v7896
    %v7898 = vadd.f32 %v7897, 0.05243302
    %v7899 = vmul.f32 %v7892, %v7898
    %v7900 = vadd.f32 %v7899, 0.18741608
    %v7901 = vmul.f32 %v7892, %v7900
    %v7902 = vadd.f32 %v7901, 1.1283791
    %v7903 = vmul.f32 %v7274, %v7902
    %v7904 = vmul.f32 %v7892, 3.8918573e-05
    %v7905 = vadd.f32 %v7904, 0.001143296
    %v7906 = vmul.f32 %v7892, %v7905
    %v7907 = vadd.f32 %v7906, 0.014752088
    %v7908 = vmul.f32 %v7892, %v7907
    %v7909 = vadd.f32 %v7908, 0.112945676
    %v7910 = vmul.f32 %v7892, %v7909
    %v7911 = vadd.f32 %v7910, 0.4994258
    %v7912 = vmul.f32 %v7892, %v7911
    %v7913 = vadd.f32 %v7912, 1.0
    %v7914 = vrcp.pop %v7913
    %v7915 = vmul.f32 %v7913, %v7914
    %v7916 = vsub.f32 1.0, %v7915
    %v7917 = vmul.f32 %v7914, %v7916
    %v7918 = vadd.f32 %v7914, %v7917
    %vm7919 = vweird.f32 %v7913
    %vm7920 = vweird.f32 %v7914
    %vm7921 = vmor %vm7919, %vm7920
    %v7922 = vsel %vm7921, %v7914, %v7918
    %v7923 = vand.u32 2147483647, %v7913
    %vm7924 = vcmp.eq.f32.partialorder %v7923, 8.507059e+37
    %v7925 = vand.u32 %v7913, 2147483648
    %v7926 = vor.u32 1.1754944e-38, %v7925
    %v7927 = vsel %vm7924, %v7926, %v7922
    %v7928 = vmul.f32 %v7903, %v7927
    %v7929 = vmin.f32 %v7928, 1.0
    %v7930 = vmax.f32 %v7929, -1.0
    %v7931 = vmul.f32 %v7275, %v7275
    %v7932 = vmin.f32 16.0, %v7931
    %v7933 = vmul.f32 %v7932, 2.1237322e-06
    %v7934 = vadd.f32 %v7933, 0.00028619796
    %v7935 = vmul.f32 %v7932, %v7934
    %v7936 = vadd.f32 %v7935, 0.0036580483
    %v7937 = vmul.f32 %v7932, %v7936
    %v7938 = vadd.f32 %v7937, 0.05243302
    %v7939 = vmul.f32 %v7932, %v7938
    %v7940 = vadd.f32 %v7939, 0.18741608
    %v7941 = vmul.f32 %v7932, %v7940
    %v7942 = vadd.f32 %v7941, 1.1283791
    %v7943 = vmul.f32 %v7275, %v7942
    %v7944 = vmul.f32 %v7932, 3.8918573e-05
    %v7945 = vadd.f32 %v7944, 0.001143296
    %v7946 = vmul.f32 %v7932, %v7945
    %v7947 = vadd.f32 %v7946, 0.014752088
    %v7948 = vmul.f32 %v7932, %v7947
    %v7949 = vadd.f32 %v7948, 0.112945676
    %v7950 = vmul.f32 %v7932, %v7949
    %v7951 = vadd.f32 %v7950, 0.4994258
    %v7952 = vmul.f32 %v7932, %v7951
    %v7953 = vadd.f32 %v7952, 1.0
    %v7954 = vrcp.pop %v7953
    %v7955 = vmul.f32 %v7953, %v7954
    %v7956 = vsub.f32 1.0, %v7955
    %v7957 = vmul.f32 %v7954, %v7956
    %v7958 = vadd.f32 %v7954, %v7957
    %vm7959 = vweird.f32 %v7953
    %vm7960 = vweird.f32 %v7954
    %vm7961 = vmor %vm7959, %vm7960
    %v7962 = vsel %vm7961, %v7954, %v7958
    %v7963 = vand.u32 2147483647, %v7953
    %vm7964 = vcmp.eq.f32.partialorder %v7963, 8.507059e+37
    %v7965 = vand.u32 %v7953, 2147483648
    %v7966 = vor.u32 1.1754944e-38, %v7965
    %v7967 = vsel %vm7964, %v7966, %v7962
    %v7968 = vmul.f32 %v7943, %v7967
    %v7969 = vmin.f32 %v7968, 1.0
    %v7970 = vmax.f32 %v7969, -1.0
    %v7971 = vmul.f32 %v7276, %v7276
    %v7972 = vmin.f32 16.0, %v7971
    %v7973 = vmul.f32 %v7972, 2.1237322e-06
    %v7974 = vadd.f32 %v7973, 0.00028619796
    %v7975 = vmul.f32 %v7972, %v7974
    %v7976 = vadd.f32 %v7975, 0.0036580483
    %v7977 = vmul.f32 %v7972, %v7976
    %v7978 = vadd.f32 %v7977, 0.05243302
    %v7979 = vmul.f32 %v7972, %v7978
    %v7980 = vadd.f32 %v7979, 0.18741608
    %v7981 = vmul.f32 %v7972, %v7980
    %v7982 = vadd.f32 %v7981, 1.1283791
    %v7983 = vmul.f32 %v7276, %v7982
    %v7984 = vmul.f32 %v7972, 3.8918573e-05
    %v7985 = vadd.f32 %v7984, 0.001143296
    %v7986 = vmul.f32 %v7972, %v7985
    %v7987 = vadd.f32 %v7986, 0.014752088
    %v7988 = vmul.f32 %v7972, %v7987
    %v7989 = vadd.f32 %v7988, 0.112945676
    %v7990 = vmul.f32 %v7972, %v7989
    %v7991 = vadd.f32 %v7990, 0.4994258
    %v7992 = vmul.f32 %v7972, %v7991
    %v7993 = vadd.f32 %v7992, 1.0
    %v7994 = vrcp.pop %v7993
    %v7995 = vmul.f32 %v7993, %v7994
    %v7996 = vsub.f32 1.0, %v7995
    %v7997 = vmul.f32 %v7994, %v7996
    %v7998 = vadd.f32 %v7994, %v7997
    %vm7999 = vweird.f32 %v7993
    %vm8000 = vweird.f32 %v7994
    %vm8001 = vmor %vm7999, %vm8000
    %v8002 = vsel %vm8001, %v7994, %v7998
    %v8003 = vand.u32 2147483647, %v7993
    %vm8004 = vcmp.eq.f32.partialorder %v8003, 8.507059e+37
    %v8005 = vand.u32 %v7993, 2147483648
    %v8006 = vor.u32 1.1754944e-38, %v8005
    %v8007 = vsel %vm8004, %v8006, %v8002
    %v8008 = vmul.f32 %v7983, %v8007
    %v8009 = vmin.f32 %v8008, 1.0
    %v8010 = vmax.f32 %v8009, -1.0
    %v8011 = vmul.f32 %v7277, %v7277
    %v8012 = vmin.f32 16.0, %v8011
    %v8013 = vmul.f32 %v8012, 2.1237322e-06
    %v8014 = vadd.f32 %v8013, 0.00028619796
    %v8015 = vmul.f32 %v8012, %v8014
    %v8016 = vadd.f32 %v8015, 0.0036580483
    %v8017 = vmul.f32 %v8012, %v8016
    %v8018 = vadd.f32 %v8017, 0.05243302
    %v8019 = vmul.f32 %v8012, %v8018
    %v8020 = vadd.f32 %v8019, 0.18741608
    %v8021 = vmul.f32 %v8012, %v8020
    %v8022 = vadd.f32 %v8021, 1.1283791
    %v8023 = vmul.f32 %v7277, %v8022
    %v8024 = vmul.f32 %v8012, 3.8918573e-05
    %v8025 = vadd.f32 %v8024, 0.001143296
    %v8026 = vmul.f32 %v8012, %v8025
    %v8027 = vadd.f32 %v8026, 0.014752088
    %v8028 = vmul.f32 %v8012, %v8027
    %v8029 = vadd.f32 %v8028, 0.112945676
    %v8030 = vmul.f32 %v8012, %v8029
    %v8031 = vadd.f32 %v8030, 0.4994258
    %v8032 = vmul.f32 %v8012, %v8031
    %v8033 = vadd.f32 %v8032, 1.0
    %v8034 = vrcp.pop %v8033
    %v8035 = vmul.f32 %v8033, %v8034
    %v8036 = vsub.f32 1.0, %v8035
    %v8037 = vmul.f32 %v8034, %v8036
    %v8038 = vadd.f32 %v8034, %v8037
    %vm8039 = vweird.f32 %v8033
    %vm8040 = vweird.f32 %v8034
    %vm8041 = vmor %vm8039, %vm8040
    %v8042 = vsel %vm8041, %v8034, %v8038
    %v8043 = vand.u32 2147483647, %v8033
    %vm8044 = vcmp.eq.f32.partialorder %v8043, 8.507059e+37
    %v8045 = vand.u32 %v8033, 2147483648
    %v8046 = vor.u32 1.1754944e-38, %v8045
    %v8047 = vsel %vm8044, %v8046, %v8042
    %v8048 = vmul.f32 %v8023, %v8047
    %v8049 = vmin.f32 %v8048, 1.0
    %v8050 = vmax.f32 %v8049, -1.0
    %v8051 = vmul.f32 %v7278, %v7278
    %v8052 = vmin.f32 16.0, %v8051
    %v8053 = vmul.f32 %v8052, 2.1237322e-06
    %v8054 = vadd.f32 %v8053, 0.00028619796
    %v8055 = vmul.f32 %v8052, %v8054
    %v8056 = vadd.f32 %v8055, 0.0036580483
    %v8057 = vmul.f32 %v8052, %v8056
    %v8058 = vadd.f32 %v8057, 0.05243302
    %v8059 = vmul.f32 %v8052, %v8058
    %v8060 = vadd.f32 %v8059, 0.18741608
    %v8061 = vmul.f32 %v8052, %v8060
    %v8062 = vadd.f32 %v8061, 1.1283791
    %v8063 = vmul.f32 %v7278, %v8062
    %v8064 = vmul.f32 %v8052, 3.8918573e-05
    %v8065 = vadd.f32 %v8064, 0.001143296
    %v8066 = vmul.f32 %v8052, %v8065
    %v8067 = vadd.f32 %v8066, 0.014752088
    %v8068 = vmul.f32 %v8052, %v8067
    %v8069 = vadd.f32 %v8068, 0.112945676
    %v8070 = vmul.f32 %v8052, %v8069
    %v8071 = vadd.f32 %v8070, 0.4994258
    %v8072 = vmul.f32 %v8052, %v8071
    %v8073 = vadd.f32 %v8072, 1.0
    %v8074 = vrcp.pop %v8073
    %v8075 = vmul.f32 %v8073, %v8074
    %v8076 = vsub.f32 1.0, %v8075
    %v8077 = vmul.f32 %v8074, %v8076
    %v8078 = vadd.f32 %v8074, %v8077
    %vm8079 = vweird.f32 %v8073
    %vm8080 = vweird.f32 %v8074
    %vm8081 = vmor %vm8079, %vm8080
    %v8082 = vsel %vm8081, %v8074, %v8078
    %v8083 = vand.u32 2147483647, %v8073
    %vm8084 = vcmp.eq.f32.partialorder %v8083, 8.507059e+37
    %v8085 = vand.u32 %v8073, 2147483648
    %v8086 = vor.u32 1.1754944e-38, %v8085
    %v8087 = vsel %vm8084, %v8086, %v8082
    %v8088 = vmul.f32 %v8063, %v8087
    %v8089 = vmin.f32 %v8088, 1.0
    %v8090 = vmax.f32 %v8089, -1.0
    %v8091 = vmul.f32 %v7279, %v7279
    %v8092 = vmin.f32 16.0, %v8091
    %v8093 = vmul.f32 %v8092, 2.1237322e-06
    %v8094 = vadd.f32 %v8093, 0.00028619796
    %v8095 = vmul.f32 %v8092, %v8094
    %v8096 = vadd.f32 %v8095, 0.0036580483
    %v8097 = vmul.f32 %v8092, %v8096
    %v8098 = vadd.f32 %v8097, 0.05243302
    %v8099 = vmul.f32 %v8092, %v8098
    %v8100 = vadd.f32 %v8099, 0.18741608
    %v8101 = vmul.f32 %v8092, %v8100
    %v8102 = vadd.f32 %v8101, 1.1283791
    %v8103 = vmul.f32 %v7279, %v8102
    %v8104 = vmul.f32 %v8092, 3.8918573e-05
    %v8105 = vadd.f32 %v8104, 0.001143296
    %v8106 = vmul.f32 %v8092, %v8105
    %v8107 = vadd.f32 %v8106, 0.014752088
    %v8108 = vmul.f32 %v8092, %v8107
    %v8109 = vadd.f32 %v8108, 0.112945676
    %v8110 = vmul.f32 %v8092, %v8109
    %v8111 = vadd.f32 %v8110, 0.4994258
    %v8112 = vmul.f32 %v8092, %v8111
    %v8113 = vadd.f32 %v8112, 1.0
    %v8114 = vrcp.pop %v8113
    %v8115 = vmul.f32 %v8113, %v8114
    %v8116 = vsub.f32 1.0, %v8115
    %v8117 = vmul.f32 %v8114, %v8116
    %v8118 = vadd.f32 %v8114, %v8117
    %vm8119 = vweird.f32 %v8113
    %vm8120 = vweird.f32 %v8114
    %vm8121 = vmor %vm8119, %vm8120
    %v8122 = vsel %vm8121, %v8114, %v8118
    %v8123 = vand.u32 2147483647, %v8113
    %vm8124 = vcmp.eq.f32.partialorder %v8123, 8.507059e+37
    %v8125 = vand.u32 %v8113, 2147483648
    %v8126 = vor.u32 1.1754944e-38, %v8125
    %v8127 = vsel %vm8124, %v8126, %v8122
    %v8128 = vmul.f32 %v8103, %v8127
    %v8129 = vmin.f32 %v8128, 1.0
    %v8130 = vmax.f32 %v8129, -1.0
    %v8131 = vmul.f32 %v7280, %v7280
    %v8132 = vmin.f32 16.0, %v8131
    %v8133 = vmul.f32 %v8132, 2.1237322e-06
    %v8134 = vadd.f32 %v8133, 0.00028619796
    %v8135 = vmul.f32 %v8132, %v8134
    %v8136 = vadd.f32 %v8135, 0.0036580483
    %v8137 = vmul.f32 %v8132, %v8136
    %v8138 = vadd.f32 %v8137, 0.05243302
    %v8139 = vmul.f32 %v8132, %v8138
    %v8140 = vadd.f32 %v8139, 0.18741608
    %v8141 = vmul.f32 %v8132, %v8140
    %v8142 = vadd.f32 %v8141, 1.1283791
    %v8143 = vmul.f32 %v7280, %v8142
    %v8144 = vmul.f32 %v8132, 3.8918573e-05
    %v8145 = vadd.f32 %v8144, 0.001143296
    %v8146 = vmul.f32 %v8132, %v8145
    %v8147 = vadd.f32 %v8146, 0.014752088
    %v8148 = vmul.f32 %v8132, %v8147
    %v8149 = vadd.f32 %v8148, 0.112945676
    %v8150 = vmul.f32 %v8132, %v8149
    %v8151 = vadd.f32 %v8150, 0.4994258
    %v8152 = vmul.f32 %v8132, %v8151
    %v8153 = vadd.f32 %v8152, 1.0
    %v8154 = vrcp.pop %v8153
    %v8155 = vmul.f32 %v8153, %v8154
    %v8156 = vsub.f32 1.0, %v8155
    %v8157 = vmul.f32 %v8154, %v8156
    %v8158 = vadd.f32 %v8154, %v8157
    %vm8159 = vweird.f32 %v8153
    %vm8160 = vweird.f32 %v8154
    %vm8161 = vmor %vm8159, %vm8160
    %v8162 = vsel %vm8161, %v8154, %v8158
    %v8163 = vand.u32 2147483647, %v8153
    %vm8164 = vcmp.eq.f32.partialorder %v8163, 8.507059e+37
    %v8165 = vand.u32 %v8153, 2147483648
    %v8166 = vor.u32 1.1754944e-38, %v8165
    %v8167 = vsel %vm8164, %v8166, %v8162
    %v8168 = vmul.f32 %v8143, %v8167
    %v8169 = vmin.f32 %v8168, 1.0
    %v8170 = vmax.f32 %v8169, -1.0
    %v8171 = vmul.f32 %v7281, %v7281
    %v8172 = vmin.f32 16.0, %v8171
    %v8173 = vmul.f32 %v8172, 2.1237322e-06
    %v8174 = vadd.f32 %v8173, 0.00028619796
    %v8175 = vmul.f32 %v8172, %v8174
    %v8176 = vadd.f32 %v8175, 0.0036580483
    %v8177 = vmul.f32 %v8172, %v8176
    %v8178 = vadd.f32 %v8177, 0.05243302
    %v8179 = vmul.f32 %v8172, %v8178
    %v8180 = vadd.f32 %v8179, 0.18741608
    %v8181 = vmul.f32 %v8172, %v8180
    %v8182 = vadd.f32 %v8181, 1.1283791
    %v8183 = vmul.f32 %v7281, %v8182
    %v8184 = vmul.f32 %v8172, 3.8918573e-05
    %v8185 = vadd.f32 %v8184, 0.001143296
    %v8186 = vmul.f32 %v8172, %v8185
    %v8187 = vadd.f32 %v8186, 0.014752088
    %v8188 = vmul.f32 %v8172, %v8187
    %v8189 = vadd.f32 %v8188, 0.112945676
    %v8190 = vmul.f32 %v8172, %v8189
    %v8191 = vadd.f32 %v8190, 0.4994258
    %v8192 = vmul.f32 %v8172, %v8191
    %v8193 = vadd.f32 %v8192, 1.0
    %v8194 = vrcp.pop %v8193
    %v8195 = vmul.f32 %v8193, %v8194
    %v8196 = vsub.f32 1.0, %v8195
    %v8197 = vmul.f32 %v8194, %v8196
    %v8198 = vadd.f32 %v8194, %v8197
    %vm8199 = vweird.f32 %v8193
    %vm8200 = vweird.f32 %v8194
    %vm8201 = vmor %vm8199, %vm8200
    %v8202 = vsel %vm8201, %v8194, %v8198
    %v8203 = vand.u32 2147483647, %v8193
    %vm8204 = vcmp.eq.f32.partialorder %v8203, 8.507059e+37
    %v8205 = vand.u32 %v8193, 2147483648
    %v8206 = vor.u32 1.1754944e-38, %v8205
    %v8207 = vsel %vm8204, %v8206, %v8202
    %v8208 = vmul.f32 %v8183, %v8207
    %v8209 = vmin.f32 %v8208, 1.0
    %v8210 = vmax.f32 %v8209, -1.0
    %v8211 = vmul.f32 %v7282, %v7282
    %v8212 = vmin.f32 16.0, %v8211
    %v8213 = vmul.f32 %v8212, 2.1237322e-06
    %v8214 = vadd.f32 %v8213, 0.00028619796
    %v8215 = vmul.f32 %v8212, %v8214
    %v8216 = vadd.f32 %v8215, 0.0036580483
    %v8217 = vmul.f32 %v8212, %v8216
    %v8218 = vadd.f32 %v8217, 0.05243302
    %v8219 = vmul.f32 %v8212, %v8218
    %v8220 = vadd.f32 %v8219, 0.18741608
    %v8221 = vmul.f32 %v8212, %v8220
    %v8222 = vadd.f32 %v8221, 1.1283791
    %v8223 = vmul.f32 %v7282, %v8222
    %v8224 = vmul.f32 %v8212, 3.8918573e-05
    %v8225 = vadd.f32 %v8224, 0.001143296
    %v8226 = vmul.f32 %v8212, %v8225
    %v8227 = vadd.f32 %v8226, 0.014752088
    %v8228 = vmul.f32 %v8212, %v8227
    %v8229 = vadd.f32 %v8228, 0.112945676
    %v8230 = vmul.f32 %v8212, %v8229
    %v8231 = vadd.f32 %v8230, 0.4994258
    %v8232 = vmul.f32 %v8212, %v8231
    %v8233 = vadd.f32 %v8232, 1.0
    %v8234 = vrcp.pop %v8233
    %v8235 = vmul.f32 %v8233, %v8234
    %v8236 = vsub.f32 1.0, %v8235
    %v8237 = vmul.f32 %v8234, %v8236
    %v8238 = vadd.f32 %v8234, %v8237
    %vm8239 = vweird.f32 %v8233
    %vm8240 = vweird.f32 %v8234
    %vm8241 = vmor %vm8239, %vm8240
    %v8242 = vsel %vm8241, %v8234, %v8238
    %v8243 = vand.u32 2147483647, %v8233
    %vm8244 = vcmp.eq.f32.partialorder %v8243, 8.507059e+37
    %v8245 = vand.u32 %v8233, 2147483648
    %v8246 = vor.u32 1.1754944e-38, %v8245
    %v8247 = vsel %vm8244, %v8246, %v8242
    %v8248 = vmul.f32 %v8223, %v8247
    %v8249 = vmin.f32 %v8248, 1.0
    %v8250 = vmax.f32 %v8249, -1.0
    %v8251 = vmul.f32 %v7283, %v7283
    %v8252 = vmin.f32 16.0, %v8251
    %v8253 = vmul.f32 %v8252, 2.1237322e-06
    %v8254 = vadd.f32 %v8253, 0.00028619796
    %v8255 = vmul.f32 %v8252, %v8254
    %v8256 = vadd.f32 %v8255, 0.0036580483
    %v8257 = vmul.f32 %v8252, %v8256
    %v8258 = vadd.f32 %v8257, 0.05243302
    %v8259 = vmul.f32 %v8252, %v8258
    %v8260 = vadd.f32 %v8259, 0.18741608
    %v8261 = vmul.f32 %v8252, %v8260
    %v8262 = vadd.f32 %v8261, 1.1283791
    %v8263 = vmul.f32 %v7283, %v8262
    %v8264 = vmul.f32 %v8252, 3.8918573e-05
    %v8265 = vadd.f32 %v8264, 0.001143296
    %v8266 = vmul.f32 %v8252, %v8265
    %v8267 = vadd.f32 %v8266, 0.014752088
    %v8268 = vmul.f32 %v8252, %v8267
    %v8269 = vadd.f32 %v8268, 0.112945676
    %v8270 = vmul.f32 %v8252, %v8269
    %v8271 = vadd.f32 %v8270, 0.4994258
    %v8272 = vmul.f32 %v8252, %v8271
    %v8273 = vadd.f32 %v8272, 1.0
    %v8274 = vrcp.pop %v8273
    %v8275 = vmul.f32 %v8273, %v8274
    %v8276 = vsub.f32 1.0, %v8275
    %v8277 = vmul.f32 %v8274, %v8276
    %v8278 = vadd.f32 %v8274, %v8277
    %vm8279 = vweird.f32 %v8273
    %vm8280 = vweird.f32 %v8274
    %vm8281 = vmor %vm8279, %vm8280
    %v8282 = vsel %vm8281, %v8274, %v8278
    %v8283 = vand.u32 2147483647, %v8273
    %vm8284 = vcmp.eq.f32.partialorder %v8283, 8.507059e+37
    %v8285 = vand.u32 %v8273, 2147483648
    %v8286 = vor.u32 1.1754944e-38, %v8285
    %v8287 = vsel %vm8284, %v8286, %v8282
    %v8288 = vmul.f32 %v8263, %v8287
    %v8289 = vmin.f32 %v8288, 1.0
    %v8290 = vmax.f32 %v8289, -1.0
    %v8291 = vmul.f32 %v7284, %v7284
    %v8292 = vmin.f32 16.0, %v8291
    %v8293 = vmul.f32 %v8292, 2.1237322e-06
    %v8294 = vadd.f32 %v8293, 0.00028619796
    %v8295 = vmul.f32 %v8292, %v8294
    %v8296 = vadd.f32 %v8295, 0.0036580483
    %v8297 = vmul.f32 %v8292, %v8296
    %v8298 = vadd.f32 %v8297, 0.05243302
    %v8299 = vmul.f32 %v8292, %v8298
    %v8300 = vadd.f32 %v8299, 0.18741608
    %v8301 = vmul.f32 %v8292, %v8300
    %v8302 = vadd.f32 %v8301, 1.1283791
    %v8303 = vmul.f32 %v7284, %v8302
    %v8304 = vmul.f32 %v8292, 3.8918573e-05
    %v8305 = vadd.f32 %v8304, 0.001143296
    %v8306 = vmul.f32 %v8292, %v8305
    %v8307 = vadd.f32 %v8306, 0.014752088
    %v8308 = vmul.f32 %v8292, %v8307
    %v8309 = vadd.f32 %v8308, 0.112945676
    %v8310 = vmul.f32 %v8292, %v8309
    %v8311 = vadd.f32 %v8310, 0.4994258
    %v8312 = vmul.f32 %v8292, %v8311
    %v8313 = vadd.f32 %v8312, 1.0
    %v8314 = vrcp.pop %v8313
    %v8315 = vmul.f32 %v8313, %v8314
    %v8316 = vsub.f32 1.0, %v8315
    %v8317 = vmul.f32 %v8314, %v8316
    %v8318 = vadd.f32 %v8314, %v8317
    %vm8319 = vweird.f32 %v8313
    %vm8320 = vweird.f32 %v8314
    %vm8321 = vmor %vm8319, %vm8320
    %v8322 = vsel %vm8321, %v8314, %v8318
    %v8323 = vand.u32 2147483647, %v8313
    %vm8324 = vcmp.eq.f32.partialorder %v8323, 8.507059e+37
    %v8325 = vand.u32 %v8313, 2147483648
    %v8326 = vor.u32 1.1754944e-38, %v8325
    %v8327 = vsel %vm8324, %v8326, %v8322
    %v8328 = vmul.f32 %v8303, %v8327
    %v8329 = vmin.f32 %v8328, 1.0
    %v8330 = vmax.f32 %v8329, -1.0
    %v8331 = vmul.f32 %v7285, %v7285
    %v8332 = vmin.f32 16.0, %v8331
    %v8333 = vmul.f32 %v8332, 2.1237322e-06
    %v8334 = vadd.f32 %v8333, 0.00028619796
    %v8335 = vmul.f32 %v8332, %v8334
    %v8336 = vadd.f32 %v8335, 0.0036580483
    %v8337 = vmul.f32 %v8332, %v8336
    %v8338 = vadd.f32 %v8337, 0.05243302
    %v8339 = vmul.f32 %v8332, %v8338
    %v8340 = vadd.f32 %v8339, 0.18741608
    %v8341 = vmul.f32 %v8332, %v8340
    %v8342 = vadd.f32 %v8341, 1.1283791
    %v8343 = vmul.f32 %v7285, %v8342
    %v8344 = vmul.f32 %v8332, 3.8918573e-05
    %v8345 = vadd.f32 %v8344, 0.001143296
    %v8346 = vmul.f32 %v8332, %v8345
    %v8347 = vadd.f32 %v8346, 0.014752088
    %v8348 = vmul.f32 %v8332, %v8347
    %v8349 = vadd.f32 %v8348, 0.112945676
    %v8350 = vmul.f32 %v8332, %v8349
    %v8351 = vadd.f32 %v8350, 0.4994258
    %v8352 = vmul.f32 %v8332, %v8351
    %v8353 = vadd.f32 %v8352, 1.0
    %v8354 = vrcp.pop %v8353
    %v8355 = vmul.f32 %v8353, %v8354
    %v8356 = vsub.f32 1.0, %v8355
    %v8357 = vmul.f32 %v8354, %v8356
    %v8358 = vadd.f32 %v8354, %v8357
    %vm8359 = vweird.f32 %v8353
    %vm8360 = vweird.f32 %v8354
    %vm8361 = vmor %vm8359, %vm8360
    %v8362 = vsel %vm8361, %v8354, %v8358
    %v8363 = vand.u32 2147483647, %v8353
    %vm8364 = vcmp.eq.f32.partialorder %v8363, 8.507059e+37
    %v8365 = vand.u32 %v8353, 2147483648
    %v8366 = vor.u32 1.1754944e-38, %v8365
    %v8367 = vsel %vm8364, %v8366, %v8362
    %v8368 = vmul.f32 %v8343, %v8367
    %v8369 = vmin.f32 %v8368, 1.0
    %v8370 = vmax.f32 %v8369, -1.0
    %v8371 = vmul.f32 %v7286, %v7286
    %v8372 = vmin.f32 16.0, %v8371
    %v8373 = vmul.f32 %v8372, 2.1237322e-06
    %v8374 = vadd.f32 %v8373, 0.00028619796
    %v8375 = vmul.f32 %v8372, %v8374
    %v8376 = vadd.f32 %v8375, 0.0036580483
    %v8377 = vmul.f32 %v8372, %v8376
    %v8378 = vadd.f32 %v8377, 0.05243302
    %v8379 = vmul.f32 %v8372, %v8378
    %v8380 = vadd.f32 %v8379, 0.18741608
    %v8381 = vmul.f32 %v8372, %v8380
    %v8382 = vadd.f32 %v8381, 1.1283791
    %v8383 = vmul.f32 %v7286, %v8382
    %v8384 = vmul.f32 %v8372, 3.8918573e-05
    %v8385 = vadd.f32 %v8384, 0.001143296
    %v8386 = vmul.f32 %v8372, %v8385
    %v8387 = vadd.f32 %v8386, 0.014752088
    %v8388 = vmul.f32 %v8372, %v8387
    %v8389 = vadd.f32 %v8388, 0.112945676
    %v8390 = vmul.f32 %v8372, %v8389
    %v8391 = vadd.f32 %v8390, 0.4994258
    %v8392 = vmul.f32 %v8372, %v8391
    %v8393 = vadd.f32 %v8392, 1.0
    %v8394 = vrcp.pop %v8393
    %v8395 = vmul.f32 %v8393, %v8394
    %v8396 = vsub.f32 1.0, %v8395
    %v8397 = vmul.f32 %v8394, %v8396
    %v8398 = vadd.f32 %v8394, %v8397
    %vm8399 = vweird.f32 %v8393
    %vm8400 = vweird.f32 %v8394
    %vm8401 = vmor %vm8399, %vm8400
    %v8402 = vsel %vm8401, %v8394, %v8398
    %v8403 = vand.u32 2147483647, %v8393
    %vm8404 = vcmp.eq.f32.partialorder %v8403, 8.507059e+37
    %v8405 = vand.u32 %v8393, 2147483648
    %v8406 = vor.u32 1.1754944e-38, %v8405
    %v8407 = vsel %vm8404, %v8406, %v8402
    %v8408 = vmul.f32 %v8383, %v8407
    %v8409 = vmin.f32 %v8408, 1.0
    %v8410 = vmax.f32 %v8409, -1.0
    %v8411 = vmul.f32 %v7287, %v7287
    %v8412 = vmin.f32 16.0, %v8411
    %v8413 = vmul.f32 %v8412, 2.1237322e-06
    %v8414 = vadd.f32 %v8413, 0.00028619796
    %v8415 = vmul.f32 %v8412, %v8414
    %v8416 = vadd.f32 %v8415, 0.0036580483
    %v8417 = vmul.f32 %v8412, %v8416
    %v8418 = vadd.f32 %v8417, 0.05243302
    %v8419 = vmul.f32 %v8412, %v8418
    %v8420 = vadd.f32 %v8419, 0.18741608
    %v8421 = vmul.f32 %v8412, %v8420
    %v8422 = vadd.f32 %v8421, 1.1283791
    %v8423 = vmul.f32 %v7287, %v8422
    %v8424 = vmul.f32 %v8412, 3.8918573e-05
    %v8425 = vadd.f32 %v8424, 0.001143296
    %v8426 = vmul.f32 %v8412, %v8425
    %v8427 = vadd.f32 %v8426, 0.014752088
    %v8428 = vmul.f32 %v8412, %v8427
    %v8429 = vadd.f32 %v8428, 0.112945676
    %v8430 = vmul.f32 %v8412, %v8429
    %v8431 = vadd.f32 %v8430, 0.4994258
    %v8432 = vmul.f32 %v8412, %v8431
    %v8433 = vadd.f32 %v8432, 1.0
    %v8434 = vrcp.pop %v8433
    %v8435 = vmul.f32 %v8433, %v8434
    %v8436 = vsub.f32 1.0, %v8435
    %v8437 = vmul.f32 %v8434, %v8436
    %v8438 = vadd.f32 %v8434, %v8437
    %vm8439 = vweird.f32 %v8433
    %vm8440 = vweird.f32 %v8434
    %vm8441 = vmor %vm8439, %vm8440
    %v8442 = vsel %vm8441, %v8434, %v8438
    %v8443 = vand.u32 2147483647, %v8433
    %vm8444 = vcmp.eq.f32.partialorder %v8443, 8.507059e+37
    %v8445 = vand.u32 %v8433, 2147483648
    %v8446 = vor.u32 1.1754944e-38, %v8445
    %v8447 = vsel %vm8444, %v8446, %v8442
    %v8448 = vmul.f32 %v8423, %v8447
    %v8449 = vmin.f32 %v8448, 1.0
    %v8450 = vmax.f32 %v8449, -1.0
    %v8451 = vmul.f32 %v7288, %v7288
    %v8452 = vmin.f32 16.0, %v8451
    %v8453 = vmul.f32 %v8452, 2.1237322e-06
    %v8454 = vadd.f32 %v8453, 0.00028619796
    %v8455 = vmul.f32 %v8452, %v8454
    %v8456 = vadd.f32 %v8455, 0.0036580483
    %v8457 = vmul.f32 %v8452, %v8456
    %v8458 = vadd.f32 %v8457, 0.05243302
    %v8459 = vmul.f32 %v8452, %v8458
    %v8460 = vadd.f32 %v8459, 0.18741608
    %v8461 = vmul.f32 %v8452, %v8460
    %v8462 = vadd.f32 %v8461, 1.1283791
    %v8463 = vmul.f32 %v7288, %v8462
    %v8464 = vmul.f32 %v8452, 3.8918573e-05
    %v8465 = vadd.f32 %v8464, 0.001143296
    %v8466 = vmul.f32 %v8452, %v8465
    %v8467 = vadd.f32 %v8466, 0.014752088
    %v8468 = vmul.f32 %v8452, %v8467
    %v8469 = vadd.f32 %v8468, 0.112945676
    %v8470 = vmul.f32 %v8452, %v8469
    %v8471 = vadd.f32 %v8470, 0.4994258
    %v8472 = vmul.f32 %v8452, %v8471
    %v8473 = vadd.f32 %v8472, 1.0
    %v8474 = vrcp.pop %v8473
    %v8475 = vmul.f32 %v8473, %v8474
    %v8476 = vsub.f32 1.0, %v8475
    %v8477 = vmul.f32 %v8474, %v8476
    %v8478 = vadd.f32 %v8474, %v8477
    %vm8479 = vweird.f32 %v8473
    %vm8480 = vweird.f32 %v8474
    %vm8481 = vmor %vm8479, %vm8480
    %v8482 = vsel %vm8481, %v8474, %v8478
    %v8483 = vand.u32 2147483647, %v8473
    %vm8484 = vcmp.eq.f32.partialorder %v8483, 8.507059e+37
    %v8485 = vand.u32 %v8473, 2147483648
    %v8486 = vor.u32 1.1754944e-38, %v8485
    %v8487 = vsel %vm8484, %v8486, %v8482
    %v8488 = vmul.f32 %v8463, %v8487
    %v8489 = vmin.f32 %v8488, 1.0
    %v8490 = vmax.f32 %v8489, -1.0
    %v8491 = vmul.f32 %v7289, %v7289
    %v8492 = vmin.f32 16.0, %v8491
    %v8493 = vmul.f32 %v8492, 2.1237322e-06
    %v8494 = vadd.f32 %v8493, 0.00028619796
    %v8495 = vmul.f32 %v8492, %v8494
    %v8496 = vadd.f32 %v8495, 0.0036580483
    %v8497 = vmul.f32 %v8492, %v8496
    %v8498 = vadd.f32 %v8497, 0.05243302
    %v8499 = vmul.f32 %v8492, %v8498
    %v8500 = vadd.f32 %v8499, 0.18741608
    %v8501 = vmul.f32 %v8492, %v8500
    %v8502 = vadd.f32 %v8501, 1.1283791
    %v8503 = vmul.f32 %v7289, %v8502
    %v8504 = vmul.f32 %v8492, 3.8918573e-05
    %v8505 = vadd.f32 %v8504, 0.001143296
    %v8506 = vmul.f32 %v8492, %v8505
    %v8507 = vadd.f32 %v8506, 0.014752088
    %v8508 = vmul.f32 %v8492, %v8507
    %v8509 = vadd.f32 %v8508, 0.112945676
    %v8510 = vmul.f32 %v8492, %v8509
    %v8511 = vadd.f32 %v8510, 0.4994258
    %v8512 = vmul.f32 %v8492, %v8511
    %v8513 = vadd.f32 %v8512, 1.0
    %v8514 = vrcp.pop %v8513
    %v8515 = vmul.f32 %v8513, %v8514
    %v8516 = vsub.f32 1.0, %v8515
    %v8517 = vmul.f32 %v8514, %v8516
    %v8518 = vadd.f32 %v8514, %v8517
    %vm8519 = vweird.f32 %v8513
    %vm8520 = vweird.f32 %v8514
    %vm8521 = vmor %vm8519, %vm8520
    %v8522 = vsel %vm8521, %v8514, %v8518
    %v8523 = vand.u32 2147483647, %v8513
    %vm8524 = vcmp.eq.f32.partialorder %v8523, 8.507059e+37
    %v8525 = vand.u32 %v8513, 2147483648
    %v8526 = vor.u32 1.1754944e-38, %v8525
    %v8527 = vsel %vm8524, %v8526, %v8522
    %v8528 = vmul.f32 %v8503, %v8527
    %v8529 = vmin.f32 %v8528, 1.0
    %v8530 = vmax.f32 %v8529, -1.0
    %v8531 = vmul.f32 %v7290, %v7290
    %v8532 = vmin.f32 16.0, %v8531
    %v8533 = vmul.f32 %v8532, 2.1237322e-06
    %v8534 = vadd.f32 %v8533, 0.00028619796
    %v8535 = vmul.f32 %v8532, %v8534
    %v8536 = vadd.f32 %v8535, 0.0036580483
    %v8537 = vmul.f32 %v8532, %v8536
    %v8538 = vadd.f32 %v8537, 0.05243302
    %v8539 = vmul.f32 %v8532, %v8538
    %v8540 = vadd.f32 %v8539, 0.18741608
    %v8541 = vmul.f32 %v8532, %v8540
    %v8542 = vadd.f32 %v8541, 1.1283791
    %v8543 = vmul.f32 %v7290, %v8542
    %v8544 = vmul.f32 %v8532, 3.8918573e-05
    %v8545 = vadd.f32 %v8544, 0.001143296
    %v8546 = vmul.f32 %v8532, %v8545
    %v8547 = vadd.f32 %v8546, 0.014752088
    %v8548 = vmul.f32 %v8532, %v8547
    %v8549 = vadd.f32 %v8548, 0.112945676
    %v8550 = vmul.f32 %v8532, %v8549
    %v8551 = vadd.f32 %v8550, 0.4994258
    %v8552 = vmul.f32 %v8532, %v8551
    %v8553 = vadd.f32 %v8552, 1.0
    %v8554 = vrcp.pop %v8553
    %v8555 = vmul.f32 %v8553, %v8554
    %v8556 = vsub.f32 1.0, %v8555
    %v8557 = vmul.f32 %v8554, %v8556
    %v8558 = vadd.f32 %v8554, %v8557
    %vm8559 = vweird.f32 %v8553
    %vm8560 = vweird.f32 %v8554
    %vm8561 = vmor %vm8559, %vm8560
    %v8562 = vsel %vm8561, %v8554, %v8558
    %v8563 = vand.u32 2147483647, %v8553
    %vm8564 = vcmp.eq.f32.partialorder %v8563, 8.507059e+37
    %v8565 = vand.u32 %v8553, 2147483648
    %v8566 = vor.u32 1.1754944e-38, %v8565
    %v8567 = vsel %vm8564, %v8566, %v8562
    %v8568 = vmul.f32 %v8543, %v8567
    %v8569 = vmin.f32 %v8568, 1.0
    %v8570 = vmax.f32 %v8569, -1.0
    %v8571 = vadd.f32 %v7330, 1.0
    %v8572 = vadd.f32 %v7370, 1.0
    %v8573 = vadd.f32 %v7410, 1.0
    %v8574 = vadd.f32 %v7450, 1.0
    %v8575 = vadd.f32 %v7490, 1.0
    %v8576 = vadd.f32 %v7530, 1.0
    %v8577 = vadd.f32 %v7570, 1.0
    %v8578 = vadd.f32 %v7610, 1.0
    %v8579 = vadd.f32 %v7650, 1.0
    %v8580 = vadd.f32 %v7690, 1.0
    %v8581 = vadd.f32 %v7730, 1.0
    %v8582 = vadd.f32 %v7770, 1.0
    %v8583 = vadd.f32 %v7810, 1.0
    %v8584 = vadd.f32 %v7850, 1.0
    %v8585 = vadd.f32 %v7890, 1.0
    %v8586 = vadd.f32 %v7930, 1.0
    %v8587 = vadd.f32 %v7970, 1.0
    %v8588 = vadd.f32 %v8010, 1.0
    %v8589 = vadd.f32 %v8050, 1.0
    %v8590 = vadd.f32 %v8090, 1.0
    %v8591 = vadd.f32 %v8130, 1.0
    %v8592 = vadd.f32 %v8170, 1.0
    %v8593 = vadd.f32 %v8210, 1.0
    %v8594 = vadd.f32 %v8250, 1.0
    %v8595 = vadd.f32 %v8290, 1.0
    %v8596 = vadd.f32 %v8330, 1.0
    %v8597 = vadd.f32 %v8370, 1.0
    %v8598 = vadd.f32 %v8410, 1.0
    %v8599 = vadd.f32 %v8450, 1.0
    %v8600 = vadd.f32 %v8490, 1.0
    %v8601 = vadd.f32 %v8530, 1.0
    %v8602 = vadd.f32 %v8570, 1.0
    %v8603 = vmul.f32 %v7227, %v8571
    %v8604 = vmul.f32 %v7228, %v8572
    %v8605 = vmul.f32 %v7229, %v8573
    %v8606 = vmul.f32 %v7230, %v8574
    %v8607 = vmul.f32 %v7231, %v8575
    %v8608 = vmul.f32 %v7232, %v8576
    %v8609 = vmul.f32 %v7233, %v8577
    %v8610 = vmul.f32 %v7234, %v8578
    %v8611 = vmul.f32 %v7235, %v8579
    %v8612 = vmul.f32 %v7236, %v8580
    %v8613 = vmul.f32 %v7237, %v8581
    %v8614 = vmul.f32 %v7238, %v8582
    %v8615 = vmul.f32 %v7239, %v8583
    %v8616 = vmul.f32 %v7240, %v8584
    %v8617 = vmul.f32 %v7241, %v8585
    %v8618 = vmul.f32 %v7242, %v8586
    %v8619 = vmul.f32 %v7243, %v8587
    %v8620 = vmul.f32 %v7244, %v8588
    %v8621 = vmul.f32 %v7245, %v8589
    %v8622 = vmul.f32 %v7246, %v8590
    %v8623 = vmul.f32 %v7247, %v8591
    %v8624 = vmul.f32 %v7248, %v8592
    %v8625 = vmul.f32 %v7249, %v8593
    %v8626 = vmul.f32 %v7250, %v8594
    %v8627 = vmul.f32 %v7251, %v8595
    %v8628 = vmul.f32 %v7252, %v8596
    %v8629 = vmul.f32 %v7253, %v8597
    %v8630 = vmul.f32 %v7254, %v8598
    %v8631 = vmul.f32 %v7255, %v8599
    %v8632 = vmul.f32 %v7256, %v8600
    %v8633 = vmul.f32 %v7257, %v8601
    %v8634 = vmul.f32 %v7258, %v8602
    %v8635 = vpack.c.bf16 %v8607, %v8603
    %v8636 = vpack.c.bf16 %v8608, %v8604
    %v8637 = vpack.c.bf16 %v8609, %v8605
    %v8638 = vpack.c.bf16 %v8610, %v8606
    %v8639 = vpack.c.bf16 %v8615, %v8611
    %v8640 = vpack.c.bf16 %v8616, %v8612
    %v8641 = vpack.c.bf16 %v8617, %v8613
    %v8642 = vpack.c.bf16 %v8618, %v8614
    %v8643 = vpack.c.bf16 %v8623, %v8619
    %v8644 = vpack.c.bf16 %v8624, %v8620
    %v8645 = vpack.c.bf16 %v8625, %v8621
    %v8646 = vpack.c.bf16 %v8626, %v8622
    %v8647 = vpack.c.bf16 %v8631, %v8627
    %v8648 = vpack.c.bf16 %v8632, %v8628
    %v8649 = vpack.c.bf16 %v8633, %v8629
    %v8650 = vpack.c.bf16 %v8634, %v8630
    %v8651 = vld [vmem:[%s14] sm:$0xf]
    %v8652 = vld [vmem:[%s14 + $0x4] sm:$0xf]
    %v8653 = vld [vmem:[%s14 + $0x8] sm:$0xf]
    %v8654 = vld [vmem:[%s14 + $0xc] sm:$0xf]
    %v8655 = vld [vmem:[%s14 + $0x10] sm:$0xf]
    %v8656 = vld [vmem:[%s14 + $0x14] sm:$0xf]
    %v8657 = vld [vmem:[%s14 + $0x18] sm:$0xf]
    %v8658 = vld [vmem:[%s14 + $0x1c] sm:$0xf]
    %v8659 = vld [vmem:[%s14 + $0x20] sm:$0xf]
    %v8660 = vld [vmem:[%s14 + $0x24] sm:$0xf]
    %v8661 = vld [vmem:[%s14 + $0x28] sm:$0xf]
    %v8662 = vld [vmem:[%s14 + $0x2c] sm:$0xf]
    %v8663 = vld [vmem:[%s14 + $0x30] sm:$0xf]
    %v8664 = vld [vmem:[%s14 + $0x34] sm:$0xf]
    %v8665 = vld [vmem:[%s14 + $0x38] sm:$0xf]
    %v8666 = vld [vmem:[%s14 + $0x3c] sm:$0xf]
    %v8667 = vld [vmem:[%s14 + $0x40] sm:$0xf]
    %v8668 = vld [vmem:[%s14 + $0x44] sm:$0xf]
    %v8669 = vld [vmem:[%s14 + $0x48] sm:$0xf]
    %v8670 = vld [vmem:[%s14 + $0x4c] sm:$0xf]
    %v8671 = vld [vmem:[%s14 + $0x50] sm:$0xf]
    %v8672 = vld [vmem:[%s14 + $0x54] sm:$0xf]
    %v8673 = vld [vmem:[%s14 + $0x58] sm:$0xf]
    %v8674 = vld [vmem:[%s14 + $0x5c] sm:$0xf]
    %v8675 = vld [vmem:[%s14 + $0x60] sm:$0xf]
    %v8676 = vld [vmem:[%s14 + $0x64] sm:$0xf]
    %v8677 = vld [vmem:[%s14 + $0x68] sm:$0xf]
    %v8678 = vld [vmem:[%s14 + $0x6c] sm:$0xf]
    %v8679 = vld [vmem:[%s14 + $0x70] sm:$0xf]
    %v8680 = vld [vmem:[%s14 + $0x74] sm:$0xf]
    %v8681 = vld [vmem:[%s14 + $0x78] sm:$0xf]
    %v8682 = vld [vmem:[%s14 + $0x7c] sm:$0xf]
    %v8683 = vld [vmem:[%s14 + $0x80] sm:$0xf]
    %v8684 = vld [vmem:[%s14 + $0x84] sm:$0xf]
    %v8685 = vld [vmem:[%s14 + $0x88] sm:$0xf]
    %v8686 = vld [vmem:[%s14 + $0x8c] sm:$0xf]
    %v8687 = vld [vmem:[%s14 + $0x90] sm:$0xf]
    %v8688 = vld [vmem:[%s14 + $0x94] sm:$0xf]
    %v8689 = vld [vmem:[%s14 + $0x98] sm:$0xf]
    %v8690 = vld [vmem:[%s14 + $0x9c] sm:$0xf]
    %v8691 = vld [vmem:[%s14 + $0xa0] sm:$0xf]
    %v8692 = vld [vmem:[%s14 + $0xa4] sm:$0xf]
    %v8693 = vld [vmem:[%s14 + $0xa8] sm:$0xf]
    %v8694 = vld [vmem:[%s14 + $0xac] sm:$0xf]
    %v8695 = vld [vmem:[%s14 + $0xb0] sm:$0xf]
    %v8696 = vld [vmem:[%s14 + $0xb4] sm:$0xf]
    %v8697 = vld [vmem:[%s14 + $0xb8] sm:$0xf]
    %v8698 = vld [vmem:[%s14 + $0xbc] sm:$0xf]
    %v8699 = vld [vmem:[%s14 + $0xc0] sm:$0xf]
    %v8700 = vld [vmem:[%s14 + $0xc4] sm:$0xf]
    %v8701 = vld [vmem:[%s14 + $0xc8] sm:$0xf]
    %v8702 = vld [vmem:[%s14 + $0xcc] sm:$0xf]
    %v8703 = vld [vmem:[%s14 + $0xd0] sm:$0xf]
    %v8704 = vld [vmem:[%s14 + $0xd4] sm:$0xf]
    %v8705 = vld [vmem:[%s14 + $0xd8] sm:$0xf]
    %v8706 = vld [vmem:[%s14 + $0xdc] sm:$0xf]
    %v8707 = vld [vmem:[%s14 + $0xe0] sm:$0xf]
    %v8708 = vld [vmem:[%s14 + $0xe4] sm:$0xf]
    %v8709 = vld [vmem:[%s14 + $0xe8] sm:$0xf]
    %v8710 = vld [vmem:[%s14 + $0xec] sm:$0xf]
    %v8711 = vld [vmem:[%s14 + $0xf0] sm:$0xf]
    %v8712 = vld [vmem:[%s14 + $0xf4] sm:$0xf]
    %v8713 = vld [vmem:[%s14 + $0xf8] sm:$0xf]
    %v8714 = vld [vmem:[%s14 + $0xfc] sm:$0xf]
    %v8779 = vunpack.c.l.b16 %v8651
    %v8780 = vunpack.c.l.b16 %v8652
    %v8781 = vunpack.c.l.b16 %v8653
    %v8782 = vunpack.c.l.b16 %v8654
    %v8783 = vunpack.c.l.b16 %v8655
    %v8784 = vunpack.c.l.b16 %v8656
    %v8785 = vunpack.c.l.b16 %v8657
    %v8786 = vunpack.c.l.b16 %v8658
    %v8787 = vunpack.c.l.b16 %v8659
    %v8788 = vunpack.c.l.b16 %v8660
    %v8789 = vunpack.c.l.b16 %v8661
    %v8790 = vunpack.c.l.b16 %v8662
    %v8791 = vunpack.c.l.b16 %v8663
    %v8792 = vunpack.c.l.b16 %v8664
    %v8793 = vunpack.c.l.b16 %v8665
    %v8794 = vunpack.c.l.b16 %v8666
    %v8795 = vunpack.c.l.b16 %v8667
    %v8796 = vunpack.c.l.b16 %v8668
    %v8797 = vunpack.c.l.b16 %v8669
    %v8798 = vunpack.c.l.b16 %v8670
    %v8799 = vunpack.c.l.b16 %v8671
    %v8800 = vunpack.c.l.b16 %v8672
    %v8801 = vunpack.c.l.b16 %v8673
    %v8802 = vunpack.c.l.b16 %v8674
    %v8803 = vunpack.c.l.b16 %v8675
    %v8804 = vunpack.c.l.b16 %v8676
    %v8805 = vunpack.c.l.b16 %v8677
    %v8806 = vunpack.c.l.b16 %v8678
    %v8807 = vunpack.c.l.b16 %v8679
    %v8808 = vunpack.c.l.b16 %v8680
    %v8809 = vunpack.c.l.b16 %v8681
    %v8810 = vunpack.c.l.b16 %v8682
    %v8811 = vunpack.c.l.b16 %v8683
    %v8812 = vunpack.c.l.b16 %v8684
    %v8813 = vunpack.c.l.b16 %v8685
    %v8814 = vunpack.c.l.b16 %v8686
    %v8815 = vunpack.c.l.b16 %v8687
    %v8816 = vunpack.c.l.b16 %v8688
    %v8817 = vunpack.c.l.b16 %v8689
    %v8818 = vunpack.c.l.b16 %v8690
    %v8819 = vunpack.c.l.b16 %v8691
    %v8820 = vunpack.c.l.b16 %v8692
    %v8821 = vunpack.c.l.b16 %v8693
    %v8822 = vunpack.c.l.b16 %v8694
    %v8823 = vunpack.c.l.b16 %v8695
    %v8824 = vunpack.c.l.b16 %v8696
    %v8825 = vunpack.c.l.b16 %v8697
    %v8826 = vunpack.c.l.b16 %v8698
    %v8827 = vunpack.c.l.b16 %v8699
    %v8828 = vunpack.c.l.b16 %v8700
    %v8829 = vunpack.c.l.b16 %v8701
    %v8830 = vunpack.c.l.b16 %v8702
    %v8831 = vunpack.c.l.b16 %v8703
    %v8832 = vunpack.c.l.b16 %v8704
    %v8833 = vunpack.c.l.b16 %v8705
    %v8834 = vunpack.c.l.b16 %v8706
    %v8835 = vunpack.c.l.b16 %v8707
    %v8836 = vunpack.c.l.b16 %v8708
    %v8837 = vunpack.c.l.b16 %v8709
    %v8838 = vunpack.c.l.b16 %v8710
    %v8839 = vunpack.c.l.b16 %v8711
    %v8840 = vunpack.c.l.b16 %v8712
    %v8841 = vunpack.c.l.b16 %v8713
    %v8842 = vunpack.c.l.b16 %v8714
    %v8843 = vpack.c.b16 %v8780, %v8779
    %v8844 = vpack.c.b16 %v8782, %v8781
    %v8845 = vpack.c.b16 %v8784, %v8783
    %v8846 = vpack.c.b16 %v8786, %v8785
    %v8847 = vpack.c.b16 %v8788, %v8787
    %v8848 = vpack.c.b16 %v8790, %v8789
    %v8849 = vpack.c.b16 %v8792, %v8791
    %v8850 = vpack.c.b16 %v8794, %v8793
    %v8851 = vpack.c.b16 %v8796, %v8795
    %v8852 = vpack.c.b16 %v8798, %v8797
    %v8853 = vpack.c.b16 %v8800, %v8799
    %v8854 = vpack.c.b16 %v8802, %v8801
    %v8855 = vpack.c.b16 %v8804, %v8803
    %v8856 = vpack.c.b16 %v8806, %v8805
    %v8857 = vpack.c.b16 %v8808, %v8807
    %v8858 = vpack.c.b16 %v8810, %v8809
    %v8859 = vpack.c.b16 %v8812, %v8811
    %v8860 = vpack.c.b16 %v8814, %v8813
    %v8861 = vpack.c.b16 %v8816, %v8815
    %v8862 = vpack.c.b16 %v8818, %v8817
    %v8863 = vpack.c.b16 %v8820, %v8819
    %v8864 = vpack.c.b16 %v8822, %v8821
    %v8865 = vpack.c.b16 %v8824, %v8823
    %v8866 = vpack.c.b16 %v8826, %v8825
    %v8867 = vpack.c.b16 %v8828, %v8827
    %v8868 = vpack.c.b16 %v8830, %v8829
    %v8869 = vpack.c.b16 %v8832, %v8831
    %v8870 = vpack.c.b16 %v8834, %v8833
    %v8871 = vpack.c.b16 %v8836, %v8835
    %v8872 = vpack.c.b16 %v8838, %v8837
    %v8873 = vpack.c.b16 %v8840, %v8839
    %v8874 = vpack.c.b16 %v8842, %v8841
    %8907 = vmatpush.bf16.msra.mxu0 %v8850
    %8908 = vmatpush.bf16.msra.mxu0 %v8849
    %8909 = vmatpush.bf16.msra.mxu0 %v8848
    %8910 = vmatpush.bf16.msra.mxu0 %v8847
    %8911 = vmatpush.bf16.msra.mxu0 %v8846
    %8912 = vmatpush.bf16.msra.mxu0 %v8845
    %8913 = vmatpush.bf16.msra.mxu0 %v8844
    %8914 = vmatpush.bf16.msra.mxu0 %v8843
    %8915 = vmatmul.bf16.gmra.mxu0 %v8635
    %v8916 = vpop.f32.mrf.mxu0
    %v8917 = vadd.f32 0.0, %v8916
    %v8918 = vpop.f32.mrf.mxu0
    %v8919 = vadd.f32 0.0, %v8918
    %8920 = vmatmul.bf16.gmra.mxu0 %v8639
    %v8921 = vpop.f32.mrf.mxu0
    %v8922 = vadd.f32 0.0, %v8921
    %v8923 = vpop.f32.mrf.mxu0
    %v8924 = vadd.f32 0.0, %v8923
    %8925 = vmatmul.bf16.gmra.mxu0 %v8643
    %v8926 = vpop.f32.mrf.mxu0
    %v8927 = vadd.f32 0.0, %v8926
    %v8928 = vpop.f32.mrf.mxu0
    %v8929 = vadd.f32 0.0, %v8928
    %8930 = vmatmul.bf16.gmra.mxu0 %v8647
    %v8931 = vpop.f32.mrf.mxu0
    %v8932 = vadd.f32 0.0, %v8931
    %v8933 = vpop.f32.mrf.mxu0
    %v8934 = vadd.f32 0.0, %v8933
    %8935 = vdwg.mxu0
    %8936 = vmatpush.bf16.msra.mxu0 %v8858
    %8937 = vmatpush.bf16.msra.mxu0 %v8857
    %8938 = vmatpush.bf16.msra.mxu0 %v8856
    %8939 = vmatpush.bf16.msra.mxu0 %v8855
    %8940 = vmatpush.bf16.msra.mxu0 %v8854
    %8941 = vmatpush.bf16.msra.mxu0 %v8853
    %8942 = vmatpush.bf16.msra.mxu0 %v8852
    %8943 = vmatpush.bf16.msra.mxu0 %v8851
    %8944 = vmatmul.bf16.gmra.mxu0 %v8636
    %v8945 = vpop.f32.mrf.mxu0
    %v8946 = vadd.f32 %v8917, %v8945
    %v8947 = vpop.f32.mrf.mxu0
    %v8948 = vadd.f32 %v8919, %v8947
    %8949 = vmatmul.bf16.gmra.mxu0 %v8640
    %v8950 = vpop.f32.mrf.mxu0
    %v8951 = vadd.f32 %v8922, %v8950
    %v8952 = vpop.f32.mrf.mxu0
    %v8953 = vadd.f32 %v8924, %v8952
    %8954 = vmatmul.bf16.gmra.mxu0 %v8644
    %v8955 = vpop.f32.mrf.mxu0
    %v8956 = vadd.f32 %v8927, %v8955
    %v8957 = vpop.f32.mrf.mxu0
    %v8958 = vadd.f32 %v8929, %v8957
    %8959 = vmatmul.bf16.gmra.mxu0 %v8648
    %v8960 = vpop.f32.mrf.mxu0
    %v8961 = vadd.f32 %v8932, %v8960
    %v8962 = vpop.f32.mrf.mxu0
    %v8963 = vadd.f32 %v8934, %v8962
    %8964 = vdwg.mxu0
    %8965 = vmatpush.bf16.msra.mxu0 %v8866
    %8966 = vmatpush.bf16.msra.mxu0 %v8865
    %8967 = vmatpush.bf16.msra.mxu0 %v8864
    %8968 = vmatpush.bf16.msra.mxu0 %v8863
    %8969 = vmatpush.bf16.msra.mxu0 %v8862
    %8970 = vmatpush.bf16.msra.mxu0 %v8861
    %8971 = vmatpush.bf16.msra.mxu0 %v8860
    %8972 = vmatpush.bf16.msra.mxu0 %v8859
    %8973 = vmatmul.bf16.gmra.mxu0 %v8637
    %v8974 = vpop.f32.mrf.mxu0
    %v8975 = vadd.f32 %v8946, %v8974
    %v8976 = vpop.f32.mrf.mxu0
    %v8977 = vadd.f32 %v8948, %v8976
    %8978 = vmatmul.bf16.gmra.mxu0 %v8641
    %v8979 = vpop.f32.mrf.mxu0
    %v8980 = vadd.f32 %v8951, %v8979
    %v8981 = vpop.f32.mrf.mxu0
    %v8982 = vadd.f32 %v8953, %v8981
    %8983 = vmatmul.bf16.gmra.mxu0 %v8645
    %v8984 = vpop.f32.mrf.mxu0
    %v8985 = vadd.f32 %v8956, %v8984
    %v8986 = vpop.f32.mrf.mxu0
    %v8987 = vadd.f32 %v8958, %v8986
    %8988 = vmatmul.bf16.gmra.mxu0 %v8649
    %v8989 = vpop.f32.mrf.mxu0
    %v8990 = vadd.f32 %v8961, %v8989
    %v8991 = vpop.f32.mrf.mxu0
    %v8992 = vadd.f32 %v8963, %v8991
    %8993 = vdwg.mxu0
    %8994 = vmatpush.bf16.msra.mxu0 %v8874
    %8995 = vmatpush.bf16.msra.mxu0 %v8873
    %8996 = vmatpush.bf16.msra.mxu0 %v8872
    %8997 = vmatpush.bf16.msra.mxu0 %v8871
    %8998 = vmatpush.bf16.msra.mxu0 %v8870
    %8999 = vmatpush.bf16.msra.mxu0 %v8869
    %9000 = vmatpush.bf16.msra.mxu0 %v8868
    %9001 = vmatpush.bf16.msra.mxu0 %v8867
    %9002 = vmatmul.bf16.gmra.mxu0 %v8638
    %v9003 = vpop.f32.mrf.mxu0
    %v9004 = vadd.f32 %v8975, %v9003
    %v9005 = vpop.f32.mrf.mxu0
    %v9006 = vadd.f32 %v8977, %v9005
    %9007 = vmatmul.bf16.gmra.mxu0 %v8642
    %v9008 = vpop.f32.mrf.mxu0
    %v9009 = vadd.f32 %v8980, %v9008
    %v9010 = vpop.f32.mrf.mxu0
    %v9011 = vadd.f32 %v8982, %v9010
    %9012 = vmatmul.bf16.gmra.mxu0 %v8646
    %v9013 = vpop.f32.mrf.mxu0
    %v9014 = vadd.f32 %v8985, %v9013
    %v9015 = vpop.f32.mrf.mxu0
    %v9016 = vadd.f32 %v8987, %v9015
    %9017 = vmatmul.bf16.gmra.mxu0 %v8650
    %v9018 = vpop.f32.mrf.mxu0
    %v9019 = vadd.f32 %v8990, %v9018
    %v9020 = vpop.f32.mrf.mxu0
    %v9021 = vadd.f32 %v8992, %v9020
    %9022 = vdwg.mxu0
    %9023 = vst [vmem:[#allocation16] sm:$0xff] %v9004
    %9024 = vst [vmem:[#allocation16 + $0x8] sm:$0xff] %v9006
    %9025 = vst [vmem:[#allocation16 + $0x10] sm:$0xff] %v9009
    %9026 = vst [vmem:[#allocation16 + $0x18] sm:$0xff] %v9011
    %9027 = vst [vmem:[#allocation16 + $0x20] sm:$0xff] %v9014
    %9028 = vst [vmem:[#allocation16 + $0x28] sm:$0xff] %v9016
    %9029 = vst [vmem:[#allocation16 + $0x30] sm:$0xff] %v9019
    %9030 = vst [vmem:[#allocation16 + $0x38] sm:$0xff] %v9021
    // Predicated region
    $region94: #{trex_projector.1} parent=1 // pred_check
      _
    $region95: #{trex_projector.1} parent=1 // pred_check_branch
      %9032 = sbr.rel (0) target = $region97
    $region96: #{trex_projector.1} parent=1 // pred_region
      %9034 = vsyncadd [#allocation4], 0
      %s9035 = sshll.u32 [#allocation16], 4
      %s9036 = int_to_ptr.vmem [resolvable:$true] %s9035
      %s9037 = sshll.u32 %s15, 4
      %s9038 = int_to_ptr.hbm [resolvable:$true] %s9037
      %9043 = dma.vmem_to_hbm [thread:$0]  %s9036, 1024, %s9038, [#allocation4], 128, 128, 8
    $region97: #{trex_projector.1} parent=1 // pred_fallthru
      _
    // Predicated region
    $region98: #{trex_projector.1} parent=1 // pred_check
      _
    $region99: #{trex_projector.1} parent=1 // pred_check_branch
      %9045 = sbr.rel (0) target = $region101
    $region100: #{trex_projector.1} parent=1 // pred_region
      %9047 = dma.done [#allocation4], 1024
    $region101: #{trex_projector.1} parent=1 // pred_fallthru
      _
    %9048 = vsyncpa [#allocation3], 1
    %9049 = vsyncpa [#allocation6], 1
    %9050 = vsyncpa [#allocation9], 1
    %9051 = vsyncpa [#allocation12], 1
    %9052 = vsyncpa [#allocation15], 1
    %9053 = vsyncpa [#allocation4], 1

</llo_original>
